<compile_context>
chip_gen: v6e
topology: v6e:2x2x1
jax: 0.10.0
libtpu: 0.0.40
codegen_flags: <defaults>
</compile_context>

<pallas_src>
import functools
import math

import jax
import jax.numpy as jnp
from jax import lax
from jax.experimental import pallas as pl
from jax.experimental.pallas import tpu as pltpu

BLOCK_KEYS = ("wqkvT", "bqkv", "woT", "bo", "g1", "be1",
              "w1T", "b1", "w2T", "b2", "g2", "be2")


# ---------------------------------------------------------------------------
# In-kernel building blocks
# ---------------------------------------------------------------------------

def _ln_lastdim(x, g, b, eps=1e-5):
    """LayerNorm over the last (feature) dim, f32 statistics."""
    mu = jnp.mean(x, axis=-1, keepdims=True)
    var = jnp.mean((x - mu) ** 2, axis=-1, keepdims=True)
    return (x - mu) * lax.rsqrt(var + eps) * g + b


def _head_masks(E, nhead, dh):
    """(E, H) one-hot head-membership matrix and its (H, E) transpose (via iota)."""
    e_ids = lax.broadcasted_iota(jnp.int32, (E, nhead), 0)
    h_ids = lax.broadcasted_iota(jnp.int32, (E, nhead), 1)
    lo = h_ids * dh
    m = jnp.where(jnp.logical_and(e_ids >= lo, e_ids < lo + dh), 1.0, 0.0)
    h2 = lax.broadcasted_iota(jnp.int32, (nhead, E), 0)
    e2 = lax.broadcasted_iota(jnp.int32, (nhead, E), 1)
    lo2 = h2 * dh
    mT = jnp.where(jnp.logical_and(e2 >= lo2, e2 < lo2 + dh), 1.0, 0.0)
    return m, mT


def _tf_layer(h, bn, T, nhead, hmask, hmaskT,
              wqkvT, bqkv, woT, bo, g1, be1, w1T, b1, w2T, b2, g2, be2):
    """One post-norm TransformerEncoderLayer on the (bn*T, E) activation slab."""
    E = wqkvT.shape[0]
    mm = wqkvT.dtype          # per-block matmul dtype (bf16 large blocks, f32 tiny)

    # Fused QKV projection (1/sqrt(dh) already folded into the Q columns at init).
    qkv = jnp.dot(h.astype(mm), wqkvT, preferred_element_type=jnp.float32) + bqkv
    q = qkv[:, :E].reshape(bn, T, E)
    k = qkv[:, E:2 * E].reshape(bn, T, E)
    v = qkv[:, 2 * E:].reshape(bn, T, E)

    # All-head scores, no per-head loop: broadcast product (VPU) + one head-sum
    # matmul; heads stay lane-contiguous the whole time.
    prod = q[:, :, None, :] * k[:, None, :, :]                       # (bn, Tq, Tk, E)
    s = jnp.dot(prod.reshape(bn * T * T, E), hmask,
                preferred_element_type=jnp.float32).reshape(bn, T, T, nhead)
    s = s - jnp.max(s, axis=2, keepdims=True)                        # softmax over keys
    p = jnp.exp(s)
    p = p * pl.reciprocal(jnp.sum(p, axis=2, keepdims=True), approx=True)
    # Expand per-head probs back to E lanes, weight V, reduce over keys.
    p_e = jnp.dot(p.reshape(bn * T * T, nhead), hmaskT,
                  preferred_element_type=jnp.float32).reshape(bn, T, T, E)
    ctx = jnp.sum(p_e * v[:, None, :, :], axis=2)                    # (bn, T, E)

    # Single output projection over all heads at once.
    sa = jnp.dot(ctx.reshape(bn * T, E).astype(mm), woT,
                 preferred_element_type=jnp.float32) + bo

    # residual + LayerNorm 1
    x1 = _ln_lastdim(h + sa, g1, be1)

    # feed-forward (ReLU)
    hdn = jnp.dot(x1.astype(mm), w1T, preferred_element_type=jnp.float32) + b1
    hdn = jnp.maximum(hdn, 0.0)
    ff = jnp.dot(hdn.astype(mm), w2T, preferred_element_type=jnp.float32) + b2

    # residual + LayerNorm 2
    return _ln_lastdim(x1 + ff, g2, be2)


# ---------------------------------------------------------------------------
# Fused encoder kernel (one batch tile per grid step, weights grid-resident)
# ---------------------------------------------------------------------------

def encoder_kernel(*refs, nhead, num_blocks):
    o_ref = refs[-1]
    it = iter(refs[:-1])
    x_ref = next(it)
    span_wT = next(it)
    span_b = next(it)
    ln_g = next(it)
    ln_b = next(it)

    x = x_ref[...]                                    # (bn, T, D) f32
    bn, T, D = x.shape
    E0 = span_wT.shape[1]

    # Span: Linear(D -> E0) on all bn*T rows at once.
    h = jnp.dot(x.reshape(bn * T, D).astype(span_wT.dtype), span_wT[...],
                preferred_element_type=jnp.float32) + span_b[...]

    # LayerNorm over the full (T, E0) slab of each sample (normalized_shape=[T, E0]).
    h3 = h.reshape(bn, T, E0)
    mu = jnp.mean(jnp.mean(h3, axis=-1, keepdims=True), axis=-2, keepdims=True)
    d = h3 - mu
    var = jnp.mean(jnp.mean(d * d, axis=-1, keepdims=True), axis=-2, keepdims=True)
    h = (d * lax.rsqrt(var + 1e-5) * ln_g[...] + ln_b[...]).reshape(bn * T, E0)

    # Three TransformerBlocks: fori_loop over stacked per-layer weights, then Linear out.
    for _ in range(num_blocks):
        lrefs = {key: next(it) for key in BLOCK_KEYS}
        out_wT = next(it)
        out_b = next(it)

        L, E, _ = lrefs["wqkvT"].shape
        dh = E // nhead
        hmask, hmaskT = _head_masks(E, nhead, dh)

        def layer_body(l, hh, lrefs=lrefs, hmask=hmask, hmaskT=hmaskT):
            return _tf_layer(hh, bn, T, nhead, hmask, hmaskT,
                             *(lrefs[key][l] for key in BLOCK_KEYS))

        h = lax.fori_loop(0, L, layer_body, h)

        h = jnp.dot(h.astype(out_wT.dtype), out_wT[...],
                    preferred_element_type=jnp.float32) + out_b[...]

    # Fused sum over the sequence dim (dim=1).
    d_out = h.shape[-1]
    o_ref[0] = jnp.sum(h.reshape(bn, T, d_out), axis=1).astype(o_ref.dtype)


def encoder_forward(x, params, nhead, batch_tile=8):
    """x: (N, T, D) f32 -> (N, dim_embedding) f32. One pipelined pallas_call."""
    N, T, D = x.shape
    bn = max(1, min(batch_tile, N))
    while N % bn:
        bn -= 1

    flat = [x, params["span_wT"], params["span_b"], params["ln_g"], params["ln_b"]]
    for blk in params["blocks"]:
        flat.extend(blk[key] for key in BLOCK_KEYS)
        flat.append(blk["out_wT"])
        flat.append(blk["out_b"])
    d_emb = params["blocks"][-1]["out_wT"].shape[1]

    # x is tiled along the batch; every weight gets a constant index_map -> resident.
    in_specs = [pl.BlockSpec((bn, T, D), lambda i: (i, 0, 0))]
    for a in flat[1:]:
        in_specs.append(pl.BlockSpec(a.shape, lambda i, nd=a.ndim: (0,) * nd))

    total_bytes = sum(int(a.size) * a.dtype.itemsize for a in flat)
    vmem_limit = int(min(64 * 2**20, max(32 * 2**20, 6 * total_bytes)))

    kernel = functools.partial(encoder_kernel, nhead=nhead,
                               num_blocks=len(params["blocks"]))
    out = pl.pallas_call(
        kernel,
        grid=(N // bn,),
        in_specs=in_specs,
        out_specs=pl.BlockSpec((1, bn, d_emb), lambda i: (i, 0, 0)),
        out_shape=jax.ShapeDtypeStruct((N // bn, bn, d_emb), jnp.float32),
        compiler_params=pltpu.CompilerParams(
            dimension_semantics=("parallel",),
            vmem_limit_bytes=vmem_limit),
    )(*flat)
    return out.reshape(N, d_emb)


# ---------------------------------------------------------------------------
# Deterministic parameter init (PyTorch layout) + one-time kernel-ready prep
# ---------------------------------------------------------------------------

def _linear_params(key, din, dout, scale=0.05):
    kw, kb = jax.random.split(key)
    w = scale * jax.random.normal(kw, (dout, din), jnp.float32)   # PyTorch (out, in)
    b = scale * jax.random.normal(kb, (dout,), jnp.float32)
    return w, b


def _init_tf_layer(key, d_model, dim_ff):
    keys = jax.random.split(key, 6)
    wq, bq = _linear_params(keys[0], d_model, d_model)
    wk, bk = _linear_params(keys[1], d_model, d_model)
    wv, bv = _linear_params(keys[2], d_model, d_model)
    wo, bo = _linear_params(keys[3], d_model, d_model)
    w1, b1 = _linear_params(keys[4], d_model, dim_ff)
    w2, b2 = _linear_params(keys[5], dim_ff, d_model)
    ones = jnp.ones((d_model,), jnp.float32)
    zeros = jnp.zeros((d_model,), jnp.float32)
    return dict(wq=wq, bq=bq, wk=wk, bk=bk, wv=wv, bv=bv, wo=wo, bo=bo,
                w1=w1, b1=b1, w2=w2, b2=b2,
                ln1_g=ones, ln1_b=zeros, ln2_g=ones, ln2_b=zeros)


def _prepare_block(layer_params, d_model, nhead, out_w, out_b):
    """Stack per-layer weights on a leading axis; pre-transpose, fuse QKV, fold the
    1/sqrt(dh) scale into Q, and pick the matmul dtype per block width."""
    assert d_model % nhead == 0, (
        f"d_model={d_model} must be divisible by nhead={nhead} (required by MHA)")
    dh = d_model // nhead
    scale = 1.0 / math.sqrt(dh)
    mm_dtype = jnp.bfloat16 if d_model >= 64 else jnp.float32

    stacked = {key: [] for key in BLOCK_KEYS}
    for lp in layer_params:
        E = d_model
        F = lp["w1"].shape[0]
        wqkvT = jnp.concatenate([lp["wq"].T * scale, lp["wk"].T, lp["wv"].T], axis=1)
        bqkv = jnp.concatenate([lp["bq"] * scale, lp["bk"], lp["bv"]]).reshape(1, 3 * E)
        stacked["wqkvT"].append(wqkvT.astype(mm_dtype))
        stacked["bqkv"].append(bqkv)
        stacked["woT"].append(lp["wo"].T.astype(mm_dtype))
        stacked["bo"].append(lp["bo"].reshape(1, E))
        stacked["g1"].append(lp["ln1_g"].reshape(1, E))
        stacked["be1"].append(lp["ln1_b"].reshape(1, E))
        stacked["w1T"].append(lp["w1"].T.astype(mm_dtype))
        stacked["b1"].append(lp["b1"].reshape(1, F))
        stacked["w2T"].append(lp["w2"].T.astype(mm_dtype))
        stacked["b2"].append(lp["b2"].reshape(1, E))
        stacked["g2"].append(lp["ln2_g"].reshape(1, E))
        stacked["be2"].append(lp["ln2_b"].reshape(1, E))

    blk = {key: jnp.stack(vals) for key, vals in stacked.items()}
    blk["out_wT"] = out_w.T.astype(mm_dtype)
    blk["out_b"] = out_b.reshape(1, out_w.shape[0])
    return blk


def init_encoder(key, dim_data, dim_embedding, nhead=4, num_layers=2):
    T, D = dim_data
    dim_initial = 2 ** int(math.ceil(math.log2(T * D)))
    in_features = [dim_initial, dim_initial // 4, dim_initial // 16]
    out_features = in_features[1:] + [dim_embedding]

    keys = jax.random.split(key, 4)
    span_w, span_b = _linear_params(keys[0], D, dim_initial)

    blocks = []
    for i in range(3):
        bkeys = jax.random.split(keys[i + 1], num_layers + 1)
        layers = [_init_tf_layer(bkeys[j], in_features[i], 2 * in_features[i])
                  for j in range(num_layers)]
        out_w, out_b = _linear_params(bkeys[-1], in_features[i], out_features[i])
        blocks.append(_prepare_block(layers, in_features[i], nhead, out_w, out_b))

    span_dtype = jnp.bfloat16 if D >= 64 else jnp.float32
    params = dict(
        span_wT=span_w.T.astype(span_dtype),
        span_b=span_b.reshape(1, dim_initial),
        ln_g=jnp.ones((T, dim_initial), jnp.float32),
        ln_b=jnp.zeros((T, dim_initial), jnp.float32),
        blocks=blocks,
    )
    return params, nhead


# ---------------------------------------------------------------------------
# Main
# ---------------------------------------------------------------------------

if __name__ == "__main__":
    # dim_data = (T, D) = (8, 8) -> dim_initial = 64, block widths [64, 16, 4]
    N, T, D = 4, 8, 8
    dim_embedding = 8

    key = jax.random.PRNGKey(0)
    kx, kp = jax.random.split(key)
    x = jax.random.normal(kx, (N, T, D), jnp.float32)

    params, nhead = init_encoder(kp, (T, D), dim_embedding, nhead=4, num_layers=2)

    # batch_tile=2 -> grid=(2,): exercises the pipelined, parallel batch grid.
    fwd = jax.jit(functools.partial(encoder_forward, nhead=nhead, batch_tile=2))
    out = fwd(x, params)
    out = jax.block_until_ready(out)

    assert out.shape == (N, dim_embedding), out.shape
    assert bool(jnp.all(jnp.isfinite(out)))
    print("KERNEL_OK")
</pallas_src>

<mosaic_0001>
module attributes {stable_mosaic.version = 11 : i64} {
  func.func @encoder_kernel(%arg0: i32, %arg1: memref<2x8x8xf32, #tpu.memory_space<vmem>>, %arg2: memref<8x64xf32, #tpu.memory_space<vmem>>, %arg3: memref<1x64xf32, #tpu.memory_space<vmem>>, %arg4: memref<8x64xf32, #tpu.memory_space<vmem>>, %arg5: memref<8x64xf32, #tpu.memory_space<vmem>>, %arg6: memref<2x64x192xbf16, #tpu.memory_space<vmem>>, %arg7: memref<2x1x192xf32, #tpu.memory_space<vmem>>, %arg8: memref<2x64x64xbf16, #tpu.memory_space<vmem>>, %arg9: memref<2x1x64xf32, #tpu.memory_space<vmem>>, %arg10: memref<2x1x64xf32, #tpu.memory_space<vmem>>, %arg11: memref<2x1x64xf32, #tpu.memory_space<vmem>>, %arg12: memref<2x64x128xbf16, #tpu.memory_space<vmem>>, %arg13: memref<2x1x128xf32, #tpu.memory_space<vmem>>, %arg14: memref<2x128x64xbf16, #tpu.memory_space<vmem>>, %arg15: memref<2x1x64xf32, #tpu.memory_space<vmem>>, %arg16: memref<2x1x64xf32, #tpu.memory_space<vmem>>, %arg17: memref<2x1x64xf32, #tpu.memory_space<vmem>>, %arg18: memref<64x16xbf16, #tpu.memory_space<vmem>>, %arg19: memref<1x16xf32, #tpu.memory_space<vmem>>, %arg20: memref<2x16x48xf32, #tpu.memory_space<vmem>>, %arg21: memref<2x1x48xf32, #tpu.memory_space<vmem>>, %arg22: memref<2x16x16xf32, #tpu.memory_space<vmem>>, %arg23: memref<2x1x16xf32, #tpu.memory_space<vmem>>, %arg24: memref<2x1x16xf32, #tpu.memory_space<vmem>>, %arg25: memref<2x1x16xf32, #tpu.memory_space<vmem>>, %arg26: memref<2x16x32xf32, #tpu.memory_space<vmem>>, %arg27: memref<2x1x32xf32, #tpu.memory_space<vmem>>, %arg28: memref<2x32x16xf32, #tpu.memory_space<vmem>>, %arg29: memref<2x1x16xf32, #tpu.memory_space<vmem>>, %arg30: memref<2x1x16xf32, #tpu.memory_space<vmem>>, %arg31: memref<2x1x16xf32, #tpu.memory_space<vmem>>, %arg32: memref<16x4xf32, #tpu.memory_space<vmem>>, %arg33: memref<1x4xf32, #tpu.memory_space<vmem>>, %arg34: memref<2x4x12xf32, #tpu.memory_space<vmem>>, %arg35: memref<2x1x12xf32, #tpu.memory_space<vmem>>, %arg36: memref<2x4x4xf32, #tpu.memory_space<vmem>>, %arg37: memref<2x1x4xf32, #tpu.memory_space<vmem>>, %arg38: memref<2x1x4xf32, #tpu.memory_space<vmem>>, %arg39: memref<2x1x4xf32, #tpu.memory_space<vmem>>, %arg40: memref<2x4x8xf32, #tpu.memory_space<vmem>>, %arg41: memref<2x1x8xf32, #tpu.memory_space<vmem>>, %arg42: memref<2x8x4xf32, #tpu.memory_space<vmem>>, %arg43: memref<2x1x4xf32, #tpu.memory_space<vmem>>, %arg44: memref<2x1x4xf32, #tpu.memory_space<vmem>>, %arg45: memref<2x1x4xf32, #tpu.memory_space<vmem>>, %arg46: memref<4x8xf32, #tpu.memory_space<vmem>>, %arg47: memref<1x8xf32, #tpu.memory_space<vmem>>, %arg48: memref<1x2x8xf32, #tpu.memory_space<vmem>>) attributes {dimension_semantics = [#tpu.dimension_semantics<parallel>], iteration_bounds = array<i64: 2>, scalar_prefetch = 0 : i64, scratch_operands = 0 : i64, tpu.core_type = #tpu.core_type<tc>, window_params = [{transform_indices = @transform_0, window_bounds = array<i64: 2, 8, 8>}, {pipeline_mode = #tpu.pipeline_mode<synchronous>, transform_indices = @transform_1, window_bounds = array<i64: 8, 64>}, {pipeline_mode = #tpu.pipeline_mode<synchronous>, transform_indices = @transform_2, window_bounds = array<i64: 1, 64>}, {pipeline_mode = #tpu.pipeline_mode<synchronous>, transform_indices = @transform_3, window_bounds = array<i64: 8, 64>}, {pipeline_mode = #tpu.pipeline_mode<synchronous>, transform_indices = @transform_4, window_bounds = array<i64: 8, 64>}, {pipeline_mode = #tpu.pipeline_mode<synchronous>, transform_indices = @transform_5, window_bounds = array<i64: 2, 64, 192>}, {pipeline_mode = #tpu.pipeline_mode<synchronous>, transform_indices = @transform_6, window_bounds = array<i64: 2, 1, 192>}, {pipeline_mode = #tpu.pipeline_mode<synchronous>, transform_indices = @transform_7, window_bounds = array<i64: 2, 64, 64>}, {pipeline_mode = #tpu.pipeline_mode<synchronous>, transform_indices = @transform_8, window_bounds = array<i64: 2, 1, 64>}, {pipeline_mode = #tpu.pipeline_mode<synchronous>, transform_indices = @transform_9, window_bounds = array<i64: 2, 1, 64>}, {pipeline_mode = #tpu.pipeline_mode<synchronous>, transform_indices = @transform_10, window_bounds = array<i64: 2, 1, 64>}, {pipeline_mode = #tpu.pipeline_mode<synchronous>, transform_indices = @transform_11, window_bounds = array<i64: 2, 64, 128>}, {pipeline_mode = #tpu.pipeline_mode<synchronous>, transform_indices = @transform_12, window_bounds = array<i64: 2, 1, 128>}, {pipeline_mode = #tpu.pipeline_mode<synchronous>, transform_indices = @transform_13, window_bounds = array<i64: 2, 128, 64>}, {pipeline_mode = #tpu.pipeline_mode<synchronous>, transform_indices = @transform_14, window_bounds = array<i64: 2, 1, 64>}, {pipeline_mode = #tpu.pipeline_mode<synchronous>, transform_indices = @transform_15, window_bounds = array<i64: 2, 1, 64>}, {pipeline_mode = #tpu.pipeline_mode<synchronous>, transform_indices = @transform_16, window_bounds = array<i64: 2, 1, 64>}, {pipeline_mode = #tpu.pipeline_mode<synchronous>, transform_indices = @transform_17, window_bounds = array<i64: 64, 16>}, {pipeline_mode = #tpu.pipeline_mode<synchronous>, transform_indices = @transform_18, window_bounds = array<i64: 1, 16>}, {pipeline_mode = #tpu.pipeline_mode<synchronous>, transform_indices = @transform_19, window_bounds = array<i64: 2, 16, 48>}, {pipeline_mode = #tpu.pipeline_mode<synchronous>, transform_indices = @transform_20, window_bounds = array<i64: 2, 1, 48>}, {pipeline_mode = #tpu.pipeline_mode<synchronous>, transform_indices = @transform_21, window_bounds = array<i64: 2, 16, 16>}, {pipeline_mode = #tpu.pipeline_mode<synchronous>, transform_indices = @transform_22, window_bounds = array<i64: 2, 1, 16>}, {pipeline_mode = #tpu.pipeline_mode<synchronous>, transform_indices = @transform_23, window_bounds = array<i64: 2, 1, 16>}, {pipeline_mode = #tpu.pipeline_mode<synchronous>, transform_indices = @transform_24, window_bounds = array<i64: 2, 1, 16>}, {pipeline_mode = #tpu.pipeline_mode<synchronous>, transform_indices = @transform_25, window_bounds = array<i64: 2, 16, 32>}, {pipeline_mode = #tpu.pipeline_mode<synchronous>, transform_indices = @transform_26, window_bounds = array<i64: 2, 1, 32>}, {pipeline_mode = #tpu.pipeline_mode<synchronous>, transform_indices = @transform_27, window_bounds = array<i64: 2, 32, 16>}, {pipeline_mode = #tpu.pipeline_mode<synchronous>, transform_indices = @transform_28, window_bounds = array<i64: 2, 1, 16>}, {pipeline_mode = #tpu.pipeline_mode<synchronous>, transform_indices = @transform_29, window_bounds = array<i64: 2, 1, 16>}, {pipeline_mode = #tpu.pipeline_mode<synchronous>, transform_indices = @transform_30, window_bounds = array<i64: 2, 1, 16>}, {pipeline_mode = #tpu.pipeline_mode<synchronous>, transform_indices = @transform_31, window_bounds = array<i64: 16, 4>}, {pipeline_mode = #tpu.pipeline_mode<synchronous>, transform_indices = @transform_32, window_bounds = array<i64: 1, 4>}, {pipeline_mode = #tpu.pipeline_mode<synchronous>, transform_indices = @transform_33, window_bounds = array<i64: 2, 4, 12>}, {pipeline_mode = #tpu.pipeline_mode<synchronous>, transform_indices = @transform_34, window_bounds = array<i64: 2, 1, 12>}, {pipeline_mode = #tpu.pipeline_mode<synchronous>, transform_indices = @transform_35, window_bounds = array<i64: 2, 4, 4>}, {pipeline_mode = #tpu.pipeline_mode<synchronous>, transform_indices = @transform_36, window_bounds = array<i64: 2, 1, 4>}, {pipeline_mode = #tpu.pipeline_mode<synchronous>, transform_indices = @transform_37, window_bounds = array<i64: 2, 1, 4>}, {pipeline_mode = #tpu.pipeline_mode<synchronous>, transform_indices = @transform_38, window_bounds = array<i64: 2, 1, 4>}, {pipeline_mode = #tpu.pipeline_mode<synchronous>, transform_indices = @transform_39, window_bounds = array<i64: 2, 4, 8>}, {pipeline_mode = #tpu.pipeline_mode<synchronous>, transform_indices = @transform_40, window_bounds = array<i64: 2, 1, 8>}, {pipeline_mode = #tpu.pipeline_mode<synchronous>, transform_indices = @transform_41, window_bounds = array<i64: 2, 8, 4>}, {pipeline_mode = #tpu.pipeline_mode<synchronous>, transform_indices = @transform_42, window_bounds = array<i64: 2, 1, 4>}, {pipeline_mode = #tpu.pipeline_mode<synchronous>, transform_indices = @transform_43, window_bounds = array<i64: 2, 1, 4>}, {pipeline_mode = #tpu.pipeline_mode<synchronous>, transform_indices = @transform_44, window_bounds = array<i64: 2, 1, 4>}, {pipeline_mode = #tpu.pipeline_mode<synchronous>, transform_indices = @transform_45, window_bounds = array<i64: 4, 8>}, {pipeline_mode = #tpu.pipeline_mode<synchronous>, transform_indices = @transform_46, window_bounds = array<i64: 1, 8>}, {transform_indices = @transform_47, window_bounds = array<i64: 1, 2, 8>}]} {
    %c0 = arith.constant 0 : index
    %c0_0 = arith.constant 0 : index
    %c0_1 = arith.constant 0 : index
    %0 = vector.load %arg1[%c0, %c0_0, %c0_1] : memref<2x8x8xf32, #tpu.memory_space<vmem>>, vector<2x8x8xf32>
    %1 = vector.shape_cast %0 : vector<2x8x8xf32> to vector<16x8xf32>
    %c0_2 = arith.constant 0 : index
    %c0_3 = arith.constant 0 : index
    %2 = vector.load %arg2[%c0_2, %c0_3] : memref<8x64xf32, #tpu.memory_space<vmem>>, vector<8x64xf32>
    %cst = arith.constant dense<0.000000e+00> : vector<16x64xf32>
    %3 = tpu.matmul %1, %2, %cst {dimension_numbers = #tpu.dot_dimension_numbers<[1], [0], [0], [1], [0, 0, 1, 1], [], []>} : vector<16x8xf32>, vector<8x64xf32>, vector<16x64xf32> -> vector<16x64xf32>
    %c0_4 = arith.constant 0 : index
    %c0_5 = arith.constant 0 : index
    %4 = vector.load %arg3[%c0_4, %c0_5] : memref<1x64xf32, #tpu.memory_space<vmem>>, vector<1x64xf32>
    %5 = vector.broadcast %4 : vector<1x64xf32> to vector<16x64xf32>
    %6 = arith.addf %3, %5 : vector<16x64xf32>
    %7 = vector.shape_cast %6 : vector<16x64xf32> to vector<2x8x64xf32>
    %cst_6 = arith.constant dense<0.000000e+00> : vector<2x8xf32>
    %8 = vector.multi_reduction <add>, %7, %cst_6 [2] : vector<2x8x64xf32> to vector<2x8xf32>
    %9 = vector.shape_cast %8 : vector<2x8xf32> to vector<2x8x1xf32>
    %cst_7 = arith.constant 6.400000e+01 : f32
    %10 = vector.broadcast %cst_7 : f32 to vector<2x8x1xf32>
    %11 = arith.divf %9, %10 : vector<2x8x1xf32>
    %cst_8 = arith.constant dense<0.000000e+00> : vector<2x1xf32>
    %12 = vector.multi_reduction <add>, %11, %cst_8 [1] : vector<2x8x1xf32> to vector<2x1xf32>
    %13 = vector.shape_cast %12 : vector<2x1xf32> to vector<2x1x1xf32>
    %cst_9 = arith.constant 8.000000e+00 : f32
    %14 = vector.broadcast %cst_9 : f32 to vector<2x1x1xf32>
    %15 = arith.divf %13, %14 : vector<2x1x1xf32>
    %16 = vector.broadcast %15 : vector<2x1x1xf32> to vector<2x8x64xf32>
    %17 = arith.subf %7, %16 : vector<2x8x64xf32>
    %18 = arith.mulf %17, %17 : vector<2x8x64xf32>
    %cst_10 = arith.constant dense<0.000000e+00> : vector<2x8xf32>
    %19 = vector.multi_reduction <add>, %18, %cst_10 [2] : vector<2x8x64xf32> to vector<2x8xf32>
    %20 = vector.shape_cast %19 : vector<2x8xf32> to vector<2x8x1xf32>
    %cst_11 = arith.constant 6.400000e+01 : f32
    %21 = vector.broadcast %cst_11 : f32 to vector<2x8x1xf32>
    %22 = arith.divf %20, %21 : vector<2x8x1xf32>
    %cst_12 = arith.constant dense<0.000000e+00> : vector<2x1xf32>
    %23 = vector.multi_reduction <add>, %22, %cst_12 [1] : vector<2x8x1xf32> to vector<2x1xf32>
    %24 = vector.shape_cast %23 : vector<2x1xf32> to vector<2x1x1xf32>
    %cst_13 = arith.constant 8.000000e+00 : f32
    %25 = vector.broadcast %cst_13 : f32 to vector<2x1x1xf32>
    %26 = arith.divf %24, %25 : vector<2x1x1xf32>
    %cst_14 = arith.constant 9.99999974E-6 : f32
    %27 = vector.broadcast %cst_14 : f32 to vector<2x1x1xf32>
    %28 = arith.addf %26, %27 : vector<2x1x1xf32>
    %29 = math.rsqrt %28 : vector<2x1x1xf32>
    %30 = vector.broadcast %29 : vector<2x1x1xf32> to vector<2x8x64xf32>
    %31 = arith.mulf %17, %30 : vector<2x8x64xf32>
    %c0_15 = arith.constant 0 : index
    %c0_16 = arith.constant 0 : index
    %32 = vector.load %arg4[%c0_15, %c0_16] : memref<8x64xf32, #tpu.memory_space<vmem>>, vector<8x64xf32>
    %33 = vector.shape_cast %32 : vector<8x64xf32> to vector<1x8x64xf32>
    %34 = vector.broadcast %33 : vector<1x8x64xf32> to vector<2x8x64xf32>
    %35 = arith.mulf %31, %34 : vector<2x8x64xf32>
    %c0_17 = arith.constant 0 : index
    %c0_18 = arith.constant 0 : index
    %36 = vector.load %arg5[%c0_17, %c0_18] : memref<8x64xf32, #tpu.memory_space<vmem>>, vector<8x64xf32>
    %37 = vector.shape_cast %36 : vector<8x64xf32> to vector<1x8x64xf32>
    %38 = vector.broadcast %37 : vector<1x8x64xf32> to vector<2x8x64xf32>
    %39 = arith.addf %35, %38 : vector<2x8x64xf32>
    %40 = vector.shape_cast %39 : vector<2x8x64xf32> to vector<16x64xf32>
    %41 = tpu.iota {dimensions = array<i32: 0>} : vector<64x4xi32>
    %42 = tpu.iota {dimensions = array<i32: 1>} : vector<64x4xi32>
    %c16_i32 = arith.constant 16 : i32
    %43 = vector.broadcast %c16_i32 : i32 to vector<64x4xi32>
    %44 = arith.muli %42, %43 : vector<64x4xi32>
    %45 = arith.cmpi sge, %41, %44 : vector<64x4xi32>
    %c16_i32_19 = arith.constant 16 : i32
    %46 = vector.broadcast %c16_i32_19 : i32 to vector<64x4xi32>
    %47 = arith.addi %44, %46 : vector<64x4xi32>
    %48 = arith.cmpi slt, %41, %47 : vector<64x4xi32>
    %49 = arith.andi %45, %48 : vector<64x4xi1>
    %cst_20 = arith.constant 1.000000e+00 : f32
    %cst_21 = arith.constant 0.000000e+00 : f32
    %50 = vector.broadcast %cst_20 : f32 to vector<64x4xf32>
    %51 = vector.broadcast %cst_21 : f32 to vector<64x4xf32>
    %52 = arith.select %49, %50, %51 : vector<64x4xi1>, vector<64x4xf32>
    %53 = tpu.iota {dimensions = array<i32: 0>} : vector<4x64xi32>
    %54 = tpu.iota {dimensions = array<i32: 1>} : vector<4x64xi32>
    %c16_i32_22 = arith.constant 16 : i32
    %55 = vector.broadcast %c16_i32_22 : i32 to vector<4x64xi32>
    %56 = arith.muli %53, %55 : vector<4x64xi32>
    %57 = arith.cmpi sge, %54, %56 : vector<4x64xi32>
    %c16_i32_23 = arith.constant 16 : i32
    %58 = vector.broadcast %c16_i32_23 : i32 to vector<4x64xi32>
    %59 = arith.addi %56, %58 : vector<4x64xi32>
    %60 = arith.cmpi slt, %54, %59 : vector<4x64xi32>
    %61 = arith.andi %57, %60 : vector<4x64xi1>
    %cst_24 = arith.constant 1.000000e+00 : f32
    %cst_25 = arith.constant 0.000000e+00 : f32
    %62 = vector.broadcast %cst_24 : f32 to vector<4x64xf32>
    %63 = vector.broadcast %cst_25 : f32 to vector<4x64xf32>
    %64 = arith.select %61, %62, %63 : vector<4x64xi1>, vector<4x64xf32>
    %c0_i32 = arith.constant 0 : i32
    %c2_i32 = arith.constant 2 : i32
    %65 = arith.addi %c0_i32, %c2_i32 : i32
    %c1_i32 = arith.constant 1 : i32
    %66 = scf.for %arg49 = %c0_i32 to %65 step %c1_i32 iter_args(%arg50 = %40) -> (vector<16x64xf32>)  : i32 {
      %140 = arith.index_cast %arg49 : i32 to index
      %c0_69 = arith.constant 0 : index
      %c0_70 = arith.constant 0 : index
      %141 = vector.load %arg6[%140, %c0_69, %c0_70] : memref<2x64x192xbf16, #tpu.memory_space<vmem>>, vector<1x64x192xbf16>
      %142 = vector.shape_cast %141 : vector<1x64x192xbf16> to vector<64x192xbf16>
      %143 = arith.index_cast %arg49 : i32 to index
      %c0_71 = arith.constant 0 : index
      %c0_72 = arith.constant 0 : index
      %144 = vector.load %arg7[%143, %c0_71, %c0_72] : memref<2x1x192xf32, #tpu.memory_space<vmem>>, vector<1x1x192xf32>
      %145 = vector.shape_cast %144 : vector<1x1x192xf32> to vector<1x192xf32>
      %146 = arith.index_cast %arg49 : i32 to index
      %c0_73 = arith.constant 0 : index
      %c0_74 = arith.constant 0 : index
      %147 = vector.load %arg8[%146, %c0_73, %c0_74] : memref<2x64x64xbf16, #tpu.memory_space<vmem>>, vector<1x64x64xbf16>
      %148 = vector.shape_cast %147 : vector<1x64x64xbf16> to vector<64x64xbf16>
      %149 = arith.index_cast %arg49 : i32 to index
      %c0_75 = arith.constant 0 : index
      %c0_76 = arith.constant 0 : index
      %150 = vector.load %arg9[%149, %c0_75, %c0_76] : memref<2x1x64xf32, #tpu.memory_space<vmem>>, vector<1x1x64xf32>
      %151 = vector.shape_cast %150 : vector<1x1x64xf32> to vector<1x64xf32>
      %152 = arith.index_cast %arg49 : i32 to index
      %c0_77 = arith.constant 0 : index
      %c0_78 = arith.constant 0 : index
      %153 = vector.load %arg10[%152, %c0_77, %c0_78] : memref<2x1x64xf32, #tpu.memory_space<vmem>>, vector<1x1x64xf32>
      %154 = vector.shape_cast %153 : vector<1x1x64xf32> to vector<1x64xf32>
      %155 = arith.index_cast %arg49 : i32 to index
      %c0_79 = arith.constant 0 : index
      %c0_80 = arith.constant 0 : index
      %156 = vector.load %arg11[%155, %c0_79, %c0_80] : memref<2x1x64xf32, #tpu.memory_space<vmem>>, vector<1x1x64xf32>
      %157 = vector.shape_cast %156 : vector<1x1x64xf32> to vector<1x64xf32>
      %158 = arith.index_cast %arg49 : i32 to index
      %c0_81 = arith.constant 0 : index
      %c0_82 = arith.constant 0 : index
      %159 = vector.load %arg12[%158, %c0_81, %c0_82] : memref<2x64x128xbf16, #tpu.memory_space<vmem>>, vector<1x64x128xbf16>
      %160 = vector.shape_cast %159 : vector<1x64x128xbf16> to vector<64x128xbf16>
      %161 = arith.index_cast %arg49 : i32 to index
      %c0_83 = arith.constant 0 : index
      %c0_84 = arith.constant 0 : index
      %162 = vector.load %arg13[%161, %c0_83, %c0_84] : memref<2x1x128xf32, #tpu.memory_space<vmem>>, vector<1x1x128xf32>
      %163 = vector.shape_cast %162 : vector<1x1x128xf32> to vector<1x128xf32>
      %164 = arith.index_cast %arg49 : i32 to index
      %c0_85 = arith.constant 0 : index
      %c0_86 = arith.constant 0 : index
      %165 = vector.load %arg14[%164, %c0_85, %c0_86] : memref<2x128x64xbf16, #tpu.memory_space<vmem>>, vector<1x128x64xbf16>
      %166 = vector.shape_cast %165 : vector<1x128x64xbf16> to vector<128x64xbf16>
      %167 = arith.index_cast %arg49 : i32 to index
      %c0_87 = arith.constant 0 : index
      %c0_88 = arith.constant 0 : index
      %168 = vector.load %arg15[%167, %c0_87, %c0_88] : memref<2x1x64xf32, #tpu.memory_space<vmem>>, vector<1x1x64xf32>
      %169 = vector.shape_cast %168 : vector<1x1x64xf32> to vector<1x64xf32>
      %170 = arith.index_cast %arg49 : i32 to index
      %c0_89 = arith.constant 0 : index
      %c0_90 = arith.constant 0 : index
      %171 = vector.load %arg16[%170, %c0_89, %c0_90] : memref<2x1x64xf32, #tpu.memory_space<vmem>>, vector<1x1x64xf32>
      %172 = vector.shape_cast %171 : vector<1x1x64xf32> to vector<1x64xf32>
      %173 = arith.index_cast %arg49 : i32 to index
      %c0_91 = arith.constant 0 : index
      %c0_92 = arith.constant 0 : index
      %174 = vector.load %arg17[%173, %c0_91, %c0_92] : memref<2x1x64xf32, #tpu.memory_space<vmem>>, vector<1x1x64xf32>
      %175 = vector.shape_cast %174 : vector<1x1x64xf32> to vector<1x64xf32>
      %176 = arith.truncf %arg50 : vector<16x64xf32> to vector<16x64xbf16>
      %cst_93 = arith.constant dense<0.000000e+00> : vector<16x192xf32>
      %177 = tpu.matmul %176, %142, %cst_93 {dimension_numbers = #tpu.dot_dimension_numbers<[1], [0], [0], [1], [0, 0, 1, 1], [], []>} : vector<16x64xbf16>, vector<64x192xbf16>, vector<16x192xf32> -> vector<16x192xf32>
      %178 = vector.broadcast %145 : vector<1x192xf32> to vector<16x192xf32>
      %179 = arith.addf %177, %178 : vector<16x192xf32>
      %180 = vector.extract_strided_slice %179 {offsets = [0, 0], sizes = [16, 64], strides = [1, 1]} : vector<16x192xf32> to vector<16x64xf32>
      %181 = vector.shape_cast %180 : vector<16x64xf32> to vector<2x8x64xf32>
      %182 = vector.extract_strided_slice %179 {offsets = [0, 64], sizes = [16, 64], strides = [1, 1]} : vector<16x192xf32> to vector<16x64xf32>
      %183 = vector.shape_cast %182 : vector<16x64xf32> to vector<2x8x64xf32>
      %184 = vector.extract_strided_slice %179 {offsets = [0, 128], sizes = [16, 64], strides = [1, 1]} : vector<16x192xf32> to vector<16x64xf32>
      %185 = vector.shape_cast %184 : vector<16x64xf32> to vector<2x8x64xf32>
      %186 = vector.shape_cast %181 : vector<2x8x64xf32> to vector<2x8x1x64xf32>
      %187 = vector.shape_cast %183 : vector<2x8x64xf32> to vector<2x1x8x64xf32>
      %188 = vector.broadcast %186 : vector<2x8x1x64xf32> to vector<2x8x8x64xf32>
      %189 = vector.broadcast %187 : vector<2x1x8x64xf32> to vector<2x8x8x64xf32>
      %190 = arith.mulf %188, %189 : vector<2x8x8x64xf32>
      %191 = vector.shape_cast %190 : vector<2x8x8x64xf32> to vector<128x64xf32>
      %cst_94 = arith.constant dense<0.000000e+00> : vector<128x4xf32>
      %192 = tpu.matmul %191, %52, %cst_94 {dimension_numbers = #tpu.dot_dimension_numbers<[1], [0], [0], [1], [0, 0, 1, 1], [], []>} : vector<128x64xf32>, vector<64x4xf32>, vector<128x4xf32> -> vector<128x4xf32>
      %193 = vector.shape_cast %192 : vector<128x4xf32> to vector<2x8x8x4xf32>
      %cst_95 = arith.constant dense<0xFF800000> : vector<2x8x4xf32>
      %194 = vector.multi_reduction <maximumf>, %193, %cst_95 [2] : vector<2x8x8x4xf32> to vector<2x8x4xf32>
      %195 = vector.shape_cast %194 : vector<2x8x4xf32> to vector<2x8x1x4xf32>
      %196 = vector.broadcast %195 : vector<2x8x1x4xf32> to vector<2x8x8x4xf32>
      %197 = arith.subf %193, %196 : vector<2x8x8x4xf32>
      %198 = math.exp %197 : vector<2x8x8x4xf32>
      %cst_96 = arith.constant dense<0.000000e+00> : vector<2x8x4xf32>
      %199 = vector.multi_reduction <add>, %198, %cst_96 [2] : vector<2x8x8x4xf32> to vector<2x8x4xf32>
      %200 = vector.shape_cast %199 : vector<2x8x4xf32> to vector<2x8x1x4xf32>
      %201 = tpu.reciprocal %200 {approx = true} : vector<2x8x1x4xf32> -> vector<2x8x1x4xf32>
      %202 = vector.broadcast %201 : vector<2x8x1x4xf32> to vector<2x8x8x4xf32>
      %203 = arith.mulf %198, %202 : vector<2x8x8x4xf32>
      %204 = vector.shape_cast %203 : vector<2x8x8x4xf32> to vector<128x4xf32>
      %cst_97 = arith.constant dense<0.000000e+00> : vector<128x64xf32>
      %205 = tpu.matmul %204, %64, %cst_97 {dimension_numbers = #tpu.dot_dimension_numbers<[1], [0], [0], [1], [0, 0, 1, 1], [], []>} : vector<128x4xf32>, vector<4x64xf32>, vector<128x64xf32> -> vector<128x64xf32>
      %206 = vector.shape_cast %205 : vector<128x64xf32> to vector<2x8x8x64xf32>
      %207 = vector.shape_cast %185 : vector<2x8x64xf32> to vector<2x1x8x64xf32>
      %208 = vector.broadcast %207 : vector<2x1x8x64xf32> to vector<2x8x8x64xf32>
      %209 = arith.mulf %206, %208 : vector<2x8x8x64xf32>
      %cst_98 = arith.constant dense<0.000000e+00> : vector<2x8x64xf32>
      %210 = vector.multi_reduction <add>, %209, %cst_98 [2] : vector<2x8x8x64xf32> to vector<2x8x64xf32>
      %211 = vector.shape_cast %210 : vector<2x8x64xf32> to vector<16x64xf32>
      %212 = arith.truncf %211 : vector<16x64xf32> to vector<16x64xbf16>
      %cst_99 = arith.constant dense<0.000000e+00> : vector<16x64xf32>
      %213 = tpu.matmul %212, %148, %cst_99 {dimension_numbers = #tpu.dot_dimension_numbers<[1], [0], [0], [1], [0, 0, 1, 1], [], []>} : vector<16x64xbf16>, vector<64x64xbf16>, vector<16x64xf32> -> vector<16x64xf32>
      %214 = vector.broadcast %151 : vector<1x64xf32> to vector<16x64xf32>
      %215 = arith.addf %213, %214 : vector<16x64xf32>
      %216 = arith.addf %arg50, %215 : vector<16x64xf32>
      %cst_100 = arith.constant dense<0.000000e+00> : vector<16xf32>
      %217 = vector.multi_reduction <add>, %216, %cst_100 [1] : vector<16x64xf32> to vector<16xf32>
      %218 = vector.shape_cast %217 : vector<16xf32> to vector<16x1xf32>
      %cst_101 = arith.constant 6.400000e+01 : f32
      %219 = vector.broadcast %cst_101 : f32 to vector<16x1xf32>
      %220 = arith.divf %218, %219 : vector<16x1xf32>
      %221 = vector.broadcast %220 : vector<16x1xf32> to vector<16x64xf32>
      %222 = arith.subf %216, %221 : vector<16x64xf32>
      %223 = arith.mulf %222, %222 : vector<16x64xf32>
      %cst_102 = arith.constant dense<0.000000e+00> : vector<16xf32>
      %224 = vector.multi_reduction <add>, %223, %cst_102 [1] : vector<16x64xf32> to vector<16xf32>
      %225 = vector.shape_cast %224 : vector<16xf32> to vector<16x1xf32>
      %cst_103 = arith.constant 6.400000e+01 : f32
      %226 = vector.broadcast %cst_103 : f32 to vector<16x1xf32>
      %227 = arith.divf %225, %226 : vector<16x1xf32>
      %228 = vector.broadcast %220 : vector<16x1xf32> to vector<16x64xf32>
      %229 = arith.subf %216, %228 : vector<16x64xf32>
      %cst_104 = arith.constant 9.99999974E-6 : f32
      %230 = vector.broadcast %cst_104 : f32 to vector<16x1xf32>
      %231 = arith.addf %227, %230 : vector<16x1xf32>
      %232 = math.rsqrt %231 : vector<16x1xf32>
      %233 = vector.broadcast %232 : vector<16x1xf32> to vector<16x64xf32>
      %234 = arith.mulf %229, %233 : vector<16x64xf32>
      %235 = vector.broadcast %154 : vector<1x64xf32> to vector<16x64xf32>
      %236 = arith.mulf %234, %235 : vector<16x64xf32>
      %237 = vector.broadcast %157 : vector<1x64xf32> to vector<16x64xf32>
      %238 = arith.addf %236, %237 : vector<16x64xf32>
      %239 = arith.truncf %238 : vector<16x64xf32> to vector<16x64xbf16>
      %cst_105 = arith.constant dense<0.000000e+00> : vector<16x128xf32>
      %240 = tpu.matmul %239, %160, %cst_105 {dimension_numbers = #tpu.dot_dimension_numbers<[1], [0], [0], [1], [0, 0, 1, 1], [], []>} : vector<16x64xbf16>, vector<64x128xbf16>, vector<16x128xf32> -> vector<16x128xf32>
      %241 = vector.broadcast %163 : vector<1x128xf32> to vector<16x128xf32>
      %242 = arith.addf %240, %241 : vector<16x128xf32>
      %cst_106 = arith.constant 0.000000e+00 : f32
      %243 = vector.broadcast %cst_106 : f32 to vector<16x128xf32>
      %244 = arith.maximumf %242, %243 : vector<16x128xf32>
      %245 = arith.truncf %244 : vector<16x128xf32> to vector<16x128xbf16>
      %cst_107 = arith.constant dense<0.000000e+00> : vector<16x64xf32>
      %246 = tpu.matmul %245, %166, %cst_107 {dimension_numbers = #tpu.dot_dimension_numbers<[1], [0], [0], [1], [0, 0, 1, 1], [], []>} : vector<16x128xbf16>, vector<128x64xbf16>, vector<16x64xf32> -> vector<16x64xf32>
      %247 = vector.broadcast %169 : vector<1x64xf32> to vector<16x64xf32>
      %248 = arith.addf %246, %247 : vector<16x64xf32>
      %249 = arith.addf %238, %248 : vector<16x64xf32>
      %cst_108 = arith.constant dense<0.000000e+00> : vector<16xf32>
      %250 = vector.multi_reduction <add>, %249, %cst_108 [1] : vector<16x64xf32> to vector<16xf32>
      %251 = vector.shape_cast %250 : vector<16xf32> to vector<16x1xf32>
      %cst_109 = arith.constant 6.400000e+01 : f32
      %252 = vector.broadcast %cst_109 : f32 to vector<16x1xf32>
      %253 = arith.divf %251, %252 : vector<16x1xf32>
      %254 = vector.broadcast %253 : vector<16x1xf32> to vector<16x64xf32>
      %255 = arith.subf %249, %254 : vector<16x64xf32>
      %256 = arith.mulf %255, %255 : vector<16x64xf32>
      %cst_110 = arith.constant dense<0.000000e+00> : vector<16xf32>
      %257 = vector.multi_reduction <add>, %256, %cst_110 [1] : vector<16x64xf32> to vector<16xf32>
      %258 = vector.shape_cast %257 : vector<16xf32> to vector<16x1xf32>
      %cst_111 = arith.constant 6.400000e+01 : f32
      %259 = vector.broadcast %cst_111 : f32 to vector<16x1xf32>
      %260 = arith.divf %258, %259 : vector<16x1xf32>
      %261 = vector.broadcast %253 : vector<16x1xf32> to vector<16x64xf32>
      %262 = arith.subf %249, %261 : vector<16x64xf32>
      %cst_112 = arith.constant 9.99999974E-6 : f32
      %263 = vector.broadcast %cst_112 : f32 to vector<16x1xf32>
      %264 = arith.addf %260, %263 : vector<16x1xf32>
      %265 = math.rsqrt %264 : vector<16x1xf32>
      %266 = vector.broadcast %265 : vector<16x1xf32> to vector<16x64xf32>
      %267 = arith.mulf %262, %266 : vector<16x64xf32>
      %268 = vector.broadcast %172 : vector<1x64xf32> to vector<16x64xf32>
      %269 = arith.mulf %267, %268 : vector<16x64xf32>
      %270 = vector.broadcast %175 : vector<1x64xf32> to vector<16x64xf32>
      %271 = arith.addf %269, %270 : vector<16x64xf32>
      scf.yield %271 : vector<16x64xf32>
    }
    %c2_i32_26 = arith.constant 2 : i32
    %67 = arith.truncf %66 : vector<16x64xf32> to vector<16x64xbf16>
    %c0_27 = arith.constant 0 : index
    %c0_28 = arith.constant 0 : index
    %68 = vector.load %arg18[%c0_27, %c0_28] : memref<64x16xbf16, #tpu.memory_space<vmem>>, vector<64x16xbf16>
    %cst_29 = arith.constant dense<0.000000e+00> : vector<16x16xf32>
    %69 = tpu.matmul %67, %68, %cst_29 {dimension_numbers = #tpu.dot_dimension_numbers<[1], [0], [0], [1], [0, 0, 1, 1], [], []>} : vector<16x64xbf16>, vector<64x16xbf16>, vector<16x16xf32> -> vector<16x16xf32>
    %c0_30 = arith.constant 0 : index
    %c0_31 = arith.constant 0 : index
    %70 = vector.load %arg19[%c0_30, %c0_31] : memref<1x16xf32, #tpu.memory_space<vmem>>, vector<1x16xf32>
    %71 = vector.broadcast %70 : vector<1x16xf32> to vector<16x16xf32>
    %72 = arith.addf %69, %71 : vector<16x16xf32>
    %73 = tpu.iota {dimensions = array<i32: 0>} : vector<16x4xi32>
    %74 = tpu.iota {dimensions = array<i32: 1>} : vector<16x4xi32>
    %c4_i32 = arith.constant 4 : i32
    %75 = vector.broadcast %c4_i32 : i32 to vector<16x4xi32>
    %76 = arith.muli %74, %75 : vector<16x4xi32>
    %77 = arith.cmpi sge, %73, %76 : vector<16x4xi32>
    %c4_i32_32 = arith.constant 4 : i32
    %78 = vector.broadcast %c4_i32_32 : i32 to vector<16x4xi32>
    %79 = arith.addi %76, %78 : vector<16x4xi32>
    %80 = arith.cmpi slt, %73, %79 : vector<16x4xi32>
    %81 = arith.andi %77, %80 : vector<16x4xi1>
    %cst_33 = arith.constant 1.000000e+00 : f32
    %cst_34 = arith.constant 0.000000e+00 : f32
    %82 = vector.broadcast %cst_33 : f32 to vector<16x4xf32>
    %83 = vector.broadcast %cst_34 : f32 to vector<16x4xf32>
    %84 = arith.select %81, %82, %83 : vector<16x4xi1>, vector<16x4xf32>
    %85 = tpu.iota {dimensions = array<i32: 0>} : vector<4x16xi32>
    %86 = tpu.iota {dimensions = array<i32: 1>} : vector<4x16xi32>
    %c4_i32_35 = arith.constant 4 : i32
    %87 = vector.broadcast %c4_i32_35 : i32 to vector<4x16xi32>
    %88 = arith.muli %85, %87 : vector<4x16xi32>
    %89 = arith.cmpi sge, %86, %88 : vector<4x16xi32>
    %c4_i32_36 = arith.constant 4 : i32
    %90 = vector.broadcast %c4_i32_36 : i32 to vector<4x16xi32>
    %91 = arith.addi %88, %90 : vector<4x16xi32>
    %92 = arith.cmpi slt, %86, %91 : vector<4x16xi32>
    %93 = arith.andi %89, %92 : vector<4x16xi1>
    %cst_37 = arith.constant 1.000000e+00 : f32
    %cst_38 = arith.constant 0.000000e+00 : f32
    %94 = vector.broadcast %cst_37 : f32 to vector<4x16xf32>
    %95 = vector.broadcast %cst_38 : f32 to vector<4x16xf32>
    %96 = arith.select %93, %94, %95 : vector<4x16xi1>, vector<4x16xf32>
    %c0_i32_39 = arith.constant 0 : i32
    %c2_i32_40 = arith.constant 2 : i32
    %97 = arith.addi %c0_i32_39, %c2_i32_40 : i32
    %c1_i32_41 = arith.constant 1 : i32
    %98 = scf.for %arg49 = %c0_i32_39 to %97 step %c1_i32_41 iter_args(%arg50 = %72) -> (vector<16x16xf32>)  : i32 {
      %140 = arith.index_cast %arg49 : i32 to index
      %c0_69 = arith.constant 0 : index
      %c0_70 = arith.constant 0 : index
      %141 = vector.load %arg20[%140, %c0_69, %c0_70] : memref<2x16x48xf32, #tpu.memory_space<vmem>>, vector<1x16x48xf32>
      %142 = vector.shape_cast %141 : vector<1x16x48xf32> to vector<16x48xf32>
      %143 = arith.index_cast %arg49 : i32 to index
      %c0_71 = arith.constant 0 : index
      %c0_72 = arith.constant 0 : index
      %144 = vector.load %arg21[%143, %c0_71, %c0_72] : memref<2x1x48xf32, #tpu.memory_space<vmem>>, vector<1x1x48xf32>
      %145 = vector.shape_cast %144 : vector<1x1x48xf32> to vector<1x48xf32>
      %146 = arith.index_cast %arg49 : i32 to index
      %c0_73 = arith.constant 0 : index
      %c0_74 = arith.constant 0 : index
      %147 = vector.load %arg22[%146, %c0_73, %c0_74] : memref<2x16x16xf32, #tpu.memory_space<vmem>>, vector<1x16x16xf32>
      %148 = vector.shape_cast %147 : vector<1x16x16xf32> to vector<16x16xf32>
      %149 = arith.index_cast %arg49 : i32 to index
      %c0_75 = arith.constant 0 : index
      %c0_76 = arith.constant 0 : index
      %150 = vector.load %arg23[%149, %c0_75, %c0_76] : memref<2x1x16xf32, #tpu.memory_space<vmem>>, vector<1x1x16xf32>
      %151 = vector.shape_cast %150 : vector<1x1x16xf32> to vector<1x16xf32>
      %152 = arith.index_cast %arg49 : i32 to index
      %c0_77 = arith.constant 0 : index
      %c0_78 = arith.constant 0 : index
      %153 = vector.load %arg24[%152, %c0_77, %c0_78] : memref<2x1x16xf32, #tpu.memory_space<vmem>>, vector<1x1x16xf32>
      %154 = vector.shape_cast %153 : vector<1x1x16xf32> to vector<1x16xf32>
      %155 = arith.index_cast %arg49 : i32 to index
      %c0_79 = arith.constant 0 : index
      %c0_80 = arith.constant 0 : index
      %156 = vector.load %arg25[%155, %c0_79, %c0_80] : memref<2x1x16xf32, #tpu.memory_space<vmem>>, vector<1x1x16xf32>
      %157 = vector.shape_cast %156 : vector<1x1x16xf32> to vector<1x16xf32>
      %158 = arith.index_cast %arg49 : i32 to index
      %c0_81 = arith.constant 0 : index
      %c0_82 = arith.constant 0 : index
      %159 = vector.load %arg26[%158, %c0_81, %c0_82] : memref<2x16x32xf32, #tpu.memory_space<vmem>>, vector<1x16x32xf32>
      %160 = vector.shape_cast %159 : vector<1x16x32xf32> to vector<16x32xf32>
      %161 = arith.index_cast %arg49 : i32 to index
      %c0_83 = arith.constant 0 : index
      %c0_84 = arith.constant 0 : index
      %162 = vector.load %arg27[%161, %c0_83, %c0_84] : memref<2x1x32xf32, #tpu.memory_space<vmem>>, vector<1x1x32xf32>
      %163 = vector.shape_cast %162 : vector<1x1x32xf32> to vector<1x32xf32>
      %164 = arith.index_cast %arg49 : i32 to index
      %c0_85 = arith.constant 0 : index
      %c0_86 = arith.constant 0 : index
      %165 = vector.load %arg28[%164, %c0_85, %c0_86] : memref<2x32x16xf32, #tpu.memory_space<vmem>>, vector<1x32x16xf32>
      %166 = vector.shape_cast %165 : vector<1x32x16xf32> to vector<32x16xf32>
      %167 = arith.index_cast %arg49 : i32 to index
      %c0_87 = arith.constant 0 : index
      %c0_88 = arith.constant 0 : index
      %168 = vector.load %arg29[%167, %c0_87, %c0_88] : memref<2x1x16xf32, #tpu.memory_space<vmem>>, vector<1x1x16xf32>
      %169 = vector.shape_cast %168 : vector<1x1x16xf32> to vector<1x16xf32>
      %170 = arith.index_cast %arg49 : i32 to index
      %c0_89 = arith.constant 0 : index
      %c0_90 = arith.constant 0 : index
      %171 = vector.load %arg30[%170, %c0_89, %c0_90] : memref<2x1x16xf32, #tpu.memory_space<vmem>>, vector<1x1x16xf32>
      %172 = vector.shape_cast %171 : vector<1x1x16xf32> to vector<1x16xf32>
      %173 = arith.index_cast %arg49 : i32 to index
      %c0_91 = arith.constant 0 : index
      %c0_92 = arith.constant 0 : index
      %174 = vector.load %arg31[%173, %c0_91, %c0_92] : memref<2x1x16xf32, #tpu.memory_space<vmem>>, vector<1x1x16xf32>
      %175 = vector.shape_cast %174 : vector<1x1x16xf32> to vector<1x16xf32>
      %cst_93 = arith.constant dense<0.000000e+00> : vector<16x48xf32>
      %176 = tpu.matmul %arg50, %142, %cst_93 {dimension_numbers = #tpu.dot_dimension_numbers<[1], [0], [0], [1], [0, 0, 1, 1], [], []>} : vector<16x16xf32>, vector<16x48xf32>, vector<16x48xf32> -> vector<16x48xf32>
      %177 = vector.broadcast %145 : vector<1x48xf32> to vector<16x48xf32>
      %178 = arith.addf %176, %177 : vector<16x48xf32>
      %179 = vector.extract_strided_slice %178 {offsets = [0, 0], sizes = [16, 16], strides = [1, 1]} : vector<16x48xf32> to vector<16x16xf32>
      %180 = vector.shape_cast %179 : vector<16x16xf32> to vector<2x8x16xf32>
      %181 = vector.extract_strided_slice %178 {offsets = [0, 16], sizes = [16, 16], strides = [1, 1]} : vector<16x48xf32> to vector<16x16xf32>
      %182 = vector.shape_cast %181 : vector<16x16xf32> to vector<2x8x16xf32>
      %183 = vector.extract_strided_slice %178 {offsets = [0, 32], sizes = [16, 16], strides = [1, 1]} : vector<16x48xf32> to vector<16x16xf32>
      %184 = vector.shape_cast %183 : vector<16x16xf32> to vector<2x8x16xf32>
      %185 = vector.shape_cast %180 : vector<2x8x16xf32> to vector<2x8x1x16xf32>
      %186 = vector.shape_cast %182 : vector<2x8x16xf32> to vector<2x1x8x16xf32>
      %187 = vector.broadcast %185 : vector<2x8x1x16xf32> to vector<2x8x8x16xf32>
      %188 = vector.broadcast %186 : vector<2x1x8x16xf32> to vector<2x8x8x16xf32>
      %189 = arith.mulf %187, %188 : vector<2x8x8x16xf32>
      %190 = vector.shape_cast %189 : vector<2x8x8x16xf32> to vector<128x16xf32>
      %cst_94 = arith.constant dense<0.000000e+00> : vector<128x4xf32>
      %191 = tpu.matmul %190, %84, %cst_94 {dimension_numbers = #tpu.dot_dimension_numbers<[1], [0], [0], [1], [0, 0, 1, 1], [], []>} : vector<128x16xf32>, vector<16x4xf32>, vector<128x4xf32> -> vector<128x4xf32>
      %192 = vector.shape_cast %191 : vector<128x4xf32> to vector<2x8x8x4xf32>
      %cst_95 = arith.constant dense<0xFF800000> : vector<2x8x4xf32>
      %193 = vector.multi_reduction <maximumf>, %192, %cst_95 [2] : vector<2x8x8x4xf32> to vector<2x8x4xf32>
      %194 = vector.shape_cast %193 : vector<2x8x4xf32> to vector<2x8x1x4xf32>
      %195 = vector.broadcast %194 : vector<2x8x1x4xf32> to vector<2x8x8x4xf32>
      %196 = arith.subf %192, %195 : vector<2x8x8x4xf32>
      %197 = math.exp %196 : vector<2x8x8x4xf32>
      %cst_96 = arith.constant dense<0.000000e+00> : vector<2x8x4xf32>
      %198 = vector.multi_reduction <add>, %197, %cst_96 [2] : vector<2x8x8x4xf32> to vector<2x8x4xf32>
      %199 = vector.shape_cast %198 : vector<2x8x4xf32> to vector<2x8x1x4xf32>
      %200 = tpu.reciprocal %199 {approx = true} : vector<2x8x1x4xf32> -> vector<2x8x1x4xf32>
      %201 = vector.broadcast %200 : vector<2x8x1x4xf32> to vector<2x8x8x4xf32>
      %202 = arith.mulf %197, %201 : vector<2x8x8x4xf32>
      %203 = vector.shape_cast %202 : vector<2x8x8x4xf32> to vector<128x4xf32>
      %cst_97 = arith.constant dense<0.000000e+00> : vector<128x16xf32>
      %204 = tpu.matmul %203, %96, %cst_97 {dimension_numbers = #tpu.dot_dimension_numbers<[1], [0], [0], [1], [0, 0, 1, 1], [], []>} : vector<128x4xf32>, vector<4x16xf32>, vector<128x16xf32> -> vector<128x16xf32>
      %205 = vector.shape_cast %204 : vector<128x16xf32> to vector<2x8x8x16xf32>
      %206 = vector.shape_cast %184 : vector<2x8x16xf32> to vector<2x1x8x16xf32>
      %207 = vector.broadcast %206 : vector<2x1x8x16xf32> to vector<2x8x8x16xf32>
      %208 = arith.mulf %205, %207 : vector<2x8x8x16xf32>
      %cst_98 = arith.constant dense<0.000000e+00> : vector<2x8x16xf32>
      %209 = vector.multi_reduction <add>, %208, %cst_98 [2] : vector<2x8x8x16xf32> to vector<2x8x16xf32>
      %210 = vector.shape_cast %209 : vector<2x8x16xf32> to vector<16x16xf32>
      %cst_99 = arith.constant dense<0.000000e+00> : vector<16x16xf32>
      %211 = tpu.matmul %210, %148, %cst_99 {dimension_numbers = #tpu.dot_dimension_numbers<[1], [0], [0], [1], [0, 0, 1, 1], [], []>} : vector<16x16xf32>, vector<16x16xf32>, vector<16x16xf32> -> vector<16x16xf32>
      %212 = vector.broadcast %151 : vector<1x16xf32> to vector<16x16xf32>
      %213 = arith.addf %211, %212 : vector<16x16xf32>
      %214 = arith.addf %arg50, %213 : vector<16x16xf32>
      %cst_100 = arith.constant dense<0.000000e+00> : vector<16xf32>
      %215 = vector.multi_reduction <add>, %214, %cst_100 [1] : vector<16x16xf32> to vector<16xf32>
      %216 = vector.shape_cast %215 : vector<16xf32> to vector<16x1xf32>
      %cst_101 = arith.constant 1.600000e+01 : f32
      %217 = vector.broadcast %cst_101 : f32 to vector<16x1xf32>
      %218 = arith.divf %216, %217 : vector<16x1xf32>
      %219 = vector.broadcast %218 : vector<16x1xf32> to vector<16x16xf32>
      %220 = arith.subf %214, %219 : vector<16x16xf32>
      %221 = arith.mulf %220, %220 : vector<16x16xf32>
      %cst_102 = arith.constant dense<0.000000e+00> : vector<16xf32>
      %222 = vector.multi_reduction <add>, %221, %cst_102 [1] : vector<16x16xf32> to vector<16xf32>
      %223 = vector.shape_cast %222 : vector<16xf32> to vector<16x1xf32>
      %cst_103 = arith.constant 1.600000e+01 : f32
      %224 = vector.broadcast %cst_103 : f32 to vector<16x1xf32>
      %225 = arith.divf %223, %224 : vector<16x1xf32>
      %226 = vector.broadcast %218 : vector<16x1xf32> to vector<16x16xf32>
      %227 = arith.subf %214, %226 : vector<16x16xf32>
      %cst_104 = arith.constant 9.99999974E-6 : f32
      %228 = vector.broadcast %cst_104 : f32 to vector<16x1xf32>
      %229 = arith.addf %225, %228 : vector<16x1xf32>
      %230 = math.rsqrt %229 : vector<16x1xf32>
      %231 = vector.broadcast %230 : vector<16x1xf32> to vector<16x16xf32>
      %232 = arith.mulf %227, %231 : vector<16x16xf32>
      %233 = vector.broadcast %154 : vector<1x16xf32> to vector<16x16xf32>
      %234 = arith.mulf %232, %233 : vector<16x16xf32>
      %235 = vector.broadcast %157 : vector<1x16xf32> to vector<16x16xf32>
      %236 = arith.addf %234, %235 : vector<16x16xf32>
      %cst_105 = arith.constant dense<0.000000e+00> : vector<16x32xf32>
      %237 = tpu.matmul %236, %160, %cst_105 {dimension_numbers = #tpu.dot_dimension_numbers<[1], [0], [0], [1], [0, 0, 1, 1], [], []>} : vector<16x16xf32>, vector<16x32xf32>, vector<16x32xf32> -> vector<16x32xf32>
      %238 = vector.broadcast %163 : vector<1x32xf32> to vector<16x32xf32>
      %239 = arith.addf %237, %238 : vector<16x32xf32>
      %cst_106 = arith.constant 0.000000e+00 : f32
      %240 = vector.broadcast %cst_106 : f32 to vector<16x32xf32>
      %241 = arith.maximumf %239, %240 : vector<16x32xf32>
      %cst_107 = arith.constant dense<0.000000e+00> : vector<16x16xf32>
      %242 = tpu.matmul %241, %166, %cst_107 {dimension_numbers = #tpu.dot_dimension_numbers<[1], [0], [0], [1], [0, 0, 1, 1], [], []>} : vector<16x32xf32>, vector<32x16xf32>, vector<16x16xf32> -> vector<16x16xf32>
      %243 = vector.broadcast %169 : vector<1x16xf32> to vector<16x16xf32>
      %244 = arith.addf %242, %243 : vector<16x16xf32>
      %245 = arith.addf %236, %244 : vector<16x16xf32>
      %cst_108 = arith.constant dense<0.000000e+00> : vector<16xf32>
      %246 = vector.multi_reduction <add>, %245, %cst_108 [1] : vector<16x16xf32> to vector<16xf32>
      %247 = vector.shape_cast %246 : vector<16xf32> to vector<16x1xf32>
      %cst_109 = arith.constant 1.600000e+01 : f32
      %248 = vector.broadcast %cst_109 : f32 to vector<16x1xf32>
      %249 = arith.divf %247, %248 : vector<16x1xf32>
      %250 = vector.broadcast %249 : vector<16x1xf32> to vector<16x16xf32>
      %251 = arith.subf %245, %250 : vector<16x16xf32>
      %252 = arith.mulf %251, %251 : vector<16x16xf32>
      %cst_110 = arith.constant dense<0.000000e+00> : vector<16xf32>
      %253 = vector.multi_reduction <add>, %252, %cst_110 [1] : vector<16x16xf32> to vector<16xf32>
      %254 = vector.shape_cast %253 : vector<16xf32> to vector<16x1xf32>
      %cst_111 = arith.constant 1.600000e+01 : f32
      %255 = vector.broadcast %cst_111 : f32 to vector<16x1xf32>
      %256 = arith.divf %254, %255 : vector<16x1xf32>
      %257 = vector.broadcast %249 : vector<16x1xf32> to vector<16x16xf32>
      %258 = arith.subf %245, %257 : vector<16x16xf32>
      %cst_112 = arith.constant 9.99999974E-6 : f32
      %259 = vector.broadcast %cst_112 : f32 to vector<16x1xf32>
      %260 = arith.addf %256, %259 : vector<16x1xf32>
      %261 = math.rsqrt %260 : vector<16x1xf32>
      %262 = vector.broadcast %261 : vector<16x1xf32> to vector<16x16xf32>
      %263 = arith.mulf %258, %262 : vector<16x16xf32>
      %264 = vector.broadcast %172 : vector<1x16xf32> to vector<16x16xf32>
      %265 = arith.mulf %263, %264 : vector<16x16xf32>
      %266 = vector.broadcast %175 : vector<1x16xf32> to vector<16x16xf32>
      %267 = arith.addf %265, %266 : vector<16x16xf32>
      scf.yield %267 : vector<16x16xf32>
    }
    %c2_i32_42 = arith.constant 2 : i32
    %c0_43 = arith.constant 0 : index
    %c0_44 = arith.constant 0 : index
    %99 = vector.load %arg32[%c0_43, %c0_44] : memref<16x4xf32, #tpu.memory_space<vmem>>, vector<16x4xf32>
    %cst_45 = arith.constant dense<0.000000e+00> : vector<16x4xf32>
    %100 = tpu.matmul %98, %99, %cst_45 {dimension_numbers = #tpu.dot_dimension_numbers<[1], [0], [0], [1], [0, 0, 1, 1], [], []>} : vector<16x16xf32>, vector<16x4xf32>, vector<16x4xf32> -> vector<16x4xf32>
    %c0_46 = arith.constant 0 : index
    %c0_47 = arith.constant 0 : index
    %101 = vector.load %arg33[%c0_46, %c0_47] : memref<1x4xf32, #tpu.memory_space<vmem>>, vector<1x4xf32>
    %102 = vector.broadcast %101 : vector<1x4xf32> to vector<16x4xf32>
    %103 = arith.addf %100, %102 : vector<16x4xf32>
    %104 = tpu.iota {dimensions = array<i32: 0>} : vector<4x4xi32>
    %105 = tpu.iota {dimensions = array<i32: 1>} : vector<4x4xi32>
    %c1_i32_48 = arith.constant 1 : i32
    %106 = vector.broadcast %c1_i32_48 : i32 to vector<4x4xi32>
    %107 = arith.muli %105, %106 : vector<4x4xi32>
    %108 = arith.cmpi sge, %104, %107 : vector<4x4xi32>
    %c1_i32_49 = arith.constant 1 : i32
    %109 = vector.broadcast %c1_i32_49 : i32 to vector<4x4xi32>
    %110 = arith.addi %107, %109 : vector<4x4xi32>
    %111 = arith.cmpi slt, %104, %110 : vector<4x4xi32>
    %112 = arith.andi %108, %111 : vector<4x4xi1>
    %cst_50 = arith.constant 1.000000e+00 : f32
    %cst_51 = arith.constant 0.000000e+00 : f32
    %113 = vector.broadcast %cst_50 : f32 to vector<4x4xf32>
    %114 = vector.broadcast %cst_51 : f32 to vector<4x4xf32>
    %115 = arith.select %112, %113, %114 : vector<4x4xi1>, vector<4x4xf32>
    %116 = tpu.iota {dimensions = array<i32: 0>} : vector<4x4xi32>
    %117 = tpu.iota {dimensions = array<i32: 1>} : vector<4x4xi32>
    %c1_i32_52 = arith.constant 1 : i32
    %118 = vector.broadcast %c1_i32_52 : i32 to vector<4x4xi32>
    %119 = arith.muli %116, %118 : vector<4x4xi32>
    %120 = arith.cmpi sge, %117, %119 : vector<4x4xi32>
    %c1_i32_53 = arith.constant 1 : i32
    %121 = vector.broadcast %c1_i32_53 : i32 to vector<4x4xi32>
    %122 = arith.addi %119, %121 : vector<4x4xi32>
    %123 = arith.cmpi slt, %117, %122 : vector<4x4xi32>
    %124 = arith.andi %120, %123 : vector<4x4xi1>
    %cst_54 = arith.constant 1.000000e+00 : f32
    %cst_55 = arith.constant 0.000000e+00 : f32
    %125 = vector.broadcast %cst_54 : f32 to vector<4x4xf32>
    %126 = vector.broadcast %cst_55 : f32 to vector<4x4xf32>
    %127 = arith.select %124, %125, %126 : vector<4x4xi1>, vector<4x4xf32>
    %c0_i32_56 = arith.constant 0 : i32
    %c2_i32_57 = arith.constant 2 : i32
    %128 = arith.addi %c0_i32_56, %c2_i32_57 : i32
    %c1_i32_58 = arith.constant 1 : i32
    %129 = scf.for %arg49 = %c0_i32_56 to %128 step %c1_i32_58 iter_args(%arg50 = %103) -> (vector<16x4xf32>)  : i32 {
      %140 = arith.index_cast %arg49 : i32 to index
      %c0_69 = arith.constant 0 : index
      %c0_70 = arith.constant 0 : index
      %141 = vector.load %arg34[%140, %c0_69, %c0_70] : memref<2x4x12xf32, #tpu.memory_space<vmem>>, vector<1x4x12xf32>
      %142 = vector.shape_cast %141 : vector<1x4x12xf32> to vector<4x12xf32>
      %143 = arith.index_cast %arg49 : i32 to index
      %c0_71 = arith.constant 0 : index
      %c0_72 = arith.constant 0 : index
      %144 = vector.load %arg35[%143, %c0_71, %c0_72] : memref<2x1x12xf32, #tpu.memory_space<vmem>>, vector<1x1x12xf32>
      %145 = vector.shape_cast %144 : vector<1x1x12xf32> to vector<1x12xf32>
      %146 = arith.index_cast %arg49 : i32 to index
      %c0_73 = arith.constant 0 : index
      %c0_74 = arith.constant 0 : index
      %147 = vector.load %arg36[%146, %c0_73, %c0_74] : memref<2x4x4xf32, #tpu.memory_space<vmem>>, vector<1x4x4xf32>
      %148 = vector.shape_cast %147 : vector<1x4x4xf32> to vector<4x4xf32>
      %149 = arith.index_cast %arg49 : i32 to index
      %c0_75 = arith.constant 0 : index
      %c0_76 = arith.constant 0 : index
      %150 = vector.load %arg37[%149, %c0_75, %c0_76] : memref<2x1x4xf32, #tpu.memory_space<vmem>>, vector<1x1x4xf32>
      %151 = vector.shape_cast %150 : vector<1x1x4xf32> to vector<1x4xf32>
      %152 = arith.index_cast %arg49 : i32 to index
      %c0_77 = arith.constant 0 : index
      %c0_78 = arith.constant 0 : index
      %153 = vector.load %arg38[%152, %c0_77, %c0_78] : memref<2x1x4xf32, #tpu.memory_space<vmem>>, vector<1x1x4xf32>
      %154 = vector.shape_cast %153 : vector<1x1x4xf32> to vector<1x4xf32>
      %155 = arith.index_cast %arg49 : i32 to index
      %c0_79 = arith.constant 0 : index
      %c0_80 = arith.constant 0 : index
      %156 = vector.load %arg39[%155, %c0_79, %c0_80] : memref<2x1x4xf32, #tpu.memory_space<vmem>>, vector<1x1x4xf32>
      %157 = vector.shape_cast %156 : vector<1x1x4xf32> to vector<1x4xf32>
      %158 = arith.index_cast %arg49 : i32 to index
      %c0_81 = arith.constant 0 : index
      %c0_82 = arith.constant 0 : index
      %159 = vector.load %arg40[%158, %c0_81, %c0_82] : memref<2x4x8xf32, #tpu.memory_space<vmem>>, vector<1x4x8xf32>
      %160 = vector.shape_cast %159 : vector<1x4x8xf32> to vector<4x8xf32>
      %161 = arith.index_cast %arg49 : i32 to index
      %c0_83 = arith.constant 0 : index
      %c0_84 = arith.constant 0 : index
      %162 = vector.load %arg41[%161, %c0_83, %c0_84] : memref<2x1x8xf32, #tpu.memory_space<vmem>>, vector<1x1x8xf32>
      %163 = vector.shape_cast %162 : vector<1x1x8xf32> to vector<1x8xf32>
      %164 = arith.index_cast %arg49 : i32 to index
      %c0_85 = arith.constant 0 : index
      %c0_86 = arith.constant 0 : index
      %165 = vector.load %arg42[%164, %c0_85, %c0_86] : memref<2x8x4xf32, #tpu.memory_space<vmem>>, vector<1x8x4xf32>
      %166 = vector.shape_cast %165 : vector<1x8x4xf32> to vector<8x4xf32>
      %167 = arith.index_cast %arg49 : i32 to index
      %c0_87 = arith.constant 0 : index
      %c0_88 = arith.constant 0 : index
      %168 = vector.load %arg43[%167, %c0_87, %c0_88] : memref<2x1x4xf32, #tpu.memory_space<vmem>>, vector<1x1x4xf32>
      %169 = vector.shape_cast %168 : vector<1x1x4xf32> to vector<1x4xf32>
      %170 = arith.index_cast %arg49 : i32 to index
      %c0_89 = arith.constant 0 : index
      %c0_90 = arith.constant 0 : index
      %171 = vector.load %arg44[%170, %c0_89, %c0_90] : memref<2x1x4xf32, #tpu.memory_space<vmem>>, vector<1x1x4xf32>
      %172 = vector.shape_cast %171 : vector<1x1x4xf32> to vector<1x4xf32>
      %173 = arith.index_cast %arg49 : i32 to index
      %c0_91 = arith.constant 0 : index
      %c0_92 = arith.constant 0 : index
      %174 = vector.load %arg45[%173, %c0_91, %c0_92] : memref<2x1x4xf32, #tpu.memory_space<vmem>>, vector<1x1x4xf32>
      %175 = vector.shape_cast %174 : vector<1x1x4xf32> to vector<1x4xf32>
      %cst_93 = arith.constant dense<0.000000e+00> : vector<16x12xf32>
      %176 = tpu.matmul %arg50, %142, %cst_93 {dimension_numbers = #tpu.dot_dimension_numbers<[1], [0], [0], [1], [0, 0, 1, 1], [], []>} : vector<16x4xf32>, vector<4x12xf32>, vector<16x12xf32> -> vector<16x12xf32>
      %177 = vector.broadcast %145 : vector<1x12xf32> to vector<16x12xf32>
      %178 = arith.addf %176, %177 : vector<16x12xf32>
      %179 = vector.extract_strided_slice %178 {offsets = [0, 0], sizes = [16, 4], strides = [1, 1]} : vector<16x12xf32> to vector<16x4xf32>
      %180 = vector.shape_cast %179 : vector<16x4xf32> to vector<2x8x4xf32>
      %181 = vector.extract_strided_slice %178 {offsets = [0, 4], sizes = [16, 4], strides = [1, 1]} : vector<16x12xf32> to vector<16x4xf32>
      %182 = vector.shape_cast %181 : vector<16x4xf32> to vector<2x8x4xf32>
      %183 = vector.extract_strided_slice %178 {offsets = [0, 8], sizes = [16, 4], strides = [1, 1]} : vector<16x12xf32> to vector<16x4xf32>
      %184 = vector.shape_cast %183 : vector<16x4xf32> to vector<2x8x4xf32>
      %185 = vector.shape_cast %180 : vector<2x8x4xf32> to vector<2x8x1x4xf32>
      %186 = vector.shape_cast %182 : vector<2x8x4xf32> to vector<2x1x8x4xf32>
      %187 = vector.broadcast %185 : vector<2x8x1x4xf32> to vector<2x8x8x4xf32>
      %188 = vector.broadcast %186 : vector<2x1x8x4xf32> to vector<2x8x8x4xf32>
      %189 = arith.mulf %187, %188 : vector<2x8x8x4xf32>
      %190 = vector.shape_cast %189 : vector<2x8x8x4xf32> to vector<128x4xf32>
      %cst_94 = arith.constant dense<0.000000e+00> : vector<128x4xf32>
      %191 = tpu.matmul %190, %115, %cst_94 {dimension_numbers = #tpu.dot_dimension_numbers<[1], [0], [0], [1], [0, 0, 1, 1], [], []>} : vector<128x4xf32>, vector<4x4xf32>, vector<128x4xf32> -> vector<128x4xf32>
      %192 = vector.shape_cast %191 : vector<128x4xf32> to vector<2x8x8x4xf32>
      %cst_95 = arith.constant dense<0xFF800000> : vector<2x8x4xf32>
      %193 = vector.multi_reduction <maximumf>, %192, %cst_95 [2] : vector<2x8x8x4xf32> to vector<2x8x4xf32>
      %194 = vector.shape_cast %193 : vector<2x8x4xf32> to vector<2x8x1x4xf32>
      %195 = vector.broadcast %194 : vector<2x8x1x4xf32> to vector<2x8x8x4xf32>
      %196 = arith.subf %192, %195 : vector<2x8x8x4xf32>
      %197 = math.exp %196 : vector<2x8x8x4xf32>
      %cst_96 = arith.constant dense<0.000000e+00> : vector<2x8x4xf32>
      %198 = vector.multi_reduction <add>, %197, %cst_96 [2] : vector<2x8x8x4xf32> to vector<2x8x4xf32>
      %199 = vector.shape_cast %198 : vector<2x8x4xf32> to vector<2x8x1x4xf32>
      %200 = tpu.reciprocal %199 {approx = true} : vector<2x8x1x4xf32> -> vector<2x8x1x4xf32>
      %201 = vector.broadcast %200 : vector<2x8x1x4xf32> to vector<2x8x8x4xf32>
      %202 = arith.mulf %197, %201 : vector<2x8x8x4xf32>
      %203 = vector.shape_cast %202 : vector<2x8x8x4xf32> to vector<128x4xf32>
      %cst_97 = arith.constant dense<0.000000e+00> : vector<128x4xf32>
      %204 = tpu.matmul %203, %127, %cst_97 {dimension_numbers = #tpu.dot_dimension_numbers<[1], [0], [0], [1], [0, 0, 1, 1], [], []>} : vector<128x4xf32>, vector<4x4xf32>, vector<128x4xf32> -> vector<128x4xf32>
      %205 = vector.shape_cast %204 : vector<128x4xf32> to vector<2x8x8x4xf32>
      %206 = vector.shape_cast %184 : vector<2x8x4xf32> to vector<2x1x8x4xf32>
      %207 = vector.broadcast %206 : vector<2x1x8x4xf32> to vector<2x8x8x4xf32>
      %208 = arith.mulf %205, %207 : vector<2x8x8x4xf32>
      %cst_98 = arith.constant dense<0.000000e+00> : vector<2x8x4xf32>
      %209 = vector.multi_reduction <add>, %208, %cst_98 [2] : vector<2x8x8x4xf32> to vector<2x8x4xf32>
      %210 = vector.shape_cast %209 : vector<2x8x4xf32> to vector<16x4xf32>
      %cst_99 = arith.constant dense<0.000000e+00> : vector<16x4xf32>
      %211 = tpu.matmul %210, %148, %cst_99 {dimension_numbers = #tpu.dot_dimension_numbers<[1], [0], [0], [1], [0, 0, 1, 1], [], []>} : vector<16x4xf32>, vector<4x4xf32>, vector<16x4xf32> -> vector<16x4xf32>
      %212 = vector.broadcast %151 : vector<1x4xf32> to vector<16x4xf32>
      %213 = arith.addf %211, %212 : vector<16x4xf32>
      %214 = arith.addf %arg50, %213 : vector<16x4xf32>
      %cst_100 = arith.constant dense<0.000000e+00> : vector<16xf32>
      %215 = vector.multi_reduction <add>, %214, %cst_100 [1] : vector<16x4xf32> to vector<16xf32>
      %216 = vector.shape_cast %215 : vector<16xf32> to vector<16x1xf32>
      %cst_101 = arith.constant 4.000000e+00 : f32
      %217 = vector.broadcast %cst_101 : f32 to vector<16x1xf32>
      %218 = arith.divf %216, %217 : vector<16x1xf32>
      %219 = vector.broadcast %218 : vector<16x1xf32> to vector<16x4xf32>
      %220 = arith.subf %214, %219 : vector<16x4xf32>
      %221 = arith.mulf %220, %220 : vector<16x4xf32>
      %cst_102 = arith.constant dense<0.000000e+00> : vector<16xf32>
      %222 = vector.multi_reduction <add>, %221, %cst_102 [1] : vector<16x4xf32> to vector<16xf32>
      %223 = vector.shape_cast %222 : vector<16xf32> to vector<16x1xf32>
      %cst_103 = arith.constant 4.000000e+00 : f32
      %224 = vector.broadcast %cst_103 : f32 to vector<16x1xf32>
      %225 = arith.divf %223, %224 : vector<16x1xf32>
      %226 = vector.broadcast %218 : vector<16x1xf32> to vector<16x4xf32>
      %227 = arith.subf %214, %226 : vector<16x4xf32>
      %cst_104 = arith.constant 9.99999974E-6 : f32
      %228 = vector.broadcast %cst_104 : f32 to vector<16x1xf32>
      %229 = arith.addf %225, %228 : vector<16x1xf32>
      %230 = math.rsqrt %229 : vector<16x1xf32>
      %231 = vector.broadcast %230 : vector<16x1xf32> to vector<16x4xf32>
      %232 = arith.mulf %227, %231 : vector<16x4xf32>
      %233 = vector.broadcast %154 : vector<1x4xf32> to vector<16x4xf32>
      %234 = arith.mulf %232, %233 : vector<16x4xf32>
      %235 = vector.broadcast %157 : vector<1x4xf32> to vector<16x4xf32>
      %236 = arith.addf %234, %235 : vector<16x4xf32>
      %cst_105 = arith.constant dense<0.000000e+00> : vector<16x8xf32>
      %237 = tpu.matmul %236, %160, %cst_105 {dimension_numbers = #tpu.dot_dimension_numbers<[1], [0], [0], [1], [0, 0, 1, 1], [], []>} : vector<16x4xf32>, vector<4x8xf32>, vector<16x8xf32> -> vector<16x8xf32>
      %238 = vector.broadcast %163 : vector<1x8xf32> to vector<16x8xf32>
      %239 = arith.addf %237, %238 : vector<16x8xf32>
      %cst_106 = arith.constant 0.000000e+00 : f32
      %240 = vector.broadcast %cst_106 : f32 to vector<16x8xf32>
      %241 = arith.maximumf %239, %240 : vector<16x8xf32>
      %cst_107 = arith.constant dense<0.000000e+00> : vector<16x4xf32>
      %242 = tpu.matmul %241, %166, %cst_107 {dimension_numbers = #tpu.dot_dimension_numbers<[1], [0], [0], [1], [0, 0, 1, 1], [], []>} : vector<16x8xf32>, vector<8x4xf32>, vector<16x4xf32> -> vector<16x4xf32>
      %243 = vector.broadcast %169 : vector<1x4xf32> to vector<16x4xf32>
      %244 = arith.addf %242, %243 : vector<16x4xf32>
      %245 = arith.addf %236, %244 : vector<16x4xf32>
      %cst_108 = arith.constant dense<0.000000e+00> : vector<16xf32>
      %246 = vector.multi_reduction <add>, %245, %cst_108 [1] : vector<16x4xf32> to vector<16xf32>
      %247 = vector.shape_cast %246 : vector<16xf32> to vector<16x1xf32>
      %cst_109 = arith.constant 4.000000e+00 : f32
      %248 = vector.broadcast %cst_109 : f32 to vector<16x1xf32>
      %249 = arith.divf %247, %248 : vector<16x1xf32>
      %250 = vector.broadcast %249 : vector<16x1xf32> to vector<16x4xf32>
      %251 = arith.subf %245, %250 : vector<16x4xf32>
      %252 = arith.mulf %251, %251 : vector<16x4xf32>
      %cst_110 = arith.constant dense<0.000000e+00> : vector<16xf32>
      %253 = vector.multi_reduction <add>, %252, %cst_110 [1] : vector<16x4xf32> to vector<16xf32>
      %254 = vector.shape_cast %253 : vector<16xf32> to vector<16x1xf32>
      %cst_111 = arith.constant 4.000000e+00 : f32
      %255 = vector.broadcast %cst_111 : f32 to vector<16x1xf32>
      %256 = arith.divf %254, %255 : vector<16x1xf32>
      %257 = vector.broadcast %249 : vector<16x1xf32> to vector<16x4xf32>
      %258 = arith.subf %245, %257 : vector<16x4xf32>
      %cst_112 = arith.constant 9.99999974E-6 : f32
      %259 = vector.broadcast %cst_112 : f32 to vector<16x1xf32>
      %260 = arith.addf %256, %259 : vector<16x1xf32>
      %261 = math.rsqrt %260 : vector<16x1xf32>
      %262 = vector.broadcast %261 : vector<16x1xf32> to vector<16x4xf32>
      %263 = arith.mulf %258, %262 : vector<16x4xf32>
      %264 = vector.broadcast %172 : vector<1x4xf32> to vector<16x4xf32>
      %265 = arith.mulf %263, %264 : vector<16x4xf32>
      %266 = vector.broadcast %175 : vector<1x4xf32> to vector<16x4xf32>
      %267 = arith.addf %265, %266 : vector<16x4xf32>
      scf.yield %267 : vector<16x4xf32>
    }
    %c2_i32_59 = arith.constant 2 : i32
    %c0_60 = arith.constant 0 : index
    %c0_61 = arith.constant 0 : index
    %130 = vector.load %arg46[%c0_60, %c0_61] : memref<4x8xf32, #tpu.memory_space<vmem>>, vector<4x8xf32>
    %cst_62 = arith.constant dense<0.000000e+00> : vector<16x8xf32>
    %131 = tpu.matmul %129, %130, %cst_62 {dimension_numbers = #tpu.dot_dimension_numbers<[1], [0], [0], [1], [0, 0, 1, 1], [], []>} : vector<16x4xf32>, vector<4x8xf32>, vector<16x8xf32> -> vector<16x8xf32>
    %c0_63 = arith.constant 0 : index
    %c0_64 = arith.constant 0 : index
    %132 = vector.load %arg47[%c0_63, %c0_64] : memref<1x8xf32, #tpu.memory_space<vmem>>, vector<1x8xf32>
    %133 = vector.broadcast %132 : vector<1x8xf32> to vector<16x8xf32>
    %134 = arith.addf %131, %133 : vector<16x8xf32>
    %135 = vector.shape_cast %134 : vector<16x8xf32> to vector<2x8x8xf32>
    %cst_65 = arith.constant dense<0.000000e+00> : vector<2x8xf32>
    %136 = vector.multi_reduction <add>, %135, %cst_65 [1] : vector<2x8x8xf32> to vector<2x8xf32>
    %c0_66 = arith.constant 0 : index
    %c0_67 = arith.constant 0 : index
    %c0_68 = arith.constant 0 : index
    %137 = vector.load %arg48[%c0_66, %c0_67, %c0_68] : memref<1x2x8xf32, #tpu.memory_space<vmem>>, vector<1x2x8xf32>
    %138 = vector.shape_cast %137 : vector<1x2x8xf32> to vector<2x8xf32>
    %139 = vector.shape_cast %136 : vector<2x8xf32> to vector<1x2x8xf32>
    tpu.vector_store %arg48[%c0_66, %c0_67, %c0_68], %139 {strides = array<i32>} : memref<1x2x8xf32, #tpu.memory_space<vmem>>, vector<1x2x8xf32>,
    return
  }
  func.func @transform_0(%arg0: i32) -> (i32, i32, i32) {
    %c0_i32 = arith.constant 0 : i32
    %c0_i32_0 = arith.constant 0 : i32
    %c0_i32_1 = arith.constant 0 : i32
    return %arg0, %c0_i32, %c0_i32_0 : i32, i32, i32
  }
  func.func @transform_1(%arg0: i32) -> (i32, i32) {
    %c0_i32 = arith.constant 0 : i32
    %c0_i32_0 = arith.constant 0 : i32
    %c0_i32_1 = arith.constant 0 : i32
    return %c0_i32, %c0_i32_0 : i32, i32
  }
  func.func @transform_2(%arg0: i32) -> (i32, i32) {
    %c0_i32 = arith.constant 0 : i32
    %c0_i32_0 = arith.constant 0 : i32
    %c0_i32_1 = arith.constant 0 : i32
    return %c0_i32, %c0_i32_0 : i32, i32
  }
  func.func @transform_3(%arg0: i32) -> (i32, i32) {
    %c0_i32 = arith.constant 0 : i32
    %c0_i32_0 = arith.constant 0 : i32
    %c0_i32_1 = arith.constant 0 : i32
    return %c0_i32, %c0_i32_0 : i32, i32
  }
  func.func @transform_4(%arg0: i32) -> (i32, i32) {
    %c0_i32 = arith.constant 0 : i32
    %c0_i32_0 = arith.constant 0 : i32
    %c0_i32_1 = arith.constant 0 : i32
    return %c0_i32, %c0_i32_0 : i32, i32
  }
  func.func @transform_5(%arg0: i32) -> (i32, i32, i32) {
    %c0_i32 = arith.constant 0 : i32
    %c0_i32_0 = arith.constant 0 : i32
    %c0_i32_1 = arith.constant 0 : i32
    %c0_i32_2 = arith.constant 0 : i32
    return %c0_i32, %c0_i32_0, %c0_i32_1 : i32, i32, i32
  }
  func.func @transform_6(%arg0: i32) -> (i32, i32, i32) {
    %c0_i32 = arith.constant 0 : i32
    %c0_i32_0 = arith.constant 0 : i32
    %c0_i32_1 = arith.constant 0 : i32
    %c0_i32_2 = arith.constant 0 : i32
    return %c0_i32, %c0_i32_0, %c0_i32_1 : i32, i32, i32
  }
  func.func @transform_7(%arg0: i32) -> (i32, i32, i32) {
    %c0_i32 = arith.constant 0 : i32
    %c0_i32_0 = arith.constant 0 : i32
    %c0_i32_1 = arith.constant 0 : i32
    %c0_i32_2 = arith.constant 0 : i32
    return %c0_i32, %c0_i32_0, %c0_i32_1 : i32, i32, i32
  }
  func.func @transform_8(%arg0: i32) -> (i32, i32, i32) {
    %c0_i32 = arith.constant 0 : i32
    %c0_i32_0 = arith.constant 0 : i32
    %c0_i32_1 = arith.constant 0 : i32
    %c0_i32_2 = arith.constant 0 : i32
    return %c0_i32, %c0_i32_0, %c0_i32_1 : i32, i32, i32
  }
  func.func @transform_9(%arg0: i32) -> (i32, i32, i32) {
    %c0_i32 = arith.constant 0 : i32
    %c0_i32_0 = arith.constant 0 : i32
    %c0_i32_1 = arith.constant 0 : i32
    %c0_i32_2 = arith.constant 0 : i32
    return %c0_i32, %c0_i32_0, %c0_i32_1 : i32, i32, i32
  }
  func.func @transform_10(%arg0: i32) -> (i32, i32, i32) {
    %c0_i32 = arith.constant 0 : i32
    %c0_i32_0 = arith.constant 0 : i32
    %c0_i32_1 = arith.constant 0 : i32
    %c0_i32_2 = arith.constant 0 : i32
    return %c0_i32, %c0_i32_0, %c0_i32_1 : i32, i32, i32
  }
  func.func @transform_11(%arg0: i32) -> (i32, i32, i32) {
    %c0_i32 = arith.constant 0 : i32
    %c0_i32_0 = arith.constant 0 : i32
    %c0_i32_1 = arith.constant 0 : i32
    %c0_i32_2 = arith.constant 0 : i32
    return %c0_i32, %c0_i32_0, %c0_i32_1 : i32, i32, i32
  }
  func.func @transform_12(%arg0: i32) -> (i32, i32, i32) {
    %c0_i32 = arith.constant 0 : i32
    %c0_i32_0 = arith.constant 0 : i32
    %c0_i32_1 = arith.constant 0 : i32
    %c0_i32_2 = arith.constant 0 : i32
    return %c0_i32, %c0_i32_0, %c0_i32_1 : i32, i32, i32
  }
  func.func @transform_13(%arg0: i32) -> (i32, i32, i32) {
    %c0_i32 = arith.constant 0 : i32
    %c0_i32_0 = arith.constant 0 : i32
    %c0_i32_1 = arith.constant 0 : i32
    %c0_i32_2 = arith.constant 0 : i32
    return %c0_i32, %c0_i32_0, %c0_i32_1 : i32, i32, i32
  }
  func.func @transform_14(%arg0: i32) -> (i32, i32, i32) {
    %c0_i32 = arith.constant 0 : i32
    %c0_i32_0 = arith.constant 0 : i32
    %c0_i32_1 = arith.constant 0 : i32
    %c0_i32_2 = arith.constant 0 : i32
    return %c0_i32, %c0_i32_0, %c0_i32_1 : i32, i32, i32
  }
  func.func @transform_15(%arg0: i32) -> (i32, i32, i32) {
    %c0_i32 = arith.constant 0 : i32
    %c0_i32_0 = arith.constant 0 : i32
    %c0_i32_1 = arith.constant 0 : i32
    %c0_i32_2 = arith.constant 0 : i32
    return %c0_i32, %c0_i32_0, %c0_i32_1 : i32, i32, i32
  }
  func.func @transform_16(%arg0: i32) -> (i32, i32, i32) {
    %c0_i32 = arith.constant 0 : i32
    %c0_i32_0 = arith.constant 0 : i32
    %c0_i32_1 = arith.constant 0 : i32
    %c0_i32_2 = arith.constant 0 : i32
    return %c0_i32, %c0_i32_0, %c0_i32_1 : i32, i32, i32
  }
  func.func @transform_17(%arg0: i32) -> (i32, i32) {
    %c0_i32 = arith.constant 0 : i32
    %c0_i32_0 = arith.constant 0 : i32
    %c0_i32_1 = arith.constant 0 : i32
    return %c0_i32, %c0_i32_0 : i32, i32
  }
  func.func @transform_18(%arg0: i32) -> (i32, i32) {
    %c0_i32 = arith.constant 0 : i32
    %c0_i32_0 = arith.constant 0 : i32
    %c0_i32_1 = arith.constant 0 : i32
    return %c0_i32, %c0_i32_0 : i32, i32
  }
  func.func @transform_19(%arg0: i32) -> (i32, i32, i32) {
    %c0_i32 = arith.constant 0 : i32
    %c0_i32_0 = arith.constant 0 : i32
    %c0_i32_1 = arith.constant 0 : i32
    %c0_i32_2 = arith.constant 0 : i32
    return %c0_i32, %c0_i32_0, %c0_i32_1 : i32, i32, i32
  }
  func.func @transform_20(%arg0: i32) -> (i32, i32, i32) {
    %c0_i32 = arith.constant 0 : i32
    %c0_i32_0 = arith.constant 0 : i32
    %c0_i32_1 = arith.constant 0 : i32
    %c0_i32_2 = arith.constant 0 : i32
    return %c0_i32, %c0_i32_0, %c0_i32_1 : i32, i32, i32
  }
  func.func @transform_21(%arg0: i32) -> (i32, i32, i32) {
    %c0_i32 = arith.constant 0 : i32
    %c0_i32_0 = arith.constant 0 : i32
    %c0_i32_1 = arith.constant 0 : i32
    %c0_i32_2 = arith.constant 0 : i32
    return %c0_i32, %c0_i32_0, %c0_i32_1 : i32, i32, i32
  }
  func.func @transform_22(%arg0: i32) -> (i32, i32, i32) {
    %c0_i32 = arith.constant 0 : i32
    %c0_i32_0 = arith.constant 0 : i32
    %c0_i32_1 = arith.constant 0 : i32
    %c0_i32_2 = arith.constant 0 : i32
    return %c0_i32, %c0_i32_0, %c0_i32_1 : i32, i32, i32
  }
  func.func @transform_23(%arg0: i32) -> (i32, i32, i32) {
    %c0_i32 = arith.constant 0 : i32
    %c0_i32_0 = arith.constant 0 : i32
    %c0_i32_1 = arith.constant 0 : i32
    %c0_i32_2 = arith.constant 0 : i32
    return %c0_i32, %c0_i32_0, %c0_i32_1 : i32, i32, i32
  }
  func.func @transform_24(%arg0: i32) -> (i32, i32, i32) {
    %c0_i32 = arith.constant 0 : i32
    %c0_i32_0 = arith.constant 0 : i32
    %c0_i32_1 = arith.constant 0 : i32
    %c0_i32_2 = arith.constant 0 : i32
    return %c0_i32, %c0_i32_0, %c0_i32_1 : i32, i32, i32
  }
  func.func @transform_25(%arg0: i32) -> (i32, i32, i32) {
    %c0_i32 = arith.constant 0 : i32
    %c0_i32_0 = arith.constant 0 : i32
    %c0_i32_1 = arith.constant 0 : i32
    %c0_i32_2 = arith.constant 0 : i32
    return %c0_i32, %c0_i32_0, %c0_i32_1 : i32, i32, i32
  }
  func.func @transform_26(%arg0: i32) -> (i32, i32, i32) {
    %c0_i32 = arith.constant 0 : i32
    %c0_i32_0 = arith.constant 0 : i32
    %c0_i32_1 = arith.constant 0 : i32
    %c0_i32_2 = arith.constant 0 : i32
    return %c0_i32, %c0_i32_0, %c0_i32_1 : i32, i32, i32
  }
  func.func @transform_27(%arg0: i32) -> (i32, i32, i32) {
    %c0_i32 = arith.constant 0 : i32
    %c0_i32_0 = arith.constant 0 : i32
    %c0_i32_1 = arith.constant 0 : i32
    %c0_i32_2 = arith.constant 0 : i32
    return %c0_i32, %c0_i32_0, %c0_i32_1 : i32, i32, i32
  }
  func.func @transform_28(%arg0: i32) -> (i32, i32, i32) {
    %c0_i32 = arith.constant 0 : i32
    %c0_i32_0 = arith.constant 0 : i32
    %c0_i32_1 = arith.constant 0 : i32
    %c0_i32_2 = arith.constant 0 : i32
    return %c0_i32, %c0_i32_0, %c0_i32_1 : i32, i32, i32
  }
  func.func @transform_29(%arg0: i32) -> (i32, i32, i32) {
    %c0_i32 = arith.constant 0 : i32
    %c0_i32_0 = arith.constant 0 : i32
    %c0_i32_1 = arith.constant 0 : i32
    %c0_i32_2 = arith.constant 0 : i32
    return %c0_i32, %c0_i32_0, %c0_i32_1 : i32, i32, i32
  }
  func.func @transform_30(%arg0: i32) -> (i32, i32, i32) {
    %c0_i32 = arith.constant 0 : i32
    %c0_i32_0 = arith.constant 0 : i32
    %c0_i32_1 = arith.constant 0 : i32
    %c0_i32_2 = arith.constant 0 : i32
    return %c0_i32, %c0_i32_0, %c0_i32_1 : i32, i32, i32
  }
  func.func @transform_31(%arg0: i32) -> (i32, i32) {
    %c0_i32 = arith.constant 0 : i32
    %c0_i32_0 = arith.constant 0 : i32
    %c0_i32_1 = arith.constant 0 : i32
    return %c0_i32, %c0_i32_0 : i32, i32
  }
  func.func @transform_32(%arg0: i32) -> (i32, i32) {
    %c0_i32 = arith.constant 0 : i32
    %c0_i32_0 = arith.constant 0 : i32
    %c0_i32_1 = arith.constant 0 : i32
    return %c0_i32, %c0_i32_0 : i32, i32
  }
  func.func @transform_33(%arg0: i32) -> (i32, i32, i32) {
    %c0_i32 = arith.constant 0 : i32
    %c0_i32_0 = arith.constant 0 : i32
    %c0_i32_1 = arith.constant 0 : i32
    %c0_i32_2 = arith.constant 0 : i32
    return %c0_i32, %c0_i32_0, %c0_i32_1 : i32, i32, i32
  }
  func.func @transform_34(%arg0: i32) -> (i32, i32, i32) {
    %c0_i32 = arith.constant 0 : i32
    %c0_i32_0 = arith.constant 0 : i32
    %c0_i32_1 = arith.constant 0 : i32
    %c0_i32_2 = arith.constant 0 : i32
    return %c0_i32, %c0_i32_0, %c0_i32_1 : i32, i32, i32
  }
  func.func @transform_35(%arg0: i32) -> (i32, i32, i32) {
    %c0_i32 = arith.constant 0 : i32
    %c0_i32_0 = arith.constant 0 : i32
    %c0_i32_1 = arith.constant 0 : i32
    %c0_i32_2 = arith.constant 0 : i32
    return %c0_i32, %c0_i32_0, %c0_i32_1 : i32, i32, i32
  }
  func.func @transform_36(%arg0: i32) -> (i32, i32, i32) {
    %c0_i32 = arith.constant 0 : i32
    %c0_i32_0 = arith.constant 0 : i32
    %c0_i32_1 = arith.constant 0 : i32
    %c0_i32_2 = arith.constant 0 : i32
    return %c0_i32, %c0_i32_0, %c0_i32_1 : i32, i32, i32
  }
  func.func @transform_37(%arg0: i32) -> (i32, i32, i32) {
    %c0_i32 = arith.constant 0 : i32
    %c0_i32_0 = arith.constant 0 : i32
    %c0_i32_1 = arith.constant 0 : i32
    %c0_i32_2 = arith.constant 0 : i32
    return %c0_i32, %c0_i32_0, %c0_i32_1 : i32, i32, i32
  }
  func.func @transform_38(%arg0: i32) -> (i32, i32, i32) {
    %c0_i32 = arith.constant 0 : i32
    %c0_i32_0 = arith.constant 0 : i32
    %c0_i32_1 = arith.constant 0 : i32
    %c0_i32_2 = arith.constant 0 : i32
    return %c0_i32, %c0_i32_0, %c0_i32_1 : i32, i32, i32
  }
  func.func @transform_39(%arg0: i32) -> (i32, i32, i32) {
    %c0_i32 = arith.constant 0 : i32
    %c0_i32_0 = arith.constant 0 : i32
    %c0_i32_1 = arith.constant 0 : i32
    %c0_i32_2 = arith.constant 0 : i32
    return %c0_i32, %c0_i32_0, %c0_i32_1 : i32, i32, i32
  }
  func.func @transform_40(%arg0: i32) -> (i32, i32, i32) {
    %c0_i32 = arith.constant 0 : i32
    %c0_i32_0 = arith.constant 0 : i32
    %c0_i32_1 = arith.constant 0 : i32
    %c0_i32_2 = arith.constant 0 : i32
    return %c0_i32, %c0_i32_0, %c0_i32_1 : i32, i32, i32
  }
  func.func @transform_41(%arg0: i32) -> (i32, i32, i32) {
    %c0_i32 = arith.constant 0 : i32
    %c0_i32_0 = arith.constant 0 : i32
    %c0_i32_1 = arith.constant 0 : i32
    %c0_i32_2 = arith.constant 0 : i32
    return %c0_i32, %c0_i32_0, %c0_i32_1 : i32, i32, i32
  }
  func.func @transform_42(%arg0: i32) -> (i32, i32, i32) {
    %c0_i32 = arith.constant 0 : i32
    %c0_i32_0 = arith.constant 0 : i32
    %c0_i32_1 = arith.constant 0 : i32
    %c0_i32_2 = arith.constant 0 : i32
    return %c0_i32, %c0_i32_0, %c0_i32_1 : i32, i32, i32
  }
  func.func @transform_43(%arg0: i32) -> (i32, i32, i32) {
    %c0_i32 = arith.constant 0 : i32
    %c0_i32_0 = arith.constant 0 : i32
    %c0_i32_1 = arith.constant 0 : i32
    %c0_i32_2 = arith.constant 0 : i32
    return %c0_i32, %c0_i32_0, %c0_i32_1 : i32, i32, i32
  }
  func.func @transform_44(%arg0: i32) -> (i32, i32, i32) {
    %c0_i32 = arith.constant 0 : i32
    %c0_i32_0 = arith.constant 0 : i32
    %c0_i32_1 = arith.constant 0 : i32
    %c0_i32_2 = arith.constant 0 : i32
    return %c0_i32, %c0_i32_0, %c0_i32_1 : i32, i32, i32
  }
  func.func @transform_45(%arg0: i32) -> (i32, i32) {
    %c0_i32 = arith.constant 0 : i32
    %c0_i32_0 = arith.constant 0 : i32
    %c0_i32_1 = arith.constant 0 : i32
    return %c0_i32, %c0_i32_0 : i32, i32
  }
  func.func @transform_46(%arg0: i32) -> (i32, i32) {
    %c0_i32 = arith.constant 0 : i32
    %c0_i32_0 = arith.constant 0 : i32
    %c0_i32_1 = arith.constant 0 : i32
    return %c0_i32, %c0_i32_0 : i32, i32
  }
  func.func @transform_47(%arg0: i32) -> (i32, i32, i32) {
    %c0_i32 = arith.constant 0 : i32
    %c0_i32_0 = arith.constant 0 : i32
    %c0_i32_1 = arith.constant 0 : i32
    return %arg0, %c0_i32, %c0_i32_0 : i32, i32, i32
  }
}

</mosaic_0001>

<llo_original>
// kernel: encoder_forward.1
$region0: #{encoder_forward.1}
  #allocation0 [shape = 'u32[]', space=smem, size = 0x4, offset = 0x4, fixed_abs, tag = 'smem constant byte address 0x4 - core index']
  #allocation1 [shape = 'u32[144,128]{1,0:T(1,128)}', space=vmem, size = 0x12000, scoped, tag = 'internal scratch']
  %s0 = inlined_call_operand.smem [shape: u32[48], index: -1, kind: input, shape index: {}]
  %s1 = sld [smem:[%s0]]
  %s2 = scalar_lea.smem %s0, 1
  %s3 = sld [smem:[%s2]]
  %s4 = scalar_lea.smem %s0, 2
  %s5 = sld [smem:[%s4]]
  %s6 = scalar_lea.smem %s0, 3
  %s7 = sld [smem:[%s6]]
  %s8 = scalar_lea.smem %s0, 4
  %s9 = sld [smem:[%s8]]
  %s10 = scalar_lea.smem %s0, 5
  %s11 = sld [smem:[%s10]]
  %s12 = scalar_lea.smem %s0, 6
  %s13 = sld [smem:[%s12]]
  %s14 = scalar_lea.smem %s0, 7
  %s15 = sld [smem:[%s14]]
  %s16 = scalar_lea.smem %s0, 8
  %s17 = sld [smem:[%s16]]
  %s18 = scalar_lea.smem %s0, 9
  %s19 = sld [smem:[%s18]]
  %s20 = scalar_lea.smem %s0, 10
  %s21 = sld [smem:[%s20]]
  %s22 = scalar_lea.smem %s0, 11
  %s23 = sld [smem:[%s22]]
  %s24 = scalar_lea.smem %s0, 12
  %s25 = sld [smem:[%s24]]
  %s26 = scalar_lea.smem %s0, 13
  %s27 = sld [smem:[%s26]]
  %s28 = scalar_lea.smem %s0, 14
  %s29 = sld [smem:[%s28]]
  %s30 = scalar_lea.smem %s0, 15
  %s31 = sld [smem:[%s30]]
  %s32 = scalar_lea.smem %s0, 16
  %s33 = sld [smem:[%s32]]
  %s34 = scalar_lea.smem %s0, 17
  %s35 = sld [smem:[%s34]]
  %s36 = scalar_lea.smem %s0, 18
  %s37 = sld [smem:[%s36]]
  %s38 = scalar_lea.smem %s0, 19
  %s39 = sld [smem:[%s38]]
  %s40 = scalar_lea.smem %s0, 20
  %s41 = sld [smem:[%s40]]
  %s42 = scalar_lea.smem %s0, 21
  %s43 = sld [smem:[%s42]]
  %s44 = scalar_lea.smem %s0, 22
  %s45 = sld [smem:[%s44]]
  %s46 = scalar_lea.smem %s0, 23
  %s47 = sld [smem:[%s46]]
  %s48 = scalar_lea.smem %s0, 24
  %s49 = sld [smem:[%s48]]
  %s50 = scalar_lea.smem %s0, 25
  %s51 = sld [smem:[%s50]]
  %s52 = scalar_lea.smem %s0, 26
  %s53 = sld [smem:[%s52]]
  %s54 = scalar_lea.smem %s0, 27
  %s55 = sld [smem:[%s54]]
  %s56 = scalar_lea.smem %s0, 28
  %s57 = sld [smem:[%s56]]
  %s58 = scalar_lea.smem %s0, 29
  %s59 = sld [smem:[%s58]]
  %s60 = scalar_lea.smem %s0, 30
  %s61 = sld [smem:[%s60]]
  %s62 = scalar_lea.smem %s0, 31
  %s63 = sld [smem:[%s62]]
  %s64 = scalar_lea.smem %s0, 32
  %s65 = sld [smem:[%s64]]
  %s66 = scalar_lea.smem %s0, 33
  %s67 = sld [smem:[%s66]]
  %s68 = scalar_lea.smem %s0, 34
  %s69 = sld [smem:[%s68]]
  %s70 = scalar_lea.smem %s0, 35
  %s71 = sld [smem:[%s70]]
  %s72 = scalar_lea.smem %s0, 36
  %s73 = sld [smem:[%s72]]
  %s74 = scalar_lea.smem %s0, 37
  %s75 = sld [smem:[%s74]]
  %s76 = scalar_lea.smem %s0, 38
  %s77 = sld [smem:[%s76]]
  %s78 = scalar_lea.smem %s0, 39
  %s79 = sld [smem:[%s78]]
  %s80 = scalar_lea.smem %s0, 40
  %s81 = sld [smem:[%s80]]
  %s82 = scalar_lea.smem %s0, 41
  %s83 = sld [smem:[%s82]]
  %s84 = scalar_lea.smem %s0, 42
  %s85 = sld [smem:[%s84]]
  %s86 = scalar_lea.smem %s0, 43
  %s87 = sld [smem:[%s86]]
  %s88 = scalar_lea.smem %s0, 44
  %s89 = sld [smem:[%s88]]
  %s90 = scalar_lea.smem %s0, 45
  %s91 = sld [smem:[%s90]]
  %s92 = scalar_lea.smem %s0, 46
  %s93 = sld [smem:[%s92]]
  %s94 = scalar_lea.smem %s0, 47
  %s95 = sld [smem:[%s94]]
  %s96 = sld [smem:[#allocation0]]
  $region374: #{encoder_forward.1} parent=0
    _
  %s98 = ssub.s32 1, %s96
  %s99 = scalar_select 0, %s98, %s96
  $region1: #{encoder_forward.1} parent=0
    #allocation2 [shape = 'u8[16384]{0}', space=vmem, size = 0x4000, scoped, tag = 'input window, operand 0']
    #allocation3 [shape = 's32[2]{0}', space=sflag, size = 0x8, scoped, tag = 'scoped memory for encoder_forward.1']
    #allocation4 [shape = 's32[2]{0}', space=sflag, size = 0x8, scoped, tag = 'scoped memory for encoder_forward.1']
    #allocation5 [shape = 'u8[2048]{0}', space=vmem, size = 0x800, scoped, tag = 'input window, operand 6, single buffered']
    #allocation6 [shape = 's32[1]{0}', space=sflag, size = 0x4, scoped, tag = 'scoped memory for encoder_forward.1']
    #allocation7 [shape = 'u8[1024]{0}', space=vmem, size = 0x400, scoped, tag = 'input window, operand 8, single buffered']
    #allocation8 [shape = 'u8[1024]{0}', space=vmem, size = 0x400, scoped, tag = 'input window, operand 9, single buffered']
    #allocation9 [shape = 's32[1]{0}', space=sflag, size = 0x4, scoped, tag = 'scoped memory for encoder_forward.1']
    #allocation10 [shape = 'u8[1024]{0}', space=vmem, size = 0x400, scoped, tag = 'input window, operand 10, single buffered']
    #allocation11 [shape = 'u8[1024]{0}', space=vmem, size = 0x400, scoped, tag = 'input window, operand 12, single buffered']
    #allocation12 [shape = 's32[1]{0}', space=sflag, size = 0x4, scoped, tag = 'scoped memory for encoder_forward.1']
    #allocation13 [shape = 'u8[1024]{0}', space=vmem, size = 0x400, scoped, tag = 'input window, operand 14, single buffered']
    #allocation14 [shape = 'u8[1024]{0}', space=vmem, size = 0x400, scoped, tag = 'input window, operand 15, single buffered']
    #allocation15 [shape = 's32[1]{0}', space=sflag, size = 0x4, scoped, tag = 'scoped memory for encoder_forward.1']
    #allocation16 [shape = 'u8[1024]{0}', space=vmem, size = 0x400, scoped, tag = 'input window, operand 16, single buffered']
    #allocation17 [shape = 'u8[512]{0}', space=vmem, size = 0x400, scoped, tag = 'input window, operand 18, single buffered']
    #allocation18 [shape = 's32[1]{0}', space=sflag, size = 0x4, scoped, tag = 'scoped memory for encoder_forward.1']
    #allocation19 [shape = 'u8[1024]{0}', space=vmem, size = 0x400, scoped, tag = 'input window, operand 20, single buffered']
    #allocation20 [shape = 'u8[1024]{0}', space=vmem, size = 0x400, scoped, tag = 'input window, operand 22, single buffered']
    #allocation21 [shape = 's32[1]{0}', space=sflag, size = 0x4, scoped, tag = 'scoped memory for encoder_forward.1']
    #allocation22 [shape = 'u8[1024]{0}', space=vmem, size = 0x400, scoped, tag = 'input window, operand 23, single buffered']
    #allocation23 [shape = 'u8[1024]{0}', space=vmem, size = 0x400, scoped, tag = 'input window, operand 24, single buffered']
    #allocation24 [shape = 's32[1]{0}', space=sflag, size = 0x4, scoped, tag = 'scoped memory for encoder_forward.1']
    #allocation25 [shape = 'u8[16384]{0}', space=vmem, size = 0x4000, scoped, tag = 'input window, operand 25, single buffered']
    #allocation26 [shape = 'u8[1024]{0}', space=vmem, size = 0x400, scoped, tag = 'input window, operand 26, single buffered']
    #allocation27 [shape = 's32[1]{0}', space=sflag, size = 0x4, scoped, tag = 'scoped memory for encoder_forward.1']
    #allocation28 [shape = 'u8[1024]{0}', space=vmem, size = 0x400, scoped, tag = 'input window, operand 28, single buffered']
    #allocation29 [shape = 'u8[1024]{0}', space=vmem, size = 0x400, scoped, tag = 'input window, operand 29, single buffered']
    #allocation30 [shape = 's32[1]{0}', space=sflag, size = 0x4, scoped, tag = 'scoped memory for encoder_forward.1']
    #allocation31 [shape = 'u8[1024]{0}', space=vmem, size = 0x400, scoped, tag = 'input window, operand 30, single buffered']
    #allocation32 [shape = 'u8[512]{0}', space=vmem, size = 0x400, scoped, tag = 'input window, operand 32, single buffered']
    #allocation33 [shape = 's32[1]{0}', space=sflag, size = 0x4, scoped, tag = 'scoped memory for encoder_forward.1']
    #allocation34 [shape = 'u8[4096]{0}', space=vmem, size = 0x1000, scoped, tag = 'input window, operand 33, single buffered']
    #allocation35 [shape = 'u8[1024]{0}', space=vmem, size = 0x400, scoped, tag = 'input window, operand 34, single buffered']
    #allocation36 [shape = 's32[1]{0}', space=sflag, size = 0x4, scoped, tag = 'scoped memory for encoder_forward.1']
    #allocation37 [shape = 'u8[4096]{0}', space=vmem, size = 0x1000, scoped, tag = 'input window, operand 35, single buffered']
    #allocation38 [shape = 'u8[1024]{0}', space=vmem, size = 0x400, scoped, tag = 'input window, operand 36, single buffered']
    #allocation39 [shape = 's32[1]{0}', space=sflag, size = 0x4, scoped, tag = 'scoped memory for encoder_forward.1']
    #allocation40 [shape = 'u8[1024]{0}', space=vmem, size = 0x400, scoped, tag = 'input window, operand 37, single buffered']
    #allocation41 [shape = 'u8[1024]{0}', space=vmem, size = 0x400, scoped, tag = 'input window, operand 38, single buffered']
    #allocation42 [shape = 's32[1]{0}', space=sflag, size = 0x4, scoped, tag = 'scoped memory for encoder_forward.1']
    #allocation43 [shape = 'u8[4096]{0}', space=vmem, size = 0x1000, scoped, tag = 'input window, operand 39, single buffered']
    #allocation44 [shape = 'u8[1024]{0}', space=vmem, size = 0x400, scoped, tag = 'input window, operand 40, single buffered']
    #allocation45 [shape = 's32[1]{0}', space=sflag, size = 0x4, scoped, tag = 'scoped memory for encoder_forward.1']
    #allocation46 [shape = 'u8[1024]{0}', space=vmem, size = 0x400, scoped, tag = 'input window, operand 42, single buffered']
    #allocation47 [shape = 'u8[1024]{0}', space=vmem, size = 0x400, scoped, tag = 'input window, operand 43, single buffered']
    #allocation48 [shape = 's32[1]{0}', space=sflag, size = 0x4, scoped, tag = 'scoped memory for encoder_forward.1']
    #allocation49 [shape = 'u8[1024]{0}', space=vmem, size = 0x400, scoped, tag = 'input window, operand 44, single buffered']
    #allocation50 [shape = 'u8[2048]{0}', space=vmem, size = 0x800, scoped, tag = 'input window, operand 45, single buffered']
    #allocation51 [shape = 's32[1]{0}', space=sflag, size = 0x4, scoped, tag = 'scoped memory for encoder_forward.1']
    #allocation52 [shape = 'u8[512]{0}', space=vmem, size = 0x400, scoped, tag = 'input window, operand 46, single buffered']
    #allocation53 [shape = 'u8[2048]{0}', space=vmem, size = 0x800, scoped, tag = 'output window, operand 0']
    %100 = vsyncpa [#allocation3], 0
    %s101 = scalar_lea.sflag [#allocation3], 1
    %102 = vsyncpa %s101, 0
    %103 = vsyncpa [#allocation6], 0
    %104 = vsyncpa [#allocation9], 0
    %105 = vsyncpa [#allocation12], 0
    %106 = vsyncpa [#allocation15], 0
    %107 = vsyncpa [#allocation18], 0
    %108 = vsyncpa [#allocation21], 0
    %109 = vsyncpa [#allocation24], 0
    %110 = vsyncpa [#allocation27], 0
    %111 = vsyncpa [#allocation30], 0
    %112 = vsyncpa [#allocation33], 0
    %113 = vsyncpa [#allocation36], 0
    %114 = vsyncpa [#allocation39], 0
    %115 = vsyncpa [#allocation42], 0
    %116 = vsyncpa [#allocation45], 0
    %117 = vsyncpa [#allocation48], 0
    %118 = vsyncpa [#allocation51], 0
    %119 = vsyncpa [#allocation4], 0
    %s120 = scalar_lea.sflag [#allocation4], 1
    %121 = vsyncpa %s120, 0
    loop: start=0, step=1, limit=4
    $region2: #{encoder_forward.1} parent=1 // loop_pre_header
      _
    $region3: #{encoder_forward.1} parent=1 // loop_header
      %s123 = sphi 0, %s127
      %p124 = scmp.ge.s32.totalorder %s123, 4
      %s133 = sphi 0, %s135
      %s136 = sphi 0, %s133
      %s137 = sphi 0, %s136
      %s153 = sphi 0, %s137
      %s157 = sphi 0, %s157
      %s159 = sphi 0, %s157
      %s160 = sphi 0, %s159
      %s174 = sphi 0, %s160
      %s178 = sphi 0, %s178
      %s180 = sphi 0, %s178
      %s181 = sphi 0, %s180
      %s195 = sphi 0, %s181
      %s199 = sphi 0, %s199
      %s201 = sphi 0, %s199
      %s202 = sphi 0, %s201
      %s216 = sphi 0, %s202
      %s220 = sphi 0, %s220
      %s222 = sphi 0, %s220
      %s223 = sphi 0, %s222
      %s237 = sphi 0, %s223
      %s241 = sphi 0, %s241
      %s243 = sphi 0, %s241
      %s244 = sphi 0, %s243
      %s258 = sphi 0, %s244
      %s262 = sphi 0, %s262
      %s264 = sphi 0, %s262
      %s265 = sphi 0, %s264
      %s279 = sphi 0, %s265
      %s283 = sphi 0, %s283
      %s285 = sphi 0, %s283
      %s286 = sphi 0, %s285
      %s300 = sphi 0, %s286
      %s304 = sphi 0, %s304
      %s306 = sphi 0, %s304
      %s307 = sphi 0, %s306
      %s321 = sphi 0, %s307
      %s325 = sphi 0, %s325
      %s327 = sphi 0, %s325
      %s328 = sphi 0, %s327
      %s342 = sphi 0, %s328
      %s346 = sphi 0, %s346
      %s348 = sphi 0, %s346
      %s349 = sphi 0, %s348
      %s363 = sphi 0, %s349
      %s367 = sphi 0, %s367
      %s369 = sphi 0, %s367
      %s370 = sphi 0, %s369
      %s384 = sphi 0, %s370
      %s388 = sphi 0, %s388
      %s390 = sphi 0, %s388
      %s391 = sphi 0, %s390
      %s405 = sphi 0, %s391
      %s409 = sphi 0, %s409
      %s411 = sphi 0, %s409
      %s412 = sphi 0, %s411
      %s426 = sphi 0, %s412
      %s430 = sphi 0, %s430
      %s432 = sphi 0, %s430
      %s433 = sphi 0, %s432
      %s447 = sphi 0, %s433
      %s451 = sphi 0, %s451
      %s453 = sphi 0, %s451
      %s454 = sphi 0, %s453
      %s468 = sphi 0, %s454
      %s472 = sphi 0, %s472
      %s474 = sphi 0, %s472
      %s475 = sphi 0, %s474
      %s489 = sphi 0, %s475
      %s493 = sphi 0, %s493
      %s495 = sphi 0, %s493
      %s496 = sphi 0, %s495
      %s510 = sphi 0, %s496
      %s514 = sphi 0, %s514
      %s516 = sphi 0, %s514
      %s517 = sphi 0, %s516
      %s531 = sphi 0, %s517
      %s535 = sphi 0, %s535
      %s537 = sphi 0, %s535
      %s538 = sphi 0, %s537
      %s552 = sphi 0, %s538
      %s556 = sphi 0, %s556
      %s558 = sphi 0, %s556
      %s559 = sphi 0, %s558
      %s573 = sphi 0, %s559
      %s577 = sphi 0, %s577
      %s579 = sphi 0, %s577
      %s580 = sphi 0, %s579
      %s594 = sphi 0, %s580
      %s598 = sphi 0, %s598
      %s600 = sphi 0, %s598
      %s601 = sphi 0, %s600
      %s615 = sphi 0, %s601
      %s619 = sphi 0, %s619
      %s621 = sphi 0, %s619
      %s622 = sphi 0, %s621
      %s636 = sphi 0, %s622
      %s640 = sphi 0, %s640
      %s642 = sphi 0, %s640
      %s643 = sphi 0, %s642
      %s657 = sphi 0, %s643
      %s661 = sphi 0, %s661
      %s663 = sphi 0, %s661
      %s664 = sphi 0, %s663
      %s678 = sphi 0, %s664
      %s682 = sphi 0, %s682
      %s684 = sphi 0, %s682
      %s685 = sphi 0, %s684
      %s699 = sphi 0, %s685
      %s703 = sphi 0, %s703
      %s705 = sphi 0, %s703
      %s706 = sphi 0, %s705
      %s720 = sphi 0, %s706
      %s724 = sphi 0, %s724
      %s726 = sphi 0, %s724
      %s727 = sphi 0, %s726
      %s741 = sphi 0, %s727
      %s745 = sphi 0, %s745
      %s747 = sphi 0, %s745
      %s748 = sphi 0, %s747
      %s762 = sphi 0, %s748
      %s766 = sphi 0, %s766
      %s768 = sphi 0, %s766
      %s769 = sphi 0, %s768
      %s783 = sphi 0, %s769
      %s787 = sphi 0, %s787
      %s789 = sphi 0, %s787
      %s790 = sphi 0, %s789
      %s804 = sphi 0, %s790
      %s808 = sphi 0, %s808
      %s810 = sphi 0, %s808
      %s811 = sphi 0, %s810
      %s825 = sphi 0, %s811
      %s829 = sphi 0, %s829
      %s831 = sphi 0, %s829
      %s832 = sphi 0, %s831
      %s846 = sphi 0, %s832
      %s850 = sphi 0, %s850
      %s852 = sphi 0, %s850
      %s853 = sphi 0, %s852
      %s867 = sphi 0, %s853
      %s871 = sphi 0, %s871
      %s873 = sphi 0, %s871
      %s874 = sphi 0, %s873
      %s888 = sphi 0, %s874
      %s892 = sphi 0, %s892
      %s894 = sphi 0, %s892
      %s895 = sphi 0, %s894
      %s909 = sphi 0, %s895
      %s913 = sphi 0, %s913
      %s915 = sphi 0, %s913
      %s916 = sphi 0, %s915
      %s930 = sphi 0, %s916
      %s934 = sphi 0, %s934
      %s936 = sphi 0, %s934
      %s937 = sphi 0, %s936
      %s951 = sphi 0, %s937
      %s955 = sphi 0, %s955
      %s957 = sphi 0, %s955
      %s958 = sphi 0, %s957
      %s972 = sphi 0, %s958
      %s976 = sphi 0, %s976
      %s978 = sphi 0, %s976
      %s979 = sphi 0, %s978
      %s993 = sphi 0, %s979
      %s997 = sphi 0, %s997
      %s999 = sphi 0, %s997
      %s1000 = sphi 0, %s999
      %s1014 = sphi 0, %s1000
      %s1018 = sphi 0, %s1018
      %s1020 = sphi 0, %s1018
      %s1021 = sphi 0, %s1020
      %s1035 = sphi 0, %s1021
      %s1039 = sphi 0, %s1039
      %s1041 = sphi 0, %s1039
      %s1042 = sphi 0, %s1041
      %s1056 = sphi 0, %s1042
      %s1060 = sphi 0, %s1060
      %s1062 = sphi 0, %s1060
      %s1063 = sphi 0, %s1062
      %s1077 = sphi 0, %s1063
      %s1081 = sphi 0, %s1081
      %s1083 = sphi 0, %s1081
      %s1084 = sphi 0, %s1083
      %s1098 = sphi 0, %s1084
      %s1102 = sphi 0, %s1102
      %s1104 = sphi 0, %s1102
      %s1105 = sphi 0, %s1104
      %s1119 = sphi 0, %s1105
      %s1125 = sphi 0, %s1127
      %s1128 = sphi 0, %s1125
      %s1129 = sphi 0, %s1128
      %s1145 = sphi 0, %s1129
    $region4: #{encoder_forward.1} parent=1 // loop_header_branch
      %126 = sbr.rel (%p124) target = $region8
    $region5: #{encoder_forward.1} parent=1 // loop_body
      %s128 = ssub.s32 %s123, 1
      %s129 = ssub.s32 %s123, 2
      %s130 = sadd.s32 %s123, 1
      %s131 = ssub.s32 %s123, %s130
      %p132 = scmp.eq.s32.totalorder %s131, 0
      %s134 = sadd.s32 %s133, 1
      %s135 = scalar_select %p132, %s133, %s134
      %p138 = pneg %p132
      %p139 = scmp.eq.s32.totalorder %s123, 1
      %p140 = por %p138, %p139
      %p141 = scmp.ne.s32.totalorder %s133, %s136
      %p142 = scmp.eq.s32.totalorder %s123, 0
      %p143 = por %p141, %p142
      %p144 = scmp.ne.s32.totalorder %s133, %s136
      %p145 = scmp.eq.s32.totalorder %s128, 1
      %p146 = por %p144, %p145
      %p147 = scmp.ne.s32.totalorder %s136, %s137
      %p148 = scmp.eq.s32.totalorder %s128, 0
      %p149 = por %p147, %p148
      %p150 = scmp.ne.s32.totalorder %s136, %s137
      %p151 = scmp.eq.s32.totalorder %s129, 1
      %p152 = por %p150, %p151
      %p154 = scmp.ne.s32.totalorder %s137, %s153
      %p155 = scmp.eq.s32.totalorder %s129, 0
      %p156 = por %p154, %p155
      %s158 = sadd.s32 %s157, 1
      %p161 = scmp.eq.s32.totalorder %s123, 1
      %p162 = scmp.ne.s32.totalorder %s157, %s159
      %p163 = scmp.eq.s32.totalorder %s123, 0
      %p164 = por %p162, %p163
      %p165 = scmp.ne.s32.totalorder %s157, %s159
      %p166 = scmp.eq.s32.totalorder %s128, 1
      %p167 = por %p165, %p166
      %p168 = scmp.ne.s32.totalorder %s159, %s160
      %p169 = scmp.eq.s32.totalorder %s128, 0
      %p170 = por %p168, %p169
      %p171 = scmp.ne.s32.totalorder %s159, %s160
      %p172 = scmp.eq.s32.totalorder %s129, 1
      %p173 = por %p171, %p172
      %p175 = scmp.ne.s32.totalorder %s160, %s174
      %p176 = scmp.eq.s32.totalorder %s129, 0
      %p177 = por %p175, %p176
      %s179 = sadd.s32 %s178, 1
      %p182 = scmp.eq.s32.totalorder %s123, 1
      %p183 = scmp.ne.s32.totalorder %s178, %s180
      %p184 = scmp.eq.s32.totalorder %s123, 0
      %p185 = por %p183, %p184
      %p186 = scmp.ne.s32.totalorder %s178, %s180
      %p187 = scmp.eq.s32.totalorder %s128, 1
      %p188 = por %p186, %p187
      %p189 = scmp.ne.s32.totalorder %s180, %s181
      %p190 = scmp.eq.s32.totalorder %s128, 0
      %p191 = por %p189, %p190
      %p192 = scmp.ne.s32.totalorder %s180, %s181
      %p193 = scmp.eq.s32.totalorder %s129, 1
      %p194 = por %p192, %p193
      %p196 = scmp.ne.s32.totalorder %s181, %s195
      %p197 = scmp.eq.s32.totalorder %s129, 0
      %p198 = por %p196, %p197
      %s200 = sadd.s32 %s199, 1
      %p203 = scmp.eq.s32.totalorder %s123, 1
      %p204 = scmp.ne.s32.totalorder %s199, %s201
      %p205 = scmp.eq.s32.totalorder %s123, 0
      %p206 = por %p204, %p205
      %p207 = scmp.ne.s32.totalorder %s199, %s201
      %p208 = scmp.eq.s32.totalorder %s128, 1
      %p209 = por %p207, %p208
      %p210 = scmp.ne.s32.totalorder %s201, %s202
      %p211 = scmp.eq.s32.totalorder %s128, 0
      %p212 = por %p210, %p211
      %p213 = scmp.ne.s32.totalorder %s201, %s202
      %p214 = scmp.eq.s32.totalorder %s129, 1
      %p215 = por %p213, %p214
      %p217 = scmp.ne.s32.totalorder %s202, %s216
      %p218 = scmp.eq.s32.totalorder %s129, 0
      %p219 = por %p217, %p218
      %s221 = sadd.s32 %s220, 1
      %p224 = scmp.eq.s32.totalorder %s123, 1
      %p225 = scmp.ne.s32.totalorder %s220, %s222
      %p226 = scmp.eq.s32.totalorder %s123, 0
      %p227 = por %p225, %p226
      %p228 = scmp.ne.s32.totalorder %s220, %s222
      %p229 = scmp.eq.s32.totalorder %s128, 1
      %p230 = por %p228, %p229
      %p231 = scmp.ne.s32.totalorder %s222, %s223
      %p232 = scmp.eq.s32.totalorder %s128, 0
      %p233 = por %p231, %p232
      %p234 = scmp.ne.s32.totalorder %s222, %s223
      %p235 = scmp.eq.s32.totalorder %s129, 1
      %p236 = por %p234, %p235
      %p238 = scmp.ne.s32.totalorder %s223, %s237
      %p239 = scmp.eq.s32.totalorder %s129, 0
      %p240 = por %p238, %p239
      %s242 = sadd.s32 %s241, 1
      %p245 = scmp.eq.s32.totalorder %s123, 1
      %p246 = scmp.ne.s32.totalorder %s241, %s243
      %p247 = scmp.eq.s32.totalorder %s123, 0
      %p248 = por %p246, %p247
      %p249 = scmp.ne.s32.totalorder %s241, %s243
      %p250 = scmp.eq.s32.totalorder %s128, 1
      %p251 = por %p249, %p250
      %p252 = scmp.ne.s32.totalorder %s243, %s244
      %p253 = scmp.eq.s32.totalorder %s128, 0
      %p254 = por %p252, %p253
      %p255 = scmp.ne.s32.totalorder %s243, %s244
      %p256 = scmp.eq.s32.totalorder %s129, 1
      %p257 = por %p255, %p256
      %p259 = scmp.ne.s32.totalorder %s244, %s258
      %p260 = scmp.eq.s32.totalorder %s129, 0
      %p261 = por %p259, %p260
      %s263 = sadd.s32 %s262, 1
      %p266 = scmp.eq.s32.totalorder %s123, 1
      %p267 = scmp.ne.s32.totalorder %s262, %s264
      %p268 = scmp.eq.s32.totalorder %s123, 0
      %p269 = por %p267, %p268
      %p270 = scmp.ne.s32.totalorder %s262, %s264
      %p271 = scmp.eq.s32.totalorder %s128, 1
      %p272 = por %p270, %p271
      %p273 = scmp.ne.s32.totalorder %s264, %s265
      %p274 = scmp.eq.s32.totalorder %s128, 0
      %p275 = por %p273, %p274
      %p276 = scmp.ne.s32.totalorder %s264, %s265
      %p277 = scmp.eq.s32.totalorder %s129, 1
      %p278 = por %p276, %p277
      %p280 = scmp.ne.s32.totalorder %s265, %s279
      %p281 = scmp.eq.s32.totalorder %s129, 0
      %p282 = por %p280, %p281
      %s284 = sadd.s32 %s283, 1
      %p287 = scmp.eq.s32.totalorder %s123, 1
      %p288 = scmp.ne.s32.totalorder %s283, %s285
      %p289 = scmp.eq.s32.totalorder %s123, 0
      %p290 = por %p288, %p289
      %p291 = scmp.ne.s32.totalorder %s283, %s285
      %p292 = scmp.eq.s32.totalorder %s128, 1
      %p293 = por %p291, %p292
      %p294 = scmp.ne.s32.totalorder %s285, %s286
      %p295 = scmp.eq.s32.totalorder %s128, 0
      %p296 = por %p294, %p295
      %p297 = scmp.ne.s32.totalorder %s285, %s286
      %p298 = scmp.eq.s32.totalorder %s129, 1
      %p299 = por %p297, %p298
      %p301 = scmp.ne.s32.totalorder %s286, %s300
      %p302 = scmp.eq.s32.totalorder %s129, 0
      %p303 = por %p301, %p302
      %s305 = sadd.s32 %s304, 1
      %p308 = scmp.eq.s32.totalorder %s123, 1
      %p309 = scmp.ne.s32.totalorder %s304, %s306
      %p310 = scmp.eq.s32.totalorder %s123, 0
      %p311 = por %p309, %p310
      %p312 = scmp.ne.s32.totalorder %s304, %s306
      %p313 = scmp.eq.s32.totalorder %s128, 1
      %p314 = por %p312, %p313
      %p315 = scmp.ne.s32.totalorder %s306, %s307
      %p316 = scmp.eq.s32.totalorder %s128, 0
      %p317 = por %p315, %p316
      %p318 = scmp.ne.s32.totalorder %s306, %s307
      %p319 = scmp.eq.s32.totalorder %s129, 1
      %p320 = por %p318, %p319
      %p322 = scmp.ne.s32.totalorder %s307, %s321
      %p323 = scmp.eq.s32.totalorder %s129, 0
      %p324 = por %p322, %p323
      %s326 = sadd.s32 %s325, 1
      %p329 = scmp.eq.s32.totalorder %s123, 1
      %p330 = scmp.ne.s32.totalorder %s325, %s327
      %p331 = scmp.eq.s32.totalorder %s123, 0
      %p332 = por %p330, %p331
      %p333 = scmp.ne.s32.totalorder %s325, %s327
      %p334 = scmp.eq.s32.totalorder %s128, 1
      %p335 = por %p333, %p334
      %p336 = scmp.ne.s32.totalorder %s327, %s328
      %p337 = scmp.eq.s32.totalorder %s128, 0
      %p338 = por %p336, %p337
      %p339 = scmp.ne.s32.totalorder %s327, %s328
      %p340 = scmp.eq.s32.totalorder %s129, 1
      %p341 = por %p339, %p340
      %p343 = scmp.ne.s32.totalorder %s328, %s342
      %p344 = scmp.eq.s32.totalorder %s129, 0
      %p345 = por %p343, %p344
      %s347 = sadd.s32 %s346, 1
      %p350 = scmp.eq.s32.totalorder %s123, 1
      %p351 = scmp.ne.s32.totalorder %s346, %s348
      %p352 = scmp.eq.s32.totalorder %s123, 0
      %p353 = por %p351, %p352
      %p354 = scmp.ne.s32.totalorder %s346, %s348
      %p355 = scmp.eq.s32.totalorder %s128, 1
      %p356 = por %p354, %p355
      %p357 = scmp.ne.s32.totalorder %s348, %s349
      %p358 = scmp.eq.s32.totalorder %s128, 0
      %p359 = por %p357, %p358
      %p360 = scmp.ne.s32.totalorder %s348, %s349
      %p361 = scmp.eq.s32.totalorder %s129, 1
      %p362 = por %p360, %p361
      %p364 = scmp.ne.s32.totalorder %s349, %s363
      %p365 = scmp.eq.s32.totalorder %s129, 0
      %p366 = por %p364, %p365
      %s368 = sadd.s32 %s367, 1
      %p371 = scmp.eq.s32.totalorder %s123, 1
      %p372 = scmp.ne.s32.totalorder %s367, %s369
      %p373 = scmp.eq.s32.totalorder %s123, 0
      %p374 = por %p372, %p373
      %p375 = scmp.ne.s32.totalorder %s367, %s369
      %p376 = scmp.eq.s32.totalorder %s128, 1
      %p377 = por %p375, %p376
      %p378 = scmp.ne.s32.totalorder %s369, %s370
      %p379 = scmp.eq.s32.totalorder %s128, 0
      %p380 = por %p378, %p379
      %p381 = scmp.ne.s32.totalorder %s369, %s370
      %p382 = scmp.eq.s32.totalorder %s129, 1
      %p383 = por %p381, %p382
      %p385 = scmp.ne.s32.totalorder %s370, %s384
      %p386 = scmp.eq.s32.totalorder %s129, 0
      %p387 = por %p385, %p386
      %s389 = sadd.s32 %s388, 1
      %p392 = scmp.eq.s32.totalorder %s123, 1
      %p393 = scmp.ne.s32.totalorder %s388, %s390
      %p394 = scmp.eq.s32.totalorder %s123, 0
      %p395 = por %p393, %p394
      %p396 = scmp.ne.s32.totalorder %s388, %s390
      %p397 = scmp.eq.s32.totalorder %s128, 1
      %p398 = por %p396, %p397
      %p399 = scmp.ne.s32.totalorder %s390, %s391
      %p400 = scmp.eq.s32.totalorder %s128, 0
      %p401 = por %p399, %p400
      %p402 = scmp.ne.s32.totalorder %s390, %s391
      %p403 = scmp.eq.s32.totalorder %s129, 1
      %p404 = por %p402, %p403
      %p406 = scmp.ne.s32.totalorder %s391, %s405
      %p407 = scmp.eq.s32.totalorder %s129, 0
      %p408 = por %p406, %p407
      %s410 = sadd.s32 %s409, 1
      %p413 = scmp.eq.s32.totalorder %s123, 1
      %p414 = scmp.ne.s32.totalorder %s409, %s411
      %p415 = scmp.eq.s32.totalorder %s123, 0
      %p416 = por %p414, %p415
      %p417 = scmp.ne.s32.totalorder %s409, %s411
      %p418 = scmp.eq.s32.totalorder %s128, 1
      %p419 = por %p417, %p418
      %p420 = scmp.ne.s32.totalorder %s411, %s412
      %p421 = scmp.eq.s32.totalorder %s128, 0
      %p422 = por %p420, %p421
      %p423 = scmp.ne.s32.totalorder %s411, %s412
      %p424 = scmp.eq.s32.totalorder %s129, 1
      %p425 = por %p423, %p424
      %p427 = scmp.ne.s32.totalorder %s412, %s426
      %p428 = scmp.eq.s32.totalorder %s129, 0
      %p429 = por %p427, %p428
      %s431 = sadd.s32 %s430, 1
      %p434 = scmp.eq.s32.totalorder %s123, 1
      %p435 = scmp.ne.s32.totalorder %s430, %s432
      %p436 = scmp.eq.s32.totalorder %s123, 0
      %p437 = por %p435, %p436
      %p438 = scmp.ne.s32.totalorder %s430, %s432
      %p439 = scmp.eq.s32.totalorder %s128, 1
      %p440 = por %p438, %p439
      %p441 = scmp.ne.s32.totalorder %s432, %s433
      %p442 = scmp.eq.s32.totalorder %s128, 0
      %p443 = por %p441, %p442
      %p444 = scmp.ne.s32.totalorder %s432, %s433
      %p445 = scmp.eq.s32.totalorder %s129, 1
      %p446 = por %p444, %p445
      %p448 = scmp.ne.s32.totalorder %s433, %s447
      %p449 = scmp.eq.s32.totalorder %s129, 0
      %p450 = por %p448, %p449
      %s452 = sadd.s32 %s451, 1
      %p455 = scmp.eq.s32.totalorder %s123, 1
      %p456 = scmp.ne.s32.totalorder %s451, %s453
      %p457 = scmp.eq.s32.totalorder %s123, 0
      %p458 = por %p456, %p457
      %p459 = scmp.ne.s32.totalorder %s451, %s453
      %p460 = scmp.eq.s32.totalorder %s128, 1
      %p461 = por %p459, %p460
      %p462 = scmp.ne.s32.totalorder %s453, %s454
      %p463 = scmp.eq.s32.totalorder %s128, 0
      %p464 = por %p462, %p463
      %p465 = scmp.ne.s32.totalorder %s453, %s454
      %p466 = scmp.eq.s32.totalorder %s129, 1
      %p467 = por %p465, %p466
      %p469 = scmp.ne.s32.totalorder %s454, %s468
      %p470 = scmp.eq.s32.totalorder %s129, 0
      %p471 = por %p469, %p470
      %s473 = sadd.s32 %s472, 1
      %p476 = scmp.eq.s32.totalorder %s123, 1
      %p477 = scmp.ne.s32.totalorder %s472, %s474
      %p478 = scmp.eq.s32.totalorder %s123, 0
      %p479 = por %p477, %p478
      %p480 = scmp.ne.s32.totalorder %s472, %s474
      %p481 = scmp.eq.s32.totalorder %s128, 1
      %p482 = por %p480, %p481
      %p483 = scmp.ne.s32.totalorder %s474, %s475
      %p484 = scmp.eq.s32.totalorder %s128, 0
      %p485 = por %p483, %p484
      %p486 = scmp.ne.s32.totalorder %s474, %s475
      %p487 = scmp.eq.s32.totalorder %s129, 1
      %p488 = por %p486, %p487
      %p490 = scmp.ne.s32.totalorder %s475, %s489
      %p491 = scmp.eq.s32.totalorder %s129, 0
      %p492 = por %p490, %p491
      %s494 = sadd.s32 %s493, 1
      %p497 = scmp.eq.s32.totalorder %s123, 1
      %p498 = scmp.ne.s32.totalorder %s493, %s495
      %p499 = scmp.eq.s32.totalorder %s123, 0
      %p500 = por %p498, %p499
      %p501 = scmp.ne.s32.totalorder %s493, %s495
      %p502 = scmp.eq.s32.totalorder %s128, 1
      %p503 = por %p501, %p502
      %p504 = scmp.ne.s32.totalorder %s495, %s496
      %p505 = scmp.eq.s32.totalorder %s128, 0
      %p506 = por %p504, %p505
      %p507 = scmp.ne.s32.totalorder %s495, %s496
      %p508 = scmp.eq.s32.totalorder %s129, 1
      %p509 = por %p507, %p508
      %p511 = scmp.ne.s32.totalorder %s496, %s510
      %p512 = scmp.eq.s32.totalorder %s129, 0
      %p513 = por %p511, %p512
      %s515 = sadd.s32 %s514, 1
      %p518 = scmp.eq.s32.totalorder %s123, 1
      %p519 = scmp.ne.s32.totalorder %s514, %s516
      %p520 = scmp.eq.s32.totalorder %s123, 0
      %p521 = por %p519, %p520
      %p522 = scmp.ne.s32.totalorder %s514, %s516
      %p523 = scmp.eq.s32.totalorder %s128, 1
      %p524 = por %p522, %p523
      %p525 = scmp.ne.s32.totalorder %s516, %s517
      %p526 = scmp.eq.s32.totalorder %s128, 0
      %p527 = por %p525, %p526
      %p528 = scmp.ne.s32.totalorder %s516, %s517
      %p529 = scmp.eq.s32.totalorder %s129, 1
      %p530 = por %p528, %p529
      %p532 = scmp.ne.s32.totalorder %s517, %s531
      %p533 = scmp.eq.s32.totalorder %s129, 0
      %p534 = por %p532, %p533
      %s536 = sadd.s32 %s535, 1
      %p539 = scmp.eq.s32.totalorder %s123, 1
      %p540 = scmp.ne.s32.totalorder %s535, %s537
      %p541 = scmp.eq.s32.totalorder %s123, 0
      %p542 = por %p540, %p541
      %p543 = scmp.ne.s32.totalorder %s535, %s537
      %p544 = scmp.eq.s32.totalorder %s128, 1
      %p545 = por %p543, %p544
      %p546 = scmp.ne.s32.totalorder %s537, %s538
      %p547 = scmp.eq.s32.totalorder %s128, 0
      %p548 = por %p546, %p547
      %p549 = scmp.ne.s32.totalorder %s537, %s538
      %p550 = scmp.eq.s32.totalorder %s129, 1
      %p551 = por %p549, %p550
      %p553 = scmp.ne.s32.totalorder %s538, %s552
      %p554 = scmp.eq.s32.totalorder %s129, 0
      %p555 = por %p553, %p554
      %s557 = sadd.s32 %s556, 1
      %p560 = scmp.eq.s32.totalorder %s123, 1
      %p561 = scmp.ne.s32.totalorder %s556, %s558
      %p562 = scmp.eq.s32.totalorder %s123, 0
      %p563 = por %p561, %p562
      %p564 = scmp.ne.s32.totalorder %s556, %s558
      %p565 = scmp.eq.s32.totalorder %s128, 1
      %p566 = por %p564, %p565
      %p567 = scmp.ne.s32.totalorder %s558, %s559
      %p568 = scmp.eq.s32.totalorder %s128, 0
      %p569 = por %p567, %p568
      %p570 = scmp.ne.s32.totalorder %s558, %s559
      %p571 = scmp.eq.s32.totalorder %s129, 1
      %p572 = por %p570, %p571
      %p574 = scmp.ne.s32.totalorder %s559, %s573
      %p575 = scmp.eq.s32.totalorder %s129, 0
      %p576 = por %p574, %p575
      %s578 = sadd.s32 %s577, 1
      %p581 = scmp.eq.s32.totalorder %s123, 1
      %p582 = scmp.ne.s32.totalorder %s577, %s579
      %p583 = scmp.eq.s32.totalorder %s123, 0
      %p584 = por %p582, %p583
      %p585 = scmp.ne.s32.totalorder %s577, %s579
      %p586 = scmp.eq.s32.totalorder %s128, 1
      %p587 = por %p585, %p586
      %p588 = scmp.ne.s32.totalorder %s579, %s580
      %p589 = scmp.eq.s32.totalorder %s128, 0
      %p590 = por %p588, %p589
      %p591 = scmp.ne.s32.totalorder %s579, %s580
      %p592 = scmp.eq.s32.totalorder %s129, 1
      %p593 = por %p591, %p592
      %p595 = scmp.ne.s32.totalorder %s580, %s594
      %p596 = scmp.eq.s32.totalorder %s129, 0
      %p597 = por %p595, %p596
      %s599 = sadd.s32 %s598, 1
      %p602 = scmp.eq.s32.totalorder %s123, 1
      %p603 = scmp.ne.s32.totalorder %s598, %s600
      %p604 = scmp.eq.s32.totalorder %s123, 0
      %p605 = por %p603, %p604
      %p606 = scmp.ne.s32.totalorder %s598, %s600
      %p607 = scmp.eq.s32.totalorder %s128, 1
      %p608 = por %p606, %p607
      %p609 = scmp.ne.s32.totalorder %s600, %s601
      %p610 = scmp.eq.s32.totalorder %s128, 0
      %p611 = por %p609, %p610
      %p612 = scmp.ne.s32.totalorder %s600, %s601
      %p613 = scmp.eq.s32.totalorder %s129, 1
      %p614 = por %p612, %p613
      %p616 = scmp.ne.s32.totalorder %s601, %s615
      %p617 = scmp.eq.s32.totalorder %s129, 0
      %p618 = por %p616, %p617
      %s620 = sadd.s32 %s619, 1
      %p623 = scmp.eq.s32.totalorder %s123, 1
      %p624 = scmp.ne.s32.totalorder %s619, %s621
      %p625 = scmp.eq.s32.totalorder %s123, 0
      %p626 = por %p624, %p625
      %p627 = scmp.ne.s32.totalorder %s619, %s621
      %p628 = scmp.eq.s32.totalorder %s128, 1
      %p629 = por %p627, %p628
      %p630 = scmp.ne.s32.totalorder %s621, %s622
      %p631 = scmp.eq.s32.totalorder %s128, 0
      %p632 = por %p630, %p631
      %p633 = scmp.ne.s32.totalorder %s621, %s622
      %p634 = scmp.eq.s32.totalorder %s129, 1
      %p635 = por %p633, %p634
      %p637 = scmp.ne.s32.totalorder %s622, %s636
      %p638 = scmp.eq.s32.totalorder %s129, 0
      %p639 = por %p637, %p638
      %s641 = sadd.s32 %s640, 1
      %p644 = scmp.eq.s32.totalorder %s123, 1
      %p645 = scmp.ne.s32.totalorder %s640, %s642
      %p646 = scmp.eq.s32.totalorder %s123, 0
      %p647 = por %p645, %p646
      %p648 = scmp.ne.s32.totalorder %s640, %s642
      %p649 = scmp.eq.s32.totalorder %s128, 1
      %p650 = por %p648, %p649
      %p651 = scmp.ne.s32.totalorder %s642, %s643
      %p652 = scmp.eq.s32.totalorder %s128, 0
      %p653 = por %p651, %p652
      %p654 = scmp.ne.s32.totalorder %s642, %s643
      %p655 = scmp.eq.s32.totalorder %s129, 1
      %p656 = por %p654, %p655
      %p658 = scmp.ne.s32.totalorder %s643, %s657
      %p659 = scmp.eq.s32.totalorder %s129, 0
      %p660 = por %p658, %p659
      %s662 = sadd.s32 %s661, 1
      %p665 = scmp.eq.s32.totalorder %s123, 1
      %p666 = scmp.ne.s32.totalorder %s661, %s663
      %p667 = scmp.eq.s32.totalorder %s123, 0
      %p668 = por %p666, %p667
      %p669 = scmp.ne.s32.totalorder %s661, %s663
      %p670 = scmp.eq.s32.totalorder %s128, 1
      %p671 = por %p669, %p670
      %p672 = scmp.ne.s32.totalorder %s663, %s664
      %p673 = scmp.eq.s32.totalorder %s128, 0
      %p674 = por %p672, %p673
      %p675 = scmp.ne.s32.totalorder %s663, %s664
      %p676 = scmp.eq.s32.totalorder %s129, 1
      %p677 = por %p675, %p676
      %p679 = scmp.ne.s32.totalorder %s664, %s678
      %p680 = scmp.eq.s32.totalorder %s129, 0
      %p681 = por %p679, %p680
      %s683 = sadd.s32 %s682, 1
      %p686 = scmp.eq.s32.totalorder %s123, 1
      %p687 = scmp.ne.s32.totalorder %s682, %s684
      %p688 = scmp.eq.s32.totalorder %s123, 0
      %p689 = por %p687, %p688
      %p690 = scmp.ne.s32.totalorder %s682, %s684
      %p691 = scmp.eq.s32.totalorder %s128, 1
      %p692 = por %p690, %p691
      %p693 = scmp.ne.s32.totalorder %s684, %s685
      %p694 = scmp.eq.s32.totalorder %s128, 0
      %p695 = por %p693, %p694
      %p696 = scmp.ne.s32.totalorder %s684, %s685
      %p697 = scmp.eq.s32.totalorder %s129, 1
      %p698 = por %p696, %p697
      %p700 = scmp.ne.s32.totalorder %s685, %s699
      %p701 = scmp.eq.s32.totalorder %s129, 0
      %p702 = por %p700, %p701
      %s704 = sadd.s32 %s703, 1
      %p707 = scmp.eq.s32.totalorder %s123, 1
      %p708 = scmp.ne.s32.totalorder %s703, %s705
      %p709 = scmp.eq.s32.totalorder %s123, 0
      %p710 = por %p708, %p709
      %p711 = scmp.ne.s32.totalorder %s703, %s705
      %p712 = scmp.eq.s32.totalorder %s128, 1
      %p713 = por %p711, %p712
      %p714 = scmp.ne.s32.totalorder %s705, %s706
      %p715 = scmp.eq.s32.totalorder %s128, 0
      %p716 = por %p714, %p715
      %p717 = scmp.ne.s32.totalorder %s705, %s706
      %p718 = scmp.eq.s32.totalorder %s129, 1
      %p719 = por %p717, %p718
      %p721 = scmp.ne.s32.totalorder %s706, %s720
      %p722 = scmp.eq.s32.totalorder %s129, 0
      %p723 = por %p721, %p722
      %s725 = sadd.s32 %s724, 1
      %p728 = scmp.eq.s32.totalorder %s123, 1
      %p729 = scmp.ne.s32.totalorder %s724, %s726
      %p730 = scmp.eq.s32.totalorder %s123, 0
      %p731 = por %p729, %p730
      %p732 = scmp.ne.s32.totalorder %s724, %s726
      %p733 = scmp.eq.s32.totalorder %s128, 1
      %p734 = por %p732, %p733
      %p735 = scmp.ne.s32.totalorder %s726, %s727
      %p736 = scmp.eq.s32.totalorder %s128, 0
      %p737 = por %p735, %p736
      %p738 = scmp.ne.s32.totalorder %s726, %s727
      %p739 = scmp.eq.s32.totalorder %s129, 1
      %p740 = por %p738, %p739
      %p742 = scmp.ne.s32.totalorder %s727, %s741
      %p743 = scmp.eq.s32.totalorder %s129, 0
      %p744 = por %p742, %p743
      %s746 = sadd.s32 %s745, 1
      %p749 = scmp.eq.s32.totalorder %s123, 1
      %p750 = scmp.ne.s32.totalorder %s745, %s747
      %p751 = scmp.eq.s32.totalorder %s123, 0
      %p752 = por %p750, %p751
      %p753 = scmp.ne.s32.totalorder %s745, %s747
      %p754 = scmp.eq.s32.totalorder %s128, 1
      %p755 = por %p753, %p754
      %p756 = scmp.ne.s32.totalorder %s747, %s748
      %p757 = scmp.eq.s32.totalorder %s128, 0
      %p758 = por %p756, %p757
      %p759 = scmp.ne.s32.totalorder %s747, %s748
      %p760 = scmp.eq.s32.totalorder %s129, 1
      %p761 = por %p759, %p760
      %p763 = scmp.ne.s32.totalorder %s748, %s762
      %p764 = scmp.eq.s32.totalorder %s129, 0
      %p765 = por %p763, %p764
      %s767 = sadd.s32 %s766, 1
      %p770 = scmp.eq.s32.totalorder %s123, 1
      %p771 = scmp.ne.s32.totalorder %s766, %s768
      %p772 = scmp.eq.s32.totalorder %s123, 0
      %p773 = por %p771, %p772
      %p774 = scmp.ne.s32.totalorder %s766, %s768
      %p775 = scmp.eq.s32.totalorder %s128, 1
      %p776 = por %p774, %p775
      %p777 = scmp.ne.s32.totalorder %s768, %s769
      %p778 = scmp.eq.s32.totalorder %s128, 0
      %p779 = por %p777, %p778
      %p780 = scmp.ne.s32.totalorder %s768, %s769
      %p781 = scmp.eq.s32.totalorder %s129, 1
      %p782 = por %p780, %p781
      %p784 = scmp.ne.s32.totalorder %s769, %s783
      %p785 = scmp.eq.s32.totalorder %s129, 0
      %p786 = por %p784, %p785
      %s788 = sadd.s32 %s787, 1
      %p791 = scmp.eq.s32.totalorder %s123, 1
      %p792 = scmp.ne.s32.totalorder %s787, %s789
      %p793 = scmp.eq.s32.totalorder %s123, 0
      %p794 = por %p792, %p793
      %p795 = scmp.ne.s32.totalorder %s787, %s789
      %p796 = scmp.eq.s32.totalorder %s128, 1
      %p797 = por %p795, %p796
      %p798 = scmp.ne.s32.totalorder %s789, %s790
      %p799 = scmp.eq.s32.totalorder %s128, 0
      %p800 = por %p798, %p799
      %p801 = scmp.ne.s32.totalorder %s789, %s790
      %p802 = scmp.eq.s32.totalorder %s129, 1
      %p803 = por %p801, %p802
      %p805 = scmp.ne.s32.totalorder %s790, %s804
      %p806 = scmp.eq.s32.totalorder %s129, 0
      %p807 = por %p805, %p806
      %s809 = sadd.s32 %s808, 1
      %p812 = scmp.eq.s32.totalorder %s123, 1
      %p813 = scmp.ne.s32.totalorder %s808, %s810
      %p814 = scmp.eq.s32.totalorder %s123, 0
      %p815 = por %p813, %p814
      %p816 = scmp.ne.s32.totalorder %s808, %s810
      %p817 = scmp.eq.s32.totalorder %s128, 1
      %p818 = por %p816, %p817
      %p819 = scmp.ne.s32.totalorder %s810, %s811
      %p820 = scmp.eq.s32.totalorder %s128, 0
      %p821 = por %p819, %p820
      %p822 = scmp.ne.s32.totalorder %s810, %s811
      %p823 = scmp.eq.s32.totalorder %s129, 1
      %p824 = por %p822, %p823
      %p826 = scmp.ne.s32.totalorder %s811, %s825
      %p827 = scmp.eq.s32.totalorder %s129, 0
      %p828 = por %p826, %p827
      %s830 = sadd.s32 %s829, 1
      %p833 = scmp.eq.s32.totalorder %s123, 1
      %p834 = scmp.ne.s32.totalorder %s829, %s831
      %p835 = scmp.eq.s32.totalorder %s123, 0
      %p836 = por %p834, %p835
      %p837 = scmp.ne.s32.totalorder %s829, %s831
      %p838 = scmp.eq.s32.totalorder %s128, 1
      %p839 = por %p837, %p838
      %p840 = scmp.ne.s32.totalorder %s831, %s832
      %p841 = scmp.eq.s32.totalorder %s128, 0
      %p842 = por %p840, %p841
      %p843 = scmp.ne.s32.totalorder %s831, %s832
      %p844 = scmp.eq.s32.totalorder %s129, 1
      %p845 = por %p843, %p844
      %p847 = scmp.ne.s32.totalorder %s832, %s846
      %p848 = scmp.eq.s32.totalorder %s129, 0
      %p849 = por %p847, %p848
      %s851 = sadd.s32 %s850, 1
      %p854 = scmp.eq.s32.totalorder %s123, 1
      %p855 = scmp.ne.s32.totalorder %s850, %s852
      %p856 = scmp.eq.s32.totalorder %s123, 0
      %p857 = por %p855, %p856
      %p858 = scmp.ne.s32.totalorder %s850, %s852
      %p859 = scmp.eq.s32.totalorder %s128, 1
      %p860 = por %p858, %p859
      %p861 = scmp.ne.s32.totalorder %s852, %s853
      %p862 = scmp.eq.s32.totalorder %s128, 0
      %p863 = por %p861, %p862
      %p864 = scmp.ne.s32.totalorder %s852, %s853
      %p865 = scmp.eq.s32.totalorder %s129, 1
      %p866 = por %p864, %p865
      %p868 = scmp.ne.s32.totalorder %s853, %s867
      %p869 = scmp.eq.s32.totalorder %s129, 0
      %p870 = por %p868, %p869
      %s872 = sadd.s32 %s871, 1
      %p875 = scmp.eq.s32.totalorder %s123, 1
      %p876 = scmp.ne.s32.totalorder %s871, %s873
      %p877 = scmp.eq.s32.totalorder %s123, 0
      %p878 = por %p876, %p877
      %p879 = scmp.ne.s32.totalorder %s871, %s873
      %p880 = scmp.eq.s32.totalorder %s128, 1
      %p881 = por %p879, %p880
      %p882 = scmp.ne.s32.totalorder %s873, %s874
      %p883 = scmp.eq.s32.totalorder %s128, 0
      %p884 = por %p882, %p883
      %p885 = scmp.ne.s32.totalorder %s873, %s874
      %p886 = scmp.eq.s32.totalorder %s129, 1
      %p887 = por %p885, %p886
      %p889 = scmp.ne.s32.totalorder %s874, %s888
      %p890 = scmp.eq.s32.totalorder %s129, 0
      %p891 = por %p889, %p890
      %s893 = sadd.s32 %s892, 1
      %p896 = scmp.eq.s32.totalorder %s123, 1
      %p897 = scmp.ne.s32.totalorder %s892, %s894
      %p898 = scmp.eq.s32.totalorder %s123, 0
      %p899 = por %p897, %p898
      %p900 = scmp.ne.s32.totalorder %s892, %s894
      %p901 = scmp.eq.s32.totalorder %s128, 1
      %p902 = por %p900, %p901
      %p903 = scmp.ne.s32.totalorder %s894, %s895
      %p904 = scmp.eq.s32.totalorder %s128, 0
      %p905 = por %p903, %p904
      %p906 = scmp.ne.s32.totalorder %s894, %s895
      %p907 = scmp.eq.s32.totalorder %s129, 1
      %p908 = por %p906, %p907
      %p910 = scmp.ne.s32.totalorder %s895, %s909
      %p911 = scmp.eq.s32.totalorder %s129, 0
      %p912 = por %p910, %p911
      %s914 = sadd.s32 %s913, 1
      %p917 = scmp.eq.s32.totalorder %s123, 1
      %p918 = scmp.ne.s32.totalorder %s913, %s915
      %p919 = scmp.eq.s32.totalorder %s123, 0
      %p920 = por %p918, %p919
      %p921 = scmp.ne.s32.totalorder %s913, %s915
      %p922 = scmp.eq.s32.totalorder %s128, 1
      %p923 = por %p921, %p922
      %p924 = scmp.ne.s32.totalorder %s915, %s916
      %p925 = scmp.eq.s32.totalorder %s128, 0
      %p926 = por %p924, %p925
      %p927 = scmp.ne.s32.totalorder %s915, %s916
      %p928 = scmp.eq.s32.totalorder %s129, 1
      %p929 = por %p927, %p928
      %p931 = scmp.ne.s32.totalorder %s916, %s930
      %p932 = scmp.eq.s32.totalorder %s129, 0
      %p933 = por %p931, %p932
      %s935 = sadd.s32 %s934, 1
      %p938 = scmp.eq.s32.totalorder %s123, 1
      %p939 = scmp.ne.s32.totalorder %s934, %s936
      %p940 = scmp.eq.s32.totalorder %s123, 0
      %p941 = por %p939, %p940
      %p942 = scmp.ne.s32.totalorder %s934, %s936
      %p943 = scmp.eq.s32.totalorder %s128, 1
      %p944 = por %p942, %p943
      %p945 = scmp.ne.s32.totalorder %s936, %s937
      %p946 = scmp.eq.s32.totalorder %s128, 0
      %p947 = por %p945, %p946
      %p948 = scmp.ne.s32.totalorder %s936, %s937
      %p949 = scmp.eq.s32.totalorder %s129, 1
      %p950 = por %p948, %p949
      %p952 = scmp.ne.s32.totalorder %s937, %s951
      %p953 = scmp.eq.s32.totalorder %s129, 0
      %p954 = por %p952, %p953
      %s956 = sadd.s32 %s955, 1
      %p959 = scmp.eq.s32.totalorder %s123, 1
      %p960 = scmp.ne.s32.totalorder %s955, %s957
      %p961 = scmp.eq.s32.totalorder %s123, 0
      %p962 = por %p960, %p961
      %p963 = scmp.ne.s32.totalorder %s955, %s957
      %p964 = scmp.eq.s32.totalorder %s128, 1
      %p965 = por %p963, %p964
      %p966 = scmp.ne.s32.totalorder %s957, %s958
      %p967 = scmp.eq.s32.totalorder %s128, 0
      %p968 = por %p966, %p967
      %p969 = scmp.ne.s32.totalorder %s957, %s958
      %p970 = scmp.eq.s32.totalorder %s129, 1
      %p971 = por %p969, %p970
      %p973 = scmp.ne.s32.totalorder %s958, %s972
      %p974 = scmp.eq.s32.totalorder %s129, 0
      %p975 = por %p973, %p974
      %s977 = sadd.s32 %s976, 1
      %p980 = scmp.eq.s32.totalorder %s123, 1
      %p981 = scmp.ne.s32.totalorder %s976, %s978
      %p982 = scmp.eq.s32.totalorder %s123, 0
      %p983 = por %p981, %p982
      %p984 = scmp.ne.s32.totalorder %s976, %s978
      %p985 = scmp.eq.s32.totalorder %s128, 1
      %p986 = por %p984, %p985
      %p987 = scmp.ne.s32.totalorder %s978, %s979
      %p988 = scmp.eq.s32.totalorder %s128, 0
      %p989 = por %p987, %p988
      %p990 = scmp.ne.s32.totalorder %s978, %s979
      %p991 = scmp.eq.s32.totalorder %s129, 1
      %p992 = por %p990, %p991
      %p994 = scmp.ne.s32.totalorder %s979, %s993
      %p995 = scmp.eq.s32.totalorder %s129, 0
      %p996 = por %p994, %p995
      %s998 = sadd.s32 %s997, 1
      %p1001 = scmp.eq.s32.totalorder %s123, 1
      %p1002 = scmp.ne.s32.totalorder %s997, %s999
      %p1003 = scmp.eq.s32.totalorder %s123, 0
      %p1004 = por %p1002, %p1003
      %p1005 = scmp.ne.s32.totalorder %s997, %s999
      %p1006 = scmp.eq.s32.totalorder %s128, 1
      %p1007 = por %p1005, %p1006
      %p1008 = scmp.ne.s32.totalorder %s999, %s1000
      %p1009 = scmp.eq.s32.totalorder %s128, 0
      %p1010 = por %p1008, %p1009
      %p1011 = scmp.ne.s32.totalorder %s999, %s1000
      %p1012 = scmp.eq.s32.totalorder %s129, 1
      %p1013 = por %p1011, %p1012
      %p1015 = scmp.ne.s32.totalorder %s1000, %s1014
      %p1016 = scmp.eq.s32.totalorder %s129, 0
      %p1017 = por %p1015, %p1016
      %s1019 = sadd.s32 %s1018, 1
      %p1022 = scmp.eq.s32.totalorder %s123, 1
      %p1023 = scmp.ne.s32.totalorder %s1018, %s1020
      %p1024 = scmp.eq.s32.totalorder %s123, 0
      %p1025 = por %p1023, %p1024
      %p1026 = scmp.ne.s32.totalorder %s1018, %s1020
      %p1027 = scmp.eq.s32.totalorder %s128, 1
      %p1028 = por %p1026, %p1027
      %p1029 = scmp.ne.s32.totalorder %s1020, %s1021
      %p1030 = scmp.eq.s32.totalorder %s128, 0
      %p1031 = por %p1029, %p1030
      %p1032 = scmp.ne.s32.totalorder %s1020, %s1021
      %p1033 = scmp.eq.s32.totalorder %s129, 1
      %p1034 = por %p1032, %p1033
      %p1036 = scmp.ne.s32.totalorder %s1021, %s1035
      %p1037 = scmp.eq.s32.totalorder %s129, 0
      %p1038 = por %p1036, %p1037
      %s1040 = sadd.s32 %s1039, 1
      %p1043 = scmp.eq.s32.totalorder %s123, 1
      %p1044 = scmp.ne.s32.totalorder %s1039, %s1041
      %p1045 = scmp.eq.s32.totalorder %s123, 0
      %p1046 = por %p1044, %p1045
      %p1047 = scmp.ne.s32.totalorder %s1039, %s1041
      %p1048 = scmp.eq.s32.totalorder %s128, 1
      %p1049 = por %p1047, %p1048
      %p1050 = scmp.ne.s32.totalorder %s1041, %s1042
      %p1051 = scmp.eq.s32.totalorder %s128, 0
      %p1052 = por %p1050, %p1051
      %p1053 = scmp.ne.s32.totalorder %s1041, %s1042
      %p1054 = scmp.eq.s32.totalorder %s129, 1
      %p1055 = por %p1053, %p1054
      %p1057 = scmp.ne.s32.totalorder %s1042, %s1056
      %p1058 = scmp.eq.s32.totalorder %s129, 0
      %p1059 = por %p1057, %p1058
      %s1061 = sadd.s32 %s1060, 1
      %p1064 = scmp.eq.s32.totalorder %s123, 1
      %p1065 = scmp.ne.s32.totalorder %s1060, %s1062
      %p1066 = scmp.eq.s32.totalorder %s123, 0
      %p1067 = por %p1065, %p1066
      %p1068 = scmp.ne.s32.totalorder %s1060, %s1062
      %p1069 = scmp.eq.s32.totalorder %s128, 1
      %p1070 = por %p1068, %p1069
      %p1071 = scmp.ne.s32.totalorder %s1062, %s1063
      %p1072 = scmp.eq.s32.totalorder %s128, 0
      %p1073 = por %p1071, %p1072
      %p1074 = scmp.ne.s32.totalorder %s1062, %s1063
      %p1075 = scmp.eq.s32.totalorder %s129, 1
      %p1076 = por %p1074, %p1075
      %p1078 = scmp.ne.s32.totalorder %s1063, %s1077
      %p1079 = scmp.eq.s32.totalorder %s129, 0
      %p1080 = por %p1078, %p1079
      %s1082 = sadd.s32 %s1081, 1
      %p1085 = scmp.eq.s32.totalorder %s123, 1
      %p1086 = scmp.ne.s32.totalorder %s1081, %s1083
      %p1087 = scmp.eq.s32.totalorder %s123, 0
      %p1088 = por %p1086, %p1087
      %p1089 = scmp.ne.s32.totalorder %s1081, %s1083
      %p1090 = scmp.eq.s32.totalorder %s128, 1
      %p1091 = por %p1089, %p1090
      %p1092 = scmp.ne.s32.totalorder %s1083, %s1084
      %p1093 = scmp.eq.s32.totalorder %s128, 0
      %p1094 = por %p1092, %p1093
      %p1095 = scmp.ne.s32.totalorder %s1083, %s1084
      %p1096 = scmp.eq.s32.totalorder %s129, 1
      %p1097 = por %p1095, %p1096
      %p1099 = scmp.ne.s32.totalorder %s1084, %s1098
      %p1100 = scmp.eq.s32.totalorder %s129, 0
      %p1101 = por %p1099, %p1100
      %s1103 = sadd.s32 %s1102, 1
      %p1106 = scmp.eq.s32.totalorder %s123, 1
      %p1107 = scmp.ne.s32.totalorder %s1102, %s1104
      %p1108 = scmp.eq.s32.totalorder %s123, 0
      %p1109 = por %p1107, %p1108
      %p1110 = scmp.ne.s32.totalorder %s1102, %s1104
      %p1111 = scmp.eq.s32.totalorder %s128, 1
      %p1112 = por %p1110, %p1111
      %p1113 = scmp.ne.s32.totalorder %s1104, %s1105
      %p1114 = scmp.eq.s32.totalorder %s128, 0
      %p1115 = por %p1113, %p1114
      %p1116 = scmp.ne.s32.totalorder %s1104, %s1105
      %p1117 = scmp.eq.s32.totalorder %s129, 1
      %p1118 = por %p1116, %p1117
      %p1120 = scmp.ne.s32.totalorder %s1105, %s1119
      %p1121 = scmp.eq.s32.totalorder %s129, 0
      %p1122 = por %p1120, %p1121
      %s1123 = ssub.s32 %s123, %s130
      %p1124 = scmp.eq.s32.totalorder %s1123, 0
      %s1126 = sadd.s32 %s1125, 1
      %s1127 = scalar_select %p1124, %s1125, %s1126
      %p1130 = pneg %p1124
      %p1131 = scmp.eq.s32.totalorder %s123, 1
      %p1132 = por %p1130, %p1131
      %p1133 = scmp.ne.s32.totalorder %s1125, %s1128
      %p1134 = scmp.eq.s32.totalorder %s123, 0
      %p1135 = por %p1133, %p1134
      %p1136 = scmp.ne.s32.totalorder %s1125, %s1128
      %p1137 = scmp.eq.s32.totalorder %s128, 1
      %p1138 = por %p1136, %p1137
      %p1139 = scmp.ne.s32.totalorder %s1128, %s1129
      %p1140 = scmp.eq.s32.totalorder %s128, 0
      %p1141 = por %p1139, %p1140
      %p1142 = scmp.ne.s32.totalorder %s1128, %s1129
      %p1143 = scmp.eq.s32.totalorder %s129, 1
      %p1144 = por %p1142, %p1143
      %p1146 = scmp.ne.s32.totalorder %s1129, %s1145
      %p1147 = scmp.eq.s32.totalorder %s129, 0
      %p1148 = por %p1146, %p1147
      %p1149 = scmp.le.s32.totalorder 1, %s123
      %p1150 = scmp.lt.s32.totalorder %s123, 3
      %p1151 = pnand %p1149, %p1150
      %p1152 = pneg %p1151
      // Predicated region
      $region9: #{encoder_forward.1} parent=5 // pred_check
        _
      $region10: #{encoder_forward.1} parent=5 // pred_check_branch
        %1154 = sbr.rel (%p1151) target = $region12
      $region11: #{encoder_forward.1} parent=5 // pred_region
        %s1155 = ssub.s32 %s123, 1
        // Predicated region
        $region13: #{encoder_forward.1} parent=11 // pred_check
          %p1156 = pneg %p170
        $region14: #{encoder_forward.1} parent=11 // pred_check_branch
          %1158 = sbr.rel (%p1156) target = $region16
        $region15: #{encoder_forward.1} parent=11 // pred_region
          _
        $region16: #{encoder_forward.1} parent=11 // pred_fallthru
          _
        // Predicated region
        $region17: #{encoder_forward.1} parent=11 // pred_check
          %p1159 = pneg %p191
        $region18: #{encoder_forward.1} parent=11 // pred_check_branch
          %1161 = sbr.rel (%p1159) target = $region20
        $region19: #{encoder_forward.1} parent=11 // pred_region
          _
        $region20: #{encoder_forward.1} parent=11 // pred_fallthru
          _
        // Predicated region
        $region21: #{encoder_forward.1} parent=11 // pred_check
          %p1162 = pneg %p212
        $region22: #{encoder_forward.1} parent=11 // pred_check_branch
          %1164 = sbr.rel (%p1162) target = $region24
        $region23: #{encoder_forward.1} parent=11 // pred_region
          _
        $region24: #{encoder_forward.1} parent=11 // pred_fallthru
          _
        // Predicated region
        $region25: #{encoder_forward.1} parent=11 // pred_check
          %p1165 = pneg %p233
        $region26: #{encoder_forward.1} parent=11 // pred_check_branch
          %1167 = sbr.rel (%p1165) target = $region28
        $region27: #{encoder_forward.1} parent=11 // pred_region
          _
        $region28: #{encoder_forward.1} parent=11 // pred_fallthru
          _
        // Predicated region
        $region29: #{encoder_forward.1} parent=11 // pred_check
          %p1168 = pneg %p254
        $region30: #{encoder_forward.1} parent=11 // pred_check_branch
          %1170 = sbr.rel (%p1168) target = $region32
        $region31: #{encoder_forward.1} parent=11 // pred_region
          _
        $region32: #{encoder_forward.1} parent=11 // pred_fallthru
          _
        // Predicated region
        $region33: #{encoder_forward.1} parent=11 // pred_check
          %p1171 = pneg %p275
        $region34: #{encoder_forward.1} parent=11 // pred_check_branch
          %1173 = sbr.rel (%p1171) target = $region36
        $region35: #{encoder_forward.1} parent=11 // pred_region
          %s1175 = ssub.s32 64, 64
          %1176 = vsyncadd [#allocation6], %s1175
          %s1177 = sshll.u32 [#allocation5], 4
          %s1178 = int_to_ptr.vmem [resolvable:$true] %s1177
          %1183 = dma.hbm_to_vmem [thread:$0]  %s13, 64, %s1178, [#allocation6], 32, 32, 2
        $region36: #{encoder_forward.1} parent=11 // pred_fallthru
          _
        // Predicated region
        $region37: #{encoder_forward.1} parent=11 // pred_check
          %p1184 = pneg %p296
        $region38: #{encoder_forward.1} parent=11 // pred_check_branch
          %1186 = sbr.rel (%p1184) target = $region40
        $region39: #{encoder_forward.1} parent=11 // pred_region
          _
        $region40: #{encoder_forward.1} parent=11 // pred_fallthru
          _
        // Predicated region
        $region41: #{encoder_forward.1} parent=11 // pred_check
          %p1187 = pneg %p317
        $region42: #{encoder_forward.1} parent=11 // pred_check_branch
          %1189 = sbr.rel (%p1187) target = $region44
        $region43: #{encoder_forward.1} parent=11 // pred_region
          %s1191 = ssub.s32 32, 32
          %1192 = vsyncadd [#allocation6], %s1191
          %s1193 = sshll.u32 [#allocation7], 4
          %s1194 = int_to_ptr.vmem [resolvable:$true] %s1193
          %1199 = dma.hbm_to_vmem [thread:$0]  %s17, 32, %s1194, [#allocation6], 16, 16, 1
        $region44: #{encoder_forward.1} parent=11 // pred_fallthru
          _
        // Predicated region
        $region45: #{encoder_forward.1} parent=11 // pred_check
          %p1200 = pneg %p338
        $region46: #{encoder_forward.1} parent=11 // pred_check_branch
          %1202 = sbr.rel (%p1200) target = $region48
        $region47: #{encoder_forward.1} parent=11 // pred_region
          %s1204 = ssub.s32 32, 32
          %1205 = vsyncadd [#allocation9], %s1204
          %s1206 = sshll.u32 [#allocation8], 4
          %s1207 = int_to_ptr.vmem [resolvable:$true] %s1206
          %1212 = dma.hbm_to_vmem [thread:$0]  %s19, 32, %s1207, [#allocation9], 16, 16, 1
        $region48: #{encoder_forward.1} parent=11 // pred_fallthru
          _
        // Predicated region
        $region49: #{encoder_forward.1} parent=11 // pred_check
          %p1213 = pneg %p359
        $region50: #{encoder_forward.1} parent=11 // pred_check_branch
          %1215 = sbr.rel (%p1213) target = $region52
        $region51: #{encoder_forward.1} parent=11 // pred_region
          %s1217 = ssub.s32 32, 32
          %1218 = vsyncadd [#allocation9], %s1217
          %s1219 = sshll.u32 [#allocation10], 4
          %s1220 = int_to_ptr.vmem [resolvable:$true] %s1219
          %1225 = dma.hbm_to_vmem [thread:$0]  %s21, 32, %s1220, [#allocation9], 16, 16, 1
        $region52: #{encoder_forward.1} parent=11 // pred_fallthru
          _
        // Predicated region
        $region53: #{encoder_forward.1} parent=11 // pred_check
          %p1226 = pneg %p380
        $region54: #{encoder_forward.1} parent=11 // pred_check_branch
          %1228 = sbr.rel (%p1226) target = $region56
        $region55: #{encoder_forward.1} parent=11 // pred_region
          _
        $region56: #{encoder_forward.1} parent=11 // pred_fallthru
          _
        // Predicated region
        $region57: #{encoder_forward.1} parent=11 // pred_check
          %p1229 = pneg %p401
        $region58: #{encoder_forward.1} parent=11 // pred_check_branch
          %1231 = sbr.rel (%p1229) target = $region60
        $region59: #{encoder_forward.1} parent=11 // pred_region
          %s1233 = ssub.s32 32, 32
          %1234 = vsyncadd [#allocation12], %s1233
          %s1235 = sshll.u32 [#allocation11], 4
          %s1236 = int_to_ptr.vmem [resolvable:$true] %s1235
          %1241 = dma.hbm_to_vmem [thread:$0]  %s25, 32, %s1236, [#allocation12], 16, 16, 1
        $region60: #{encoder_forward.1} parent=11 // pred_fallthru
          _
        // Predicated region
        $region61: #{encoder_forward.1} parent=11 // pred_check
          %p1242 = pneg %p422
        $region62: #{encoder_forward.1} parent=11 // pred_check_branch
          %1244 = sbr.rel (%p1242) target = $region64
        $region63: #{encoder_forward.1} parent=11 // pred_region
          _
        $region64: #{encoder_forward.1} parent=11 // pred_fallthru
          _
        // Predicated region
        $region65: #{encoder_forward.1} parent=11 // pred_check
          %p1245 = pneg %p443
        $region66: #{encoder_forward.1} parent=11 // pred_check_branch
          %1247 = sbr.rel (%p1245) target = $region68
        $region67: #{encoder_forward.1} parent=11 // pred_region
          %s1249 = ssub.s32 32, 32
          %1250 = vsyncadd [#allocation12], %s1249
          %s1251 = sshll.u32 [#allocation13], 4
          %s1252 = int_to_ptr.vmem [resolvable:$true] %s1251
          %1257 = dma.hbm_to_vmem [thread:$0]  %s29, 32, %s1252, [#allocation12], 16, 16, 1
        $region68: #{encoder_forward.1} parent=11 // pred_fallthru
          _
        // Predicated region
        $region69: #{encoder_forward.1} parent=11 // pred_check
          %p1258 = pneg %p464
        $region70: #{encoder_forward.1} parent=11 // pred_check_branch
          %1260 = sbr.rel (%p1258) target = $region72
        $region71: #{encoder_forward.1} parent=11 // pred_region
          %s1262 = ssub.s32 32, 32
          %1263 = vsyncadd [#allocation15], %s1262
          %s1264 = sshll.u32 [#allocation14], 4
          %s1265 = int_to_ptr.vmem [resolvable:$true] %s1264
          %1270 = dma.hbm_to_vmem [thread:$0]  %s31, 32, %s1265, [#allocation15], 16, 16, 1
        $region72: #{encoder_forward.1} parent=11 // pred_fallthru
          _
        // Predicated region
        $region73: #{encoder_forward.1} parent=11 // pred_check
          %p1271 = pneg %p485
        $region74: #{encoder_forward.1} parent=11 // pred_check_branch
          %1273 = sbr.rel (%p1271) target = $region76
        $region75: #{encoder_forward.1} parent=11 // pred_region
          %s1275 = ssub.s32 32, 32
          %1276 = vsyncadd [#allocation15], %s1275
          %s1277 = sshll.u32 [#allocation16], 4
          %s1278 = int_to_ptr.vmem [resolvable:$true] %s1277
          %1283 = dma.hbm_to_vmem [thread:$0]  %s33, 32, %s1278, [#allocation15], 16, 16, 1
        $region76: #{encoder_forward.1} parent=11 // pred_fallthru
          _
        // Predicated region
        $region77: #{encoder_forward.1} parent=11 // pred_check
          %p1284 = pneg %p506
        $region78: #{encoder_forward.1} parent=11 // pred_check_branch
          %1286 = sbr.rel (%p1284) target = $region80
        $region79: #{encoder_forward.1} parent=11 // pred_region
          _
        $region80: #{encoder_forward.1} parent=11 // pred_fallthru
          _
        // Predicated region
        $region81: #{encoder_forward.1} parent=11 // pred_check
          %p1287 = pneg %p527
        $region82: #{encoder_forward.1} parent=11 // pred_check_branch
          %1289 = sbr.rel (%p1287) target = $region84
        $region83: #{encoder_forward.1} parent=11 // pred_region
          %s1291 = ssub.s32 16, 16
          %1292 = vsyncadd [#allocation18], %s1291
          %s1294 = sshll.u32 [#allocation17], 4
          %s1295 = int_to_ptr.vmem [resolvable:$true] %s1294
          %1297 = dma.hbm_to_vmem [thread:$0]  %s37, 16, %s1295, [#allocation18]
        $region84: #{encoder_forward.1} parent=11 // pred_fallthru
          _
        // Predicated region
        $region85: #{encoder_forward.1} parent=11 // pred_check
          %p1298 = pneg %p548
        $region86: #{encoder_forward.1} parent=11 // pred_check_branch
          %1300 = sbr.rel (%p1298) target = $region88
        $region87: #{encoder_forward.1} parent=11 // pred_region
          _
        $region88: #{encoder_forward.1} parent=11 // pred_fallthru
          _
        // Predicated region
        $region89: #{encoder_forward.1} parent=11 // pred_check
          %p1301 = pneg %p569
        $region90: #{encoder_forward.1} parent=11 // pred_check_branch
          %1303 = sbr.rel (%p1301) target = $region92
        $region91: #{encoder_forward.1} parent=11 // pred_region
          %s1305 = ssub.s32 32, 32
          %1306 = vsyncadd [#allocation18], %s1305
          %s1307 = sshll.u32 [#allocation19], 4
          %s1308 = int_to_ptr.vmem [resolvable:$true] %s1307
          %1313 = dma.hbm_to_vmem [thread:$0]  %s41, 32, %s1308, [#allocation18], 16, 16, 1
        $region92: #{encoder_forward.1} parent=11 // pred_fallthru
          _
        // Predicated region
        $region93: #{encoder_forward.1} parent=11 // pred_check
          %p1314 = pneg %p590
        $region94: #{encoder_forward.1} parent=11 // pred_check_branch
          %1316 = sbr.rel (%p1314) target = $region96
        $region95: #{encoder_forward.1} parent=11 // pred_region
          _
        $region96: #{encoder_forward.1} parent=11 // pred_fallthru
          _
        // Predicated region
        $region97: #{encoder_forward.1} parent=11 // pred_check
          %p1317 = pneg %p611
        $region98: #{encoder_forward.1} parent=11 // pred_check_branch
          %1319 = sbr.rel (%p1317) target = $region100
        $region99: #{encoder_forward.1} parent=11 // pred_region
          %s1321 = ssub.s32 32, 32
          %1322 = vsyncadd [#allocation21], %s1321
          %s1323 = sshll.u32 [#allocation20], 4
          %s1324 = int_to_ptr.vmem [resolvable:$true] %s1323
          %1329 = dma.hbm_to_vmem [thread:$0]  %s45, 32, %s1324, [#allocation21], 16, 16, 1
        $region100: #{encoder_forward.1} parent=11 // pred_fallthru
          _
        // Predicated region
        $region101: #{encoder_forward.1} parent=11 // pred_check
          %p1330 = pneg %p632
        $region102: #{encoder_forward.1} parent=11 // pred_check_branch
          %1332 = sbr.rel (%p1330) target = $region104
        $region103: #{encoder_forward.1} parent=11 // pred_region
          %s1334 = ssub.s32 32, 32
          %1335 = vsyncadd [#allocation21], %s1334
          %s1336 = sshll.u32 [#allocation22], 4
          %s1337 = int_to_ptr.vmem [resolvable:$true] %s1336
          %1342 = dma.hbm_to_vmem [thread:$0]  %s47, 32, %s1337, [#allocation21], 16, 16, 1
        $region104: #{encoder_forward.1} parent=11 // pred_fallthru
          _
        // Predicated region
        $region105: #{encoder_forward.1} parent=11 // pred_check
          %p1343 = pneg %p653
        $region106: #{encoder_forward.1} parent=11 // pred_check_branch
          %1345 = sbr.rel (%p1343) target = $region108
        $region107: #{encoder_forward.1} parent=11 // pred_region
          %s1347 = ssub.s32 32, 32
          %1348 = vsyncadd [#allocation24], %s1347
          %s1349 = sshll.u32 [#allocation23], 4
          %s1350 = int_to_ptr.vmem [resolvable:$true] %s1349
          %1355 = dma.hbm_to_vmem [thread:$0]  %s49, 32, %s1350, [#allocation24], 16, 16, 1
        $region108: #{encoder_forward.1} parent=11 // pred_fallthru
          _
        // Predicated region
        $region109: #{encoder_forward.1} parent=11 // pred_check
          %p1356 = pneg %p674
        $region110: #{encoder_forward.1} parent=11 // pred_check_branch
          %1358 = sbr.rel (%p1356) target = $region112
        $region111: #{encoder_forward.1} parent=11 // pred_region
          %s1360 = ssub.s32 512, 512
          %1361 = vsyncadd [#allocation24], %s1360
          %s1362 = sshll.u32 [#allocation25], 4
          %s1363 = int_to_ptr.vmem [resolvable:$true] %s1362
          %1368 = dma.hbm_to_vmem [thread:$0]  %s51, 512, %s1363, [#allocation24], 128, 128, 8
        $region112: #{encoder_forward.1} parent=11 // pred_fallthru
          _
        // Predicated region
        $region113: #{encoder_forward.1} parent=11 // pred_check
          %p1369 = pneg %p695
        $region114: #{encoder_forward.1} parent=11 // pred_check_branch
          %1371 = sbr.rel (%p1369) target = $region116
        $region115: #{encoder_forward.1} parent=11 // pred_region
          %s1373 = ssub.s32 32, 32
          %1374 = vsyncadd [#allocation27], %s1373
          %s1375 = sshll.u32 [#allocation26], 4
          %s1376 = int_to_ptr.vmem [resolvable:$true] %s1375
          %1381 = dma.hbm_to_vmem [thread:$0]  %s53, 32, %s1376, [#allocation27], 16, 16, 1
        $region116: #{encoder_forward.1} parent=11 // pred_fallthru
          _
        // Predicated region
        $region117: #{encoder_forward.1} parent=11 // pred_check
          %p1382 = pneg %p716
        $region118: #{encoder_forward.1} parent=11 // pred_check_branch
          %1384 = sbr.rel (%p1382) target = $region120
        $region119: #{encoder_forward.1} parent=11 // pred_region
          _
        $region120: #{encoder_forward.1} parent=11 // pred_fallthru
          _
        // Predicated region
        $region121: #{encoder_forward.1} parent=11 // pred_check
          %p1385 = pneg %p737
        $region122: #{encoder_forward.1} parent=11 // pred_check_branch
          %1387 = sbr.rel (%p1385) target = $region124
        $region123: #{encoder_forward.1} parent=11 // pred_region
          %s1389 = ssub.s32 32, 32
          %1390 = vsyncadd [#allocation27], %s1389
          %s1391 = sshll.u32 [#allocation28], 4
          %s1392 = int_to_ptr.vmem [resolvable:$true] %s1391
          %1397 = dma.hbm_to_vmem [thread:$0]  %s57, 32, %s1392, [#allocation27], 16, 16, 1
        $region124: #{encoder_forward.1} parent=11 // pred_fallthru
          _
        // Predicated region
        $region125: #{encoder_forward.1} parent=11 // pred_check
          %p1398 = pneg %p758
        $region126: #{encoder_forward.1} parent=11 // pred_check_branch
          %1400 = sbr.rel (%p1398) target = $region128
        $region127: #{encoder_forward.1} parent=11 // pred_region
          %s1402 = ssub.s32 32, 32
          %1403 = vsyncadd [#allocation30], %s1402
          %s1404 = sshll.u32 [#allocation29], 4
          %s1405 = int_to_ptr.vmem [resolvable:$true] %s1404
          %1410 = dma.hbm_to_vmem [thread:$0]  %s59, 32, %s1405, [#allocation30], 16, 16, 1
        $region128: #{encoder_forward.1} parent=11 // pred_fallthru
          _
        // Predicated region
        $region129: #{encoder_forward.1} parent=11 // pred_check
          %p1411 = pneg %p779
        $region130: #{encoder_forward.1} parent=11 // pred_check_branch
          %1413 = sbr.rel (%p1411) target = $region132
        $region131: #{encoder_forward.1} parent=11 // pred_region
          %s1415 = ssub.s32 32, 32
          %1416 = vsyncadd [#allocation30], %s1415
          %s1417 = sshll.u32 [#allocation31], 4
          %s1418 = int_to_ptr.vmem [resolvable:$true] %s1417
          %1423 = dma.hbm_to_vmem [thread:$0]  %s61, 32, %s1418, [#allocation30], 16, 16, 1
        $region132: #{encoder_forward.1} parent=11 // pred_fallthru
          _
        // Predicated region
        $region133: #{encoder_forward.1} parent=11 // pred_check
          %p1424 = pneg %p800
        $region134: #{encoder_forward.1} parent=11 // pred_check_branch
          %1426 = sbr.rel (%p1424) target = $region136
        $region135: #{encoder_forward.1} parent=11 // pred_region
          _
        $region136: #{encoder_forward.1} parent=11 // pred_fallthru
          _
        // Predicated region
        $region137: #{encoder_forward.1} parent=11 // pred_check
          %p1427 = pneg %p821
        $region138: #{encoder_forward.1} parent=11 // pred_check_branch
          %1429 = sbr.rel (%p1427) target = $region140
        $region139: #{encoder_forward.1} parent=11 // pred_region
          %s1431 = ssub.s32 16, 16
          %1432 = vsyncadd [#allocation33], %s1431
          %s1434 = sshll.u32 [#allocation32], 4
          %s1435 = int_to_ptr.vmem [resolvable:$true] %s1434
          %1437 = dma.hbm_to_vmem [thread:$0]  %s65, 16, %s1435, [#allocation33]
        $region140: #{encoder_forward.1} parent=11 // pred_fallthru
          _
        // Predicated region
        $region141: #{encoder_forward.1} parent=11 // pred_check
          %p1438 = pneg %p842
        $region142: #{encoder_forward.1} parent=11 // pred_check_branch
          %1440 = sbr.rel (%p1438) target = $region144
        $region143: #{encoder_forward.1} parent=11 // pred_region
          %s1442 = ssub.s32 128, 128
          %1443 = vsyncadd [#allocation33], %s1442
          %s1444 = sshll.u32 [#allocation34], 4
          %s1445 = int_to_ptr.vmem [resolvable:$true] %s1444
          %1450 = dma.hbm_to_vmem [thread:$0]  %s67, 128, %s1445, [#allocation33], 64, 64, 4
        $region144: #{encoder_forward.1} parent=11 // pred_fallthru
          _
        // Predicated region
        $region145: #{encoder_forward.1} parent=11 // pred_check
          %p1451 = pneg %p863
        $region146: #{encoder_forward.1} parent=11 // pred_check_branch
          %1453 = sbr.rel (%p1451) target = $region148
        $region147: #{encoder_forward.1} parent=11 // pred_region
          %s1455 = ssub.s32 32, 32
          %1456 = vsyncadd [#allocation36], %s1455
          %s1457 = sshll.u32 [#allocation35], 4
          %s1458 = int_to_ptr.vmem [resolvable:$true] %s1457
          %1463 = dma.hbm_to_vmem [thread:$0]  %s69, 32, %s1458, [#allocation36], 16, 16, 1
        $region148: #{encoder_forward.1} parent=11 // pred_fallthru
          _
        // Predicated region
        $region149: #{encoder_forward.1} parent=11 // pred_check
          %p1464 = pneg %p884
        $region150: #{encoder_forward.1} parent=11 // pred_check_branch
          %1466 = sbr.rel (%p1464) target = $region152
        $region151: #{encoder_forward.1} parent=11 // pred_region
          %s1468 = ssub.s32 128, 128
          %1469 = vsyncadd [#allocation36], %s1468
          %s1470 = sshll.u32 [#allocation37], 4
          %s1471 = int_to_ptr.vmem [resolvable:$true] %s1470
          %1476 = dma.hbm_to_vmem [thread:$0]  %s71, 128, %s1471, [#allocation36], 64, 64, 4
        $region152: #{encoder_forward.1} parent=11 // pred_fallthru
          _
        // Predicated region
        $region153: #{encoder_forward.1} parent=11 // pred_check
          %p1477 = pneg %p905
        $region154: #{encoder_forward.1} parent=11 // pred_check_branch
          %1479 = sbr.rel (%p1477) target = $region156
        $region155: #{encoder_forward.1} parent=11 // pred_region
          %s1481 = ssub.s32 32, 32
          %1482 = vsyncadd [#allocation39], %s1481
          %s1483 = sshll.u32 [#allocation38], 4
          %s1484 = int_to_ptr.vmem [resolvable:$true] %s1483
          %1489 = dma.hbm_to_vmem [thread:$0]  %s73, 32, %s1484, [#allocation39], 16, 16, 1
        $region156: #{encoder_forward.1} parent=11 // pred_fallthru
          _
        // Predicated region
        $region157: #{encoder_forward.1} parent=11 // pred_check
          %p1490 = pneg %p926
        $region158: #{encoder_forward.1} parent=11 // pred_check_branch
          %1492 = sbr.rel (%p1490) target = $region160
        $region159: #{encoder_forward.1} parent=11 // pred_region
          %s1494 = ssub.s32 32, 32
          %1495 = vsyncadd [#allocation39], %s1494
          %s1496 = sshll.u32 [#allocation40], 4
          %s1497 = int_to_ptr.vmem [resolvable:$true] %s1496
          %1502 = dma.hbm_to_vmem [thread:$0]  %s75, 32, %s1497, [#allocation39], 16, 16, 1
        $region160: #{encoder_forward.1} parent=11 // pred_fallthru
          _
        // Predicated region
        $region161: #{encoder_forward.1} parent=11 // pred_check
          %p1503 = pneg %p947
        $region162: #{encoder_forward.1} parent=11 // pred_check_branch
          %1505 = sbr.rel (%p1503) target = $region164
        $region163: #{encoder_forward.1} parent=11 // pred_region
          %s1507 = ssub.s32 32, 32
          %1508 = vsyncadd [#allocation42], %s1507
          %s1509 = sshll.u32 [#allocation41], 4
          %s1510 = int_to_ptr.vmem [resolvable:$true] %s1509
          %1515 = dma.hbm_to_vmem [thread:$0]  %s77, 32, %s1510, [#allocation42], 16, 16, 1
        $region164: #{encoder_forward.1} parent=11 // pred_fallthru
          _
        // Predicated region
        $region165: #{encoder_forward.1} parent=11 // pred_check
          %p1516 = pneg %p968
        $region166: #{encoder_forward.1} parent=11 // pred_check_branch
          %1518 = sbr.rel (%p1516) target = $region168
        $region167: #{encoder_forward.1} parent=11 // pred_region
          %s1520 = ssub.s32 128, 128
          %1521 = vsyncadd [#allocation42], %s1520
          %s1522 = sshll.u32 [#allocation43], 4
          %s1523 = int_to_ptr.vmem [resolvable:$true] %s1522
          %1528 = dma.hbm_to_vmem [thread:$0]  %s79, 128, %s1523, [#allocation42], 64, 64, 4
        $region168: #{encoder_forward.1} parent=11 // pred_fallthru
          _
        // Predicated region
        $region169: #{encoder_forward.1} parent=11 // pred_check
          %p1529 = pneg %p989
        $region170: #{encoder_forward.1} parent=11 // pred_check_branch
          %1531 = sbr.rel (%p1529) target = $region172
        $region171: #{encoder_forward.1} parent=11 // pred_region
          %s1533 = ssub.s32 32, 32
          %1534 = vsyncadd [#allocation45], %s1533
          %s1535 = sshll.u32 [#allocation44], 4
          %s1536 = int_to_ptr.vmem [resolvable:$true] %s1535
          %1541 = dma.hbm_to_vmem [thread:$0]  %s81, 32, %s1536, [#allocation45], 16, 16, 1
        $region172: #{encoder_forward.1} parent=11 // pred_fallthru
          _
        // Predicated region
        $region173: #{encoder_forward.1} parent=11 // pred_check
          %p1542 = pneg %p1010
        $region174: #{encoder_forward.1} parent=11 // pred_check_branch
          %1544 = sbr.rel (%p1542) target = $region176
        $region175: #{encoder_forward.1} parent=11 // pred_region
          _
        $region176: #{encoder_forward.1} parent=11 // pred_fallthru
          _
        // Predicated region
        $region177: #{encoder_forward.1} parent=11 // pred_check
          %p1545 = pneg %p1031
        $region178: #{encoder_forward.1} parent=11 // pred_check_branch
          %1547 = sbr.rel (%p1545) target = $region180
        $region179: #{encoder_forward.1} parent=11 // pred_region
          %s1549 = ssub.s32 32, 32
          %1550 = vsyncadd [#allocation45], %s1549
          %s1551 = sshll.u32 [#allocation46], 4
          %s1552 = int_to_ptr.vmem [resolvable:$true] %s1551
          %1557 = dma.hbm_to_vmem [thread:$0]  %s85, 32, %s1552, [#allocation45], 16, 16, 1
        $region180: #{encoder_forward.1} parent=11 // pred_fallthru
          _
        // Predicated region
        $region181: #{encoder_forward.1} parent=11 // pred_check
          %p1558 = pneg %p1052
        $region182: #{encoder_forward.1} parent=11 // pred_check_branch
          %1560 = sbr.rel (%p1558) target = $region184
        $region183: #{encoder_forward.1} parent=11 // pred_region
          %s1562 = ssub.s32 32, 32
          %1563 = vsyncadd [#allocation48], %s1562
          %s1564 = sshll.u32 [#allocation47], 4
          %s1565 = int_to_ptr.vmem [resolvable:$true] %s1564
          %1570 = dma.hbm_to_vmem [thread:$0]  %s87, 32, %s1565, [#allocation48], 16, 16, 1
        $region184: #{encoder_forward.1} parent=11 // pred_fallthru
          _
        // Predicated region
        $region185: #{encoder_forward.1} parent=11 // pred_check
          %p1571 = pneg %p1073
        $region186: #{encoder_forward.1} parent=11 // pred_check_branch
          %1573 = sbr.rel (%p1571) target = $region188
        $region187: #{encoder_forward.1} parent=11 // pred_region
          %s1575 = ssub.s32 32, 32
          %1576 = vsyncadd [#allocation48], %s1575
          %s1577 = sshll.u32 [#allocation49], 4
          %s1578 = int_to_ptr.vmem [resolvable:$true] %s1577
          %1583 = dma.hbm_to_vmem [thread:$0]  %s89, 32, %s1578, [#allocation48], 16, 16, 1
        $region188: #{encoder_forward.1} parent=11 // pred_fallthru
          _
        // Predicated region
        $region189: #{encoder_forward.1} parent=11 // pred_check
          %p1584 = pneg %p1094
        $region190: #{encoder_forward.1} parent=11 // pred_check_branch
          %1586 = sbr.rel (%p1584) target = $region192
        $region191: #{encoder_forward.1} parent=11 // pred_region
          %s1588 = ssub.s32 64, 64
          %1589 = vsyncadd [#allocation51], %s1588
          %s1591 = sshll.u32 [#allocation50], 4
          %s1592 = int_to_ptr.vmem [resolvable:$true] %s1591
          %1594 = dma.hbm_to_vmem [thread:$0]  %s91, 64, %s1592, [#allocation51]
        $region192: #{encoder_forward.1} parent=11 // pred_fallthru
          _
        // Predicated region
        $region193: #{encoder_forward.1} parent=11 // pred_check
          %p1595 = pneg %p1115
        $region194: #{encoder_forward.1} parent=11 // pred_check_branch
          %1597 = sbr.rel (%p1595) target = $region196
        $region195: #{encoder_forward.1} parent=11 // pred_region
          %s1599 = ssub.s32 16, 16
          %1600 = vsyncadd [#allocation51], %s1599
          %s1602 = sshll.u32 [#allocation52], 4
          %s1603 = int_to_ptr.vmem [resolvable:$true] %s1602
          %1605 = dma.hbm_to_vmem [thread:$0]  %s93, 16, %s1603, [#allocation51]
        $region196: #{encoder_forward.1} parent=11 // pred_fallthru
          _
      $region12: #{encoder_forward.1} parent=5 // pred_fallthru
        _
      %p1606 = scmp.lt.s32.totalorder %s123, 2
      // Predicated region
      $region197: #{encoder_forward.1} parent=5 // pred_check
        %p1607 = pneg %p1606
      $region198: #{encoder_forward.1} parent=5 // pred_check_branch
        %1609 = sbr.rel (%p1607) target = $region200
      $region199: #{encoder_forward.1} parent=5 // pred_region
        // Predicated region
        $region201: #{encoder_forward.1} parent=199 // pred_check
          %p1610 = pneg %p143
        $region202: #{encoder_forward.1} parent=199 // pred_check_branch
          %1612 = sbr.rel (%p1610) target = $region204
        $region203: #{encoder_forward.1} parent=199 // pred_region
          %s1613 = sand.u32 %s133, 1
          %s1614 = scalar_lea.sflag [#allocation3], %s1613
          %s1615 = sand.u32 %s133, 1
          %s1616 = smul.addr %s1615, 16
          %s1617 = scalar_lea.vmem [#allocation2], %s1616
          %s1618 = smul.u32 2, %s123
          %s1620 = ssub.s32 256, 256
          %1621 = vsyncadd %s1614, %s1620
          %s1622 = smul.addr %s1618, 128
          %s1623 = scalar_lea.hbm %s1, %s1622
          %s1624 = sshll.u32 %s1617, 4
          %s1625 = int_to_ptr.vmem [resolvable:$true] %s1624
          %1630 = dma.hbm_to_vmem [thread:$0]  %s1623, 256, %s1625, %s1614, 128, 128, 8
        $region204: #{encoder_forward.1} parent=199 // pred_fallthru
          _
      $region200: #{encoder_forward.1} parent=5 // pred_fallthru
        _
      %p1631 = scmp.le.s32.totalorder 1, %s123
      %p1632 = scmp.lt.s32.totalorder %s123, 3
      %p1633 = pnand %p1631, %p1632
      %p1634 = pneg %p1633
      // Predicated region
      $region205: #{encoder_forward.1} parent=5 // pred_check
        _
      $region206: #{encoder_forward.1} parent=5 // pred_check_branch
        %1636 = sbr.rel (%p1633) target = $region208
      $region207: #{encoder_forward.1} parent=5 // pred_region
        %s1637 = ssub.s32 %s123, 1
        %s1638 = sand.u32 %s136, 1
        %s1639 = scalar_lea.sflag [#allocation3], %s1638
        %s1640 = sand.u32 %s136, 1
        %s1641 = smul.addr %s1640, 16
        %s1642 = scalar_lea.vmem [#allocation2], %s1641
        // Predicated region
        $region209: #{encoder_forward.1} parent=207 // pred_check
          %p1643 = pneg %p149
        $region210: #{encoder_forward.1} parent=207 // pred_check_branch
          %1645 = sbr.rel (%p1643) target = $region212
        $region211: #{encoder_forward.1} parent=207 // pred_region
          %1646 = dma.done %s1639, 256
        $region212: #{encoder_forward.1} parent=207 // pred_fallthru
          _
        // Predicated region
        $region213: #{encoder_forward.1} parent=207 // pred_check
          %p1647 = pneg %p275
        $region214: #{encoder_forward.1} parent=207 // pred_check_branch
          %1649 = sbr.rel (%p1647) target = $region216
        $region215: #{encoder_forward.1} parent=207 // pred_region
          %1650 = dma.done [#allocation6], 64
        $region216: #{encoder_forward.1} parent=207 // pred_fallthru
          _
        // Predicated region
        $region217: #{encoder_forward.1} parent=207 // pred_check
          %p1651 = pneg %p317
        $region218: #{encoder_forward.1} parent=207 // pred_check_branch
          %1653 = sbr.rel (%p1651) target = $region220
        $region219: #{encoder_forward.1} parent=207 // pred_region
          %1654 = dma.done [#allocation6], 32
        $region220: #{encoder_forward.1} parent=207 // pred_fallthru
          _
        // Predicated region
        $region221: #{encoder_forward.1} parent=207 // pred_check
          %p1655 = pneg %p338
        $region222: #{encoder_forward.1} parent=207 // pred_check_branch
          %1657 = sbr.rel (%p1655) target = $region224
        $region223: #{encoder_forward.1} parent=207 // pred_region
          %1658 = dma.done [#allocation9], 32
        $region224: #{encoder_forward.1} parent=207 // pred_fallthru
          _
        // Predicated region
        $region225: #{encoder_forward.1} parent=207 // pred_check
          %p1659 = pneg %p359
        $region226: #{encoder_forward.1} parent=207 // pred_check_branch
          %1661 = sbr.rel (%p1659) target = $region228
        $region227: #{encoder_forward.1} parent=207 // pred_region
          %1662 = dma.done [#allocation9], 32
        $region228: #{encoder_forward.1} parent=207 // pred_fallthru
          _
        // Predicated region
        $region229: #{encoder_forward.1} parent=207 // pred_check
          %p1663 = pneg %p401
        $region230: #{encoder_forward.1} parent=207 // pred_check_branch
          %1665 = sbr.rel (%p1663) target = $region232
        $region231: #{encoder_forward.1} parent=207 // pred_region
          %1666 = dma.done [#allocation12], 32
        $region232: #{encoder_forward.1} parent=207 // pred_fallthru
          _
        // Predicated region
        $region233: #{encoder_forward.1} parent=207 // pred_check
          %p1667 = pneg %p443
        $region234: #{encoder_forward.1} parent=207 // pred_check_branch
          %1669 = sbr.rel (%p1667) target = $region236
        $region235: #{encoder_forward.1} parent=207 // pred_region
          %1670 = dma.done [#allocation12], 32
        $region236: #{encoder_forward.1} parent=207 // pred_fallthru
          _
        // Predicated region
        $region237: #{encoder_forward.1} parent=207 // pred_check
          %p1671 = pneg %p464
        $region238: #{encoder_forward.1} parent=207 // pred_check_branch
          %1673 = sbr.rel (%p1671) target = $region240
        $region239: #{encoder_forward.1} parent=207 // pred_region
          %1674 = dma.done [#allocation15], 32
        $region240: #{encoder_forward.1} parent=207 // pred_fallthru
          _
        // Predicated region
        $region241: #{encoder_forward.1} parent=207 // pred_check
          %p1675 = pneg %p485
        $region242: #{encoder_forward.1} parent=207 // pred_check_branch
          %1677 = sbr.rel (%p1675) target = $region244
        $region243: #{encoder_forward.1} parent=207 // pred_region
          %1678 = dma.done [#allocation15], 32
        $region244: #{encoder_forward.1} parent=207 // pred_fallthru
          _
        // Predicated region
        $region245: #{encoder_forward.1} parent=207 // pred_check
          %p1679 = pneg %p527
        $region246: #{encoder_forward.1} parent=207 // pred_check_branch
          %1681 = sbr.rel (%p1679) target = $region248
        $region247: #{encoder_forward.1} parent=207 // pred_region
          %1682 = dma.done [#allocation18], 16
        $region248: #{encoder_forward.1} parent=207 // pred_fallthru
          _
        // Predicated region
        $region249: #{encoder_forward.1} parent=207 // pred_check
          %p1683 = pneg %p569
        $region250: #{encoder_forward.1} parent=207 // pred_check_branch
          %1685 = sbr.rel (%p1683) target = $region252
        $region251: #{encoder_forward.1} parent=207 // pred_region
          %1686 = dma.done [#allocation18], 32
        $region252: #{encoder_forward.1} parent=207 // pred_fallthru
          _
        // Predicated region
        $region253: #{encoder_forward.1} parent=207 // pred_check
          %p1687 = pneg %p611
        $region254: #{encoder_forward.1} parent=207 // pred_check_branch
          %1689 = sbr.rel (%p1687) target = $region256
        $region255: #{encoder_forward.1} parent=207 // pred_region
          %1690 = dma.done [#allocation21], 32
        $region256: #{encoder_forward.1} parent=207 // pred_fallthru
          _
        // Predicated region
        $region257: #{encoder_forward.1} parent=207 // pred_check
          %p1691 = pneg %p632
        $region258: #{encoder_forward.1} parent=207 // pred_check_branch
          %1693 = sbr.rel (%p1691) target = $region260
        $region259: #{encoder_forward.1} parent=207 // pred_region
          %1694 = dma.done [#allocation21], 32
        $region260: #{encoder_forward.1} parent=207 // pred_fallthru
          _
        // Predicated region
        $region261: #{encoder_forward.1} parent=207 // pred_check
          %p1695 = pneg %p653
        $region262: #{encoder_forward.1} parent=207 // pred_check_branch
          %1697 = sbr.rel (%p1695) target = $region264
        $region263: #{encoder_forward.1} parent=207 // pred_region
          %1698 = dma.done [#allocation24], 32
        $region264: #{encoder_forward.1} parent=207 // pred_fallthru
          _
        // Predicated region
        $region265: #{encoder_forward.1} parent=207 // pred_check
          %p1699 = pneg %p674
        $region266: #{encoder_forward.1} parent=207 // pred_check_branch
          %1701 = sbr.rel (%p1699) target = $region268
        $region267: #{encoder_forward.1} parent=207 // pred_region
          %1702 = dma.done [#allocation24], 512
        $region268: #{encoder_forward.1} parent=207 // pred_fallthru
          _
        // Predicated region
        $region269: #{encoder_forward.1} parent=207 // pred_check
          %p1703 = pneg %p695
        $region270: #{encoder_forward.1} parent=207 // pred_check_branch
          %1705 = sbr.rel (%p1703) target = $region272
        $region271: #{encoder_forward.1} parent=207 // pred_region
          %1706 = dma.done [#allocation27], 32
        $region272: #{encoder_forward.1} parent=207 // pred_fallthru
          _
        // Predicated region
        $region273: #{encoder_forward.1} parent=207 // pred_check
          %p1707 = pneg %p737
        $region274: #{encoder_forward.1} parent=207 // pred_check_branch
          %1709 = sbr.rel (%p1707) target = $region276
        $region275: #{encoder_forward.1} parent=207 // pred_region
          %1710 = dma.done [#allocation27], 32
        $region276: #{encoder_forward.1} parent=207 // pred_fallthru
          _
        // Predicated region
        $region277: #{encoder_forward.1} parent=207 // pred_check
          %p1711 = pneg %p758
        $region278: #{encoder_forward.1} parent=207 // pred_check_branch
          %1713 = sbr.rel (%p1711) target = $region280
        $region279: #{encoder_forward.1} parent=207 // pred_region
          %1714 = dma.done [#allocation30], 32
        $region280: #{encoder_forward.1} parent=207 // pred_fallthru
          _
        // Predicated region
        $region281: #{encoder_forward.1} parent=207 // pred_check
          %p1715 = pneg %p779
        $region282: #{encoder_forward.1} parent=207 // pred_check_branch
          %1717 = sbr.rel (%p1715) target = $region284
        $region283: #{encoder_forward.1} parent=207 // pred_region
          %1718 = dma.done [#allocation30], 32
        $region284: #{encoder_forward.1} parent=207 // pred_fallthru
          _
        // Predicated region
        $region285: #{encoder_forward.1} parent=207 // pred_check
          %p1719 = pneg %p821
        $region286: #{encoder_forward.1} parent=207 // pred_check_branch
          %1721 = sbr.rel (%p1719) target = $region288
        $region287: #{encoder_forward.1} parent=207 // pred_region
          %1722 = dma.done [#allocation33], 16
        $region288: #{encoder_forward.1} parent=207 // pred_fallthru
          _
        // Predicated region
        $region289: #{encoder_forward.1} parent=207 // pred_check
          %p1723 = pneg %p842
        $region290: #{encoder_forward.1} parent=207 // pred_check_branch
          %1725 = sbr.rel (%p1723) target = $region292
        $region291: #{encoder_forward.1} parent=207 // pred_region
          %1726 = dma.done [#allocation33], 128
        $region292: #{encoder_forward.1} parent=207 // pred_fallthru
          _
        // Predicated region
        $region293: #{encoder_forward.1} parent=207 // pred_check
          %p1727 = pneg %p863
        $region294: #{encoder_forward.1} parent=207 // pred_check_branch
          %1729 = sbr.rel (%p1727) target = $region296
        $region295: #{encoder_forward.1} parent=207 // pred_region
          %1730 = dma.done [#allocation36], 32
        $region296: #{encoder_forward.1} parent=207 // pred_fallthru
          _
        // Predicated region
        $region297: #{encoder_forward.1} parent=207 // pred_check
          %p1731 = pneg %p884
        $region298: #{encoder_forward.1} parent=207 // pred_check_branch
          %1733 = sbr.rel (%p1731) target = $region300
        $region299: #{encoder_forward.1} parent=207 // pred_region
          %1734 = dma.done [#allocation36], 128
        $region300: #{encoder_forward.1} parent=207 // pred_fallthru
          _
        // Predicated region
        $region301: #{encoder_forward.1} parent=207 // pred_check
          %p1735 = pneg %p905
        $region302: #{encoder_forward.1} parent=207 // pred_check_branch
          %1737 = sbr.rel (%p1735) target = $region304
        $region303: #{encoder_forward.1} parent=207 // pred_region
          %1738 = dma.done [#allocation39], 32
        $region304: #{encoder_forward.1} parent=207 // pred_fallthru
          _
        // Predicated region
        $region305: #{encoder_forward.1} parent=207 // pred_check
          %p1739 = pneg %p926
        $region306: #{encoder_forward.1} parent=207 // pred_check_branch
          %1741 = sbr.rel (%p1739) target = $region308
        $region307: #{encoder_forward.1} parent=207 // pred_region
          %1742 = dma.done [#allocation39], 32
        $region308: #{encoder_forward.1} parent=207 // pred_fallthru
          _
        // Predicated region
        $region309: #{encoder_forward.1} parent=207 // pred_check
          %p1743 = pneg %p947
        $region310: #{encoder_forward.1} parent=207 // pred_check_branch
          %1745 = sbr.rel (%p1743) target = $region312
        $region311: #{encoder_forward.1} parent=207 // pred_region
          %1746 = dma.done [#allocation42], 32
        $region312: #{encoder_forward.1} parent=207 // pred_fallthru
          _
        // Predicated region
        $region313: #{encoder_forward.1} parent=207 // pred_check
          %p1747 = pneg %p968
        $region314: #{encoder_forward.1} parent=207 // pred_check_branch
          %1749 = sbr.rel (%p1747) target = $region316
        $region315: #{encoder_forward.1} parent=207 // pred_region
          %1750 = dma.done [#allocation42], 128
        $region316: #{encoder_forward.1} parent=207 // pred_fallthru
          _
        // Predicated region
        $region317: #{encoder_forward.1} parent=207 // pred_check
          %p1751 = pneg %p989
        $region318: #{encoder_forward.1} parent=207 // pred_check_branch
          %1753 = sbr.rel (%p1751) target = $region320
        $region319: #{encoder_forward.1} parent=207 // pred_region
          %1754 = dma.done [#allocation45], 32
        $region320: #{encoder_forward.1} parent=207 // pred_fallthru
          _
        // Predicated region
        $region321: #{encoder_forward.1} parent=207 // pred_check
          %p1755 = pneg %p1031
        $region322: #{encoder_forward.1} parent=207 // pred_check_branch
          %1757 = sbr.rel (%p1755) target = $region324
        $region323: #{encoder_forward.1} parent=207 // pred_region
          %1758 = dma.done [#allocation45], 32
        $region324: #{encoder_forward.1} parent=207 // pred_fallthru
          _
        // Predicated region
        $region325: #{encoder_forward.1} parent=207 // pred_check
          %p1759 = pneg %p1052
        $region326: #{encoder_forward.1} parent=207 // pred_check_branch
          %1761 = sbr.rel (%p1759) target = $region328
        $region327: #{encoder_forward.1} parent=207 // pred_region
          %1762 = dma.done [#allocation48], 32
        $region328: #{encoder_forward.1} parent=207 // pred_fallthru
          _
        // Predicated region
        $region329: #{encoder_forward.1} parent=207 // pred_check
          %p1763 = pneg %p1073
        $region330: #{encoder_forward.1} parent=207 // pred_check_branch
          %1765 = sbr.rel (%p1763) target = $region332
        $region331: #{encoder_forward.1} parent=207 // pred_region
          %1766 = dma.done [#allocation48], 32
        $region332: #{encoder_forward.1} parent=207 // pred_fallthru
          _
        // Predicated region
        $region333: #{encoder_forward.1} parent=207 // pred_check
          %p1767 = pneg %p1094
        $region334: #{encoder_forward.1} parent=207 // pred_check_branch
          %1769 = sbr.rel (%p1767) target = $region336
        $region335: #{encoder_forward.1} parent=207 // pred_region
          %1770 = dma.done [#allocation51], 64
        $region336: #{encoder_forward.1} parent=207 // pred_fallthru
          _
        // Predicated region
        $region337: #{encoder_forward.1} parent=207 // pred_check
          %p1771 = pneg %p1115
        $region338: #{encoder_forward.1} parent=207 // pred_check_branch
          %1773 = sbr.rel (%p1771) target = $region340
        $region339: #{encoder_forward.1} parent=207 // pred_region
          %1774 = dma.done [#allocation51], 16
        $region340: #{encoder_forward.1} parent=207 // pred_fallthru
          _
        %s1775 = sand.u32 %s136, 1
        %s1776 = scalar_lea.sflag [#allocation3], %s1775
        %s1777 = sand.u32 %s136, 1
        %s1778 = smul.addr %s1777, 16
        %s1779 = scalar_lea.vmem [#allocation2], %s1778
        %p1780 = pneg %p149
        %p1781 = pneg %p146
        %p1782 = pneg %p170
        %p1783 = pneg %p167
        %p1784 = pneg %p191
        %p1785 = pneg %p188
        %p1786 = pneg %p212
        %p1787 = pneg %p209
        %p1788 = pneg %p233
        %p1789 = pneg %p230
        %p1790 = pneg %p254
        %p1791 = pneg %p251
        %p1792 = pneg %p275
        %p1793 = pneg %p272
        %p1794 = pneg %p296
        %p1795 = pneg %p293
        %p1796 = pneg %p317
        %p1797 = pneg %p314
        %p1798 = pneg %p338
        %p1799 = pneg %p335
        %p1800 = pneg %p359
        %p1801 = pneg %p356
        %p1802 = pneg %p380
        %p1803 = pneg %p377
        %p1804 = pneg %p401
        %p1805 = pneg %p398
        %p1806 = pneg %p422
        %p1807 = pneg %p419
        %p1808 = pneg %p443
        %p1809 = pneg %p440
        %p1810 = pneg %p464
        %p1811 = pneg %p461
        %p1812 = pneg %p485
        %p1813 = pneg %p482
        %p1814 = pneg %p506
        %p1815 = pneg %p503
        %p1816 = pneg %p527
        %p1817 = pneg %p524
        %p1818 = pneg %p548
        %p1819 = pneg %p545
        %p1820 = pneg %p569
        %p1821 = pneg %p566
        %p1822 = pneg %p590
        %p1823 = pneg %p587
        %p1824 = pneg %p611
        %p1825 = pneg %p608
        %p1826 = pneg %p632
        %p1827 = pneg %p629
        %p1828 = pneg %p653
        %p1829 = pneg %p650
        %p1830 = pneg %p674
        %p1831 = pneg %p671
        %p1832 = pneg %p695
        %p1833 = pneg %p692
        %p1834 = pneg %p716
        %p1835 = pneg %p713
        %p1836 = pneg %p737
        %p1837 = pneg %p734
        %p1838 = pneg %p758
        %p1839 = pneg %p755
        %p1840 = pneg %p779
        %p1841 = pneg %p776
        %p1842 = pneg %p800
        %p1843 = pneg %p797
        %p1844 = pneg %p821
        %p1845 = pneg %p818
        %p1846 = pneg %p842
        %p1847 = pneg %p839
        %p1848 = pneg %p863
        %p1849 = pneg %p860
        %p1850 = pneg %p884
        %p1851 = pneg %p881
        %p1852 = pneg %p905
        %p1853 = pneg %p902
        %p1854 = pneg %p926
        %p1855 = pneg %p923
        %p1856 = pneg %p947
        %p1857 = pneg %p944
        %p1858 = pneg %p968
        %p1859 = pneg %p965
        %p1860 = pneg %p989
        %p1861 = pneg %p986
        %p1862 = pneg %p1010
        %p1863 = pneg %p1007
        %p1864 = pneg %p1031
        %p1865 = pneg %p1028
        %p1866 = pneg %p1052
        %p1867 = pneg %p1049
        %p1868 = pneg %p1073
        %p1869 = pneg %p1070
        %p1870 = pneg %p1094
        %p1871 = pneg %p1091
        %p1872 = pneg %p1115
        %p1873 = pneg %p1112
        %p1874 = pneg %p1141
        %p1875 = pneg %p1138
        %s1876 = sand.u32 %s1128, 1
        %s1877 = scalar_lea.sflag [#allocation4], %s1876
        %s1878 = sand.u32 %s1128, 1
        %s1879 = smul.addr %s1878, 2
        %s1880 = scalar_lea.vmem [#allocation53], %s1879
        %s1881 = smul.u32 2, %s128
        %v1883 = vld [vmem:[%s1642] sm:$0xff]
        %v1884 = vld [vmem:[%s1642 + $0x8] sm:$0xff]
        %v1885 = vld [vmem:[%s3] sm:$0xff]
        %v1886 = vld [vmem:[%s5] sm:$0x1]
        %v1888 = vlaneseq
        %v1889 = vshrl.u32 %v1888, 7
        %v1890 = vsub.s32 0, %v1889
        %v1891 = vrot.slane %v1886, %v1890
        %vm1893 = vcmask 64512
        %v1895 = vsel %vm1893, %v1883, 0
        %v1898 = vsel %vm1893, %v1884, 0
        %1900 = vmatprep.subr.mxu0 0.0
        %1901 = vmatpush1.msra.mxu0 0.0
        %1902 = vmatprep.subr.mxu0 0.0
        %1903 = vmatpush1.msra.mxu0 0.0
        %1904 = vmatprep.subr.mxu0 0.0
        %1905 = vmatpush1.msra.mxu0 0.0
        %1906 = vmatprep.subr.mxu0 0.0
        %1907 = vmatpush1.msra.mxu0 0.0
        %1908 = vmatprep.subr.mxu0 0.0
        %1909 = vmatpush1.msra.mxu0 0.0
        %1910 = vmatprep.subr.mxu0 0.0
        %1911 = vmatpush1.msra.mxu0 0.0
        %1912 = vmatprep.subr.mxu0 0.0
        %1913 = vmatpush1.msra.mxu0 0.0
        %1914 = vmatprep.subr.mxu0 0.0
        %1915 = vmatpush1.msra.mxu0 0.0
        %1916 = vmatprep.subr.mxu0 0.0
        %1917 = vmatpush1.msra.mxu0 0.0
        %1918 = vmatprep.subr.mxu0 0.0
        %1919 = vmatpush1.msra.mxu0 0.0
        %1920 = vmatprep.subr.mxu0 0.0
        %1921 = vmatpush1.msra.mxu0 0.0
        %1922 = vmatprep.subr.mxu0 0.0
        %1923 = vmatpush1.msra.mxu0 0.0
        %1924 = vmatprep.subr.mxu0 0.0
        %1925 = vmatpush1.msra.mxu0 0.0
        %1926 = vmatprep.subr.mxu0 0.0
        %1927 = vmatpush1.msra.mxu0 0.0
        %1928 = vmatprep.subr.mxu0 0.0
        %1929 = vmatpush1.msra.mxu0 0.0
        %1930 = vmatprep.subr.mxu0 0.0
        %1931 = vmatpush1.msra.mxu0 %v1885
        %1932 = vmatprep.subr.mxu0 0.0
        %1933 = vmatpush2.msra.mxu0 0.0
        %1934 = vmatprep.subr.mxu0 0.0
        %1935 = vmatpush2.msra.mxu0 0.0
        %1936 = vmatprep.subr.mxu0 0.0
        %1937 = vmatpush2.msra.mxu0 0.0
        %1938 = vmatprep.subr.mxu0 0.0
        %1939 = vmatpush2.msra.mxu0 0.0
        %1940 = vmatprep.subr.mxu0 0.0
        %1941 = vmatpush2.msra.mxu0 0.0
        %1942 = vmatprep.subr.mxu0 0.0
        %1943 = vmatpush2.msra.mxu0 0.0
        %1944 = vmatprep.subr.mxu0 0.0
        %1945 = vmatpush2.msra.mxu0 0.0
        %1946 = vmatprep.subr.mxu0 0.0
        %1947 = vmatpush2.msra.mxu0 0.0
        %1948 = vmatprep.subr.mxu0 0.0
        %1949 = vmatpush2.msra.mxu0 0.0
        %1950 = vmatprep.subr.mxu0 0.0
        %1951 = vmatpush2.msra.mxu0 0.0
        %1952 = vmatprep.subr.mxu0 0.0
        %1953 = vmatpush2.msra.mxu0 0.0
        %1954 = vmatprep.subr.mxu0 0.0
        %1955 = vmatpush2.msra.mxu0 0.0
        %1956 = vmatprep.subr.mxu0 0.0
        %1957 = vmatpush2.msra.mxu0 0.0
        %1958 = vmatprep.subr.mxu0 0.0
        %1959 = vmatpush2.msra.mxu0 0.0
        %1960 = vmatprep.subr.mxu0 0.0
        %1961 = vmatpush2.msra.mxu0 0.0
        %1962 = vmatprep.subr.mxu0 0.0
        %1963 = vmatpush2.msra.mxu0 0.0
        %1964 = vmatprep.mubr.f32.mxu0 0.0
        %1965 = vmatmul.mubr.f32.gmra.mxu0 %v1895
        %v1966 = vpop.f32.mrf.mxu0
        %v1967 = vadd.f32 %v1891, %v1966
        %v1968 = vpop.f32.mrf.mxu0
        %1969 = vmatprep.mubr.f32.mxu0 0.0
        %1970 = vmatmul.mubr.f32.gmra.mxu0 %v1898
        %v1971 = vpop.f32.mrf.mxu0
        %v1972 = vadd.f32 %v1891, %v1971
        %v1973 = vpop.f32.mrf.mxu0
        %1974 = vdwg.mxu0
        %vm1975 = vcmask 523264
        %v1976 = vsel %vm1975, %v1967, 0.0
        %1977 = vadd.xlane.f32.xlu0 %v1976
        %v1978 = vpop.xlane.xlu0 %1977
        %v1979 = vsel %vm1975, %v1972, 0.0
        %1980 = vadd.xlane.f32.xlu0 %v1979
        %v1981 = vpop.xlane.xlu0 %1980
        %v1982 = vrcp.pop 64.0
        %v1983 = vmul.f32 %v1978, %v1982
        %v1984 = vmul.f32 %v1981, %v1982
        %v1985 = vrot.slane %v1983, 4
        %v1986 = vadd.f32 %v1983, %v1985
        %v1987 = vrot.slane %v1986, 2
        %v1988 = vadd.f32 %v1986, %v1987
        %v1989 = vrot.slane %v1988, 1
        %v1990 = vadd.f32 %v1988, %v1989
        %v1991 = vrot.slane %v1984, 4
        %v1992 = vadd.f32 %v1984, %v1991
        %v1993 = vrot.slane %v1992, 2
        %v1994 = vadd.f32 %v1992, %v1993
        %v1995 = vrot.slane %v1994, 1
        %v1996 = vadd.f32 %v1994, %v1995
        %v1997 = vrcp.pop 8.0
        %v1998 = vmul.f32 %v1990, %v1997
        %v1999 = vmul.f32 %v1996, %v1997
        %v2000 = vsub.f32 %v1967, %v1998
        %v2001 = vsub.f32 %v1972, %v1999
        %v2002 = vmul.f32 %v2000, %v2000
        %v2003 = vmul.f32 %v2001, %v2001
        %v2004 = vsel %vm1975, %v2002, 0.0
        %2005 = vadd.xlane.f32.xlu0 %v2004
        %v2006 = vpop.xlane.xlu0 %2005
        %v2007 = vsel %vm1975, %v2003, 0.0
        %2008 = vadd.xlane.f32.xlu0 %v2007
        %v2009 = vpop.xlane.xlu0 %2008
        %v2010 = vmul.f32 %v2006, %v1982
        %v2011 = vmul.f32 %v2009, %v1982
        %v2012 = vrot.slane %v2010, 4
        %v2013 = vadd.f32 %v2010, %v2012
        %v2014 = vrot.slane %v2013, 2
        %v2015 = vadd.f32 %v2013, %v2014
        %v2016 = vrot.slane %v2015, 1
        %v2017 = vadd.f32 %v2015, %v2016
        %v2018 = vrot.slane %v2011, 4
        %v2019 = vadd.f32 %v2011, %v2018
        %v2020 = vrot.slane %v2019, 2
        %v2021 = vadd.f32 %v2019, %v2020
        %v2022 = vrot.slane %v2021, 1
        %v2023 = vadd.f32 %v2021, %v2022
        %v2024 = vmul.f32 %v2017, %v1997
        %v2025 = vmul.f32 %v2023, %v1997
        %v2026 = vadd.f32 %v2024, 1e-05
        %v2027 = vadd.f32 %v2025, 1e-05
        %v2028 = vrsqrt.pop %v2026
        %v2029 = vrsqrt.pop %v2027
        %v2030 = vmul.f32 %v2000, %v2028
        %v2031 = vmul.f32 %v2001, %v2029
        %v2032 = vld [vmem:[%s7] sm:$0xff]
        %v2033 = vmul.f32 %v2030, %v2032
        %v2034 = vmul.f32 %v2031, %v2032
        %v2035 = vld [vmem:[%s9] sm:$0xff]
        %v2036 = vadd.f32 %v2033, %v2035
        %v2037 = vadd.f32 %v2034, %v2035
        %v2038 = vlaneseq
        %v2039 = vshrl.u32 %v2038, 7
        %v2040 = vadd.s32 %v2039, 8
        %v2041 = vadd.s32 %v2039, 16
        %v2042 = vadd.s32 %v2039, 24
        %v2043 = vadd.s32 %v2039, 32
        %v2044 = vadd.s32 %v2039, 40
        %v2045 = vadd.s32 %v2039, 48
        %v2046 = vadd.s32 %v2039, 56
        %v2047 = vlaneseq
        %v2048 = vand.u32 %v2047, 127
        %v2049 = vmul.u32 %v2048, 16
        %vm2050 = vcmp.ge.s32.totalorder %v2039, %v2049
        %vm2051 = vcmp.ge.s32.totalorder %v2040, %v2049
        %vm2052 = vcmp.ge.s32.totalorder %v2041, %v2049
        %vm2053 = vcmp.ge.s32.totalorder %v2042, %v2049
        %vm2054 = vcmp.ge.s32.totalorder %v2043, %v2049
        %vm2055 = vcmp.ge.s32.totalorder %v2044, %v2049
        %vm2056 = vcmp.ge.s32.totalorder %v2045, %v2049
        %vm2057 = vcmp.ge.s32.totalorder %v2046, %v2049
        %v2058 = vadd.s32 %v2049, 16
        %vm2059 = vcmp.lt.s32.totalorder %v2039, %v2058
        %vm2060 = vcmp.lt.s32.totalorder %v2040, %v2058
        %vm2061 = vcmp.lt.s32.totalorder %v2041, %v2058
        %vm2062 = vcmp.lt.s32.totalorder %v2042, %v2058
        %vm2063 = vcmp.lt.s32.totalorder %v2043, %v2058
        %vm2064 = vcmp.lt.s32.totalorder %v2044, %v2058
        %vm2065 = vcmp.lt.s32.totalorder %v2045, %v2058
        %vm2066 = vcmp.lt.s32.totalorder %v2046, %v2058
        %vm2067 = vmand %vm2050, %vm2059
        %vm2068 = vmand %vm2051, %vm2060
        %vm2069 = vmand %vm2052, %vm2061
        %vm2070 = vmand %vm2053, %vm2062
        %vm2071 = vmand %vm2054, %vm2063
        %vm2072 = vmand %vm2055, %vm2064
        %vm2073 = vmand %vm2056, %vm2065
        %vm2074 = vmand %vm2057, %vm2066
        %v2075 = vsel %vm2067, 1.0, 0.0
        %v2076 = vsel %vm2068, 1.0, 0.0
        %v2077 = vsel %vm2069, 1.0, 0.0
        %v2078 = vsel %vm2070, 1.0, 0.0
        %v2079 = vsel %vm2071, 1.0, 0.0
        %v2080 = vsel %vm2072, 1.0, 0.0
        %v2081 = vsel %vm2073, 1.0, 0.0
        %v2082 = vsel %vm2074, 1.0, 0.0
        %v2083 = vmul.u32 %v2039, 16
        %vm2084 = vcmp.ge.s32.totalorder %v2048, %v2083
        %v2085 = vadd.s32 %v2083, 16
        %vm2086 = vcmp.lt.s32.totalorder %v2048, %v2085
        %vm2087 = vmand %vm2084, %vm2086
        %v2088 = vsel %vm2087, 1.0, 0.0
        loop: start=0, step=1, limit=2
        $region341: #{encoder_forward.1} parent=207 // loop_pre_header
          _
        $region342: #{encoder_forward.1} parent=207 // loop_header
          %s2090 = sphi 0, %s2094
          %p2091 = scmp.ge.s32.totalorder %s2090, 2
          %v2095 = vphi %v2036, %v3690
          %v2096 = vphi %v2037, %v3691
        $region343: #{encoder_forward.1} parent=207 // loop_header_branch
          %2093 = sbr.rel (%p2091) target = $region347
        $region344: #{encoder_forward.1} parent=207 // loop_body
          %s2097 = smul.u32 %s2090, 16
          %s2098 = smul.addr %s2097, 4
          %s2099 = scalar_lea.vmem %s11, %s2098
          %v2100 = vld [vmem:[%s2099] sm:$0xff]
          %v2101 = vld [vmem:[%s2099 + $0x8] sm:$0xff]
          %v2102 = vld [vmem:[%s2099 + $0x10] sm:$0xff]
          %v2103 = vld [vmem:[%s2099 + $0x18] sm:$0xff]
          %v2104 = vld [vmem:[%s2099 + $0x20] sm:$0xff]
          %v2105 = vld [vmem:[%s2099 + $0x28] sm:$0xff]
          %v2106 = vld [vmem:[%s2099 + $0x30] sm:$0xff]
          %v2107 = vld [vmem:[%s2099 + $0x38] sm:$0xff]
          %s2108 = smul.u32 %s2090, 2
          %s2109 = scalar_lea.vmem [#allocation5], %s2108
          %v2110 = vld [vmem:[%s2109] sm:$0x3]
          %s2111 = smul.u32 %s2090, 8
          %s2112 = smul.addr %s2111, 4
          %s2113 = scalar_lea.vmem %s15, %s2112
          %v2114 = vld [vmem:[%s2113] sm:$0xf]
          %v2115 = vld [vmem:[%s2113 + $0x4] sm:$0xf]
          %v2116 = vld [vmem:[%s2113 + $0x8] sm:$0xf]
          %v2117 = vld [vmem:[%s2113 + $0xc] sm:$0xf]
          %v2118 = vld [vmem:[%s2113 + $0x10] sm:$0xf]
          %v2119 = vld [vmem:[%s2113 + $0x14] sm:$0xf]
          %v2120 = vld [vmem:[%s2113 + $0x18] sm:$0xf]
          %v2121 = vld [vmem:[%s2113 + $0x1c] sm:$0xf]
          %s2122 = scalar_lea.vmem [#allocation7], %s2090
          %v2123 = vld [vmem:[%s2122] sm:$0x1]
          %s2124 = scalar_lea.vmem [#allocation8], %s2090
          %v2125 = vld [vmem:[%s2124] sm:$0x1]
          %s2126 = scalar_lea.vmem [#allocation10], %s2090
          %v2127 = vld [vmem:[%s2126] sm:$0x1]
          %s2128 = smul.addr %s2111, 4
          %s2129 = scalar_lea.vmem %s23, %s2128
          %v2130 = vld [vmem:[%s2129] sm:$0xf]
          %v2131 = vld [vmem:[%s2129 + $0x4] sm:$0xf]
          %v2132 = vld [vmem:[%s2129 + $0x8] sm:$0xf]
          %v2133 = vld [vmem:[%s2129 + $0xc] sm:$0xf]
          %v2134 = vld [vmem:[%s2129 + $0x10] sm:$0xf]
          %v2135 = vld [vmem:[%s2129 + $0x14] sm:$0xf]
          %v2136 = vld [vmem:[%s2129 + $0x18] sm:$0xf]
          %v2137 = vld [vmem:[%s2129 + $0x1c] sm:$0xf]
          %s2138 = scalar_lea.vmem [#allocation11], %s2090
          %v2139 = vld [vmem:[%s2138] sm:$0x1]
          %s2140 = smul.addr %s2097, 4
          %s2141 = scalar_lea.vmem %s27, %s2140
          %v2142 = vld [vmem:[%s2141] sm:$0xf]
          %v2143 = vld [vmem:[%s2141 + $0x4] sm:$0xf]
          %v2144 = vld [vmem:[%s2141 + $0x8] sm:$0xf]
          %v2145 = vld [vmem:[%s2141 + $0xc] sm:$0xf]
          %v2146 = vld [vmem:[%s2141 + $0x10] sm:$0xf]
          %v2147 = vld [vmem:[%s2141 + $0x14] sm:$0xf]
          %v2148 = vld [vmem:[%s2141 + $0x18] sm:$0xf]
          %v2149 = vld [vmem:[%s2141 + $0x1c] sm:$0xf]
          %v2150 = vld [vmem:[%s2141 + $0x20] sm:$0xf]
          %v2151 = vld [vmem:[%s2141 + $0x24] sm:$0xf]
          %v2152 = vld [vmem:[%s2141 + $0x28] sm:$0xf]
          %v2153 = vld [vmem:[%s2141 + $0x2c] sm:$0xf]
          %v2154 = vld [vmem:[%s2141 + $0x30] sm:$0xf]
          %v2155 = vld [vmem:[%s2141 + $0x34] sm:$0xf]
          %v2156 = vld [vmem:[%s2141 + $0x38] sm:$0xf]
          %v2157 = vld [vmem:[%s2141 + $0x3c] sm:$0xf]
          %s2158 = scalar_lea.vmem [#allocation13], %s2090
          %v2159 = vld [vmem:[%s2158] sm:$0x1]
          %s2160 = scalar_lea.vmem [#allocation14], %s2090
          %v2161 = vld [vmem:[%s2160] sm:$0x1]
          %s2162 = scalar_lea.vmem [#allocation16], %s2090
          %v2163 = vld [vmem:[%s2162] sm:$0x1]
          %v2164 = vpack.c.bf16 %v2096, %v2095
          %v2166 = vlaneseq
          %v2167 = vshrl.u32 %v2166, 7
          %v2168 = vsub.s32 0, %v2167
          %v2169 = vrot.slane %v2110, %v2168
          %v2170 = vlaneseq
          %v2171 = vshrl.u32 %v2170, 7
          %v2172 = vsub.s32 1, %v2171
          %v2173 = vrot.slane %v2110, %v2172
          %v2184 = vunpack.c.l.b16 %v2100
          %v2185 = vunpack.c.h.b16 %v2100
          %v2186 = vunpack.c.l.b16 %v2101
          %v2187 = vunpack.c.h.b16 %v2101
          %v2188 = vunpack.c.l.b16 %v2102
          %v2189 = vunpack.c.h.b16 %v2102
          %v2190 = vunpack.c.l.b16 %v2103
          %v2191 = vunpack.c.h.b16 %v2103
          %v2192 = vunpack.c.l.b16 %v2104
          %v2193 = vunpack.c.h.b16 %v2104
          %v2194 = vunpack.c.l.b16 %v2105
          %v2195 = vunpack.c.h.b16 %v2105
          %v2196 = vunpack.c.l.b16 %v2106
          %v2197 = vunpack.c.h.b16 %v2106
          %v2198 = vunpack.c.l.b16 %v2107
          %v2199 = vunpack.c.h.b16 %v2107
          %v2200 = vpack.c.b16 %v2186, %v2184
          %v2201 = vpack.c.b16 %v2187, %v2185
          %v2202 = vpack.c.b16 %v2190, %v2188
          %v2203 = vpack.c.b16 %v2191, %v2189
          %v2204 = vpack.c.b16 %v2194, %v2192
          %v2205 = vpack.c.b16 %v2195, %v2193
          %v2206 = vpack.c.b16 %v2198, %v2196
          %v2207 = vpack.c.b16 %v2199, %v2197
          %v2217 = vsel %vm1975, %v2164, 0
          %2219 = vmatprep.subr.bf16.mxu0 0
          %2220 = vmatpush1.bf16.msra.mxu0 0
          %2221 = vmatprep.subr.bf16.mxu0 0
          %2222 = vmatpush1.bf16.msra.mxu0 0
          %2223 = vmatprep.subr.bf16.mxu0 0
          %2224 = vmatpush1.bf16.msra.mxu0 0
          %2225 = vmatprep.subr.bf16.mxu0 0
          %2226 = vmatpush1.bf16.msra.mxu0 0
          %2227 = vmatprep.subr.bf16.mxu0 %v2207
          %2228 = vmatpush1.bf16.msra.mxu0 %v2206
          %2229 = vmatprep.subr.bf16.mxu0 %v2205
          %2230 = vmatpush1.bf16.msra.mxu0 %v2204
          %2231 = vmatprep.subr.bf16.mxu0 %v2203
          %2232 = vmatpush1.bf16.msra.mxu0 %v2202
          %2233 = vmatprep.subr.bf16.mxu0 %v2201
          %2234 = vmatpush1.bf16.msra.mxu0 %v2200
          %2235 = vmatprep.subr.bf16.mxu0 0
          %2236 = vmatpush2.bf16.msra.mxu0 0
          %2237 = vmatprep.subr.bf16.mxu0 0
          %2238 = vmatpush2.bf16.msra.mxu0 0
          %2239 = vmatprep.subr.bf16.mxu0 0
          %2240 = vmatpush2.bf16.msra.mxu0 0
          %2241 = vmatprep.subr.bf16.mxu0 0
          %2242 = vmatpush2.bf16.msra.mxu0 0
          %2243 = vmatprep.subr.bf16.mxu0 0
          %2244 = vmatpush2.bf16.msra.mxu0 0
          %2245 = vmatprep.subr.bf16.mxu0 0
          %2246 = vmatpush2.bf16.msra.mxu0 0
          %2247 = vmatprep.subr.bf16.mxu0 0
          %2248 = vmatpush2.bf16.msra.mxu0 0
          %2249 = vmatprep.subr.bf16.mxu0 0
          %2250 = vmatpush2.bf16.msra.mxu0 0
          %2251 = vmatprep.mubr.bf16.mxu0 0
          %2252 = vmatmul.mubr.bf16.gmra.mxu0 %v2217
          %v2253 = vpop.f32.mrf.mxu0
          %v2254 = vadd.f32 %v2169, %v2253
          %v2255 = vpop.f32.mrf.mxu0
          %v2256 = vadd.f32 %v2173, %v2255
          %v2257 = vpop.f32.mrf.mxu0
          %v2258 = vadd.f32 %v2169, %v2257
          %v2259 = vpop.f32.mrf.mxu0
          %v2260 = vadd.f32 %v2173, %v2259
          %2261 = vdwg.mxu0
          %v2264 = vcombine.high %v2254, %v2254
          %v2266 = vunpack.c.l.s4 1966171168
          %v2267 = vunpack.c.0.s8 %v2266
          %v2268 = vlaneseq
          %v2269 = vshrl.u32 %v2268, 7
          %v2270 = vsub.s32 %v2267, %v2269
          %v2271 = vrot.slane %v2254, %v2270
          %v2273 = vunpack.c.l.s4 1966171168
          %v2274 = vunpack.c.0.s8 %v2273
          %v2275 = vlaneseq
          %v2276 = vshrl.u32 %v2275, 7
          %v2277 = vsub.s32 %v2274, %v2276
          %v2278 = vrot.slane %v2264, %v2277
          %v2279 = vcombine.high %v2271, %v2271
          %v2280 = vcombine.high %v2278, %v2278
          %v2282 = vunpack.c.l.s4 1966171168
          %v2283 = vunpack.c.0.s8 %v2282
          %v2284 = vlaneseq
          %v2285 = vshrl.u32 %v2284, 7
          %v2286 = vsub.s32 %v2283, %v2285
          %v2287 = vrot.slane %v2271, %v2286
          %v2289 = vunpack.c.l.s4 1966171168
          %v2290 = vunpack.c.0.s8 %v2289
          %v2291 = vlaneseq
          %v2292 = vshrl.u32 %v2291, 7
          %v2293 = vsub.s32 %v2290, %v2292
          %v2294 = vrot.slane %v2278, %v2293
          %v2296 = vunpack.c.l.s4 1966171168
          %v2297 = vunpack.c.0.s8 %v2296
          %v2298 = vlaneseq
          %v2299 = vshrl.u32 %v2298, 7
          %v2300 = vsub.s32 %v2297, %v2299
          %v2301 = vrot.slane %v2279, %v2300
          %v2303 = vunpack.c.l.s4 1966171168
          %v2304 = vunpack.c.0.s8 %v2303
          %v2305 = vlaneseq
          %v2306 = vshrl.u32 %v2305, 7
          %v2307 = vsub.s32 %v2304, %v2306
          %v2308 = vrot.slane %v2280, %v2307
          %v2309 = vcombine.high %v2287, %v2287
          %v2310 = vcombine.high %v2294, %v2294
          %v2311 = vcombine.high %v2301, %v2301
          %v2312 = vcombine.high %v2308, %v2308
          %v2313 = vcombine.high %v2258, %v2258
          %v2315 = vunpack.c.l.s4 1966171168
          %v2316 = vunpack.c.0.s8 %v2315
          %v2317 = vlaneseq
          %v2318 = vshrl.u32 %v2317, 7
          %v2319 = vsub.s32 %v2316, %v2318
          %v2320 = vrot.slane %v2258, %v2319
          %v2322 = vunpack.c.l.s4 1966171168
          %v2323 = vunpack.c.0.s8 %v2322
          %v2324 = vlaneseq
          %v2325 = vshrl.u32 %v2324, 7
          %v2326 = vsub.s32 %v2323, %v2325
          %v2327 = vrot.slane %v2313, %v2326
          %v2328 = vcombine.high %v2320, %v2320
          %v2329 = vcombine.high %v2327, %v2327
          %v2331 = vunpack.c.l.s4 1966171168
          %v2332 = vunpack.c.0.s8 %v2331
          %v2333 = vlaneseq
          %v2334 = vshrl.u32 %v2333, 7
          %v2335 = vsub.s32 %v2332, %v2334
          %v2336 = vrot.slane %v2320, %v2335
          %v2338 = vunpack.c.l.s4 1966171168
          %v2339 = vunpack.c.0.s8 %v2338
          %v2340 = vlaneseq
          %v2341 = vshrl.u32 %v2340, 7
          %v2342 = vsub.s32 %v2339, %v2341
          %v2343 = vrot.slane %v2327, %v2342
          %v2345 = vunpack.c.l.s4 1966171168
          %v2346 = vunpack.c.0.s8 %v2345
          %v2347 = vlaneseq
          %v2348 = vshrl.u32 %v2347, 7
          %v2349 = vsub.s32 %v2346, %v2348
          %v2350 = vrot.slane %v2328, %v2349
          %v2352 = vunpack.c.l.s4 1966171168
          %v2353 = vunpack.c.0.s8 %v2352
          %v2354 = vlaneseq
          %v2355 = vshrl.u32 %v2354, 7
          %v2356 = vsub.s32 %v2353, %v2355
          %v2357 = vrot.slane %v2329, %v2356
          %v2358 = vcombine.high %v2336, %v2336
          %v2359 = vcombine.high %v2343, %v2343
          %v2360 = vcombine.high %v2350, %v2350
          %v2361 = vcombine.high %v2357, %v2357
          %v2362 = vlaneseq
          %v2363 = vshrl.u32 %v2362, 7
          %v2364 = vsub.s32 0, %v2363
          %v2365 = vrot.slane %v2287, %v2364
          %v2366 = vlaneseq
          %v2367 = vshrl.u32 %v2366, 7
          %v2368 = vsub.s32 0, %v2367
          %v2369 = vrot.slane %v2301, %v2368
          %v2370 = vlaneseq
          %v2371 = vshrl.u32 %v2370, 7
          %v2372 = vsub.s32 0, %v2371
          %v2373 = vrot.slane %v2309, %v2372
          %v2374 = vlaneseq
          %v2375 = vshrl.u32 %v2374, 7
          %v2376 = vsub.s32 0, %v2375
          %v2377 = vrot.slane %v2311, %v2376
          %v2378 = vlaneseq
          %v2379 = vshrl.u32 %v2378, 7
          %v2380 = vsub.s32 0, %v2379
          %v2381 = vrot.slane %v2294, %v2380
          %v2382 = vlaneseq
          %v2383 = vshrl.u32 %v2382, 7
          %v2384 = vsub.s32 0, %v2383
          %v2385 = vrot.slane %v2308, %v2384
          %v2386 = vlaneseq
          %v2387 = vshrl.u32 %v2386, 7
          %v2388 = vsub.s32 0, %v2387
          %v2389 = vrot.slane %v2310, %v2388
          %v2390 = vlaneseq
          %v2391 = vshrl.u32 %v2390, 7
          %v2392 = vsub.s32 0, %v2391
          %v2393 = vrot.slane %v2312, %v2392
          %v2394 = vlaneseq
          %v2395 = vshrl.u32 %v2394, 7
          %v2396 = vsub.s32 0, %v2395
          %v2397 = vrot.slane %v2336, %v2396
          %v2398 = vlaneseq
          %v2399 = vshrl.u32 %v2398, 7
          %v2400 = vsub.s32 0, %v2399
          %v2401 = vrot.slane %v2350, %v2400
          %v2402 = vlaneseq
          %v2403 = vshrl.u32 %v2402, 7
          %v2404 = vsub.s32 0, %v2403
          %v2405 = vrot.slane %v2358, %v2404
          %v2406 = vlaneseq
          %v2407 = vshrl.u32 %v2406, 7
          %v2408 = vsub.s32 0, %v2407
          %v2409 = vrot.slane %v2360, %v2408
          %v2410 = vlaneseq
          %v2411 = vshrl.u32 %v2410, 7
          %v2412 = vsub.s32 0, %v2411
          %v2413 = vrot.slane %v2343, %v2412
          %v2414 = vlaneseq
          %v2415 = vshrl.u32 %v2414, 7
          %v2416 = vsub.s32 0, %v2415
          %v2417 = vrot.slane %v2357, %v2416
          %v2418 = vlaneseq
          %v2419 = vshrl.u32 %v2418, 7
          %v2420 = vsub.s32 0, %v2419
          %v2421 = vrot.slane %v2359, %v2420
          %v2422 = vlaneseq
          %v2423 = vshrl.u32 %v2422, 7
          %v2424 = vsub.s32 0, %v2423
          %v2425 = vrot.slane %v2361, %v2424
          %2442 = vrot.lane.b32.xlu0 %v2254, 64
          %v2443 = vpop.permute.xlu0 %2442
          %2444 = vrot.lane.b32.xlu0 %v2258, 64
          %v2445 = vpop.permute.xlu0 %2444
          %v2448 = vmul.f32 %v2365, %v2443
          %v2449 = vmul.f32 %v2369, %v2443
          %v2450 = vmul.f32 %v2373, %v2443
          %v2451 = vmul.f32 %v2377, %v2443
          %v2452 = vmul.f32 %v2381, %v2443
          %v2453 = vmul.f32 %v2385, %v2443
          %v2454 = vmul.f32 %v2389, %v2443
          %v2455 = vmul.f32 %v2393, %v2443
          %v2456 = vmul.f32 %v2397, %v2445
          %v2457 = vmul.f32 %v2401, %v2445
          %v2458 = vmul.f32 %v2405, %v2445
          %v2459 = vmul.f32 %v2409, %v2445
          %v2460 = vmul.f32 %v2413, %v2445
          %v2461 = vmul.f32 %v2417, %v2445
          %v2462 = vmul.f32 %v2421, %v2445
          %v2463 = vmul.f32 %v2425, %v2445
          %v2465 = vsel %vm1975, %v2448, 0
          %v2468 = vsel %vm1975, %v2449, 0
          %v2471 = vsel %vm1975, %v2450, 0
          %v2474 = vsel %vm1975, %v2451, 0
          %v2477 = vsel %vm1975, %v2452, 0
          %v2480 = vsel %vm1975, %v2453, 0
          %v2483 = vsel %vm1975, %v2454, 0
          %v2486 = vsel %vm1975, %v2455, 0
          %v2489 = vsel %vm1975, %v2456, 0
          %v2492 = vsel %vm1975, %v2457, 0
          %v2495 = vsel %vm1975, %v2458, 0
          %v2498 = vsel %vm1975, %v2459, 0
          %v2501 = vsel %vm1975, %v2460, 0
          %v2504 = vsel %vm1975, %v2461, 0
          %v2507 = vsel %vm1975, %v2462, 0
          %v2510 = vsel %vm1975, %v2463, 0
          %2512 = vmatprep.subr.mxu0 0.0
          %2513 = vmatpush1.msra.mxu0 0.0
          %2514 = vmatprep.subr.mxu0 0.0
          %2515 = vmatpush1.msra.mxu0 0.0
          %2516 = vmatprep.subr.mxu0 0.0
          %2517 = vmatpush1.msra.mxu0 0.0
          %2518 = vmatprep.subr.mxu0 0.0
          %2519 = vmatpush1.msra.mxu0 0.0
          %2520 = vmatprep.subr.mxu0 0.0
          %2521 = vmatpush1.msra.mxu0 0.0
          %2522 = vmatprep.subr.mxu0 0.0
          %2523 = vmatpush1.msra.mxu0 0.0
          %2524 = vmatprep.subr.mxu0 0.0
          %2525 = vmatpush1.msra.mxu0 0.0
          %2526 = vmatprep.subr.mxu0 0.0
          %2527 = vmatpush1.msra.mxu0 0.0
          %2528 = vmatprep.subr.mxu0 0.0
          %2529 = vmatpush1.msra.mxu0 %v2082
          %2530 = vmatprep.subr.mxu0 0.0
          %2531 = vmatpush1.msra.mxu0 %v2081
          %2532 = vmatprep.subr.mxu0 0.0
          %2533 = vmatpush1.msra.mxu0 %v2080
          %2534 = vmatprep.subr.mxu0 0.0
          %2535 = vmatpush1.msra.mxu0 %v2079
          %2536 = vmatprep.subr.mxu0 0.0
          %2537 = vmatpush1.msra.mxu0 %v2078
          %2538 = vmatprep.subr.mxu0 0.0
          %2539 = vmatpush1.msra.mxu0 %v2077
          %2540 = vmatprep.subr.mxu0 0.0
          %2541 = vmatpush1.msra.mxu0 %v2076
          %2542 = vmatprep.subr.mxu0 0.0
          %2543 = vmatpush1.msra.mxu0 %v2075
          %2544 = vmatprep.subr.mxu0 0.0
          %2545 = vmatpush2.msra.mxu0 0.0
          %2546 = vmatprep.subr.mxu0 0.0
          %2547 = vmatpush2.msra.mxu0 0.0
          %2548 = vmatprep.subr.mxu0 0.0
          %2549 = vmatpush2.msra.mxu0 0.0
          %2550 = vmatprep.subr.mxu0 0.0
          %2551 = vmatpush2.msra.mxu0 0.0
          %2552 = vmatprep.subr.mxu0 0.0
          %2553 = vmatpush2.msra.mxu0 0.0
          %2554 = vmatprep.subr.mxu0 0.0
          %2555 = vmatpush2.msra.mxu0 0.0
          %2556 = vmatprep.subr.mxu0 0.0
          %2557 = vmatpush2.msra.mxu0 0.0
          %2558 = vmatprep.subr.mxu0 0.0
          %2559 = vmatpush2.msra.mxu0 0.0
          %2560 = vmatprep.subr.mxu0 0.0
          %2561 = vmatpush2.msra.mxu0 0.0
          %2562 = vmatprep.subr.mxu0 0.0
          %2563 = vmatpush2.msra.mxu0 0.0
          %2564 = vmatprep.subr.mxu0 0.0
          %2565 = vmatpush2.msra.mxu0 0.0
          %2566 = vmatprep.subr.mxu0 0.0
          %2567 = vmatpush2.msra.mxu0 0.0
          %2568 = vmatprep.subr.mxu0 0.0
          %2569 = vmatpush2.msra.mxu0 0.0
          %2570 = vmatprep.subr.mxu0 0.0
          %2571 = vmatpush2.msra.mxu0 0.0
          %2572 = vmatprep.subr.mxu0 0.0
          %2573 = vmatpush2.msra.mxu0 0.0
          %2574 = vmatprep.subr.mxu0 0.0
          %2575 = vmatpush2.msra.mxu0 0.0
          %2576 = vmatprep.mubr.f32.mxu0 0.0
          %2577 = vmatmul.mubr.f32.gmra.mxu0 %v2465
          %v2578 = vpop.f32.mrf.mxu0
          %v2579 = vadd.f32 0.0, %v2578
          %v2580 = vpop.f32.mrf.mxu0
          %2581 = vmatprep.mubr.f32.mxu0 0.0
          %2582 = vmatmul.mubr.f32.gmra.mxu0 %v2468
          %v2583 = vpop.f32.mrf.mxu0
          %v2584 = vadd.f32 0.0, %v2583
          %v2585 = vpop.f32.mrf.mxu0
          %2586 = vmatprep.mubr.f32.mxu0 0.0
          %2587 = vmatmul.mubr.f32.gmra.mxu0 %v2471
          %v2588 = vpop.f32.mrf.mxu0
          %v2589 = vadd.f32 0.0, %v2588
          %v2590 = vpop.f32.mrf.mxu0
          %2591 = vmatprep.mubr.f32.mxu0 0.0
          %2592 = vmatmul.mubr.f32.gmra.mxu0 %v2474
          %v2593 = vpop.f32.mrf.mxu0
          %v2594 = vadd.f32 0.0, %v2593
          %v2595 = vpop.f32.mrf.mxu0
          %2596 = vmatprep.mubr.f32.mxu0 0.0
          %2597 = vmatmul.mubr.f32.gmra.mxu0 %v2477
          %v2598 = vpop.f32.mrf.mxu0
          %v2599 = vadd.f32 0.0, %v2598
          %v2600 = vpop.f32.mrf.mxu0
          %2601 = vmatprep.mubr.f32.mxu0 0.0
          %2602 = vmatmul.mubr.f32.gmra.mxu0 %v2480
          %v2603 = vpop.f32.mrf.mxu0
          %v2604 = vadd.f32 0.0, %v2603
          %v2605 = vpop.f32.mrf.mxu0
          %2606 = vmatprep.mubr.f32.mxu0 0.0
          %2607 = vmatmul.mubr.f32.gmra.mxu0 %v2483
          %v2608 = vpop.f32.mrf.mxu0
          %v2609 = vadd.f32 0.0, %v2608
          %v2610 = vpop.f32.mrf.mxu0
          %2611 = vmatprep.mubr.f32.mxu0 0.0
          %2612 = vmatmul.mubr.f32.gmra.mxu0 %v2486
          %v2613 = vpop.f32.mrf.mxu0
          %v2614 = vadd.f32 0.0, %v2613
          %v2615 = vpop.f32.mrf.mxu0
          %2616 = vmatprep.mubr.f32.mxu0 0.0
          %2617 = vmatmul.mubr.f32.gmra.mxu0 %v2489
          %v2618 = vpop.f32.mrf.mxu0
          %v2619 = vadd.f32 0.0, %v2618
          %v2620 = vpop.f32.mrf.mxu0
          %2621 = vmatprep.mubr.f32.mxu0 0.0
          %2622 = vmatmul.mubr.f32.gmra.mxu0 %v2492
          %v2623 = vpop.f32.mrf.mxu0
          %v2624 = vadd.f32 0.0, %v2623
          %v2625 = vpop.f32.mrf.mxu0
          %2626 = vmatprep.mubr.f32.mxu0 0.0
          %2627 = vmatmul.mubr.f32.gmra.mxu0 %v2495
          %v2628 = vpop.f32.mrf.mxu0
          %v2629 = vadd.f32 0.0, %v2628
          %v2630 = vpop.f32.mrf.mxu0
          %2631 = vmatprep.mubr.f32.mxu0 0.0
          %2632 = vmatmul.mubr.f32.gmra.mxu0 %v2498
          %v2633 = vpop.f32.mrf.mxu0
          %v2634 = vadd.f32 0.0, %v2633
          %v2635 = vpop.f32.mrf.mxu0
          %2636 = vmatprep.mubr.f32.mxu0 0.0
          %2637 = vmatmul.mubr.f32.gmra.mxu0 %v2501
          %v2638 = vpop.f32.mrf.mxu0
          %v2639 = vadd.f32 0.0, %v2638
          %v2640 = vpop.f32.mrf.mxu0
          %2641 = vmatprep.mubr.f32.mxu0 0.0
          %2642 = vmatmul.mubr.f32.gmra.mxu0 %v2504
          %v2643 = vpop.f32.mrf.mxu0
          %v2644 = vadd.f32 0.0, %v2643
          %v2645 = vpop.f32.mrf.mxu0
          %2646 = vmatprep.mubr.f32.mxu0 0.0
          %2647 = vmatmul.mubr.f32.gmra.mxu0 %v2507
          %v2648 = vpop.f32.mrf.mxu0
          %v2649 = vadd.f32 0.0, %v2648
          %v2650 = vpop.f32.mrf.mxu0
          %2651 = vmatprep.mubr.f32.mxu0 0.0
          %2652 = vmatmul.mubr.f32.gmra.mxu0 %v2510
          %v2653 = vpop.f32.mrf.mxu0
          %v2654 = vadd.f32 0.0, %v2653
          %v2655 = vpop.f32.mrf.mxu0
          %2656 = vdwg.mxu0
          %vm2657 = vcmask 31744
          %v2658 = vsel %vm2657, %v2579, -inf
          %v2659 = vrot.slane %v2658, 4
          %v2660 = vmax.f32 %v2658, %v2659
          %v2661 = vrot.slane %v2660, 2
          %v2662 = vmax.f32 %v2660, %v2661
          %v2663 = vrot.slane %v2662, 1
          %v2664 = vmax.f32 %v2662, %v2663
          %v2665 = vsel %vm2657, %v2584, -inf
          %v2666 = vrot.slane %v2665, 4
          %v2667 = vmax.f32 %v2665, %v2666
          %v2668 = vrot.slane %v2667, 2
          %v2669 = vmax.f32 %v2667, %v2668
          %v2670 = vrot.slane %v2669, 1
          %v2671 = vmax.f32 %v2669, %v2670
          %v2672 = vsel %vm2657, %v2589, -inf
          %v2673 = vrot.slane %v2672, 4
          %v2674 = vmax.f32 %v2672, %v2673
          %v2675 = vrot.slane %v2674, 2
          %v2676 = vmax.f32 %v2674, %v2675
          %v2677 = vrot.slane %v2676, 1
          %v2678 = vmax.f32 %v2676, %v2677
          %v2679 = vsel %vm2657, %v2594, -inf
          %v2680 = vrot.slane %v2679, 4
          %v2681 = vmax.f32 %v2679, %v2680
          %v2682 = vrot.slane %v2681, 2
          %v2683 = vmax.f32 %v2681, %v2682
          %v2684 = vrot.slane %v2683, 1
          %v2685 = vmax.f32 %v2683, %v2684
          %v2686 = vsel %vm2657, %v2599, -inf
          %v2687 = vrot.slane %v2686, 4
          %v2688 = vmax.f32 %v2686, %v2687
          %v2689 = vrot.slane %v2688, 2
          %v2690 = vmax.f32 %v2688, %v2689
          %v2691 = vrot.slane %v2690, 1
          %v2692 = vmax.f32 %v2690, %v2691
          %v2693 = vsel %vm2657, %v2604, -inf
          %v2694 = vrot.slane %v2693, 4
          %v2695 = vmax.f32 %v2693, %v2694
          %v2696 = vrot.slane %v2695, 2
          %v2697 = vmax.f32 %v2695, %v2696
          %v2698 = vrot.slane %v2697, 1
          %v2699 = vmax.f32 %v2697, %v2698
          %v2700 = vsel %vm2657, %v2609, -inf
          %v2701 = vrot.slane %v2700, 4
          %v2702 = vmax.f32 %v2700, %v2701
          %v2703 = vrot.slane %v2702, 2
          %v2704 = vmax.f32 %v2702, %v2703
          %v2705 = vrot.slane %v2704, 1
          %v2706 = vmax.f32 %v2704, %v2705
          %v2707 = vsel %vm2657, %v2614, -inf
          %v2708 = vrot.slane %v2707, 4
          %v2709 = vmax.f32 %v2707, %v2708
          %v2710 = vrot.slane %v2709, 2
          %v2711 = vmax.f32 %v2709, %v2710
          %v2712 = vrot.slane %v2711, 1
          %v2713 = vmax.f32 %v2711, %v2712
          %v2714 = vsel %vm2657, %v2619, -inf
          %v2715 = vrot.slane %v2714, 4
          %v2716 = vmax.f32 %v2714, %v2715
          %v2717 = vrot.slane %v2716, 2
          %v2718 = vmax.f32 %v2716, %v2717
          %v2719 = vrot.slane %v2718, 1
          %v2720 = vmax.f32 %v2718, %v2719
          %v2721 = vsel %vm2657, %v2624, -inf
          %v2722 = vrot.slane %v2721, 4
          %v2723 = vmax.f32 %v2721, %v2722
          %v2724 = vrot.slane %v2723, 2
          %v2725 = vmax.f32 %v2723, %v2724
          %v2726 = vrot.slane %v2725, 1
          %v2727 = vmax.f32 %v2725, %v2726
          %v2728 = vsel %vm2657, %v2629, -inf
          %v2729 = vrot.slane %v2728, 4
          %v2730 = vmax.f32 %v2728, %v2729
          %v2731 = vrot.slane %v2730, 2
          %v2732 = vmax.f32 %v2730, %v2731
          %v2733 = vrot.slane %v2732, 1
          %v2734 = vmax.f32 %v2732, %v2733
          %v2735 = vsel %vm2657, %v2634, -inf
          %v2736 = vrot.slane %v2735, 4
          %v2737 = vmax.f32 %v2735, %v2736
          %v2738 = vrot.slane %v2737, 2
          %v2739 = vmax.f32 %v2737, %v2738
          %v2740 = vrot.slane %v2739, 1
          %v2741 = vmax.f32 %v2739, %v2740
          %v2742 = vsel %vm2657, %v2639, -inf
          %v2743 = vrot.slane %v2742, 4
          %v2744 = vmax.f32 %v2742, %v2743
          %v2745 = vrot.slane %v2744, 2
          %v2746 = vmax.f32 %v2744, %v2745
          %v2747 = vrot.slane %v2746, 1
          %v2748 = vmax.f32 %v2746, %v2747
          %v2749 = vsel %vm2657, %v2644, -inf
          %v2750 = vrot.slane %v2749, 4
          %v2751 = vmax.f32 %v2749, %v2750
          %v2752 = vrot.slane %v2751, 2
          %v2753 = vmax.f32 %v2751, %v2752
          %v2754 = vrot.slane %v2753, 1
          %v2755 = vmax.f32 %v2753, %v2754
          %v2756 = vsel %vm2657, %v2649, -inf
          %v2757 = vrot.slane %v2756, 4
          %v2758 = vmax.f32 %v2756, %v2757
          %v2759 = vrot.slane %v2758, 2
          %v2760 = vmax.f32 %v2758, %v2759
          %v2761 = vrot.slane %v2760, 1
          %v2762 = vmax.f32 %v2760, %v2761
          %v2763 = vsel %vm2657, %v2654, -inf
          %v2764 = vrot.slane %v2763, 4
          %v2765 = vmax.f32 %v2763, %v2764
          %v2766 = vrot.slane %v2765, 2
          %v2767 = vmax.f32 %v2765, %v2766
          %v2768 = vrot.slane %v2767, 1
          %v2769 = vmax.f32 %v2767, %v2768
          %v2770 = vsub.f32 %v2579, %v2664
          %v2771 = vsub.f32 %v2584, %v2671
          %v2772 = vsub.f32 %v2589, %v2678
          %v2773 = vsub.f32 %v2594, %v2685
          %v2774 = vsub.f32 %v2599, %v2692
          %v2775 = vsub.f32 %v2604, %v2699
          %v2776 = vsub.f32 %v2609, %v2706
          %v2777 = vsub.f32 %v2614, %v2713
          %v2778 = vsub.f32 %v2619, %v2720
          %v2779 = vsub.f32 %v2624, %v2727
          %v2780 = vsub.f32 %v2629, %v2734
          %v2781 = vsub.f32 %v2634, %v2741
          %v2782 = vsub.f32 %v2639, %v2748
          %v2783 = vsub.f32 %v2644, %v2755
          %v2784 = vsub.f32 %v2649, %v2762
          %v2785 = vsub.f32 %v2654, %v2769
          %v2786 = vmul.f32 %v2770, 1.442695
          %v2787 = vpow.pop %v2786
          %v2788 = vmul.f32 %v2771, 1.442695
          %v2789 = vpow.pop %v2788
          %v2790 = vmul.f32 %v2772, 1.442695
          %v2791 = vpow.pop %v2790
          %v2792 = vmul.f32 %v2773, 1.442695
          %v2793 = vpow.pop %v2792
          %v2794 = vmul.f32 %v2774, 1.442695
          %v2795 = vpow.pop %v2794
          %v2796 = vmul.f32 %v2775, 1.442695
          %v2797 = vpow.pop %v2796
          %v2798 = vmul.f32 %v2776, 1.442695
          %v2799 = vpow.pop %v2798
          %v2800 = vmul.f32 %v2777, 1.442695
          %v2801 = vpow.pop %v2800
          %v2802 = vmul.f32 %v2778, 1.442695
          %v2803 = vpow.pop %v2802
          %v2804 = vmul.f32 %v2779, 1.442695
          %v2805 = vpow.pop %v2804
          %v2806 = vmul.f32 %v2780, 1.442695
          %v2807 = vpow.pop %v2806
          %v2808 = vmul.f32 %v2781, 1.442695
          %v2809 = vpow.pop %v2808
          %v2810 = vmul.f32 %v2782, 1.442695
          %v2811 = vpow.pop %v2810
          %v2812 = vmul.f32 %v2783, 1.442695
          %v2813 = vpow.pop %v2812
          %v2814 = vmul.f32 %v2784, 1.442695
          %v2815 = vpow.pop %v2814
          %v2816 = vmul.f32 %v2785, 1.442695
          %v2817 = vpow.pop %v2816
          %v2818 = vsel %vm2657, %v2787, 0.0
          %v2819 = vrot.slane %v2818, 4
          %v2820 = vadd.f32 %v2818, %v2819
          %v2821 = vrot.slane %v2820, 2
          %v2822 = vadd.f32 %v2820, %v2821
          %v2823 = vrot.slane %v2822, 1
          %v2824 = vadd.f32 %v2822, %v2823
          %v2825 = vsel %vm2657, %v2789, 0.0
          %v2826 = vrot.slane %v2825, 4
          %v2827 = vadd.f32 %v2825, %v2826
          %v2828 = vrot.slane %v2827, 2
          %v2829 = vadd.f32 %v2827, %v2828
          %v2830 = vrot.slane %v2829, 1
          %v2831 = vadd.f32 %v2829, %v2830
          %v2832 = vsel %vm2657, %v2791, 0.0
          %v2833 = vrot.slane %v2832, 4
          %v2834 = vadd.f32 %v2832, %v2833
          %v2835 = vrot.slane %v2834, 2
          %v2836 = vadd.f32 %v2834, %v2835
          %v2837 = vrot.slane %v2836, 1
          %v2838 = vadd.f32 %v2836, %v2837
          %v2839 = vsel %vm2657, %v2793, 0.0
          %v2840 = vrot.slane %v2839, 4
          %v2841 = vadd.f32 %v2839, %v2840
          %v2842 = vrot.slane %v2841, 2
          %v2843 = vadd.f32 %v2841, %v2842
          %v2844 = vrot.slane %v2843, 1
          %v2845 = vadd.f32 %v2843, %v2844
          %v2846 = vsel %vm2657, %v2795, 0.0
          %v2847 = vrot.slane %v2846, 4
          %v2848 = vadd.f32 %v2846, %v2847
          %v2849 = vrot.slane %v2848, 2
          %v2850 = vadd.f32 %v2848, %v2849
          %v2851 = vrot.slane %v2850, 1
          %v2852 = vadd.f32 %v2850, %v2851
          %v2853 = vsel %vm2657, %v2797, 0.0
          %v2854 = vrot.slane %v2853, 4
          %v2855 = vadd.f32 %v2853, %v2854
          %v2856 = vrot.slane %v2855, 2
          %v2857 = vadd.f32 %v2855, %v2856
          %v2858 = vrot.slane %v2857, 1
          %v2859 = vadd.f32 %v2857, %v2858
          %v2860 = vsel %vm2657, %v2799, 0.0
          %v2861 = vrot.slane %v2860, 4
          %v2862 = vadd.f32 %v2860, %v2861
          %v2863 = vrot.slane %v2862, 2
          %v2864 = vadd.f32 %v2862, %v2863
          %v2865 = vrot.slane %v2864, 1
          %v2866 = vadd.f32 %v2864, %v2865
          %v2867 = vsel %vm2657, %v2801, 0.0
          %v2868 = vrot.slane %v2867, 4
          %v2869 = vadd.f32 %v2867, %v2868
          %v2870 = vrot.slane %v2869, 2
          %v2871 = vadd.f32 %v2869, %v2870
          %v2872 = vrot.slane %v2871, 1
          %v2873 = vadd.f32 %v2871, %v2872
          %v2874 = vsel %vm2657, %v2803, 0.0
          %v2875 = vrot.slane %v2874, 4
          %v2876 = vadd.f32 %v2874, %v2875
          %v2877 = vrot.slane %v2876, 2
          %v2878 = vadd.f32 %v2876, %v2877
          %v2879 = vrot.slane %v2878, 1
          %v2880 = vadd.f32 %v2878, %v2879
          %v2881 = vsel %vm2657, %v2805, 0.0
          %v2882 = vrot.slane %v2881, 4
          %v2883 = vadd.f32 %v2881, %v2882
          %v2884 = vrot.slane %v2883, 2
          %v2885 = vadd.f32 %v2883, %v2884
          %v2886 = vrot.slane %v2885, 1
          %v2887 = vadd.f32 %v2885, %v2886
          %v2888 = vsel %vm2657, %v2807, 0.0
          %v2889 = vrot.slane %v2888, 4
          %v2890 = vadd.f32 %v2888, %v2889
          %v2891 = vrot.slane %v2890, 2
          %v2892 = vadd.f32 %v2890, %v2891
          %v2893 = vrot.slane %v2892, 1
          %v2894 = vadd.f32 %v2892, %v2893
          %v2895 = vsel %vm2657, %v2809, 0.0
          %v2896 = vrot.slane %v2895, 4
          %v2897 = vadd.f32 %v2895, %v2896
          %v2898 = vrot.slane %v2897, 2
          %v2899 = vadd.f32 %v2897, %v2898
          %v2900 = vrot.slane %v2899, 1
          %v2901 = vadd.f32 %v2899, %v2900
          %v2902 = vsel %vm2657, %v2811, 0.0
          %v2903 = vrot.slane %v2902, 4
          %v2904 = vadd.f32 %v2902, %v2903
          %v2905 = vrot.slane %v2904, 2
          %v2906 = vadd.f32 %v2904, %v2905
          %v2907 = vrot.slane %v2906, 1
          %v2908 = vadd.f32 %v2906, %v2907
          %v2909 = vsel %vm2657, %v2813, 0.0
          %v2910 = vrot.slane %v2909, 4
          %v2911 = vadd.f32 %v2909, %v2910
          %v2912 = vrot.slane %v2911, 2
          %v2913 = vadd.f32 %v2911, %v2912
          %v2914 = vrot.slane %v2913, 1
          %v2915 = vadd.f32 %v2913, %v2914
          %v2916 = vsel %vm2657, %v2815, 0.0
          %v2917 = vrot.slane %v2916, 4
          %v2918 = vadd.f32 %v2916, %v2917
          %v2919 = vrot.slane %v2918, 2
          %v2920 = vadd.f32 %v2918, %v2919
          %v2921 = vrot.slane %v2920, 1
          %v2922 = vadd.f32 %v2920, %v2921
          %v2923 = vsel %vm2657, %v2817, 0.0
          %v2924 = vrot.slane %v2923, 4
          %v2925 = vadd.f32 %v2923, %v2924
          %v2926 = vrot.slane %v2925, 2
          %v2927 = vadd.f32 %v2925, %v2926
          %v2928 = vrot.slane %v2927, 1
          %v2929 = vadd.f32 %v2927, %v2928
          %v2930 = vrcp.pop %v2824
          %v2931 = vrcp.pop %v2831
          %v2932 = vrcp.pop %v2838
          %v2933 = vrcp.pop %v2845
          %v2934 = vrcp.pop %v2852
          %v2935 = vrcp.pop %v2859
          %v2936 = vrcp.pop %v2866
          %v2937 = vrcp.pop %v2873
          %v2938 = vrcp.pop %v2880
          %v2939 = vrcp.pop %v2887
          %v2940 = vrcp.pop %v2894
          %v2941 = vrcp.pop %v2901
          %v2942 = vrcp.pop %v2908
          %v2943 = vrcp.pop %v2915
          %v2944 = vrcp.pop %v2922
          %v2945 = vrcp.pop %v2929
          %v2946 = vmul.f32 %v2787, %v2930
          %v2947 = vmul.f32 %v2789, %v2931
          %v2948 = vmul.f32 %v2791, %v2932
          %v2949 = vmul.f32 %v2793, %v2933
          %v2950 = vmul.f32 %v2795, %v2934
          %v2951 = vmul.f32 %v2797, %v2935
          %v2952 = vmul.f32 %v2799, %v2936
          %v2953 = vmul.f32 %v2801, %v2937
          %v2954 = vmul.f32 %v2803, %v2938
          %v2955 = vmul.f32 %v2805, %v2939
          %v2956 = vmul.f32 %v2807, %v2940
          %v2957 = vmul.f32 %v2809, %v2941
          %v2958 = vmul.f32 %v2811, %v2942
          %v2959 = vmul.f32 %v2813, %v2943
          %v2960 = vmul.f32 %v2815, %v2944
          %v2961 = vmul.f32 %v2817, %v2945
          %v2963 = vsel %vm2657, %v2946, 0
          %v2966 = vsel %vm2657, %v2947, 0
          %v2969 = vsel %vm2657, %v2948, 0
          %v2972 = vsel %vm2657, %v2949, 0
          %v2975 = vsel %vm2657, %v2950, 0
          %v2978 = vsel %vm2657, %v2951, 0
          %v2981 = vsel %vm2657, %v2952, 0
          %v2984 = vsel %vm2657, %v2953, 0
          %v2987 = vsel %vm2657, %v2954, 0
          %v2990 = vsel %vm2657, %v2955, 0
          %v2993 = vsel %vm2657, %v2956, 0
          %v2996 = vsel %vm2657, %v2957, 0
          %v2999 = vsel %vm2657, %v2958, 0
          %v3002 = vsel %vm2657, %v2959, 0
          %v3005 = vsel %vm2657, %v2960, 0
          %v3008 = vsel %vm2657, %v2961, 0
          %vm3010 = vcmask 1043456
          %v3012 = vsel %vm3010, %v2088, 0
          %3014 = vmatprep.subr.mxu0 0.0
          %3015 = vmatpush1.msra.mxu0 0.0
          %3016 = vmatprep.subr.mxu0 0.0
          %3017 = vmatpush1.msra.mxu0 0.0
          %3018 = vmatprep.subr.mxu0 0.0
          %3019 = vmatpush1.msra.mxu0 0.0
          %3020 = vmatprep.subr.mxu0 0.0
          %3021 = vmatpush1.msra.mxu0 0.0
          %3022 = vmatprep.subr.mxu0 0.0
          %3023 = vmatpush1.msra.mxu0 0.0
          %3024 = vmatprep.subr.mxu0 0.0
          %3025 = vmatpush1.msra.mxu0 0.0
          %3026 = vmatprep.subr.mxu0 0.0
          %3027 = vmatpush1.msra.mxu0 0.0
          %3028 = vmatprep.subr.mxu0 0.0
          %3029 = vmatpush1.msra.mxu0 0.0
          %3030 = vmatprep.subr.mxu0 0.0
          %3031 = vmatpush1.msra.mxu0 0.0
          %3032 = vmatprep.subr.mxu0 0.0
          %3033 = vmatpush1.msra.mxu0 0.0
          %3034 = vmatprep.subr.mxu0 0.0
          %3035 = vmatpush1.msra.mxu0 0.0
          %3036 = vmatprep.subr.mxu0 0.0
          %3037 = vmatpush1.msra.mxu0 0.0
          %3038 = vmatprep.subr.mxu0 0.0
          %3039 = vmatpush1.msra.mxu0 0.0
          %3040 = vmatprep.subr.mxu0 0.0
          %3041 = vmatpush1.msra.mxu0 0.0
          %3042 = vmatprep.subr.mxu0 0.0
          %3043 = vmatpush1.msra.mxu0 0.0
          %3044 = vmatprep.subr.mxu0 0.0
          %3045 = vmatpush1.msra.mxu0 %v3012
          %3046 = vmatprep.subr.mxu0 0.0
          %3047 = vmatpush2.msra.mxu0 0.0
          %3048 = vmatprep.subr.mxu0 0.0
          %3049 = vmatpush2.msra.mxu0 0.0
          %3050 = vmatprep.subr.mxu0 0.0
          %3051 = vmatpush2.msra.mxu0 0.0
          %3052 = vmatprep.subr.mxu0 0.0
          %3053 = vmatpush2.msra.mxu0 0.0
          %3054 = vmatprep.subr.mxu0 0.0
          %3055 = vmatpush2.msra.mxu0 0.0
          %3056 = vmatprep.subr.mxu0 0.0
          %3057 = vmatpush2.msra.mxu0 0.0
          %3058 = vmatprep.subr.mxu0 0.0
          %3059 = vmatpush2.msra.mxu0 0.0
          %3060 = vmatprep.subr.mxu0 0.0
          %3061 = vmatpush2.msra.mxu0 0.0
          %3062 = vmatprep.subr.mxu0 0.0
          %3063 = vmatpush2.msra.mxu0 0.0
          %3064 = vmatprep.subr.mxu0 0.0
          %3065 = vmatpush2.msra.mxu0 0.0
          %3066 = vmatprep.subr.mxu0 0.0
          %3067 = vmatpush2.msra.mxu0 0.0
          %3068 = vmatprep.subr.mxu0 0.0
          %3069 = vmatpush2.msra.mxu0 0.0
          %3070 = vmatprep.subr.mxu0 0.0
          %3071 = vmatpush2.msra.mxu0 0.0
          %3072 = vmatprep.subr.mxu0 0.0
          %3073 = vmatpush2.msra.mxu0 0.0
          %3074 = vmatprep.subr.mxu0 0.0
          %3075 = vmatpush2.msra.mxu0 0.0
          %3076 = vmatprep.subr.mxu0 0.0
          %3077 = vmatpush2.msra.mxu0 0.0
          %3078 = vmatprep.mubr.f32.mxu0 0.0
          %3079 = vmatmul.mubr.f32.gmra.mxu0 %v2963
          %v3080 = vpop.f32.mrf.mxu0
          %v3081 = vadd.f32 0.0, %v3080
          %v3082 = vpop.f32.mrf.mxu0
          %3083 = vmatprep.mubr.f32.mxu0 0.0
          %3084 = vmatmul.mubr.f32.gmra.mxu0 %v2966
          %v3085 = vpop.f32.mrf.mxu0
          %v3086 = vadd.f32 0.0, %v3085
          %v3087 = vpop.f32.mrf.mxu0
          %3088 = vmatprep.mubr.f32.mxu0 0.0
          %3089 = vmatmul.mubr.f32.gmra.mxu0 %v2969
          %v3090 = vpop.f32.mrf.mxu0
          %v3091 = vadd.f32 0.0, %v3090
          %v3092 = vpop.f32.mrf.mxu0
          %3093 = vmatprep.mubr.f32.mxu0 0.0
          %3094 = vmatmul.mubr.f32.gmra.mxu0 %v2972
          %v3095 = vpop.f32.mrf.mxu0
          %v3096 = vadd.f32 0.0, %v3095
          %v3097 = vpop.f32.mrf.mxu0
          %3098 = vmatprep.mubr.f32.mxu0 0.0
          %3099 = vmatmul.mubr.f32.gmra.mxu0 %v2975
          %v3100 = vpop.f32.mrf.mxu0
          %v3101 = vadd.f32 0.0, %v3100
          %v3102 = vpop.f32.mrf.mxu0
          %3103 = vmatprep.mubr.f32.mxu0 0.0
          %3104 = vmatmul.mubr.f32.gmra.mxu0 %v2978
          %v3105 = vpop.f32.mrf.mxu0
          %v3106 = vadd.f32 0.0, %v3105
          %v3107 = vpop.f32.mrf.mxu0
          %3108 = vmatprep.mubr.f32.mxu0 0.0
          %3109 = vmatmul.mubr.f32.gmra.mxu0 %v2981
          %v3110 = vpop.f32.mrf.mxu0
          %v3111 = vadd.f32 0.0, %v3110
          %v3112 = vpop.f32.mrf.mxu0
          %3113 = vmatprep.mubr.f32.mxu0 0.0
          %3114 = vmatmul.mubr.f32.gmra.mxu0 %v2984
          %v3115 = vpop.f32.mrf.mxu0
          %v3116 = vadd.f32 0.0, %v3115
          %v3117 = vpop.f32.mrf.mxu0
          %3118 = vmatprep.mubr.f32.mxu0 0.0
          %3119 = vmatmul.mubr.f32.gmra.mxu0 %v2987
          %v3120 = vpop.f32.mrf.mxu0
          %v3121 = vadd.f32 0.0, %v3120
          %v3122 = vpop.f32.mrf.mxu0
          %3123 = vmatprep.mubr.f32.mxu0 0.0
          %3124 = vmatmul.mubr.f32.gmra.mxu0 %v2990
          %v3125 = vpop.f32.mrf.mxu0
          %v3126 = vadd.f32 0.0, %v3125
          %v3127 = vpop.f32.mrf.mxu0
          %3128 = vmatprep.mubr.f32.mxu0 0.0
          %3129 = vmatmul.mubr.f32.gmra.mxu0 %v2993
          %v3130 = vpop.f32.mrf.mxu0
          %v3131 = vadd.f32 0.0, %v3130
          %v3132 = vpop.f32.mrf.mxu0
          %3133 = vmatprep.mubr.f32.mxu0 0.0
          %3134 = vmatmul.mubr.f32.gmra.mxu0 %v2996
          %v3135 = vpop.f32.mrf.mxu0
          %v3136 = vadd.f32 0.0, %v3135
          %v3137 = vpop.f32.mrf.mxu0
          %3138 = vmatprep.mubr.f32.mxu0 0.0
          %3139 = vmatmul.mubr.f32.gmra.mxu0 %v2999
          %v3140 = vpop.f32.mrf.mxu0
          %v3141 = vadd.f32 0.0, %v3140
          %v3142 = vpop.f32.mrf.mxu0
          %3143 = vmatprep.mubr.f32.mxu0 0.0
          %3144 = vmatmul.mubr.f32.gmra.mxu0 %v3002
          %v3145 = vpop.f32.mrf.mxu0
          %v3146 = vadd.f32 0.0, %v3145
          %v3147 = vpop.f32.mrf.mxu0
          %3148 = vmatprep.mubr.f32.mxu0 0.0
          %3149 = vmatmul.mubr.f32.gmra.mxu0 %v3005
          %v3150 = vpop.f32.mrf.mxu0
          %v3151 = vadd.f32 0.0, %v3150
          %v3152 = vpop.f32.mrf.mxu0
          %3153 = vmatprep.mubr.f32.mxu0 0.0
          %3154 = vmatmul.mubr.f32.gmra.mxu0 %v3008
          %v3155 = vpop.f32.mrf.mxu0
          %v3156 = vadd.f32 0.0, %v3155
          %v3157 = vpop.f32.mrf.mxu0
          %3158 = vdwg.mxu0
          %v3159 = vmul.f32 %v3081, %v2256
          %v3160 = vmul.f32 %v3086, %v2256
          %v3161 = vmul.f32 %v3091, %v2256
          %v3162 = vmul.f32 %v3096, %v2256
          %v3163 = vmul.f32 %v3101, %v2256
          %v3164 = vmul.f32 %v3106, %v2256
          %v3165 = vmul.f32 %v3111, %v2256
          %v3166 = vmul.f32 %v3116, %v2256
          %v3167 = vmul.f32 %v3121, %v2260
          %v3168 = vmul.f32 %v3126, %v2260
          %v3169 = vmul.f32 %v3131, %v2260
          %v3170 = vmul.f32 %v3136, %v2260
          %v3171 = vmul.f32 %v3141, %v2260
          %v3172 = vmul.f32 %v3146, %v2260
          %v3173 = vmul.f32 %v3151, %v2260
          %v3174 = vmul.f32 %v3156, %v2260
          %v3175 = vsel %vm1975, %v3159, 0.0
          %v3176 = vrot.slane %v3175, 4
          %v3177 = vadd.f32 %v3175, %v3176
          %v3178 = vrot.slane %v3177, 2
          %v3179 = vadd.f32 %v3177, %v3178
          %v3180 = vrot.slane %v3179, 1
          %v3181 = vadd.f32 %v3179, %v3180
          %v3182 = vsel %vm1975, %v3160, 0.0
          %v3183 = vrot.slane %v3182, 4
          %v3184 = vadd.f32 %v3182, %v3183
          %v3185 = vrot.slane %v3184, 2
          %v3186 = vadd.f32 %v3184, %v3185
          %v3187 = vrot.slane %v3186, 1
          %v3188 = vadd.f32 %v3186, %v3187
          %v3189 = vsel %vm1975, %v3161, 0.0
          %v3190 = vrot.slane %v3189, 4
          %v3191 = vadd.f32 %v3189, %v3190
          %v3192 = vrot.slane %v3191, 2
          %v3193 = vadd.f32 %v3191, %v3192
          %v3194 = vrot.slane %v3193, 1
          %v3195 = vadd.f32 %v3193, %v3194
          %v3196 = vsel %vm1975, %v3162, 0.0
          %v3197 = vrot.slane %v3196, 4
          %v3198 = vadd.f32 %v3196, %v3197
          %v3199 = vrot.slane %v3198, 2
          %v3200 = vadd.f32 %v3198, %v3199
          %v3201 = vrot.slane %v3200, 1
          %v3202 = vadd.f32 %v3200, %v3201
          %v3203 = vsel %vm1975, %v3163, 0.0
          %v3204 = vrot.slane %v3203, 4
          %v3205 = vadd.f32 %v3203, %v3204
          %v3206 = vrot.slane %v3205, 2
          %v3207 = vadd.f32 %v3205, %v3206
          %v3208 = vrot.slane %v3207, 1
          %v3209 = vadd.f32 %v3207, %v3208
          %v3210 = vsel %vm1975, %v3164, 0.0
          %v3211 = vrot.slane %v3210, 4
          %v3212 = vadd.f32 %v3210, %v3211
          %v3213 = vrot.slane %v3212, 2
          %v3214 = vadd.f32 %v3212, %v3213
          %v3215 = vrot.slane %v3214, 1
          %v3216 = vadd.f32 %v3214, %v3215
          %v3217 = vsel %vm1975, %v3165, 0.0
          %v3218 = vrot.slane %v3217, 4
          %v3219 = vadd.f32 %v3217, %v3218
          %v3220 = vrot.slane %v3219, 2
          %v3221 = vadd.f32 %v3219, %v3220
          %v3222 = vrot.slane %v3221, 1
          %v3223 = vadd.f32 %v3221, %v3222
          %v3224 = vsel %vm1975, %v3166, 0.0
          %v3225 = vrot.slane %v3224, 4
          %v3226 = vadd.f32 %v3224, %v3225
          %v3227 = vrot.slane %v3226, 2
          %v3228 = vadd.f32 %v3226, %v3227
          %v3229 = vrot.slane %v3228, 1
          %v3230 = vadd.f32 %v3228, %v3229
          %v3231 = vsel %vm1975, %v3167, 0.0
          %v3232 = vrot.slane %v3231, 4
          %v3233 = vadd.f32 %v3231, %v3232
          %v3234 = vrot.slane %v3233, 2
          %v3235 = vadd.f32 %v3233, %v3234
          %v3236 = vrot.slane %v3235, 1
          %v3237 = vadd.f32 %v3235, %v3236
          %v3238 = vsel %vm1975, %v3168, 0.0
          %v3239 = vrot.slane %v3238, 4
          %v3240 = vadd.f32 %v3238, %v3239
          %v3241 = vrot.slane %v3240, 2
          %v3242 = vadd.f32 %v3240, %v3241
          %v3243 = vrot.slane %v3242, 1
          %v3244 = vadd.f32 %v3242, %v3243
          %v3245 = vsel %vm1975, %v3169, 0.0
          %v3246 = vrot.slane %v3245, 4
          %v3247 = vadd.f32 %v3245, %v3246
          %v3248 = vrot.slane %v3247, 2
          %v3249 = vadd.f32 %v3247, %v3248
          %v3250 = vrot.slane %v3249, 1
          %v3251 = vadd.f32 %v3249, %v3250
          %v3252 = vsel %vm1975, %v3170, 0.0
          %v3253 = vrot.slane %v3252, 4
          %v3254 = vadd.f32 %v3252, %v3253
          %v3255 = vrot.slane %v3254, 2
          %v3256 = vadd.f32 %v3254, %v3255
          %v3257 = vrot.slane %v3256, 1
          %v3258 = vadd.f32 %v3256, %v3257
          %v3259 = vsel %vm1975, %v3171, 0.0
          %v3260 = vrot.slane %v3259, 4
          %v3261 = vadd.f32 %v3259, %v3260
          %v3262 = vrot.slane %v3261, 2
          %v3263 = vadd.f32 %v3261, %v3262
          %v3264 = vrot.slane %v3263, 1
          %v3265 = vadd.f32 %v3263, %v3264
          %v3266 = vsel %vm1975, %v3172, 0.0
          %v3267 = vrot.slane %v3266, 4
          %v3268 = vadd.f32 %v3266, %v3267
          %v3269 = vrot.slane %v3268, 2
          %v3270 = vadd.f32 %v3268, %v3269
          %v3271 = vrot.slane %v3270, 1
          %v3272 = vadd.f32 %v3270, %v3271
          %v3273 = vsel %vm1975, %v3173, 0.0
          %v3274 = vrot.slane %v3273, 4
          %v3275 = vadd.f32 %v3273, %v3274
          %v3276 = vrot.slane %v3275, 2
          %v3277 = vadd.f32 %v3275, %v3276
          %v3278 = vrot.slane %v3277, 1
          %v3279 = vadd.f32 %v3277, %v3278
          %v3280 = vsel %vm1975, %v3174, 0.0
          %v3281 = vrot.slane %v3280, 4
          %v3282 = vadd.f32 %v3280, %v3281
          %v3283 = vrot.slane %v3282, 2
          %v3284 = vadd.f32 %v3282, %v3283
          %v3285 = vrot.slane %v3284, 1
          %v3286 = vadd.f32 %v3284, %v3285
          %v3287 = vpack.c.bf16 %v3181, %v3181
          %v3288 = vpack.c.bf16 %v3188, %v3188
          %v3289 = vpack.c.bf16 %v3195, %v3195
          %v3290 = vpack.c.bf16 %v3202, %v3202
          %v3291 = vpack.c.bf16 %v3209, %v3209
          %v3292 = vpack.c.bf16 %v3216, %v3216
          %v3293 = vpack.c.bf16 %v3223, %v3223
          %v3294 = vpack.c.bf16 %v3230, %v3230
          %v3295 = vpack.c.bf16 %v3237, %v3237
          %v3296 = vpack.c.bf16 %v3244, %v3244
          %v3297 = vpack.c.bf16 %v3251, %v3251
          %v3298 = vpack.c.bf16 %v3258, %v3258
          %v3299 = vpack.c.bf16 %v3265, %v3265
          %v3300 = vpack.c.bf16 %v3272, %v3272
          %v3301 = vpack.c.bf16 %v3279, %v3279
          %v3302 = vpack.c.bf16 %v3286, %v3286
          %v3304 = vlaneseq
          %v3305 = vshrl.u32 %v3304, 7
          %v3306 = vsub.s32 0, %v3305
          %v3307 = vrot.slane %v2123, %v3306
          %v3325 = vunpack.c.l.b16 %v3287
          %v3326 = vunpack.c.l.b16 %v3288
          %v3327 = vunpack.c.l.b16 %v3289
          %v3328 = vunpack.c.l.b16 %v3290
          %v3329 = vunpack.c.l.b16 %v3291
          %v3330 = vunpack.c.l.b16 %v3292
          %v3331 = vunpack.c.l.b16 %v3293
          %v3332 = vunpack.c.l.b16 %v3294
          %v3333 = vunpack.c.l.b16 %v3295
          %v3334 = vunpack.c.l.b16 %v3296
          %v3335 = vunpack.c.l.b16 %v3297
          %v3336 = vunpack.c.l.b16 %v3298
          %v3337 = vunpack.c.l.b16 %v3299
          %v3338 = vunpack.c.l.b16 %v3300
          %v3339 = vunpack.c.l.b16 %v3301
          %v3340 = vunpack.c.l.b16 %v3302
          %vm3341 = vcmask 1041409
          %v3342 = vsel %vm3341, %v3326, %v3325
          %vm3343 = vcmask 1042434
          %v3344 = vsel %vm3343, %v3327, %v3342
          %vm3345 = vcmask 1043459
          %v3346 = vsel %vm3345, %v3328, %v3344
          %vm3347 = vcmask 1044484
          %v3348 = vsel %vm3347, %v3329, %v3346
          %vm3349 = vcmask 1045509
          %v3350 = vsel %vm3349, %v3330, %v3348
          %vm3351 = vcmask 1046534
          %v3352 = vsel %vm3351, %v3331, %v3350
          %vm3353 = vcmask 1047559
          %v3354 = vsel %vm3353, %v3332, %v3352
          %v3355 = vsel %vm3341, %v3334, %v3333
          %v3356 = vsel %vm3343, %v3335, %v3355
          %v3357 = vsel %vm3345, %v3336, %v3356
          %v3358 = vsel %vm3347, %v3337, %v3357
          %v3359 = vsel %vm3349, %v3338, %v3358
          %v3360 = vsel %vm3351, %v3339, %v3359
          %v3361 = vsel %vm3353, %v3340, %v3360
          %v3362 = vpack.c.b16 %v3361, %v3354
          %v3371 = vunpack.c.l.b16 %v2114
          %v3372 = vunpack.c.l.b16 %v2115
          %v3373 = vunpack.c.l.b16 %v2116
          %v3374 = vunpack.c.l.b16 %v2117
          %v3375 = vunpack.c.l.b16 %v2118
          %v3376 = vunpack.c.l.b16 %v2119
          %v3377 = vunpack.c.l.b16 %v2120
          %v3378 = vunpack.c.l.b16 %v2121
          %v3379 = vpack.c.b16 %v3372, %v3371
          %v3380 = vpack.c.b16 %v3374, %v3373
          %v3381 = vpack.c.b16 %v3376, %v3375
          %v3382 = vpack.c.b16 %v3378, %v3377
          %v3388 = vsel %vm1975, %v3362, 0
          %3390 = vmatprep.subr.bf16.mxu0 0
          %3391 = vmatpush1.bf16.msra.mxu0 0
          %3392 = vmatprep.subr.bf16.mxu0 0
          %3393 = vmatpush1.bf16.msra.mxu0 0
          %3394 = vmatprep.subr.bf16.mxu0 0
          %3395 = vmatpush1.bf16.msra.mxu0 0
          %3396 = vmatprep.subr.bf16.mxu0 0
          %3397 = vmatpush1.bf16.msra.mxu0 0
          %3398 = vmatprep.subr.bf16.mxu0 0
          %3399 = vmatpush1.bf16.msra.mxu0 %v3382
          %3400 = vmatprep.subr.bf16.mxu0 0
          %3401 = vmatpush1.bf16.msra.mxu0 %v3381
          %3402 = vmatprep.subr.bf16.mxu0 0
          %3403 = vmatpush1.bf16.msra.mxu0 %v3380
          %3404 = vmatprep.subr.bf16.mxu0 0
          %3405 = vmatpush1.bf16.msra.mxu0 %v3379
          %3406 = vmatprep.subr.bf16.mxu0 0
          %3407 = vmatpush2.bf16.msra.mxu0 0
          %3408 = vmatprep.subr.bf16.mxu0 0
          %3409 = vmatpush2.bf16.msra.mxu0 0
          %3410 = vmatprep.subr.bf16.mxu0 0
          %3411 = vmatpush2.bf16.msra.mxu0 0
          %3412 = vmatprep.subr.bf16.mxu0 0
          %3413 = vmatpush2.bf16.msra.mxu0 0
          %3414 = vmatprep.subr.bf16.mxu0 0
          %3415 = vmatpush2.bf16.msra.mxu0 0
          %3416 = vmatprep.subr.bf16.mxu0 0
          %3417 = vmatpush2.bf16.msra.mxu0 0
          %3418 = vmatprep.subr.bf16.mxu0 0
          %3419 = vmatpush2.bf16.msra.mxu0 0
          %3420 = vmatprep.subr.bf16.mxu0 0
          %3421 = vmatpush2.bf16.msra.mxu0 0
          %3422 = vmatprep.mubr.bf16.mxu0 0
          %3423 = vmatmul.mubr.bf16.gmra.mxu0 %v3388
          %v3424 = vpop.f32.mrf.mxu0
          %v3425 = vadd.f32 %v3307, %v3424
          %v3426 = vpop.f32.mrf.mxu0
          %v3427 = vpop.f32.mrf.mxu0
          %v3428 = vadd.f32 %v3307, %v3427
          %v3429 = vpop.f32.mrf.mxu0
          %3430 = vdwg.mxu0
          %v3431 = vadd.f32 %v2095, %v3425
          %v3432 = vadd.f32 %v2096, %v3428
          %v3433 = vsel %vm1975, %v3431, 0.0
          %3434 = vadd.xlane.f32.xlu0 %v3433
          %v3435 = vpop.xlane.xlu0 %3434
          %v3436 = vsel %vm1975, %v3432, 0.0
          %3437 = vadd.xlane.f32.xlu0 %v3436
          %v3438 = vpop.xlane.xlu0 %3437
          %v3439 = vmul.f32 %v3435, %v1982
          %v3440 = vmul.f32 %v3438, %v1982
          %v3441 = vsub.f32 %v3431, %v3439
          %v3442 = vsub.f32 %v3432, %v3440
          %v3443 = vmul.f32 %v3441, %v3441
          %v3444 = vmul.f32 %v3442, %v3442
          %v3445 = vsel %vm1975, %v3443, 0.0
          %3446 = vadd.xlane.f32.xlu0 %v3445
          %v3447 = vpop.xlane.xlu0 %3446
          %v3448 = vsel %vm1975, %v3444, 0.0
          %3449 = vadd.xlane.f32.xlu0 %v3448
          %v3450 = vpop.xlane.xlu0 %3449
          %v3451 = vmul.f32 %v3447, %v1982
          %v3452 = vmul.f32 %v3450, %v1982
          %v3453 = vadd.f32 %v3451, 1e-05
          %v3454 = vadd.f32 %v3452, 1e-05
          %v3455 = vrsqrt.pop %v3453
          %v3456 = vrsqrt.pop %v3454
          %v3457 = vmul.f32 %v3441, %v3455
          %v3458 = vmul.f32 %v3442, %v3456
          %v3460 = vlaneseq
          %v3461 = vshrl.u32 %v3460, 7
          %v3462 = vsub.s32 0, %v3461
          %v3463 = vrot.slane %v2125, %v3462
          %v3465 = vmul.f32 %v3457, %v3463
          %v3466 = vmul.f32 %v3458, %v3463
          %v3468 = vlaneseq
          %v3469 = vshrl.u32 %v3468, 7
          %v3470 = vsub.s32 0, %v3469
          %v3471 = vrot.slane %v2127, %v3470
          %v3473 = vadd.f32 %v3465, %v3471
          %v3474 = vadd.f32 %v3466, %v3471
          %v3475 = vpack.c.bf16 %v3474, %v3473
          %v3477 = vlaneseq
          %v3478 = vshrl.u32 %v3477, 7
          %v3479 = vsub.s32 0, %v3478
          %v3480 = vrot.slane %v2139, %v3479
          %v3490 = vunpack.c.l.b16 %v2130
          %v3491 = vunpack.c.l.b16 %v2131
          %v3492 = vunpack.c.l.b16 %v2132
          %v3493 = vunpack.c.l.b16 %v2133
          %v3494 = vunpack.c.l.b16 %v2134
          %v3495 = vunpack.c.l.b16 %v2135
          %v3496 = vunpack.c.l.b16 %v2136
          %v3497 = vunpack.c.l.b16 %v2137
          %v3498 = vpack.c.b16 %v3491, %v3490
          %v3499 = vpack.c.b16 %v3493, %v3492
          %v3500 = vpack.c.b16 %v3495, %v3494
          %v3501 = vpack.c.b16 %v3497, %v3496
          %v3507 = vsel %vm1975, %v3475, 0
          %3509 = vmatprep.subr.bf16.mxu0 0
          %3510 = vmatpush1.bf16.msra.mxu0 0
          %3511 = vmatprep.subr.bf16.mxu0 0
          %3512 = vmatpush1.bf16.msra.mxu0 0
          %3513 = vmatprep.subr.bf16.mxu0 0
          %3514 = vmatpush1.bf16.msra.mxu0 0
          %3515 = vmatprep.subr.bf16.mxu0 0
          %3516 = vmatpush1.bf16.msra.mxu0 0
          %3517 = vmatprep.subr.bf16.mxu0 0
          %3518 = vmatpush1.bf16.msra.mxu0 %v3501
          %3519 = vmatprep.subr.bf16.mxu0 0
          %3520 = vmatpush1.bf16.msra.mxu0 %v3500
          %3521 = vmatprep.subr.bf16.mxu0 0
          %3522 = vmatpush1.bf16.msra.mxu0 %v3499
          %3523 = vmatprep.subr.bf16.mxu0 0
          %3524 = vmatpush1.bf16.msra.mxu0 %v3498
          %3525 = vmatprep.subr.bf16.mxu0 0
          %3526 = vmatpush2.bf16.msra.mxu0 0
          %3527 = vmatprep.subr.bf16.mxu0 0
          %3528 = vmatpush2.bf16.msra.mxu0 0
          %3529 = vmatprep.subr.bf16.mxu0 0
          %3530 = vmatpush2.bf16.msra.mxu0 0
          %3531 = vmatprep.subr.bf16.mxu0 0
          %3532 = vmatpush2.bf16.msra.mxu0 0
          %3533 = vmatprep.subr.bf16.mxu0 0
          %3534 = vmatpush2.bf16.msra.mxu0 0
          %3535 = vmatprep.subr.bf16.mxu0 0
          %3536 = vmatpush2.bf16.msra.mxu0 0
          %3537 = vmatprep.subr.bf16.mxu0 0
          %3538 = vmatpush2.bf16.msra.mxu0 0
          %3539 = vmatprep.subr.bf16.mxu0 0
          %3540 = vmatpush2.bf16.msra.mxu0 0
          %3541 = vmatprep.mubr.bf16.mxu0 0
          %3542 = vmatmul.mubr.bf16.gmra.mxu0 %v3507
          %v3543 = vpop.f32.mrf.mxu0
          %v3544 = vadd.f32 %v3480, %v3543
          %v3545 = vpop.f32.mrf.mxu0
          %v3546 = vpop.f32.mrf.mxu0
          %v3547 = vadd.f32 %v3480, %v3546
          %v3548 = vpop.f32.mrf.mxu0
          %3549 = vdwg.mxu0
          %v3550 = vmax.f32 %v3544, 0.0
          %v3551 = vmax.f32 %v3547, 0.0
          %v3552 = vpack.c.bf16 %v3551, %v3550
          %v3554 = vlaneseq
          %v3555 = vshrl.u32 %v3554, 7
          %v3556 = vsub.s32 0, %v3555
          %v3557 = vrot.slane %v2159, %v3556
          %v3575 = vunpack.c.l.b16 %v2142
          %v3576 = vunpack.c.l.b16 %v2143
          %v3577 = vunpack.c.l.b16 %v2144
          %v3578 = vunpack.c.l.b16 %v2145
          %v3579 = vunpack.c.l.b16 %v2146
          %v3580 = vunpack.c.l.b16 %v2147
          %v3581 = vunpack.c.l.b16 %v2148
          %v3582 = vunpack.c.l.b16 %v2149
          %v3583 = vunpack.c.l.b16 %v2150
          %v3584 = vunpack.c.l.b16 %v2151
          %v3585 = vunpack.c.l.b16 %v2152
          %v3586 = vunpack.c.l.b16 %v2153
          %v3587 = vunpack.c.l.b16 %v2154
          %v3588 = vunpack.c.l.b16 %v2155
          %v3589 = vunpack.c.l.b16 %v2156
          %v3590 = vunpack.c.l.b16 %v2157
          %v3591 = vpack.c.b16 %v3576, %v3575
          %v3592 = vpack.c.b16 %v3578, %v3577
          %v3593 = vpack.c.b16 %v3580, %v3579
          %v3594 = vpack.c.b16 %v3582, %v3581
          %v3595 = vpack.c.b16 %v3584, %v3583
          %v3596 = vpack.c.b16 %v3586, %v3585
          %v3597 = vpack.c.b16 %v3588, %v3587
          %v3598 = vpack.c.b16 %v3590, %v3589
          %3607 = vmatprep.subr.bf16.mxu0 0
          %3608 = vmatpush1.bf16.msra.mxu0 %v3598
          %3609 = vmatprep.subr.bf16.mxu0 0
          %3610 = vmatpush1.bf16.msra.mxu0 %v3597
          %3611 = vmatprep.subr.bf16.mxu0 0
          %3612 = vmatpush1.bf16.msra.mxu0 %v3596
          %3613 = vmatprep.subr.bf16.mxu0 0
          %3614 = vmatpush1.bf16.msra.mxu0 %v3595
          %3615 = vmatprep.subr.bf16.mxu0 0
          %3616 = vmatpush1.bf16.msra.mxu0 %v3594
          %3617 = vmatprep.subr.bf16.mxu0 0
          %3618 = vmatpush1.bf16.msra.mxu0 %v3593
          %3619 = vmatprep.subr.bf16.mxu0 0
          %3620 = vmatpush1.bf16.msra.mxu0 %v3592
          %3621 = vmatprep.subr.bf16.mxu0 0
          %3622 = vmatpush1.bf16.msra.mxu0 %v3591
          %3623 = vmatprep.subr.bf16.mxu0 0
          %3624 = vmatpush2.bf16.msra.mxu0 0
          %3625 = vmatprep.subr.bf16.mxu0 0
          %3626 = vmatpush2.bf16.msra.mxu0 0
          %3627 = vmatprep.subr.bf16.mxu0 0
          %3628 = vmatpush2.bf16.msra.mxu0 0
          %3629 = vmatprep.subr.bf16.mxu0 0
          %3630 = vmatpush2.bf16.msra.mxu0 0
          %3631 = vmatprep.subr.bf16.mxu0 0
          %3632 = vmatpush2.bf16.msra.mxu0 0
          %3633 = vmatprep.subr.bf16.mxu0 0
          %3634 = vmatpush2.bf16.msra.mxu0 0
          %3635 = vmatprep.subr.bf16.mxu0 0
          %3636 = vmatpush2.bf16.msra.mxu0 0
          %3637 = vmatprep.subr.bf16.mxu0 0
          %3638 = vmatpush2.bf16.msra.mxu0 0
          %3639 = vmatprep.mubr.bf16.mxu0 0
          %3640 = vmatmul.mubr.bf16.gmra.mxu0 %v3552
          %v3641 = vpop.f32.mrf.mxu0
          %v3642 = vadd.f32 %v3557, %v3641
          %v3643 = vpop.f32.mrf.mxu0
          %v3644 = vpop.f32.mrf.mxu0
          %v3645 = vadd.f32 %v3557, %v3644
          %v3646 = vpop.f32.mrf.mxu0
          %3647 = vdwg.mxu0
          %v3648 = vadd.f32 %v3473, %v3642
          %v3649 = vadd.f32 %v3474, %v3645
          %v3650 = vsel %vm1975, %v3648, 0.0
          %3651 = vadd.xlane.f32.xlu0 %v3650
          %v3652 = vpop.xlane.xlu0 %3651
          %v3653 = vsel %vm1975, %v3649, 0.0
          %3654 = vadd.xlane.f32.xlu0 %v3653
          %v3655 = vpop.xlane.xlu0 %3654
          %v3656 = vmul.f32 %v3652, %v1982
          %v3657 = vmul.f32 %v3655, %v1982
          %v3658 = vsub.f32 %v3648, %v3656
          %v3659 = vsub.f32 %v3649, %v3657
          %v3660 = vmul.f32 %v3658, %v3658
          %v3661 = vmul.f32 %v3659, %v3659
          %v3662 = vsel %vm1975, %v3660, 0.0
          %3663 = vadd.xlane.f32.xlu0 %v3662
          %v3664 = vpop.xlane.xlu0 %3663
          %v3665 = vsel %vm1975, %v3661, 0.0
          %3666 = vadd.xlane.f32.xlu0 %v3665
          %v3667 = vpop.xlane.xlu0 %3666
          %v3668 = vmul.f32 %v3664, %v1982
          %v3669 = vmul.f32 %v3667, %v1982
          %v3670 = vadd.f32 %v3668, 1e-05
          %v3671 = vadd.f32 %v3669, 1e-05
          %v3672 = vrsqrt.pop %v3670
          %v3673 = vrsqrt.pop %v3671
          %v3674 = vmul.f32 %v3658, %v3672
          %v3675 = vmul.f32 %v3659, %v3673
          %v3677 = vlaneseq
          %v3678 = vshrl.u32 %v3677, 7
          %v3679 = vsub.s32 0, %v3678
          %v3680 = vrot.slane %v2161, %v3679
          %v3682 = vmul.f32 %v3674, %v3680
          %v3683 = vmul.f32 %v3675, %v3680
          %v3685 = vlaneseq
          %v3686 = vshrl.u32 %v3685, 7
          %v3687 = vsub.s32 0, %v3686
          %v3688 = vrot.slane %v2163, %v3687
          %v3690 = vadd.f32 %v3682, %v3688
          %v3691 = vadd.f32 %v3683, %v3688
        $region345: #{encoder_forward.1} parent=207 // loop_footer
          %s2094 = sadd.s32 1, %s2090
        $region346: #{encoder_forward.1} parent=207 // loop_footer_branch
          %2089 = sbr.rel target = $region342
        $region347: #{encoder_forward.1} parent=207 // loop_exit
          _
        %v3692 = vpack.c.bf16 %v2096, %v2095
        %v3693 = vld [vmem:[%s35] sm:$0xf]
        %v3694 = vld [vmem:[%s35 + $0x4] sm:$0xf]
        %v3695 = vld [vmem:[%s35 + $0x8] sm:$0xf]
        %v3696 = vld [vmem:[%s35 + $0xc] sm:$0xf]
        %v3697 = vld [vmem:[%s35 + $0x10] sm:$0xf]
        %v3698 = vld [vmem:[%s35 + $0x14] sm:$0xf]
        %v3699 = vld [vmem:[%s35 + $0x18] sm:$0xf]
        %v3700 = vld [vmem:[%s35 + $0x1c] sm:$0xf]
        %v3701 = vld [vmem:[#allocation17] sm:$0x1]
        %v3703 = vlaneseq
        %v3704 = vshrl.u32 %v3703, 7
        %v3705 = vsub.s32 0, %v3704
        %v3706 = vrot.slane %v3701, %v3705
        %v3716 = vunpack.c.l.b16 %v3693
        %v3717 = vunpack.c.l.b16 %v3694
        %v3718 = vunpack.c.l.b16 %v3695
        %v3719 = vunpack.c.l.b16 %v3696
        %v3720 = vunpack.c.l.b16 %v3697
        %v3721 = vunpack.c.l.b16 %v3698
        %v3722 = vunpack.c.l.b16 %v3699
        %v3723 = vunpack.c.l.b16 %v3700
        %v3724 = vpack.c.b16 %v3717, %v3716
        %v3725 = vpack.c.b16 %v3719, %v3718
        %v3726 = vpack.c.b16 %v3721, %v3720
        %v3727 = vpack.c.b16 %v3723, %v3722
        %v3733 = vsel %vm1975, %v3692, 0
        %3735 = vmatprep.subr.bf16.mxu0 0
        %3736 = vmatpush1.bf16.msra.mxu0 0
        %3737 = vmatprep.subr.bf16.mxu0 0
        %3738 = vmatpush1.bf16.msra.mxu0 0
        %3739 = vmatprep.subr.bf16.mxu0 0
        %3740 = vmatpush1.bf16.msra.mxu0 0
        %3741 = vmatprep.subr.bf16.mxu0 0
        %3742 = vmatpush1.bf16.msra.mxu0 0
        %3743 = vmatprep.subr.bf16.mxu0 0
        %3744 = vmatpush1.bf16.msra.mxu0 %v3727
        %3745 = vmatprep.subr.bf16.mxu0 0
        %3746 = vmatpush1.bf16.msra.mxu0 %v3726
        %3747 = vmatprep.subr.bf16.mxu0 0
        %3748 = vmatpush1.bf16.msra.mxu0 %v3725
        %3749 = vmatprep.subr.bf16.mxu0 0
        %3750 = vmatpush1.bf16.msra.mxu0 %v3724
        %3751 = vmatprep.subr.bf16.mxu0 0
        %3752 = vmatpush2.bf16.msra.mxu0 0
        %3753 = vmatprep.subr.bf16.mxu0 0
        %3754 = vmatpush2.bf16.msra.mxu0 0
        %3755 = vmatprep.subr.bf16.mxu0 0
        %3756 = vmatpush2.bf16.msra.mxu0 0
        %3757 = vmatprep.subr.bf16.mxu0 0
        %3758 = vmatpush2.bf16.msra.mxu0 0
        %3759 = vmatprep.subr.bf16.mxu0 0
        %3760 = vmatpush2.bf16.msra.mxu0 0
        %3761 = vmatprep.subr.bf16.mxu0 0
        %3762 = vmatpush2.bf16.msra.mxu0 0
        %3763 = vmatprep.subr.bf16.mxu0 0
        %3764 = vmatpush2.bf16.msra.mxu0 0
        %3765 = vmatprep.subr.bf16.mxu0 0
        %3766 = vmatpush2.bf16.msra.mxu0 0
        %3767 = vmatprep.mubr.bf16.mxu0 0
        %3768 = vmatmul.mubr.bf16.gmra.mxu0 %v3733
        %v3769 = vpop.f32.mrf.mxu0
        %v3770 = vadd.f32 %v3706, %v3769
        %v3771 = vpop.f32.mrf.mxu0
        %v3772 = vpop.f32.mrf.mxu0
        %v3773 = vadd.f32 %v3706, %v3772
        %v3774 = vpop.f32.mrf.mxu0
        %3775 = vdwg.mxu0
        %v3776 = vmul.u32 %v2048, 4
        %vm3777 = vcmp.ge.s32.totalorder %v2039, %v3776
        %vm3778 = vcmp.ge.s32.totalorder %v2040, %v3776
        %v3779 = vadd.s32 %v3776, 4
        %vm3780 = vcmp.lt.s32.totalorder %v2039, %v3779
        %vm3781 = vcmp.lt.s32.totalorder %v2040, %v3779
        %vm3782 = vmand %vm3777, %vm3780
        %vm3783 = vmand %vm3778, %vm3781
        %v3784 = vsel %vm3782, 1.0, 0.0
        %v3785 = vsel %vm3783, 1.0, 0.0
        %v3786 = vmul.u32 %v2039, 4
        %vm3787 = vcmp.ge.s32.totalorder %v2048, %v3786
        %v3788 = vadd.s32 %v3786, 4
        %vm3789 = vcmp.lt.s32.totalorder %v2048, %v3788
        %vm3790 = vmand %vm3787, %vm3789
        %v3791 = vsel %vm3790, 1.0, 0.0
        loop: start=0, step=1, limit=2
        $region348: #{encoder_forward.1} parent=207 // loop_pre_header
          _
        $region349: #{encoder_forward.1} parent=207 // loop_header
          %s3793 = sphi 0, %s3797
          %p3794 = scmp.ge.s32.totalorder %s3793, 2
          %v3798 = vphi %v3770, %v5337
          %v3799 = vphi %v3773, %v5338
        $region350: #{encoder_forward.1} parent=207 // loop_header_branch
          %3796 = sbr.rel (%p3794) target = $region354
        $region351: #{encoder_forward.1} parent=207 // loop_body
          %s3800 = smul.u32 %s3793, 16
          %s3801 = scalar_lea.vmem %s39, %s3800
          %v3802 = vld [vmem:[%s3801] sm:$0xff]
          %v3803 = vld [vmem:[%s3801 + $0x8] sm:$0xff]
          %s3804 = scalar_lea.vmem [#allocation19], %s3793
          %v3805 = vld [vmem:[%s3804] sm:$0x1]
          %s3806 = scalar_lea.vmem %s43, %s3800
          %v3807 = vld [vmem:[%s3806] sm:$0xff]
          %v3808 = vld [vmem:[%s3806 + $0x8] sm:$0xff]
          %s3809 = scalar_lea.vmem [#allocation20], %s3793
          %v3810 = vld [vmem:[%s3809] sm:$0x1]
          %s3811 = scalar_lea.vmem [#allocation22], %s3793
          %v3812 = vld [vmem:[%s3811] sm:$0x1]
          %s3813 = scalar_lea.vmem [#allocation23], %s3793
          %v3814 = vld [vmem:[%s3813] sm:$0x1]
          %s3815 = scalar_lea.vmem [#allocation25], %s3800
          %v3816 = vld [vmem:[%s3815] sm:$0xff]
          %v3817 = vld [vmem:[%s3815 + $0x8] sm:$0xff]
          %s3818 = scalar_lea.vmem [#allocation26], %s3793
          %v3819 = vld [vmem:[%s3818] sm:$0x1]
          %s3820 = smul.u32 %s3793, 32
          %s3821 = scalar_lea.vmem %s55, %s3820
          %v3822 = vld [vmem:[%s3821] sm:$0xff]
          %v3823 = vld [vmem:[%s3821 + $0x8] sm:$0xff]
          %v3824 = vld [vmem:[%s3821 + $0x10] sm:$0xff]
          %v3825 = vld [vmem:[%s3821 + $0x18] sm:$0xff]
          %s3826 = scalar_lea.vmem [#allocation28], %s3793
          %v3827 = vld [vmem:[%s3826] sm:$0x1]
          %s3828 = scalar_lea.vmem [#allocation29], %s3793
          %v3829 = vld [vmem:[%s3828] sm:$0x1]
          %s3830 = scalar_lea.vmem [#allocation31], %s3793
          %v3831 = vld [vmem:[%s3830] sm:$0x1]
          %v3833 = vlaneseq
          %v3834 = vshrl.u32 %v3833, 7
          %v3835 = vsub.s32 0, %v3834
          %v3836 = vrot.slane %v3805, %v3835
          %vm3838 = vcmask 130048
          %v3840 = vsel %vm3838, %v3798, 0
          %v3843 = vsel %vm3838, %v3799, 0
          %3845 = vmatprep.subr.mxu0 0.0
          %3846 = vmatpush1.msra.mxu0 0.0
          %3847 = vmatprep.subr.mxu0 0.0
          %3848 = vmatpush1.msra.mxu0 0.0
          %3849 = vmatprep.subr.mxu0 0.0
          %3850 = vmatpush1.msra.mxu0 0.0
          %3851 = vmatprep.subr.mxu0 0.0
          %3852 = vmatpush1.msra.mxu0 0.0
          %3853 = vmatprep.subr.mxu0 0.0
          %3854 = vmatpush1.msra.mxu0 0.0
          %3855 = vmatprep.subr.mxu0 0.0
          %3856 = vmatpush1.msra.mxu0 0.0
          %3857 = vmatprep.subr.mxu0 0.0
          %3858 = vmatpush1.msra.mxu0 0.0
          %3859 = vmatprep.subr.mxu0 0.0
          %3860 = vmatpush1.msra.mxu0 0.0
          %3861 = vmatprep.subr.mxu0 0.0
          %3862 = vmatpush1.msra.mxu0 0.0
          %3863 = vmatprep.subr.mxu0 0.0
          %3864 = vmatpush1.msra.mxu0 0.0
          %3865 = vmatprep.subr.mxu0 0.0
          %3866 = vmatpush1.msra.mxu0 0.0
          %3867 = vmatprep.subr.mxu0 0.0
          %3868 = vmatpush1.msra.mxu0 0.0
          %3869 = vmatprep.subr.mxu0 0.0
          %3870 = vmatpush1.msra.mxu0 0.0
          %3871 = vmatprep.subr.mxu0 0.0
          %3872 = vmatpush1.msra.mxu0 0.0
          %3873 = vmatprep.subr.mxu0 0.0
          %3874 = vmatpush1.msra.mxu0 %v3803
          %3875 = vmatprep.subr.mxu0 0.0
          %3876 = vmatpush1.msra.mxu0 %v3802
          %3877 = vmatprep.subr.mxu0 0.0
          %3878 = vmatpush2.msra.mxu0 0.0
          %3879 = vmatprep.subr.mxu0 0.0
          %3880 = vmatpush2.msra.mxu0 0.0
          %3881 = vmatprep.subr.mxu0 0.0
          %3882 = vmatpush2.msra.mxu0 0.0
          %3883 = vmatprep.subr.mxu0 0.0
          %3884 = vmatpush2.msra.mxu0 0.0
          %3885 = vmatprep.subr.mxu0 0.0
          %3886 = vmatpush2.msra.mxu0 0.0
          %3887 = vmatprep.subr.mxu0 0.0
          %3888 = vmatpush2.msra.mxu0 0.0
          %3889 = vmatprep.subr.mxu0 0.0
          %3890 = vmatpush2.msra.mxu0 0.0
          %3891 = vmatprep.subr.mxu0 0.0
          %3892 = vmatpush2.msra.mxu0 0.0
          %3893 = vmatprep.subr.mxu0 0.0
          %3894 = vmatpush2.msra.mxu0 0.0
          %3895 = vmatprep.subr.mxu0 0.0
          %3896 = vmatpush2.msra.mxu0 0.0
          %3897 = vmatprep.subr.mxu0 0.0
          %3898 = vmatpush2.msra.mxu0 0.0
          %3899 = vmatprep.subr.mxu0 0.0
          %3900 = vmatpush2.msra.mxu0 0.0
          %3901 = vmatprep.subr.mxu0 0.0
          %3902 = vmatpush2.msra.mxu0 0.0
          %3903 = vmatprep.subr.mxu0 0.0
          %3904 = vmatpush2.msra.mxu0 0.0
          %3905 = vmatprep.subr.mxu0 0.0
          %3906 = vmatpush2.msra.mxu0 0.0
          %3907 = vmatprep.subr.mxu0 0.0
          %3908 = vmatpush2.msra.mxu0 0.0
          %3909 = vmatprep.mubr.f32.mxu0 0.0
          %3910 = vmatmul.mubr.f32.gmra.mxu0 %v3840
          %v3911 = vpop.f32.mrf.mxu0
          %v3912 = vadd.f32 %v3836, %v3911
          %v3913 = vpop.f32.mrf.mxu0
          %3914 = vmatprep.mubr.f32.mxu0 0.0
          %3915 = vmatmul.mubr.f32.gmra.mxu0 %v3843
          %v3916 = vpop.f32.mrf.mxu0
          %v3917 = vadd.f32 %v3836, %v3916
          %v3918 = vpop.f32.mrf.mxu0
          %3919 = vdwg.mxu0
          %v3922 = vcombine.high %v3912, %v3912
          %v3924 = vunpack.c.l.s4 1966171168
          %v3925 = vunpack.c.0.s8 %v3924
          %v3926 = vlaneseq
          %v3927 = vshrl.u32 %v3926, 7
          %v3928 = vsub.s32 %v3925, %v3927
          %v3929 = vrot.slane %v3912, %v3928
          %v3931 = vunpack.c.l.s4 1966171168
          %v3932 = vunpack.c.0.s8 %v3931
          %v3933 = vlaneseq
          %v3934 = vshrl.u32 %v3933, 7
          %v3935 = vsub.s32 %v3932, %v3934
          %v3936 = vrot.slane %v3922, %v3935
          %v3937 = vcombine.high %v3929, %v3929
          %v3938 = vcombine.high %v3936, %v3936
          %v3940 = vunpack.c.l.s4 1966171168
          %v3941 = vunpack.c.0.s8 %v3940
          %v3942 = vlaneseq
          %v3943 = vshrl.u32 %v3942, 7
          %v3944 = vsub.s32 %v3941, %v3943
          %v3945 = vrot.slane %v3929, %v3944
          %v3947 = vunpack.c.l.s4 1966171168
          %v3948 = vunpack.c.0.s8 %v3947
          %v3949 = vlaneseq
          %v3950 = vshrl.u32 %v3949, 7
          %v3951 = vsub.s32 %v3948, %v3950
          %v3952 = vrot.slane %v3936, %v3951
          %v3954 = vunpack.c.l.s4 1966171168
          %v3955 = vunpack.c.0.s8 %v3954
          %v3956 = vlaneseq
          %v3957 = vshrl.u32 %v3956, 7
          %v3958 = vsub.s32 %v3955, %v3957
          %v3959 = vrot.slane %v3937, %v3958
          %v3961 = vunpack.c.l.s4 1966171168
          %v3962 = vunpack.c.0.s8 %v3961
          %v3963 = vlaneseq
          %v3964 = vshrl.u32 %v3963, 7
          %v3965 = vsub.s32 %v3962, %v3964
          %v3966 = vrot.slane %v3938, %v3965
          %v3967 = vcombine.high %v3945, %v3945
          %v3968 = vcombine.high %v3952, %v3952
          %v3969 = vcombine.high %v3959, %v3959
          %v3970 = vcombine.high %v3966, %v3966
          %v3971 = vcombine.high %v3917, %v3917
          %v3973 = vunpack.c.l.s4 1966171168
          %v3974 = vunpack.c.0.s8 %v3973
          %v3975 = vlaneseq
          %v3976 = vshrl.u32 %v3975, 7
          %v3977 = vsub.s32 %v3974, %v3976
          %v3978 = vrot.slane %v3917, %v3977
          %v3980 = vunpack.c.l.s4 1966171168
          %v3981 = vunpack.c.0.s8 %v3980
          %v3982 = vlaneseq
          %v3983 = vshrl.u32 %v3982, 7
          %v3984 = vsub.s32 %v3981, %v3983
          %v3985 = vrot.slane %v3971, %v3984
          %v3986 = vcombine.high %v3978, %v3978
          %v3987 = vcombine.high %v3985, %v3985
          %v3989 = vunpack.c.l.s4 1966171168
          %v3990 = vunpack.c.0.s8 %v3989
          %v3991 = vlaneseq
          %v3992 = vshrl.u32 %v3991, 7
          %v3993 = vsub.s32 %v3990, %v3992
          %v3994 = vrot.slane %v3978, %v3993
          %v3996 = vunpack.c.l.s4 1966171168
          %v3997 = vunpack.c.0.s8 %v3996
          %v3998 = vlaneseq
          %v3999 = vshrl.u32 %v3998, 7
          %v4000 = vsub.s32 %v3997, %v3999
          %v4001 = vrot.slane %v3985, %v4000
          %v4003 = vunpack.c.l.s4 1966171168
          %v4004 = vunpack.c.0.s8 %v4003
          %v4005 = vlaneseq
          %v4006 = vshrl.u32 %v4005, 7
          %v4007 = vsub.s32 %v4004, %v4006
          %v4008 = vrot.slane %v3986, %v4007
          %v4010 = vunpack.c.l.s4 1966171168
          %v4011 = vunpack.c.0.s8 %v4010
          %v4012 = vlaneseq
          %v4013 = vshrl.u32 %v4012, 7
          %v4014 = vsub.s32 %v4011, %v4013
          %v4015 = vrot.slane %v3987, %v4014
          %v4016 = vcombine.high %v3994, %v3994
          %v4017 = vcombine.high %v4001, %v4001
          %v4018 = vcombine.high %v4008, %v4008
          %v4019 = vcombine.high %v4015, %v4015
          %v4020 = vlaneseq
          %v4021 = vshrl.u32 %v4020, 7
          %v4022 = vsub.s32 0, %v4021
          %v4023 = vrot.slane %v3945, %v4022
          %v4024 = vlaneseq
          %v4025 = vshrl.u32 %v4024, 7
          %v4026 = vsub.s32 0, %v4025
          %v4027 = vrot.slane %v3959, %v4026
          %v4028 = vlaneseq
          %v4029 = vshrl.u32 %v4028, 7
          %v4030 = vsub.s32 0, %v4029
          %v4031 = vrot.slane %v3967, %v4030
          %v4032 = vlaneseq
          %v4033 = vshrl.u32 %v4032, 7
          %v4034 = vsub.s32 0, %v4033
          %v4035 = vrot.slane %v3969, %v4034
          %v4036 = vlaneseq
          %v4037 = vshrl.u32 %v4036, 7
          %v4038 = vsub.s32 0, %v4037
          %v4039 = vrot.slane %v3952, %v4038
          %v4040 = vlaneseq
          %v4041 = vshrl.u32 %v4040, 7
          %v4042 = vsub.s32 0, %v4041
          %v4043 = vrot.slane %v3966, %v4042
          %v4044 = vlaneseq
          %v4045 = vshrl.u32 %v4044, 7
          %v4046 = vsub.s32 0, %v4045
          %v4047 = vrot.slane %v3968, %v4046
          %v4048 = vlaneseq
          %v4049 = vshrl.u32 %v4048, 7
          %v4050 = vsub.s32 0, %v4049
          %v4051 = vrot.slane %v3970, %v4050
          %v4052 = vlaneseq
          %v4053 = vshrl.u32 %v4052, 7
          %v4054 = vsub.s32 0, %v4053
          %v4055 = vrot.slane %v3994, %v4054
          %v4056 = vlaneseq
          %v4057 = vshrl.u32 %v4056, 7
          %v4058 = vsub.s32 0, %v4057
          %v4059 = vrot.slane %v4008, %v4058
          %v4060 = vlaneseq
          %v4061 = vshrl.u32 %v4060, 7
          %v4062 = vsub.s32 0, %v4061
          %v4063 = vrot.slane %v4016, %v4062
          %v4064 = vlaneseq
          %v4065 = vshrl.u32 %v4064, 7
          %v4066 = vsub.s32 0, %v4065
          %v4067 = vrot.slane %v4018, %v4066
          %v4068 = vlaneseq
          %v4069 = vshrl.u32 %v4068, 7
          %v4070 = vsub.s32 0, %v4069
          %v4071 = vrot.slane %v4001, %v4070
          %v4072 = vlaneseq
          %v4073 = vshrl.u32 %v4072, 7
          %v4074 = vsub.s32 0, %v4073
          %v4075 = vrot.slane %v4015, %v4074
          %v4076 = vlaneseq
          %v4077 = vshrl.u32 %v4076, 7
          %v4078 = vsub.s32 0, %v4077
          %v4079 = vrot.slane %v4017, %v4078
          %v4080 = vlaneseq
          %v4081 = vshrl.u32 %v4080, 7
          %v4082 = vsub.s32 0, %v4081
          %v4083 = vrot.slane %v4019, %v4082
          %4100 = vrot.lane.b32.xlu0 %v3912, 112
          %v4101 = vpop.permute.xlu0 %4100
          %4102 = vrot.lane.b32.xlu0 %v3917, 112
          %v4103 = vpop.permute.xlu0 %4102
          %v4106 = vmul.f32 %v4023, %v4101
          %v4107 = vmul.f32 %v4027, %v4101
          %v4108 = vmul.f32 %v4031, %v4101
          %v4109 = vmul.f32 %v4035, %v4101
          %v4110 = vmul.f32 %v4039, %v4101
          %v4111 = vmul.f32 %v4043, %v4101
          %v4112 = vmul.f32 %v4047, %v4101
          %v4113 = vmul.f32 %v4051, %v4101
          %v4114 = vmul.f32 %v4055, %v4103
          %v4115 = vmul.f32 %v4059, %v4103
          %v4116 = vmul.f32 %v4063, %v4103
          %v4117 = vmul.f32 %v4067, %v4103
          %v4118 = vmul.f32 %v4071, %v4103
          %v4119 = vmul.f32 %v4075, %v4103
          %v4120 = vmul.f32 %v4079, %v4103
          %v4121 = vmul.f32 %v4083, %v4103
          %v4123 = vsel %vm3838, %v4106, 0
          %v4126 = vsel %vm3838, %v4107, 0
          %v4129 = vsel %vm3838, %v4108, 0
          %v4132 = vsel %vm3838, %v4109, 0
          %v4135 = vsel %vm3838, %v4110, 0
          %v4138 = vsel %vm3838, %v4111, 0
          %v4141 = vsel %vm3838, %v4112, 0
          %v4144 = vsel %vm3838, %v4113, 0
          %v4147 = vsel %vm3838, %v4114, 0
          %v4150 = vsel %vm3838, %v4115, 0
          %v4153 = vsel %vm3838, %v4116, 0
          %v4156 = vsel %vm3838, %v4117, 0
          %v4159 = vsel %vm3838, %v4118, 0
          %v4162 = vsel %vm3838, %v4119, 0
          %v4165 = vsel %vm3838, %v4120, 0
          %v4168 = vsel %vm3838, %v4121, 0
          %4170 = vmatprep.subr.mxu0 0.0
          %4171 = vmatpush1.msra.mxu0 0.0
          %4172 = vmatprep.subr.mxu0 0.0
          %4173 = vmatpush1.msra.mxu0 0.0
          %4174 = vmatprep.subr.mxu0 0.0
          %4175 = vmatpush1.msra.mxu0 0.0
          %4176 = vmatprep.subr.mxu0 0.0
          %4177 = vmatpush1.msra.mxu0 0.0
          %4178 = vmatprep.subr.mxu0 0.0
          %4179 = vmatpush1.msra.mxu0 0.0
          %4180 = vmatprep.subr.mxu0 0.0
          %4181 = vmatpush1.msra.mxu0 0.0
          %4182 = vmatprep.subr.mxu0 0.0
          %4183 = vmatpush1.msra.mxu0 0.0
          %4184 = vmatprep.subr.mxu0 0.0
          %4185 = vmatpush1.msra.mxu0 0.0
          %4186 = vmatprep.subr.mxu0 0.0
          %4187 = vmatpush1.msra.mxu0 0.0
          %4188 = vmatprep.subr.mxu0 0.0
          %4189 = vmatpush1.msra.mxu0 0.0
          %4190 = vmatprep.subr.mxu0 0.0
          %4191 = vmatpush1.msra.mxu0 0.0
          %4192 = vmatprep.subr.mxu0 0.0
          %4193 = vmatpush1.msra.mxu0 0.0
          %4194 = vmatprep.subr.mxu0 0.0
          %4195 = vmatpush1.msra.mxu0 0.0
          %4196 = vmatprep.subr.mxu0 0.0
          %4197 = vmatpush1.msra.mxu0 0.0
          %4198 = vmatprep.subr.mxu0 0.0
          %4199 = vmatpush1.msra.mxu0 %v3785
          %4200 = vmatprep.subr.mxu0 0.0
          %4201 = vmatpush1.msra.mxu0 %v3784
          %4202 = vmatprep.subr.mxu0 0.0
          %4203 = vmatpush2.msra.mxu0 0.0
          %4204 = vmatprep.subr.mxu0 0.0
          %4205 = vmatpush2.msra.mxu0 0.0
          %4206 = vmatprep.subr.mxu0 0.0
          %4207 = vmatpush2.msra.mxu0 0.0
          %4208 = vmatprep.subr.mxu0 0.0
          %4209 = vmatpush2.msra.mxu0 0.0
          %4210 = vmatprep.subr.mxu0 0.0
          %4211 = vmatpush2.msra.mxu0 0.0
          %4212 = vmatprep.subr.mxu0 0.0
          %4213 = vmatpush2.msra.mxu0 0.0
          %4214 = vmatprep.subr.mxu0 0.0
          %4215 = vmatpush2.msra.mxu0 0.0
          %4216 = vmatprep.subr.mxu0 0.0
          %4217 = vmatpush2.msra.mxu0 0.0
          %4218 = vmatprep.subr.mxu0 0.0
          %4219 = vmatpush2.msra.mxu0 0.0
          %4220 = vmatprep.subr.mxu0 0.0
          %4221 = vmatpush2.msra.mxu0 0.0
          %4222 = vmatprep.subr.mxu0 0.0
          %4223 = vmatpush2.msra.mxu0 0.0
          %4224 = vmatprep.subr.mxu0 0.0
          %4225 = vmatpush2.msra.mxu0 0.0
          %4226 = vmatprep.subr.mxu0 0.0
          %4227 = vmatpush2.msra.mxu0 0.0
          %4228 = vmatprep.subr.mxu0 0.0
          %4229 = vmatpush2.msra.mxu0 0.0
          %4230 = vmatprep.subr.mxu0 0.0
          %4231 = vmatpush2.msra.mxu0 0.0
          %4232 = vmatprep.subr.mxu0 0.0
          %4233 = vmatpush2.msra.mxu0 0.0
          %4234 = vmatprep.mubr.f32.mxu0 0.0
          %4235 = vmatmul.mubr.f32.gmra.mxu0 %v4123
          %v4236 = vpop.f32.mrf.mxu0
          %v4237 = vadd.f32 0.0, %v4236
          %v4238 = vpop.f32.mrf.mxu0
          %4239 = vmatprep.mubr.f32.mxu0 0.0
          %4240 = vmatmul.mubr.f32.gmra.mxu0 %v4126
          %v4241 = vpop.f32.mrf.mxu0
          %v4242 = vadd.f32 0.0, %v4241
          %v4243 = vpop.f32.mrf.mxu0
          %4244 = vmatprep.mubr.f32.mxu0 0.0
          %4245 = vmatmul.mubr.f32.gmra.mxu0 %v4129
          %v4246 = vpop.f32.mrf.mxu0
          %v4247 = vadd.f32 0.0, %v4246
          %v4248 = vpop.f32.mrf.mxu0
          %4249 = vmatprep.mubr.f32.mxu0 0.0
          %4250 = vmatmul.mubr.f32.gmra.mxu0 %v4132
          %v4251 = vpop.f32.mrf.mxu0
          %v4252 = vadd.f32 0.0, %v4251
          %v4253 = vpop.f32.mrf.mxu0
          %4254 = vmatprep.mubr.f32.mxu0 0.0
          %4255 = vmatmul.mubr.f32.gmra.mxu0 %v4135
          %v4256 = vpop.f32.mrf.mxu0
          %v4257 = vadd.f32 0.0, %v4256
          %v4258 = vpop.f32.mrf.mxu0
          %4259 = vmatprep.mubr.f32.mxu0 0.0
          %4260 = vmatmul.mubr.f32.gmra.mxu0 %v4138
          %v4261 = vpop.f32.mrf.mxu0
          %v4262 = vadd.f32 0.0, %v4261
          %v4263 = vpop.f32.mrf.mxu0
          %4264 = vmatprep.mubr.f32.mxu0 0.0
          %4265 = vmatmul.mubr.f32.gmra.mxu0 %v4141
          %v4266 = vpop.f32.mrf.mxu0
          %v4267 = vadd.f32 0.0, %v4266
          %v4268 = vpop.f32.mrf.mxu0
          %4269 = vmatprep.mubr.f32.mxu0 0.0
          %4270 = vmatmul.mubr.f32.gmra.mxu0 %v4144
          %v4271 = vpop.f32.mrf.mxu0
          %v4272 = vadd.f32 0.0, %v4271
          %v4273 = vpop.f32.mrf.mxu0
          %4274 = vmatprep.mubr.f32.mxu0 0.0
          %4275 = vmatmul.mubr.f32.gmra.mxu0 %v4147
          %v4276 = vpop.f32.mrf.mxu0
          %v4277 = vadd.f32 0.0, %v4276
          %v4278 = vpop.f32.mrf.mxu0
          %4279 = vmatprep.mubr.f32.mxu0 0.0
          %4280 = vmatmul.mubr.f32.gmra.mxu0 %v4150
          %v4281 = vpop.f32.mrf.mxu0
          %v4282 = vadd.f32 0.0, %v4281
          %v4283 = vpop.f32.mrf.mxu0
          %4284 = vmatprep.mubr.f32.mxu0 0.0
          %4285 = vmatmul.mubr.f32.gmra.mxu0 %v4153
          %v4286 = vpop.f32.mrf.mxu0
          %v4287 = vadd.f32 0.0, %v4286
          %v4288 = vpop.f32.mrf.mxu0
          %4289 = vmatprep.mubr.f32.mxu0 0.0
          %4290 = vmatmul.mubr.f32.gmra.mxu0 %v4156
          %v4291 = vpop.f32.mrf.mxu0
          %v4292 = vadd.f32 0.0, %v4291
          %v4293 = vpop.f32.mrf.mxu0
          %4294 = vmatprep.mubr.f32.mxu0 0.0
          %4295 = vmatmul.mubr.f32.gmra.mxu0 %v4159
          %v4296 = vpop.f32.mrf.mxu0
          %v4297 = vadd.f32 0.0, %v4296
          %v4298 = vpop.f32.mrf.mxu0
          %4299 = vmatprep.mubr.f32.mxu0 0.0
          %4300 = vmatmul.mubr.f32.gmra.mxu0 %v4162
          %v4301 = vpop.f32.mrf.mxu0
          %v4302 = vadd.f32 0.0, %v4301
          %v4303 = vpop.f32.mrf.mxu0
          %4304 = vmatprep.mubr.f32.mxu0 0.0
          %4305 = vmatmul.mubr.f32.gmra.mxu0 %v4165
          %v4306 = vpop.f32.mrf.mxu0
          %v4307 = vadd.f32 0.0, %v4306
          %v4308 = vpop.f32.mrf.mxu0
          %4309 = vmatprep.mubr.f32.mxu0 0.0
          %4310 = vmatmul.mubr.f32.gmra.mxu0 %v4168
          %v4311 = vpop.f32.mrf.mxu0
          %v4312 = vadd.f32 0.0, %v4311
          %v4313 = vpop.f32.mrf.mxu0
          %4314 = vdwg.mxu0
          %vm4315 = vcmask 31744
          %v4316 = vsel %vm4315, %v4237, -inf
          %v4317 = vrot.slane %v4316, 4
          %v4318 = vmax.f32 %v4316, %v4317
          %v4319 = vrot.slane %v4318, 2
          %v4320 = vmax.f32 %v4318, %v4319
          %v4321 = vrot.slane %v4320, 1
          %v4322 = vmax.f32 %v4320, %v4321
          %v4323 = vsel %vm4315, %v4242, -inf
          %v4324 = vrot.slane %v4323, 4
          %v4325 = vmax.f32 %v4323, %v4324
          %v4326 = vrot.slane %v4325, 2
          %v4327 = vmax.f32 %v4325, %v4326
          %v4328 = vrot.slane %v4327, 1
          %v4329 = vmax.f32 %v4327, %v4328
          %v4330 = vsel %vm4315, %v4247, -inf
          %v4331 = vrot.slane %v4330, 4
          %v4332 = vmax.f32 %v4330, %v4331
          %v4333 = vrot.slane %v4332, 2
          %v4334 = vmax.f32 %v4332, %v4333
          %v4335 = vrot.slane %v4334, 1
          %v4336 = vmax.f32 %v4334, %v4335
          %v4337 = vsel %vm4315, %v4252, -inf
          %v4338 = vrot.slane %v4337, 4
          %v4339 = vmax.f32 %v4337, %v4338
          %v4340 = vrot.slane %v4339, 2
          %v4341 = vmax.f32 %v4339, %v4340
          %v4342 = vrot.slane %v4341, 1
          %v4343 = vmax.f32 %v4341, %v4342
          %v4344 = vsel %vm4315, %v4257, -inf
          %v4345 = vrot.slane %v4344, 4
          %v4346 = vmax.f32 %v4344, %v4345
          %v4347 = vrot.slane %v4346, 2
          %v4348 = vmax.f32 %v4346, %v4347
          %v4349 = vrot.slane %v4348, 1
          %v4350 = vmax.f32 %v4348, %v4349
          %v4351 = vsel %vm4315, %v4262, -inf
          %v4352 = vrot.slane %v4351, 4
          %v4353 = vmax.f32 %v4351, %v4352
          %v4354 = vrot.slane %v4353, 2
          %v4355 = vmax.f32 %v4353, %v4354
          %v4356 = vrot.slane %v4355, 1
          %v4357 = vmax.f32 %v4355, %v4356
          %v4358 = vsel %vm4315, %v4267, -inf
          %v4359 = vrot.slane %v4358, 4
          %v4360 = vmax.f32 %v4358, %v4359
          %v4361 = vrot.slane %v4360, 2
          %v4362 = vmax.f32 %v4360, %v4361
          %v4363 = vrot.slane %v4362, 1
          %v4364 = vmax.f32 %v4362, %v4363
          %v4365 = vsel %vm4315, %v4272, -inf
          %v4366 = vrot.slane %v4365, 4
          %v4367 = vmax.f32 %v4365, %v4366
          %v4368 = vrot.slane %v4367, 2
          %v4369 = vmax.f32 %v4367, %v4368
          %v4370 = vrot.slane %v4369, 1
          %v4371 = vmax.f32 %v4369, %v4370
          %v4372 = vsel %vm4315, %v4277, -inf
          %v4373 = vrot.slane %v4372, 4
          %v4374 = vmax.f32 %v4372, %v4373
          %v4375 = vrot.slane %v4374, 2
          %v4376 = vmax.f32 %v4374, %v4375
          %v4377 = vrot.slane %v4376, 1
          %v4378 = vmax.f32 %v4376, %v4377
          %v4379 = vsel %vm4315, %v4282, -inf
          %v4380 = vrot.slane %v4379, 4
          %v4381 = vmax.f32 %v4379, %v4380
          %v4382 = vrot.slane %v4381, 2
          %v4383 = vmax.f32 %v4381, %v4382
          %v4384 = vrot.slane %v4383, 1
          %v4385 = vmax.f32 %v4383, %v4384
          %v4386 = vsel %vm4315, %v4287, -inf
          %v4387 = vrot.slane %v4386, 4
          %v4388 = vmax.f32 %v4386, %v4387
          %v4389 = vrot.slane %v4388, 2
          %v4390 = vmax.f32 %v4388, %v4389
          %v4391 = vrot.slane %v4390, 1
          %v4392 = vmax.f32 %v4390, %v4391
          %v4393 = vsel %vm4315, %v4292, -inf
          %v4394 = vrot.slane %v4393, 4
          %v4395 = vmax.f32 %v4393, %v4394
          %v4396 = vrot.slane %v4395, 2
          %v4397 = vmax.f32 %v4395, %v4396
          %v4398 = vrot.slane %v4397, 1
          %v4399 = vmax.f32 %v4397, %v4398
          %v4400 = vsel %vm4315, %v4297, -inf
          %v4401 = vrot.slane %v4400, 4
          %v4402 = vmax.f32 %v4400, %v4401
          %v4403 = vrot.slane %v4402, 2
          %v4404 = vmax.f32 %v4402, %v4403
          %v4405 = vrot.slane %v4404, 1
          %v4406 = vmax.f32 %v4404, %v4405
          %v4407 = vsel %vm4315, %v4302, -inf
          %v4408 = vrot.slane %v4407, 4
          %v4409 = vmax.f32 %v4407, %v4408
          %v4410 = vrot.slane %v4409, 2
          %v4411 = vmax.f32 %v4409, %v4410
          %v4412 = vrot.slane %v4411, 1
          %v4413 = vmax.f32 %v4411, %v4412
          %v4414 = vsel %vm4315, %v4307, -inf
          %v4415 = vrot.slane %v4414, 4
          %v4416 = vmax.f32 %v4414, %v4415
          %v4417 = vrot.slane %v4416, 2
          %v4418 = vmax.f32 %v4416, %v4417
          %v4419 = vrot.slane %v4418, 1
          %v4420 = vmax.f32 %v4418, %v4419
          %v4421 = vsel %vm4315, %v4312, -inf
          %v4422 = vrot.slane %v4421, 4
          %v4423 = vmax.f32 %v4421, %v4422
          %v4424 = vrot.slane %v4423, 2
          %v4425 = vmax.f32 %v4423, %v4424
          %v4426 = vrot.slane %v4425, 1
          %v4427 = vmax.f32 %v4425, %v4426
          %v4428 = vsub.f32 %v4237, %v4322
          %v4429 = vsub.f32 %v4242, %v4329
          %v4430 = vsub.f32 %v4247, %v4336
          %v4431 = vsub.f32 %v4252, %v4343
          %v4432 = vsub.f32 %v4257, %v4350
          %v4433 = vsub.f32 %v4262, %v4357
          %v4434 = vsub.f32 %v4267, %v4364
          %v4435 = vsub.f32 %v4272, %v4371
          %v4436 = vsub.f32 %v4277, %v4378
          %v4437 = vsub.f32 %v4282, %v4385
          %v4438 = vsub.f32 %v4287, %v4392
          %v4439 = vsub.f32 %v4292, %v4399
          %v4440 = vsub.f32 %v4297, %v4406
          %v4441 = vsub.f32 %v4302, %v4413
          %v4442 = vsub.f32 %v4307, %v4420
          %v4443 = vsub.f32 %v4312, %v4427
          %v4444 = vmul.f32 %v4428, 1.442695
          %v4445 = vpow.pop %v4444
          %v4446 = vmul.f32 %v4429, 1.442695
          %v4447 = vpow.pop %v4446
          %v4448 = vmul.f32 %v4430, 1.442695
          %v4449 = vpow.pop %v4448
          %v4450 = vmul.f32 %v4431, 1.442695
          %v4451 = vpow.pop %v4450
          %v4452 = vmul.f32 %v4432, 1.442695
          %v4453 = vpow.pop %v4452
          %v4454 = vmul.f32 %v4433, 1.442695
          %v4455 = vpow.pop %v4454
          %v4456 = vmul.f32 %v4434, 1.442695
          %v4457 = vpow.pop %v4456
          %v4458 = vmul.f32 %v4435, 1.442695
          %v4459 = vpow.pop %v4458
          %v4460 = vmul.f32 %v4436, 1.442695
          %v4461 = vpow.pop %v4460
          %v4462 = vmul.f32 %v4437, 1.442695
          %v4463 = vpow.pop %v4462
          %v4464 = vmul.f32 %v4438, 1.442695
          %v4465 = vpow.pop %v4464
          %v4466 = vmul.f32 %v4439, 1.442695
          %v4467 = vpow.pop %v4466
          %v4468 = vmul.f32 %v4440, 1.442695
          %v4469 = vpow.pop %v4468
          %v4470 = vmul.f32 %v4441, 1.442695
          %v4471 = vpow.pop %v4470
          %v4472 = vmul.f32 %v4442, 1.442695
          %v4473 = vpow.pop %v4472
          %v4474 = vmul.f32 %v4443, 1.442695
          %v4475 = vpow.pop %v4474
          %v4476 = vsel %vm4315, %v4445, 0.0
          %v4477 = vrot.slane %v4476, 4
          %v4478 = vadd.f32 %v4476, %v4477
          %v4479 = vrot.slane %v4478, 2
          %v4480 = vadd.f32 %v4478, %v4479
          %v4481 = vrot.slane %v4480, 1
          %v4482 = vadd.f32 %v4480, %v4481
          %v4483 = vsel %vm4315, %v4447, 0.0
          %v4484 = vrot.slane %v4483, 4
          %v4485 = vadd.f32 %v4483, %v4484
          %v4486 = vrot.slane %v4485, 2
          %v4487 = vadd.f32 %v4485, %v4486
          %v4488 = vrot.slane %v4487, 1
          %v4489 = vadd.f32 %v4487, %v4488
          %v4490 = vsel %vm4315, %v4449, 0.0
          %v4491 = vrot.slane %v4490, 4
          %v4492 = vadd.f32 %v4490, %v4491
          %v4493 = vrot.slane %v4492, 2
          %v4494 = vadd.f32 %v4492, %v4493
          %v4495 = vrot.slane %v4494, 1
          %v4496 = vadd.f32 %v4494, %v4495
          %v4497 = vsel %vm4315, %v4451, 0.0
          %v4498 = vrot.slane %v4497, 4
          %v4499 = vadd.f32 %v4497, %v4498
          %v4500 = vrot.slane %v4499, 2
          %v4501 = vadd.f32 %v4499, %v4500
          %v4502 = vrot.slane %v4501, 1
          %v4503 = vadd.f32 %v4501, %v4502
          %v4504 = vsel %vm4315, %v4453, 0.0
          %v4505 = vrot.slane %v4504, 4
          %v4506 = vadd.f32 %v4504, %v4505
          %v4507 = vrot.slane %v4506, 2
          %v4508 = vadd.f32 %v4506, %v4507
          %v4509 = vrot.slane %v4508, 1
          %v4510 = vadd.f32 %v4508, %v4509
          %v4511 = vsel %vm4315, %v4455, 0.0
          %v4512 = vrot.slane %v4511, 4
          %v4513 = vadd.f32 %v4511, %v4512
          %v4514 = vrot.slane %v4513, 2
          %v4515 = vadd.f32 %v4513, %v4514
          %v4516 = vrot.slane %v4515, 1
          %v4517 = vadd.f32 %v4515, %v4516
          %v4518 = vsel %vm4315, %v4457, 0.0
          %v4519 = vrot.slane %v4518, 4
          %v4520 = vadd.f32 %v4518, %v4519
          %v4521 = vrot.slane %v4520, 2
          %v4522 = vadd.f32 %v4520, %v4521
          %v4523 = vrot.slane %v4522, 1
          %v4524 = vadd.f32 %v4522, %v4523
          %v4525 = vsel %vm4315, %v4459, 0.0
          %v4526 = vrot.slane %v4525, 4
          %v4527 = vadd.f32 %v4525, %v4526
          %v4528 = vrot.slane %v4527, 2
          %v4529 = vadd.f32 %v4527, %v4528
          %v4530 = vrot.slane %v4529, 1
          %v4531 = vadd.f32 %v4529, %v4530
          %v4532 = vsel %vm4315, %v4461, 0.0
          %v4533 = vrot.slane %v4532, 4
          %v4534 = vadd.f32 %v4532, %v4533
          %v4535 = vrot.slane %v4534, 2
          %v4536 = vadd.f32 %v4534, %v4535
          %v4537 = vrot.slane %v4536, 1
          %v4538 = vadd.f32 %v4536, %v4537
          %v4539 = vsel %vm4315, %v4463, 0.0
          %v4540 = vrot.slane %v4539, 4
          %v4541 = vadd.f32 %v4539, %v4540
          %v4542 = vrot.slane %v4541, 2
          %v4543 = vadd.f32 %v4541, %v4542
          %v4544 = vrot.slane %v4543, 1
          %v4545 = vadd.f32 %v4543, %v4544
          %v4546 = vsel %vm4315, %v4465, 0.0
          %v4547 = vrot.slane %v4546, 4
          %v4548 = vadd.f32 %v4546, %v4547
          %v4549 = vrot.slane %v4548, 2
          %v4550 = vadd.f32 %v4548, %v4549
          %v4551 = vrot.slane %v4550, 1
          %v4552 = vadd.f32 %v4550, %v4551
          %v4553 = vsel %vm4315, %v4467, 0.0
          %v4554 = vrot.slane %v4553, 4
          %v4555 = vadd.f32 %v4553, %v4554
          %v4556 = vrot.slane %v4555, 2
          %v4557 = vadd.f32 %v4555, %v4556
          %v4558 = vrot.slane %v4557, 1
          %v4559 = vadd.f32 %v4557, %v4558
          %v4560 = vsel %vm4315, %v4469, 0.0
          %v4561 = vrot.slane %v4560, 4
          %v4562 = vadd.f32 %v4560, %v4561
          %v4563 = vrot.slane %v4562, 2
          %v4564 = vadd.f32 %v4562, %v4563
          %v4565 = vrot.slane %v4564, 1
          %v4566 = vadd.f32 %v4564, %v4565
          %v4567 = vsel %vm4315, %v4471, 0.0
          %v4568 = vrot.slane %v4567, 4
          %v4569 = vadd.f32 %v4567, %v4568
          %v4570 = vrot.slane %v4569, 2
          %v4571 = vadd.f32 %v4569, %v4570
          %v4572 = vrot.slane %v4571, 1
          %v4573 = vadd.f32 %v4571, %v4572
          %v4574 = vsel %vm4315, %v4473, 0.0
          %v4575 = vrot.slane %v4574, 4
          %v4576 = vadd.f32 %v4574, %v4575
          %v4577 = vrot.slane %v4576, 2
          %v4578 = vadd.f32 %v4576, %v4577
          %v4579 = vrot.slane %v4578, 1
          %v4580 = vadd.f32 %v4578, %v4579
          %v4581 = vsel %vm4315, %v4475, 0.0
          %v4582 = vrot.slane %v4581, 4
          %v4583 = vadd.f32 %v4581, %v4582
          %v4584 = vrot.slane %v4583, 2
          %v4585 = vadd.f32 %v4583, %v4584
          %v4586 = vrot.slane %v4585, 1
          %v4587 = vadd.f32 %v4585, %v4586
          %v4588 = vrcp.pop %v4482
          %v4589 = vrcp.pop %v4489
          %v4590 = vrcp.pop %v4496
          %v4591 = vrcp.pop %v4503
          %v4592 = vrcp.pop %v4510
          %v4593 = vrcp.pop %v4517
          %v4594 = vrcp.pop %v4524
          %v4595 = vrcp.pop %v4531
          %v4596 = vrcp.pop %v4538
          %v4597 = vrcp.pop %v4545
          %v4598 = vrcp.pop %v4552
          %v4599 = vrcp.pop %v4559
          %v4600 = vrcp.pop %v4566
          %v4601 = vrcp.pop %v4573
          %v4602 = vrcp.pop %v4580
          %v4603 = vrcp.pop %v4587
          %v4604 = vmul.f32 %v4445, %v4588
          %v4605 = vmul.f32 %v4447, %v4589
          %v4606 = vmul.f32 %v4449, %v4590
          %v4607 = vmul.f32 %v4451, %v4591
          %v4608 = vmul.f32 %v4453, %v4592
          %v4609 = vmul.f32 %v4455, %v4593
          %v4610 = vmul.f32 %v4457, %v4594
          %v4611 = vmul.f32 %v4459, %v4595
          %v4612 = vmul.f32 %v4461, %v4596
          %v4613 = vmul.f32 %v4463, %v4597
          %v4614 = vmul.f32 %v4465, %v4598
          %v4615 = vmul.f32 %v4467, %v4599
          %v4616 = vmul.f32 %v4469, %v4600
          %v4617 = vmul.f32 %v4471, %v4601
          %v4618 = vmul.f32 %v4473, %v4602
          %v4619 = vmul.f32 %v4475, %v4603
          %v4621 = vsel %vm4315, %v4604, 0
          %v4624 = vsel %vm4315, %v4605, 0
          %v4627 = vsel %vm4315, %v4606, 0
          %v4630 = vsel %vm4315, %v4607, 0
          %v4633 = vsel %vm4315, %v4608, 0
          %v4636 = vsel %vm4315, %v4609, 0
          %v4639 = vsel %vm4315, %v4610, 0
          %v4642 = vsel %vm4315, %v4611, 0
          %v4645 = vsel %vm4315, %v4612, 0
          %v4648 = vsel %vm4315, %v4613, 0
          %v4651 = vsel %vm4315, %v4614, 0
          %v4654 = vsel %vm4315, %v4615, 0
          %v4657 = vsel %vm4315, %v4616, 0
          %v4660 = vsel %vm4315, %v4617, 0
          %v4663 = vsel %vm4315, %v4618, 0
          %v4666 = vsel %vm4315, %v4619, 0
          %vm4668 = vcmask 1043456
          %v4670 = vsel %vm4668, %v3791, 0
          %4672 = vmatprep.subr.mxu0 0.0
          %4673 = vmatpush1.msra.mxu0 0.0
          %4674 = vmatprep.subr.mxu0 0.0
          %4675 = vmatpush1.msra.mxu0 0.0
          %4676 = vmatprep.subr.mxu0 0.0
          %4677 = vmatpush1.msra.mxu0 0.0
          %4678 = vmatprep.subr.mxu0 0.0
          %4679 = vmatpush1.msra.mxu0 0.0
          %4680 = vmatprep.subr.mxu0 0.0
          %4681 = vmatpush1.msra.mxu0 0.0
          %4682 = vmatprep.subr.mxu0 0.0
          %4683 = vmatpush1.msra.mxu0 0.0
          %4684 = vmatprep.subr.mxu0 0.0
          %4685 = vmatpush1.msra.mxu0 0.0
          %4686 = vmatprep.subr.mxu0 0.0
          %4687 = vmatpush1.msra.mxu0 0.0
          %4688 = vmatprep.subr.mxu0 0.0
          %4689 = vmatpush1.msra.mxu0 0.0
          %4690 = vmatprep.subr.mxu0 0.0
          %4691 = vmatpush1.msra.mxu0 0.0
          %4692 = vmatprep.subr.mxu0 0.0
          %4693 = vmatpush1.msra.mxu0 0.0
          %4694 = vmatprep.subr.mxu0 0.0
          %4695 = vmatpush1.msra.mxu0 0.0
          %4696 = vmatprep.subr.mxu0 0.0
          %4697 = vmatpush1.msra.mxu0 0.0
          %4698 = vmatprep.subr.mxu0 0.0
          %4699 = vmatpush1.msra.mxu0 0.0
          %4700 = vmatprep.subr.mxu0 0.0
          %4701 = vmatpush1.msra.mxu0 0.0
          %4702 = vmatprep.subr.mxu0 0.0
          %4703 = vmatpush1.msra.mxu0 %v4670
          %4704 = vmatprep.subr.mxu0 0.0
          %4705 = vmatpush2.msra.mxu0 0.0
          %4706 = vmatprep.subr.mxu0 0.0
          %4707 = vmatpush2.msra.mxu0 0.0
          %4708 = vmatprep.subr.mxu0 0.0
          %4709 = vmatpush2.msra.mxu0 0.0
          %4710 = vmatprep.subr.mxu0 0.0
          %4711 = vmatpush2.msra.mxu0 0.0
          %4712 = vmatprep.subr.mxu0 0.0
          %4713 = vmatpush2.msra.mxu0 0.0
          %4714 = vmatprep.subr.mxu0 0.0
          %4715 = vmatpush2.msra.mxu0 0.0
          %4716 = vmatprep.subr.mxu0 0.0
          %4717 = vmatpush2.msra.mxu0 0.0
          %4718 = vmatprep.subr.mxu0 0.0
          %4719 = vmatpush2.msra.mxu0 0.0
          %4720 = vmatprep.subr.mxu0 0.0
          %4721 = vmatpush2.msra.mxu0 0.0
          %4722 = vmatprep.subr.mxu0 0.0
          %4723 = vmatpush2.msra.mxu0 0.0
          %4724 = vmatprep.subr.mxu0 0.0
          %4725 = vmatpush2.msra.mxu0 0.0
          %4726 = vmatprep.subr.mxu0 0.0
          %4727 = vmatpush2.msra.mxu0 0.0
          %4728 = vmatprep.subr.mxu0 0.0
          %4729 = vmatpush2.msra.mxu0 0.0
          %4730 = vmatprep.subr.mxu0 0.0
          %4731 = vmatpush2.msra.mxu0 0.0
          %4732 = vmatprep.subr.mxu0 0.0
          %4733 = vmatpush2.msra.mxu0 0.0
          %4734 = vmatprep.subr.mxu0 0.0
          %4735 = vmatpush2.msra.mxu0 0.0
          %4736 = vmatprep.mubr.f32.mxu0 0.0
          %4737 = vmatmul.mubr.f32.gmra.mxu0 %v4621
          %v4738 = vpop.f32.mrf.mxu0
          %v4739 = vadd.f32 0.0, %v4738
          %v4740 = vpop.f32.mrf.mxu0
          %4741 = vmatprep.mubr.f32.mxu0 0.0
          %4742 = vmatmul.mubr.f32.gmra.mxu0 %v4624
          %v4743 = vpop.f32.mrf.mxu0
          %v4744 = vadd.f32 0.0, %v4743
          %v4745 = vpop.f32.mrf.mxu0
          %4746 = vmatprep.mubr.f32.mxu0 0.0
          %4747 = vmatmul.mubr.f32.gmra.mxu0 %v4627
          %v4748 = vpop.f32.mrf.mxu0
          %v4749 = vadd.f32 0.0, %v4748
          %v4750 = vpop.f32.mrf.mxu0
          %4751 = vmatprep.mubr.f32.mxu0 0.0
          %4752 = vmatmul.mubr.f32.gmra.mxu0 %v4630
          %v4753 = vpop.f32.mrf.mxu0
          %v4754 = vadd.f32 0.0, %v4753
          %v4755 = vpop.f32.mrf.mxu0
          %4756 = vmatprep.mubr.f32.mxu0 0.0
          %4757 = vmatmul.mubr.f32.gmra.mxu0 %v4633
          %v4758 = vpop.f32.mrf.mxu0
          %v4759 = vadd.f32 0.0, %v4758
          %v4760 = vpop.f32.mrf.mxu0
          %4761 = vmatprep.mubr.f32.mxu0 0.0
          %4762 = vmatmul.mubr.f32.gmra.mxu0 %v4636
          %v4763 = vpop.f32.mrf.mxu0
          %v4764 = vadd.f32 0.0, %v4763
          %v4765 = vpop.f32.mrf.mxu0
          %4766 = vmatprep.mubr.f32.mxu0 0.0
          %4767 = vmatmul.mubr.f32.gmra.mxu0 %v4639
          %v4768 = vpop.f32.mrf.mxu0
          %v4769 = vadd.f32 0.0, %v4768
          %v4770 = vpop.f32.mrf.mxu0
          %4771 = vmatprep.mubr.f32.mxu0 0.0
          %4772 = vmatmul.mubr.f32.gmra.mxu0 %v4642
          %v4773 = vpop.f32.mrf.mxu0
          %v4774 = vadd.f32 0.0, %v4773
          %v4775 = vpop.f32.mrf.mxu0
          %4776 = vmatprep.mubr.f32.mxu0 0.0
          %4777 = vmatmul.mubr.f32.gmra.mxu0 %v4645
          %v4778 = vpop.f32.mrf.mxu0
          %v4779 = vadd.f32 0.0, %v4778
          %v4780 = vpop.f32.mrf.mxu0
          %4781 = vmatprep.mubr.f32.mxu0 0.0
          %4782 = vmatmul.mubr.f32.gmra.mxu0 %v4648
          %v4783 = vpop.f32.mrf.mxu0
          %v4784 = vadd.f32 0.0, %v4783
          %v4785 = vpop.f32.mrf.mxu0
          %4786 = vmatprep.mubr.f32.mxu0 0.0
          %4787 = vmatmul.mubr.f32.gmra.mxu0 %v4651
          %v4788 = vpop.f32.mrf.mxu0
          %v4789 = vadd.f32 0.0, %v4788
          %v4790 = vpop.f32.mrf.mxu0
          %4791 = vmatprep.mubr.f32.mxu0 0.0
          %4792 = vmatmul.mubr.f32.gmra.mxu0 %v4654
          %v4793 = vpop.f32.mrf.mxu0
          %v4794 = vadd.f32 0.0, %v4793
          %v4795 = vpop.f32.mrf.mxu0
          %4796 = vmatprep.mubr.f32.mxu0 0.0
          %4797 = vmatmul.mubr.f32.gmra.mxu0 %v4657
          %v4798 = vpop.f32.mrf.mxu0
          %v4799 = vadd.f32 0.0, %v4798
          %v4800 = vpop.f32.mrf.mxu0
          %4801 = vmatprep.mubr.f32.mxu0 0.0
          %4802 = vmatmul.mubr.f32.gmra.mxu0 %v4660
          %v4803 = vpop.f32.mrf.mxu0
          %v4804 = vadd.f32 0.0, %v4803
          %v4805 = vpop.f32.mrf.mxu0
          %4806 = vmatprep.mubr.f32.mxu0 0.0
          %4807 = vmatmul.mubr.f32.gmra.mxu0 %v4663
          %v4808 = vpop.f32.mrf.mxu0
          %v4809 = vadd.f32 0.0, %v4808
          %v4810 = vpop.f32.mrf.mxu0
          %4811 = vmatprep.mubr.f32.mxu0 0.0
          %4812 = vmatmul.mubr.f32.gmra.mxu0 %v4666
          %v4813 = vpop.f32.mrf.mxu0
          %v4814 = vadd.f32 0.0, %v4813
          %v4815 = vpop.f32.mrf.mxu0
          %4816 = vdwg.mxu0
          %4817 = vrot.lane.b32.xlu0 %v3912, 96
          %v4818 = vpop.permute.xlu0 %4817
          %4819 = vrot.lane.b32.xlu0 %v3917, 96
          %v4820 = vpop.permute.xlu0 %4819
          %v4823 = vmul.f32 %v4739, %v4818
          %v4824 = vmul.f32 %v4744, %v4818
          %v4825 = vmul.f32 %v4749, %v4818
          %v4826 = vmul.f32 %v4754, %v4818
          %v4827 = vmul.f32 %v4759, %v4818
          %v4828 = vmul.f32 %v4764, %v4818
          %v4829 = vmul.f32 %v4769, %v4818
          %v4830 = vmul.f32 %v4774, %v4818
          %v4831 = vmul.f32 %v4779, %v4820
          %v4832 = vmul.f32 %v4784, %v4820
          %v4833 = vmul.f32 %v4789, %v4820
          %v4834 = vmul.f32 %v4794, %v4820
          %v4835 = vmul.f32 %v4799, %v4820
          %v4836 = vmul.f32 %v4804, %v4820
          %v4837 = vmul.f32 %v4809, %v4820
          %v4838 = vmul.f32 %v4814, %v4820
          %v4839 = vsel %vm3838, %v4823, 0.0
          %v4840 = vrot.slane %v4839, 4
          %v4841 = vadd.f32 %v4839, %v4840
          %v4842 = vrot.slane %v4841, 2
          %v4843 = vadd.f32 %v4841, %v4842
          %v4844 = vrot.slane %v4843, 1
          %v4845 = vadd.f32 %v4843, %v4844
          %v4846 = vsel %vm3838, %v4824, 0.0
          %v4847 = vrot.slane %v4846, 4
          %v4848 = vadd.f32 %v4846, %v4847
          %v4849 = vrot.slane %v4848, 2
          %v4850 = vadd.f32 %v4848, %v4849
          %v4851 = vrot.slane %v4850, 1
          %v4852 = vadd.f32 %v4850, %v4851
          %v4853 = vsel %vm3838, %v4825, 0.0
          %v4854 = vrot.slane %v4853, 4
          %v4855 = vadd.f32 %v4853, %v4854
          %v4856 = vrot.slane %v4855, 2
          %v4857 = vadd.f32 %v4855, %v4856
          %v4858 = vrot.slane %v4857, 1
          %v4859 = vadd.f32 %v4857, %v4858
          %v4860 = vsel %vm3838, %v4826, 0.0
          %v4861 = vrot.slane %v4860, 4
          %v4862 = vadd.f32 %v4860, %v4861
          %v4863 = vrot.slane %v4862, 2
          %v4864 = vadd.f32 %v4862, %v4863
          %v4865 = vrot.slane %v4864, 1
          %v4866 = vadd.f32 %v4864, %v4865
          %v4867 = vsel %vm3838, %v4827, 0.0
          %v4868 = vrot.slane %v4867, 4
          %v4869 = vadd.f32 %v4867, %v4868
          %v4870 = vrot.slane %v4869, 2
          %v4871 = vadd.f32 %v4869, %v4870
          %v4872 = vrot.slane %v4871, 1
          %v4873 = vadd.f32 %v4871, %v4872
          %v4874 = vsel %vm3838, %v4828, 0.0
          %v4875 = vrot.slane %v4874, 4
          %v4876 = vadd.f32 %v4874, %v4875
          %v4877 = vrot.slane %v4876, 2
          %v4878 = vadd.f32 %v4876, %v4877
          %v4879 = vrot.slane %v4878, 1
          %v4880 = vadd.f32 %v4878, %v4879
          %v4881 = vsel %vm3838, %v4829, 0.0
          %v4882 = vrot.slane %v4881, 4
          %v4883 = vadd.f32 %v4881, %v4882
          %v4884 = vrot.slane %v4883, 2
          %v4885 = vadd.f32 %v4883, %v4884
          %v4886 = vrot.slane %v4885, 1
          %v4887 = vadd.f32 %v4885, %v4886
          %v4888 = vsel %vm3838, %v4830, 0.0
          %v4889 = vrot.slane %v4888, 4
          %v4890 = vadd.f32 %v4888, %v4889
          %v4891 = vrot.slane %v4890, 2
          %v4892 = vadd.f32 %v4890, %v4891
          %v4893 = vrot.slane %v4892, 1
          %v4894 = vadd.f32 %v4892, %v4893
          %v4895 = vsel %vm3838, %v4831, 0.0
          %v4896 = vrot.slane %v4895, 4
          %v4897 = vadd.f32 %v4895, %v4896
          %v4898 = vrot.slane %v4897, 2
          %v4899 = vadd.f32 %v4897, %v4898
          %v4900 = vrot.slane %v4899, 1
          %v4901 = vadd.f32 %v4899, %v4900
          %v4902 = vsel %vm3838, %v4832, 0.0
          %v4903 = vrot.slane %v4902, 4
          %v4904 = vadd.f32 %v4902, %v4903
          %v4905 = vrot.slane %v4904, 2
          %v4906 = vadd.f32 %v4904, %v4905
          %v4907 = vrot.slane %v4906, 1
          %v4908 = vadd.f32 %v4906, %v4907
          %v4909 = vsel %vm3838, %v4833, 0.0
          %v4910 = vrot.slane %v4909, 4
          %v4911 = vadd.f32 %v4909, %v4910
          %v4912 = vrot.slane %v4911, 2
          %v4913 = vadd.f32 %v4911, %v4912
          %v4914 = vrot.slane %v4913, 1
          %v4915 = vadd.f32 %v4913, %v4914
          %v4916 = vsel %vm3838, %v4834, 0.0
          %v4917 = vrot.slane %v4916, 4
          %v4918 = vadd.f32 %v4916, %v4917
          %v4919 = vrot.slane %v4918, 2
          %v4920 = vadd.f32 %v4918, %v4919
          %v4921 = vrot.slane %v4920, 1
          %v4922 = vadd.f32 %v4920, %v4921
          %v4923 = vsel %vm3838, %v4835, 0.0
          %v4924 = vrot.slane %v4923, 4
          %v4925 = vadd.f32 %v4923, %v4924
          %v4926 = vrot.slane %v4925, 2
          %v4927 = vadd.f32 %v4925, %v4926
          %v4928 = vrot.slane %v4927, 1
          %v4929 = vadd.f32 %v4927, %v4928
          %v4930 = vsel %vm3838, %v4836, 0.0
          %v4931 = vrot.slane %v4930, 4
          %v4932 = vadd.f32 %v4930, %v4931
          %v4933 = vrot.slane %v4932, 2
          %v4934 = vadd.f32 %v4932, %v4933
          %v4935 = vrot.slane %v4934, 1
          %v4936 = vadd.f32 %v4934, %v4935
          %v4937 = vsel %vm3838, %v4837, 0.0
          %v4938 = vrot.slane %v4937, 4
          %v4939 = vadd.f32 %v4937, %v4938
          %v4940 = vrot.slane %v4939, 2
          %v4941 = vadd.f32 %v4939, %v4940
          %v4942 = vrot.slane %v4941, 1
          %v4943 = vadd.f32 %v4941, %v4942
          %v4944 = vsel %vm3838, %v4838, 0.0
          %v4945 = vrot.slane %v4944, 4
          %v4946 = vadd.f32 %v4944, %v4945
          %v4947 = vrot.slane %v4946, 2
          %v4948 = vadd.f32 %v4946, %v4947
          %v4949 = vrot.slane %v4948, 1
          %v4950 = vadd.f32 %v4948, %v4949
          %v4952 = vlaneseq
          %v4953 = vshrl.u32 %v4952, 7
          %v4954 = vsub.s32 0, %v4953
          %v4955 = vrot.slane %v3810, %v4954
          %vm4973 = vcmask 1041409
          %v4974 = vsel %vm4973, %v4852, %v4845
          %vm4975 = vcmask 1042434
          %v4976 = vsel %vm4975, %v4859, %v4974
          %vm4977 = vcmask 1043459
          %v4978 = vsel %vm4977, %v4866, %v4976
          %vm4979 = vcmask 1044484
          %v4980 = vsel %vm4979, %v4873, %v4978
          %vm4981 = vcmask 1045509
          %v4982 = vsel %vm4981, %v4880, %v4980
          %vm4983 = vcmask 1046534
          %v4984 = vsel %vm4983, %v4887, %v4982
          %vm4985 = vcmask 1047559
          %v4986 = vsel %vm4985, %v4894, %v4984
          %v4987 = vsel %vm4973, %v4908, %v4901
          %v4988 = vsel %vm4975, %v4915, %v4987
          %v4989 = vsel %vm4977, %v4922, %v4988
          %v4990 = vsel %vm4979, %v4929, %v4989
          %v4991 = vsel %vm4981, %v4936, %v4990
          %v4992 = vsel %vm4983, %v4943, %v4991
          %v4993 = vsel %vm4985, %v4950, %v4992
          %v4994 = vsel %vm3838, %v4986, 0
          %v4996 = vsel %vm3838, %v4993, 0
          %4998 = vmatprep.subr.mxu0 0.0
          %4999 = vmatpush1.msra.mxu0 0.0
          %5000 = vmatprep.subr.mxu0 0.0
          %5001 = vmatpush1.msra.mxu0 0.0
          %5002 = vmatprep.subr.mxu0 0.0
          %5003 = vmatpush1.msra.mxu0 0.0
          %5004 = vmatprep.subr.mxu0 0.0
          %5005 = vmatpush1.msra.mxu0 0.0
          %5006 = vmatprep.subr.mxu0 0.0
          %5007 = vmatpush1.msra.mxu0 0.0
          %5008 = vmatprep.subr.mxu0 0.0
          %5009 = vmatpush1.msra.mxu0 0.0
          %5010 = vmatprep.subr.mxu0 0.0
          %5011 = vmatpush1.msra.mxu0 0.0
          %5012 = vmatprep.subr.mxu0 0.0
          %5013 = vmatpush1.msra.mxu0 0.0
          %5014 = vmatprep.subr.mxu0 0.0
          %5015 = vmatpush1.msra.mxu0 0.0
          %5016 = vmatprep.subr.mxu0 0.0
          %5017 = vmatpush1.msra.mxu0 0.0
          %5018 = vmatprep.subr.mxu0 0.0
          %5019 = vmatpush1.msra.mxu0 0.0
          %5020 = vmatprep.subr.mxu0 0.0
          %5021 = vmatpush1.msra.mxu0 0.0
          %5022 = vmatprep.subr.mxu0 0.0
          %5023 = vmatpush1.msra.mxu0 0.0
          %5024 = vmatprep.subr.mxu0 0.0
          %5025 = vmatpush1.msra.mxu0 0.0
          %5026 = vmatprep.subr.mxu0 0.0
          %5027 = vmatpush1.msra.mxu0 %v3808
          %5028 = vmatprep.subr.mxu0 0.0
          %5029 = vmatpush1.msra.mxu0 %v3807
          %5030 = vmatprep.subr.mxu0 0.0
          %5031 = vmatpush2.msra.mxu0 0.0
          %5032 = vmatprep.subr.mxu0 0.0
          %5033 = vmatpush2.msra.mxu0 0.0
          %5034 = vmatprep.subr.mxu0 0.0
          %5035 = vmatpush2.msra.mxu0 0.0
          %5036 = vmatprep.subr.mxu0 0.0
          %5037 = vmatpush2.msra.mxu0 0.0
          %5038 = vmatprep.subr.mxu0 0.0
          %5039 = vmatpush2.msra.mxu0 0.0
          %5040 = vmatprep.subr.mxu0 0.0
          %5041 = vmatpush2.msra.mxu0 0.0
          %5042 = vmatprep.subr.mxu0 0.0
          %5043 = vmatpush2.msra.mxu0 0.0
          %5044 = vmatprep.subr.mxu0 0.0
          %5045 = vmatpush2.msra.mxu0 0.0
          %5046 = vmatprep.subr.mxu0 0.0
          %5047 = vmatpush2.msra.mxu0 0.0
          %5048 = vmatprep.subr.mxu0 0.0
          %5049 = vmatpush2.msra.mxu0 0.0
          %5050 = vmatprep.subr.mxu0 0.0
          %5051 = vmatpush2.msra.mxu0 0.0
          %5052 = vmatprep.subr.mxu0 0.0
          %5053 = vmatpush2.msra.mxu0 0.0
          %5054 = vmatprep.subr.mxu0 0.0
          %5055 = vmatpush2.msra.mxu0 0.0
          %5056 = vmatprep.subr.mxu0 0.0
          %5057 = vmatpush2.msra.mxu0 0.0
          %5058 = vmatprep.subr.mxu0 0.0
          %5059 = vmatpush2.msra.mxu0 0.0
          %5060 = vmatprep.subr.mxu0 0.0
          %5061 = vmatpush2.msra.mxu0 0.0
          %5062 = vmatprep.mubr.f32.mxu0 0.0
          %5063 = vmatmul.mubr.f32.gmra.mxu0 %v4994
          %v5064 = vpop.f32.mrf.mxu0
          %v5065 = vadd.f32 %v4955, %v5064
          %v5066 = vpop.f32.mrf.mxu0
          %5067 = vmatprep.mubr.f32.mxu0 0.0
          %5068 = vmatmul.mubr.f32.gmra.mxu0 %v4996
          %v5069 = vpop.f32.mrf.mxu0
          %v5070 = vadd.f32 %v4955, %v5069
          %v5071 = vpop.f32.mrf.mxu0
          %5072 = vdwg.mxu0
          %v5073 = vadd.f32 %v3798, %v5065
          %v5074 = vadd.f32 %v3799, %v5070
          %v5075 = vsel %vm3838, %v5073, 0.0
          %5076 = vadd.xlane.f32.xlu0 %v5075
          %v5077 = vpop.xlane.xlu0 %5076
          %v5078 = vsel %vm3838, %v5074, 0.0
          %5079 = vadd.xlane.f32.xlu0 %v5078
          %v5080 = vpop.xlane.xlu0 %5079
          %v5081 = vrcp.pop 16.0
          %v5082 = vmul.f32 %v5077, %v5081
          %v5083 = vmul.f32 %v5080, %v5081
          %v5084 = vsub.f32 %v5073, %v5082
          %v5085 = vsub.f32 %v5074, %v5083
          %v5086 = vmul.f32 %v5084, %v5084
          %v5087 = vmul.f32 %v5085, %v5085
          %v5088 = vsel %vm3838, %v5086, 0.0
          %5089 = vadd.xlane.f32.xlu0 %v5088
          %v5090 = vpop.xlane.xlu0 %5089
          %v5091 = vsel %vm3838, %v5087, 0.0
          %5092 = vadd.xlane.f32.xlu0 %v5091
          %v5093 = vpop.xlane.xlu0 %5092
          %v5094 = vmul.f32 %v5090, %v5081
          %v5095 = vmul.f32 %v5093, %v5081
          %v5096 = vadd.f32 %v5094, 1e-05
          %v5097 = vadd.f32 %v5095, 1e-05
          %v5098 = vrsqrt.pop %v5096
          %v5099 = vrsqrt.pop %v5097
          %v5100 = vmul.f32 %v5084, %v5098
          %v5101 = vmul.f32 %v5085, %v5099
          %v5103 = vlaneseq
          %v5104 = vshrl.u32 %v5103, 7
          %v5105 = vsub.s32 0, %v5104
          %v5106 = vrot.slane %v3812, %v5105
          %v5108 = vmul.f32 %v5100, %v5106
          %v5109 = vmul.f32 %v5101, %v5106
          %v5111 = vlaneseq
          %v5112 = vshrl.u32 %v5111, 7
          %v5113 = vsub.s32 0, %v5112
          %v5114 = vrot.slane %v3814, %v5113
          %v5116 = vadd.f32 %v5108, %v5114
          %v5117 = vadd.f32 %v5109, %v5114
          %v5119 = vlaneseq
          %v5120 = vshrl.u32 %v5119, 7
          %v5121 = vsub.s32 0, %v5120
          %v5122 = vrot.slane %v3819, %v5121
          %v5125 = vsel %vm3838, %v5116, 0
          %v5128 = vsel %vm3838, %v5117, 0
          %5130 = vmatprep.subr.mxu0 0.0
          %5131 = vmatpush1.msra.mxu0 0.0
          %5132 = vmatprep.subr.mxu0 0.0
          %5133 = vmatpush1.msra.mxu0 0.0
          %5134 = vmatprep.subr.mxu0 0.0
          %5135 = vmatpush1.msra.mxu0 0.0
          %5136 = vmatprep.subr.mxu0 0.0
          %5137 = vmatpush1.msra.mxu0 0.0
          %5138 = vmatprep.subr.mxu0 0.0
          %5139 = vmatpush1.msra.mxu0 0.0
          %5140 = vmatprep.subr.mxu0 0.0
          %5141 = vmatpush1.msra.mxu0 0.0
          %5142 = vmatprep.subr.mxu0 0.0
          %5143 = vmatpush1.msra.mxu0 0.0
          %5144 = vmatprep.subr.mxu0 0.0
          %5145 = vmatpush1.msra.mxu0 0.0
          %5146 = vmatprep.subr.mxu0 0.0
          %5147 = vmatpush1.msra.mxu0 0.0
          %5148 = vmatprep.subr.mxu0 0.0
          %5149 = vmatpush1.msra.mxu0 0.0
          %5150 = vmatprep.subr.mxu0 0.0
          %5151 = vmatpush1.msra.mxu0 0.0
          %5152 = vmatprep.subr.mxu0 0.0
          %5153 = vmatpush1.msra.mxu0 0.0
          %5154 = vmatprep.subr.mxu0 0.0
          %5155 = vmatpush1.msra.mxu0 0.0
          %5156 = vmatprep.subr.mxu0 0.0
          %5157 = vmatpush1.msra.mxu0 0.0
          %5158 = vmatprep.subr.mxu0 0.0
          %5159 = vmatpush1.msra.mxu0 %v3817
          %5160 = vmatprep.subr.mxu0 0.0
          %5161 = vmatpush1.msra.mxu0 %v3816
          %5162 = vmatprep.subr.mxu0 0.0
          %5163 = vmatpush2.msra.mxu0 0.0
          %5164 = vmatprep.subr.mxu0 0.0
          %5165 = vmatpush2.msra.mxu0 0.0
          %5166 = vmatprep.subr.mxu0 0.0
          %5167 = vmatpush2.msra.mxu0 0.0
          %5168 = vmatprep.subr.mxu0 0.0
          %5169 = vmatpush2.msra.mxu0 0.0
          %5170 = vmatprep.subr.mxu0 0.0
          %5171 = vmatpush2.msra.mxu0 0.0
          %5172 = vmatprep.subr.mxu0 0.0
          %5173 = vmatpush2.msra.mxu0 0.0
          %5174 = vmatprep.subr.mxu0 0.0
          %5175 = vmatpush2.msra.mxu0 0.0
          %5176 = vmatprep.subr.mxu0 0.0
          %5177 = vmatpush2.msra.mxu0 0.0
          %5178 = vmatprep.subr.mxu0 0.0
          %5179 = vmatpush2.msra.mxu0 0.0
          %5180 = vmatprep.subr.mxu0 0.0
          %5181 = vmatpush2.msra.mxu0 0.0
          %5182 = vmatprep.subr.mxu0 0.0
          %5183 = vmatpush2.msra.mxu0 0.0
          %5184 = vmatprep.subr.mxu0 0.0
          %5185 = vmatpush2.msra.mxu0 0.0
          %5186 = vmatprep.subr.mxu0 0.0
          %5187 = vmatpush2.msra.mxu0 0.0
          %5188 = vmatprep.subr.mxu0 0.0
          %5189 = vmatpush2.msra.mxu0 0.0
          %5190 = vmatprep.subr.mxu0 0.0
          %5191 = vmatpush2.msra.mxu0 0.0
          %5192 = vmatprep.subr.mxu0 0.0
          %5193 = vmatpush2.msra.mxu0 0.0
          %5194 = vmatprep.mubr.f32.mxu0 0.0
          %5195 = vmatmul.mubr.f32.gmra.mxu0 %v5125
          %v5196 = vpop.f32.mrf.mxu0
          %v5197 = vadd.f32 %v5122, %v5196
          %v5198 = vpop.f32.mrf.mxu0
          %5199 = vmatprep.mubr.f32.mxu0 0.0
          %5200 = vmatmul.mubr.f32.gmra.mxu0 %v5128
          %v5201 = vpop.f32.mrf.mxu0
          %v5202 = vadd.f32 %v5122, %v5201
          %v5203 = vpop.f32.mrf.mxu0
          %5204 = vdwg.mxu0
          %v5205 = vmax.f32 %v5197, 0.0
          %v5206 = vmax.f32 %v5202, 0.0
          %v5208 = vlaneseq
          %v5209 = vshrl.u32 %v5208, 7
          %v5210 = vsub.s32 0, %v5209
          %v5211 = vrot.slane %v3827, %v5210
          %vm5213 = vcmask 261120
          %v5215 = vsel %vm5213, %v5205, 0
          %v5218 = vsel %vm5213, %v5206, 0
          %5220 = vmatprep.subr.mxu0 0.0
          %5221 = vmatpush1.msra.mxu0 0.0
          %5222 = vmatprep.subr.mxu0 0.0
          %5223 = vmatpush1.msra.mxu0 0.0
          %5224 = vmatprep.subr.mxu0 0.0
          %5225 = vmatpush1.msra.mxu0 0.0
          %5226 = vmatprep.subr.mxu0 0.0
          %5227 = vmatpush1.msra.mxu0 0.0
          %5228 = vmatprep.subr.mxu0 0.0
          %5229 = vmatpush1.msra.mxu0 0.0
          %5230 = vmatprep.subr.mxu0 0.0
          %5231 = vmatpush1.msra.mxu0 0.0
          %5232 = vmatprep.subr.mxu0 0.0
          %5233 = vmatpush1.msra.mxu0 0.0
          %5234 = vmatprep.subr.mxu0 0.0
          %5235 = vmatpush1.msra.mxu0 0.0
          %5236 = vmatprep.subr.mxu0 0.0
          %5237 = vmatpush1.msra.mxu0 0.0
          %5238 = vmatprep.subr.mxu0 0.0
          %5239 = vmatpush1.msra.mxu0 0.0
          %5240 = vmatprep.subr.mxu0 0.0
          %5241 = vmatpush1.msra.mxu0 0.0
          %5242 = vmatprep.subr.mxu0 0.0
          %5243 = vmatpush1.msra.mxu0 0.0
          %5244 = vmatprep.subr.mxu0 0.0
          %5245 = vmatpush1.msra.mxu0 %v3825
          %5246 = vmatprep.subr.mxu0 0.0
          %5247 = vmatpush1.msra.mxu0 %v3824
          %5248 = vmatprep.subr.mxu0 0.0
          %5249 = vmatpush1.msra.mxu0 %v3823
          %5250 = vmatprep.subr.mxu0 0.0
          %5251 = vmatpush1.msra.mxu0 %v3822
          %5252 = vmatprep.subr.mxu0 0.0
          %5253 = vmatpush2.msra.mxu0 0.0
          %5254 = vmatprep.subr.mxu0 0.0
          %5255 = vmatpush2.msra.mxu0 0.0
          %5256 = vmatprep.subr.mxu0 0.0
          %5257 = vmatpush2.msra.mxu0 0.0
          %5258 = vmatprep.subr.mxu0 0.0
          %5259 = vmatpush2.msra.mxu0 0.0
          %5260 = vmatprep.subr.mxu0 0.0
          %5261 = vmatpush2.msra.mxu0 0.0
          %5262 = vmatprep.subr.mxu0 0.0
          %5263 = vmatpush2.msra.mxu0 0.0
          %5264 = vmatprep.subr.mxu0 0.0
          %5265 = vmatpush2.msra.mxu0 0.0
          %5266 = vmatprep.subr.mxu0 0.0
          %5267 = vmatpush2.msra.mxu0 0.0
          %5268 = vmatprep.subr.mxu0 0.0
          %5269 = vmatpush2.msra.mxu0 0.0
          %5270 = vmatprep.subr.mxu0 0.0
          %5271 = vmatpush2.msra.mxu0 0.0
          %5272 = vmatprep.subr.mxu0 0.0
          %5273 = vmatpush2.msra.mxu0 0.0
          %5274 = vmatprep.subr.mxu0 0.0
          %5275 = vmatpush2.msra.mxu0 0.0
          %5276 = vmatprep.subr.mxu0 0.0
          %5277 = vmatpush2.msra.mxu0 0.0
          %5278 = vmatprep.subr.mxu0 0.0
          %5279 = vmatpush2.msra.mxu0 0.0
          %5280 = vmatprep.subr.mxu0 0.0
          %5281 = vmatpush2.msra.mxu0 0.0
          %5282 = vmatprep.subr.mxu0 0.0
          %5283 = vmatpush2.msra.mxu0 0.0
          %5284 = vmatprep.mubr.f32.mxu0 0.0
          %5285 = vmatmul.mubr.f32.gmra.mxu0 %v5215
          %v5286 = vpop.f32.mrf.mxu0
          %v5287 = vadd.f32 %v5211, %v5286
          %v5288 = vpop.f32.mrf.mxu0
          %5289 = vmatprep.mubr.f32.mxu0 0.0
          %5290 = vmatmul.mubr.f32.gmra.mxu0 %v5218
          %v5291 = vpop.f32.mrf.mxu0
          %v5292 = vadd.f32 %v5211, %v5291
          %v5293 = vpop.f32.mrf.mxu0
          %5294 = vdwg.mxu0
          %v5295 = vadd.f32 %v5116, %v5287
          %v5296 = vadd.f32 %v5117, %v5292
          %v5297 = vsel %vm3838, %v5295, 0.0
          %5298 = vadd.xlane.f32.xlu0 %v5297
          %v5299 = vpop.xlane.xlu0 %5298
          %v5300 = vsel %vm3838, %v5296, 0.0
          %5301 = vadd.xlane.f32.xlu0 %v5300
          %v5302 = vpop.xlane.xlu0 %5301
          %v5303 = vmul.f32 %v5299, %v5081
          %v5304 = vmul.f32 %v5302, %v5081
          %v5305 = vsub.f32 %v5295, %v5303
          %v5306 = vsub.f32 %v5296, %v5304
          %v5307 = vmul.f32 %v5305, %v5305
          %v5308 = vmul.f32 %v5306, %v5306
          %v5309 = vsel %vm3838, %v5307, 0.0
          %5310 = vadd.xlane.f32.xlu0 %v5309
          %v5311 = vpop.xlane.xlu0 %5310
          %v5312 = vsel %vm3838, %v5308, 0.0
          %5313 = vadd.xlane.f32.xlu0 %v5312
          %v5314 = vpop.xlane.xlu0 %5313
          %v5315 = vmul.f32 %v5311, %v5081
          %v5316 = vmul.f32 %v5314, %v5081
          %v5317 = vadd.f32 %v5315, 1e-05
          %v5318 = vadd.f32 %v5316, 1e-05
          %v5319 = vrsqrt.pop %v5317
          %v5320 = vrsqrt.pop %v5318
          %v5321 = vmul.f32 %v5305, %v5319
          %v5322 = vmul.f32 %v5306, %v5320
          %v5324 = vlaneseq
          %v5325 = vshrl.u32 %v5324, 7
          %v5326 = vsub.s32 0, %v5325
          %v5327 = vrot.slane %v3829, %v5326
          %v5329 = vmul.f32 %v5321, %v5327
          %v5330 = vmul.f32 %v5322, %v5327
          %v5332 = vlaneseq
          %v5333 = vshrl.u32 %v5332, 7
          %v5334 = vsub.s32 0, %v5333
          %v5335 = vrot.slane %v3831, %v5334
          %v5337 = vadd.f32 %v5329, %v5335
          %v5338 = vadd.f32 %v5330, %v5335
        $region352: #{encoder_forward.1} parent=207 // loop_footer
          %s3797 = sadd.s32 1, %s3793
        $region353: #{encoder_forward.1} parent=207 // loop_footer_branch
          %3792 = sbr.rel target = $region349
        $region354: #{encoder_forward.1} parent=207 // loop_exit
          _
        %v5339 = vld [vmem:[%s63] sm:$0xff]
        %v5340 = vld [vmem:[%s63 + $0x8] sm:$0xff]
        %v5341 = vld [vmem:[#allocation32] sm:$0x1]
        %v5343 = vlaneseq
        %v5344 = vshrl.u32 %v5343, 7
        %v5345 = vsub.s32 0, %v5344
        %v5346 = vrot.slane %v5341, %v5345
        %vm5348 = vcmask 130048
        %v5350 = vsel %vm5348, %v3798, 0
        %v5353 = vsel %vm5348, %v3799, 0
        %5355 = vmatprep.subr.mxu0 0.0
        %5356 = vmatpush1.msra.mxu0 0.0
        %5357 = vmatprep.subr.mxu0 0.0
        %5358 = vmatpush1.msra.mxu0 0.0
        %5359 = vmatprep.subr.mxu0 0.0
        %5360 = vmatpush1.msra.mxu0 0.0
        %5361 = vmatprep.subr.mxu0 0.0
        %5362 = vmatpush1.msra.mxu0 0.0
        %5363 = vmatprep.subr.mxu0 0.0
        %5364 = vmatpush1.msra.mxu0 0.0
        %5365 = vmatprep.subr.mxu0 0.0
        %5366 = vmatpush1.msra.mxu0 0.0
        %5367 = vmatprep.subr.mxu0 0.0
        %5368 = vmatpush1.msra.mxu0 0.0
        %5369 = vmatprep.subr.mxu0 0.0
        %5370 = vmatpush1.msra.mxu0 0.0
        %5371 = vmatprep.subr.mxu0 0.0
        %5372 = vmatpush1.msra.mxu0 0.0
        %5373 = vmatprep.subr.mxu0 0.0
        %5374 = vmatpush1.msra.mxu0 0.0
        %5375 = vmatprep.subr.mxu0 0.0
        %5376 = vmatpush1.msra.mxu0 0.0
        %5377 = vmatprep.subr.mxu0 0.0
        %5378 = vmatpush1.msra.mxu0 0.0
        %5379 = vmatprep.subr.mxu0 0.0
        %5380 = vmatpush1.msra.mxu0 0.0
        %5381 = vmatprep.subr.mxu0 0.0
        %5382 = vmatpush1.msra.mxu0 0.0
        %5383 = vmatprep.subr.mxu0 0.0
        %5384 = vmatpush1.msra.mxu0 %v5340
        %5385 = vmatprep.subr.mxu0 0.0
        %5386 = vmatpush1.msra.mxu0 %v5339
        %5387 = vmatprep.subr.mxu0 0.0
        %5388 = vmatpush2.msra.mxu0 0.0
        %5389 = vmatprep.subr.mxu0 0.0
        %5390 = vmatpush2.msra.mxu0 0.0
        %5391 = vmatprep.subr.mxu0 0.0
        %5392 = vmatpush2.msra.mxu0 0.0
        %5393 = vmatprep.subr.mxu0 0.0
        %5394 = vmatpush2.msra.mxu0 0.0
        %5395 = vmatprep.subr.mxu0 0.0
        %5396 = vmatpush2.msra.mxu0 0.0
        %5397 = vmatprep.subr.mxu0 0.0
        %5398 = vmatpush2.msra.mxu0 0.0
        %5399 = vmatprep.subr.mxu0 0.0
        %5400 = vmatpush2.msra.mxu0 0.0
        %5401 = vmatprep.subr.mxu0 0.0
        %5402 = vmatpush2.msra.mxu0 0.0
        %5403 = vmatprep.subr.mxu0 0.0
        %5404 = vmatpush2.msra.mxu0 0.0
        %5405 = vmatprep.subr.mxu0 0.0
        %5406 = vmatpush2.msra.mxu0 0.0
        %5407 = vmatprep.subr.mxu0 0.0
        %5408 = vmatpush2.msra.mxu0 0.0
        %5409 = vmatprep.subr.mxu0 0.0
        %5410 = vmatpush2.msra.mxu0 0.0
        %5411 = vmatprep.subr.mxu0 0.0
        %5412 = vmatpush2.msra.mxu0 0.0
        %5413 = vmatprep.subr.mxu0 0.0
        %5414 = vmatpush2.msra.mxu0 0.0
        %5415 = vmatprep.subr.mxu0 0.0
        %5416 = vmatpush2.msra.mxu0 0.0
        %5417 = vmatprep.subr.mxu0 0.0
        %5418 = vmatpush2.msra.mxu0 0.0
        %5419 = vmatprep.mubr.f32.mxu0 0.0
        %5420 = vmatmul.mubr.f32.gmra.mxu0 %v5350
        %v5421 = vpop.f32.mrf.mxu0
        %v5422 = vadd.f32 %v5346, %v5421
        %v5423 = vpop.f32.mrf.mxu0
        %5424 = vmatprep.mubr.f32.mxu0 0.0
        %5425 = vmatmul.mubr.f32.gmra.mxu0 %v5353
        %v5426 = vpop.f32.mrf.mxu0
        %v5427 = vadd.f32 %v5346, %v5426
        %v5428 = vpop.f32.mrf.mxu0
        %5429 = vdwg.mxu0
        %vm5430 = vcmp.ge.s32.totalorder %v2039, %v2048
        %v5431 = vadd.s32 %v2048, 1
        %vm5432 = vcmp.lt.s32.totalorder %v2039, %v5431
        %vm5433 = vmand %vm5430, %vm5432
        %v5434 = vsel %vm5433, 1.0, 0.0
        %vm5435 = vcmp.ge.s32.totalorder %v2048, %v2039
        %v5436 = vadd.s32 %v2039, 1
        %vm5437 = vcmp.lt.s32.totalorder %v2048, %v5436
        %vm5438 = vmand %vm5435, %vm5437
        %v5439 = vsel %vm5438, 1.0, 0.0
        loop: start=0, step=1, limit=2
        $region355: #{encoder_forward.1} parent=207 // loop_pre_header
          _
        $region356: #{encoder_forward.1} parent=207 // loop_header
          %s5441 = sphi 0, %s5445
          %p5442 = scmp.ge.s32.totalorder %s5441, 2
          %v5446 = vphi %v5422, %v6989
          %v5447 = vphi %v5427, %v6990
        $region357: #{encoder_forward.1} parent=207 // loop_header_branch
          %5444 = sbr.rel (%p5442) target = $region361
        $region358: #{encoder_forward.1} parent=207 // loop_body
          %s5448 = smul.u32 %s5441, 4
          %s5449 = scalar_lea.vmem [#allocation34], %s5448
          %v5450 = vld [vmem:[%s5449] sm:$0xf]
          %s5451 = scalar_lea.vmem [#allocation35], %s5441
          %v5452 = vld [vmem:[%s5451] sm:$0x1]
          %s5453 = scalar_lea.vmem [#allocation37], %s5448
          %v5454 = vld [vmem:[%s5453] sm:$0xf]
          %s5455 = scalar_lea.vmem [#allocation38], %s5441
          %v5456 = vld [vmem:[%s5455] sm:$0x1]
          %s5457 = scalar_lea.vmem [#allocation40], %s5441
          %v5458 = vld [vmem:[%s5457] sm:$0x1]
          %s5459 = scalar_lea.vmem [#allocation41], %s5441
          %v5460 = vld [vmem:[%s5459] sm:$0x1]
          %s5461 = scalar_lea.vmem [#allocation43], %s5448
          %v5462 = vld [vmem:[%s5461] sm:$0xf]
          %s5463 = scalar_lea.vmem [#allocation44], %s5441
          %v5464 = vld [vmem:[%s5463] sm:$0x1]
          %s5465 = smul.u32 %s5441, 8
          %s5466 = scalar_lea.vmem %s83, %s5465
          %v5467 = vld [vmem:[%s5466] sm:$0xff]
          %s5468 = scalar_lea.vmem [#allocation46], %s5441
          %v5469 = vld [vmem:[%s5468] sm:$0x1]
          %s5470 = scalar_lea.vmem [#allocation47], %s5441
          %v5471 = vld [vmem:[%s5470] sm:$0x1]
          %s5472 = scalar_lea.vmem [#allocation49], %s5441
          %v5473 = vld [vmem:[%s5472] sm:$0x1]
          %v5475 = vlaneseq
          %v5476 = vshrl.u32 %v5475, 7
          %v5477 = vsub.s32 0, %v5476
          %v5478 = vrot.slane %v5452, %v5477
          %vm5480 = vcmask 31744
          %v5482 = vsel %vm5480, %v5446, 0
          %v5485 = vsel %vm5480, %v5447, 0
          %vm5487 = vcmask 1043456
          %v5489 = vsel %vm5487, %v5450, 0
          %5491 = vmatprep.subr.mxu0 0.0
          %5492 = vmatpush1.msra.mxu0 0.0
          %5493 = vmatprep.subr.mxu0 0.0
          %5494 = vmatpush1.msra.mxu0 0.0
          %5495 = vmatprep.subr.mxu0 0.0
          %5496 = vmatpush1.msra.mxu0 0.0
          %5497 = vmatprep.subr.mxu0 0.0
          %5498 = vmatpush1.msra.mxu0 0.0
          %5499 = vmatprep.subr.mxu0 0.0
          %5500 = vmatpush1.msra.mxu0 0.0
          %5501 = vmatprep.subr.mxu0 0.0
          %5502 = vmatpush1.msra.mxu0 0.0
          %5503 = vmatprep.subr.mxu0 0.0
          %5504 = vmatpush1.msra.mxu0 0.0
          %5505 = vmatprep.subr.mxu0 0.0
          %5506 = vmatpush1.msra.mxu0 0.0
          %5507 = vmatprep.subr.mxu0 0.0
          %5508 = vmatpush1.msra.mxu0 0.0
          %5509 = vmatprep.subr.mxu0 0.0
          %5510 = vmatpush1.msra.mxu0 0.0
          %5511 = vmatprep.subr.mxu0 0.0
          %5512 = vmatpush1.msra.mxu0 0.0
          %5513 = vmatprep.subr.mxu0 0.0
          %5514 = vmatpush1.msra.mxu0 0.0
          %5515 = vmatprep.subr.mxu0 0.0
          %5516 = vmatpush1.msra.mxu0 0.0
          %5517 = vmatprep.subr.mxu0 0.0
          %5518 = vmatpush1.msra.mxu0 0.0
          %5519 = vmatprep.subr.mxu0 0.0
          %5520 = vmatpush1.msra.mxu0 0.0
          %5521 = vmatprep.subr.mxu0 0.0
          %5522 = vmatpush1.msra.mxu0 %v5489
          %5523 = vmatprep.subr.mxu0 0.0
          %5524 = vmatpush2.msra.mxu0 0.0
          %5525 = vmatprep.subr.mxu0 0.0
          %5526 = vmatpush2.msra.mxu0 0.0
          %5527 = vmatprep.subr.mxu0 0.0
          %5528 = vmatpush2.msra.mxu0 0.0
          %5529 = vmatprep.subr.mxu0 0.0
          %5530 = vmatpush2.msra.mxu0 0.0
          %5531 = vmatprep.subr.mxu0 0.0
          %5532 = vmatpush2.msra.mxu0 0.0
          %5533 = vmatprep.subr.mxu0 0.0
          %5534 = vmatpush2.msra.mxu0 0.0
          %5535 = vmatprep.subr.mxu0 0.0
          %5536 = vmatpush2.msra.mxu0 0.0
          %5537 = vmatprep.subr.mxu0 0.0
          %5538 = vmatpush2.msra.mxu0 0.0
          %5539 = vmatprep.subr.mxu0 0.0
          %5540 = vmatpush2.msra.mxu0 0.0
          %5541 = vmatprep.subr.mxu0 0.0
          %5542 = vmatpush2.msra.mxu0 0.0
          %5543 = vmatprep.subr.mxu0 0.0
          %5544 = vmatpush2.msra.mxu0 0.0
          %5545 = vmatprep.subr.mxu0 0.0
          %5546 = vmatpush2.msra.mxu0 0.0
          %5547 = vmatprep.subr.mxu0 0.0
          %5548 = vmatpush2.msra.mxu0 0.0
          %5549 = vmatprep.subr.mxu0 0.0
          %5550 = vmatpush2.msra.mxu0 0.0
          %5551 = vmatprep.subr.mxu0 0.0
          %5552 = vmatpush2.msra.mxu0 0.0
          %5553 = vmatprep.subr.mxu0 0.0
          %5554 = vmatpush2.msra.mxu0 0.0
          %5555 = vmatprep.mubr.f32.mxu0 0.0
          %5556 = vmatmul.mubr.f32.gmra.mxu0 %v5482
          %v5557 = vpop.f32.mrf.mxu0
          %v5558 = vadd.f32 %v5478, %v5557
          %v5559 = vpop.f32.mrf.mxu0
          %5560 = vmatprep.mubr.f32.mxu0 0.0
          %5561 = vmatmul.mubr.f32.gmra.mxu0 %v5485
          %v5562 = vpop.f32.mrf.mxu0
          %v5563 = vadd.f32 %v5478, %v5562
          %v5564 = vpop.f32.mrf.mxu0
          %5565 = vdwg.mxu0
          %v5568 = vcombine.high %v5558, %v5558
          %v5570 = vunpack.c.l.s4 1966171168
          %v5571 = vunpack.c.0.s8 %v5570
          %v5572 = vlaneseq
          %v5573 = vshrl.u32 %v5572, 7
          %v5574 = vsub.s32 %v5571, %v5573
          %v5575 = vrot.slane %v5558, %v5574
          %v5577 = vunpack.c.l.s4 1966171168
          %v5578 = vunpack.c.0.s8 %v5577
          %v5579 = vlaneseq
          %v5580 = vshrl.u32 %v5579, 7
          %v5581 = vsub.s32 %v5578, %v5580
          %v5582 = vrot.slane %v5568, %v5581
          %v5583 = vcombine.high %v5575, %v5575
          %v5584 = vcombine.high %v5582, %v5582
          %v5586 = vunpack.c.l.s4 1966171168
          %v5587 = vunpack.c.0.s8 %v5586
          %v5588 = vlaneseq
          %v5589 = vshrl.u32 %v5588, 7
          %v5590 = vsub.s32 %v5587, %v5589
          %v5591 = vrot.slane %v5575, %v5590
          %v5593 = vunpack.c.l.s4 1966171168
          %v5594 = vunpack.c.0.s8 %v5593
          %v5595 = vlaneseq
          %v5596 = vshrl.u32 %v5595, 7
          %v5597 = vsub.s32 %v5594, %v5596
          %v5598 = vrot.slane %v5582, %v5597
          %v5600 = vunpack.c.l.s4 1966171168
          %v5601 = vunpack.c.0.s8 %v5600
          %v5602 = vlaneseq
          %v5603 = vshrl.u32 %v5602, 7
          %v5604 = vsub.s32 %v5601, %v5603
          %v5605 = vrot.slane %v5583, %v5604
          %v5607 = vunpack.c.l.s4 1966171168
          %v5608 = vunpack.c.0.s8 %v5607
          %v5609 = vlaneseq
          %v5610 = vshrl.u32 %v5609, 7
          %v5611 = vsub.s32 %v5608, %v5610
          %v5612 = vrot.slane %v5584, %v5611
          %v5613 = vcombine.high %v5591, %v5591
          %v5614 = vcombine.high %v5598, %v5598
          %v5615 = vcombine.high %v5605, %v5605
          %v5616 = vcombine.high %v5612, %v5612
          %v5617 = vcombine.high %v5563, %v5563
          %v5619 = vunpack.c.l.s4 1966171168
          %v5620 = vunpack.c.0.s8 %v5619
          %v5621 = vlaneseq
          %v5622 = vshrl.u32 %v5621, 7
          %v5623 = vsub.s32 %v5620, %v5622
          %v5624 = vrot.slane %v5563, %v5623
          %v5626 = vunpack.c.l.s4 1966171168
          %v5627 = vunpack.c.0.s8 %v5626
          %v5628 = vlaneseq
          %v5629 = vshrl.u32 %v5628, 7
          %v5630 = vsub.s32 %v5627, %v5629
          %v5631 = vrot.slane %v5617, %v5630
          %v5632 = vcombine.high %v5624, %v5624
          %v5633 = vcombine.high %v5631, %v5631
          %v5635 = vunpack.c.l.s4 1966171168
          %v5636 = vunpack.c.0.s8 %v5635
          %v5637 = vlaneseq
          %v5638 = vshrl.u32 %v5637, 7
          %v5639 = vsub.s32 %v5636, %v5638
          %v5640 = vrot.slane %v5624, %v5639
          %v5642 = vunpack.c.l.s4 1966171168
          %v5643 = vunpack.c.0.s8 %v5642
          %v5644 = vlaneseq
          %v5645 = vshrl.u32 %v5644, 7
          %v5646 = vsub.s32 %v5643, %v5645
          %v5647 = vrot.slane %v5631, %v5646
          %v5649 = vunpack.c.l.s4 1966171168
          %v5650 = vunpack.c.0.s8 %v5649
          %v5651 = vlaneseq
          %v5652 = vshrl.u32 %v5651, 7
          %v5653 = vsub.s32 %v5650, %v5652
          %v5654 = vrot.slane %v5632, %v5653
          %v5656 = vunpack.c.l.s4 1966171168
          %v5657 = vunpack.c.0.s8 %v5656
          %v5658 = vlaneseq
          %v5659 = vshrl.u32 %v5658, 7
          %v5660 = vsub.s32 %v5657, %v5659
          %v5661 = vrot.slane %v5633, %v5660
          %v5662 = vcombine.high %v5640, %v5640
          %v5663 = vcombine.high %v5647, %v5647
          %v5664 = vcombine.high %v5654, %v5654
          %v5665 = vcombine.high %v5661, %v5661
          %v5666 = vlaneseq
          %v5667 = vshrl.u32 %v5666, 7
          %v5668 = vsub.s32 0, %v5667
          %v5669 = vrot.slane %v5591, %v5668
          %v5670 = vlaneseq
          %v5671 = vshrl.u32 %v5670, 7
          %v5672 = vsub.s32 0, %v5671
          %v5673 = vrot.slane %v5605, %v5672
          %v5674 = vlaneseq
          %v5675 = vshrl.u32 %v5674, 7
          %v5676 = vsub.s32 0, %v5675
          %v5677 = vrot.slane %v5613, %v5676
          %v5678 = vlaneseq
          %v5679 = vshrl.u32 %v5678, 7
          %v5680 = vsub.s32 0, %v5679
          %v5681 = vrot.slane %v5615, %v5680
          %v5682 = vlaneseq
          %v5683 = vshrl.u32 %v5682, 7
          %v5684 = vsub.s32 0, %v5683
          %v5685 = vrot.slane %v5598, %v5684
          %v5686 = vlaneseq
          %v5687 = vshrl.u32 %v5686, 7
          %v5688 = vsub.s32 0, %v5687
          %v5689 = vrot.slane %v5612, %v5688
          %v5690 = vlaneseq
          %v5691 = vshrl.u32 %v5690, 7
          %v5692 = vsub.s32 0, %v5691
          %v5693 = vrot.slane %v5614, %v5692
          %v5694 = vlaneseq
          %v5695 = vshrl.u32 %v5694, 7
          %v5696 = vsub.s32 0, %v5695
          %v5697 = vrot.slane %v5616, %v5696
          %v5698 = vlaneseq
          %v5699 = vshrl.u32 %v5698, 7
          %v5700 = vsub.s32 0, %v5699
          %v5701 = vrot.slane %v5640, %v5700
          %v5702 = vlaneseq
          %v5703 = vshrl.u32 %v5702, 7
          %v5704 = vsub.s32 0, %v5703
          %v5705 = vrot.slane %v5654, %v5704
          %v5706 = vlaneseq
          %v5707 = vshrl.u32 %v5706, 7
          %v5708 = vsub.s32 0, %v5707
          %v5709 = vrot.slane %v5662, %v5708
          %v5710 = vlaneseq
          %v5711 = vshrl.u32 %v5710, 7
          %v5712 = vsub.s32 0, %v5711
          %v5713 = vrot.slane %v5664, %v5712
          %v5714 = vlaneseq
          %v5715 = vshrl.u32 %v5714, 7
          %v5716 = vsub.s32 0, %v5715
          %v5717 = vrot.slane %v5647, %v5716
          %v5718 = vlaneseq
          %v5719 = vshrl.u32 %v5718, 7
          %v5720 = vsub.s32 0, %v5719
          %v5721 = vrot.slane %v5661, %v5720
          %v5722 = vlaneseq
          %v5723 = vshrl.u32 %v5722, 7
          %v5724 = vsub.s32 0, %v5723
          %v5725 = vrot.slane %v5663, %v5724
          %v5726 = vlaneseq
          %v5727 = vshrl.u32 %v5726, 7
          %v5728 = vsub.s32 0, %v5727
          %v5729 = vrot.slane %v5665, %v5728
          %5746 = vrot.lane.b32.xlu0 %v5558, 124
          %v5747 = vpop.permute.xlu0 %5746
          %5748 = vrot.lane.b32.xlu0 %v5563, 124
          %v5749 = vpop.permute.xlu0 %5748
          %v5752 = vmul.f32 %v5669, %v5747
          %v5753 = vmul.f32 %v5673, %v5747
          %v5754 = vmul.f32 %v5677, %v5747
          %v5755 = vmul.f32 %v5681, %v5747
          %v5756 = vmul.f32 %v5685, %v5747
          %v5757 = vmul.f32 %v5689, %v5747
          %v5758 = vmul.f32 %v5693, %v5747
          %v5759 = vmul.f32 %v5697, %v5747
          %v5760 = vmul.f32 %v5701, %v5749
          %v5761 = vmul.f32 %v5705, %v5749
          %v5762 = vmul.f32 %v5709, %v5749
          %v5763 = vmul.f32 %v5713, %v5749
          %v5764 = vmul.f32 %v5717, %v5749
          %v5765 = vmul.f32 %v5721, %v5749
          %v5766 = vmul.f32 %v5725, %v5749
          %v5767 = vmul.f32 %v5729, %v5749
          %v5769 = vsel %vm5480, %v5752, 0
          %v5772 = vsel %vm5480, %v5753, 0
          %v5775 = vsel %vm5480, %v5754, 0
          %v5778 = vsel %vm5480, %v5755, 0
          %v5781 = vsel %vm5480, %v5756, 0
          %v5784 = vsel %vm5480, %v5757, 0
          %v5787 = vsel %vm5480, %v5758, 0
          %v5790 = vsel %vm5480, %v5759, 0
          %v5793 = vsel %vm5480, %v5760, 0
          %v5796 = vsel %vm5480, %v5761, 0
          %v5799 = vsel %vm5480, %v5762, 0
          %v5802 = vsel %vm5480, %v5763, 0
          %v5805 = vsel %vm5480, %v5764, 0
          %v5808 = vsel %vm5480, %v5765, 0
          %v5811 = vsel %vm5480, %v5766, 0
          %v5814 = vsel %vm5480, %v5767, 0
          %v5817 = vsel %vm5487, %v5434, 0
          %5819 = vmatprep.subr.mxu0 0.0
          %5820 = vmatpush1.msra.mxu0 0.0
          %5821 = vmatprep.subr.mxu0 0.0
          %5822 = vmatpush1.msra.mxu0 0.0
          %5823 = vmatprep.subr.mxu0 0.0
          %5824 = vmatpush1.msra.mxu0 0.0
          %5825 = vmatprep.subr.mxu0 0.0
          %5826 = vmatpush1.msra.mxu0 0.0
          %5827 = vmatprep.subr.mxu0 0.0
          %5828 = vmatpush1.msra.mxu0 0.0
          %5829 = vmatprep.subr.mxu0 0.0
          %5830 = vmatpush1.msra.mxu0 0.0
          %5831 = vmatprep.subr.mxu0 0.0
          %5832 = vmatpush1.msra.mxu0 0.0
          %5833 = vmatprep.subr.mxu0 0.0
          %5834 = vmatpush1.msra.mxu0 0.0
          %5835 = vmatprep.subr.mxu0 0.0
          %5836 = vmatpush1.msra.mxu0 0.0
          %5837 = vmatprep.subr.mxu0 0.0
          %5838 = vmatpush1.msra.mxu0 0.0
          %5839 = vmatprep.subr.mxu0 0.0
          %5840 = vmatpush1.msra.mxu0 0.0
          %5841 = vmatprep.subr.mxu0 0.0
          %5842 = vmatpush1.msra.mxu0 0.0
          %5843 = vmatprep.subr.mxu0 0.0
          %5844 = vmatpush1.msra.mxu0 0.0
          %5845 = vmatprep.subr.mxu0 0.0
          %5846 = vmatpush1.msra.mxu0 0.0
          %5847 = vmatprep.subr.mxu0 0.0
          %5848 = vmatpush1.msra.mxu0 0.0
          %5849 = vmatprep.subr.mxu0 0.0
          %5850 = vmatpush1.msra.mxu0 %v5817
          %5851 = vmatprep.subr.mxu0 0.0
          %5852 = vmatpush2.msra.mxu0 0.0
          %5853 = vmatprep.subr.mxu0 0.0
          %5854 = vmatpush2.msra.mxu0 0.0
          %5855 = vmatprep.subr.mxu0 0.0
          %5856 = vmatpush2.msra.mxu0 0.0
          %5857 = vmatprep.subr.mxu0 0.0
          %5858 = vmatpush2.msra.mxu0 0.0
          %5859 = vmatprep.subr.mxu0 0.0
          %5860 = vmatpush2.msra.mxu0 0.0
          %5861 = vmatprep.subr.mxu0 0.0
          %5862 = vmatpush2.msra.mxu0 0.0
          %5863 = vmatprep.subr.mxu0 0.0
          %5864 = vmatpush2.msra.mxu0 0.0
          %5865 = vmatprep.subr.mxu0 0.0
          %5866 = vmatpush2.msra.mxu0 0.0
          %5867 = vmatprep.subr.mxu0 0.0
          %5868 = vmatpush2.msra.mxu0 0.0
          %5869 = vmatprep.subr.mxu0 0.0
          %5870 = vmatpush2.msra.mxu0 0.0
          %5871 = vmatprep.subr.mxu0 0.0
          %5872 = vmatpush2.msra.mxu0 0.0
          %5873 = vmatprep.subr.mxu0 0.0
          %5874 = vmatpush2.msra.mxu0 0.0
          %5875 = vmatprep.subr.mxu0 0.0
          %5876 = vmatpush2.msra.mxu0 0.0
          %5877 = vmatprep.subr.mxu0 0.0
          %5878 = vmatpush2.msra.mxu0 0.0
          %5879 = vmatprep.subr.mxu0 0.0
          %5880 = vmatpush2.msra.mxu0 0.0
          %5881 = vmatprep.subr.mxu0 0.0
          %5882 = vmatpush2.msra.mxu0 0.0
          %5883 = vmatprep.mubr.f32.mxu0 0.0
          %5884 = vmatmul.mubr.f32.gmra.mxu0 %v5769
          %v5885 = vpop.f32.mrf.mxu0
          %v5886 = vadd.f32 0.0, %v5885
          %v5887 = vpop.f32.mrf.mxu0
          %5888 = vmatprep.mubr.f32.mxu0 0.0
          %5889 = vmatmul.mubr.f32.gmra.mxu0 %v5772
          %v5890 = vpop.f32.mrf.mxu0
          %v5891 = vadd.f32 0.0, %v5890
          %v5892 = vpop.f32.mrf.mxu0
          %5893 = vmatprep.mubr.f32.mxu0 0.0
          %5894 = vmatmul.mubr.f32.gmra.mxu0 %v5775
          %v5895 = vpop.f32.mrf.mxu0
          %v5896 = vadd.f32 0.0, %v5895
          %v5897 = vpop.f32.mrf.mxu0
          %5898 = vmatprep.mubr.f32.mxu0 0.0
          %5899 = vmatmul.mubr.f32.gmra.mxu0 %v5778
          %v5900 = vpop.f32.mrf.mxu0
          %v5901 = vadd.f32 0.0, %v5900
          %v5902 = vpop.f32.mrf.mxu0
          %5903 = vmatprep.mubr.f32.mxu0 0.0
          %5904 = vmatmul.mubr.f32.gmra.mxu0 %v5781
          %v5905 = vpop.f32.mrf.mxu0
          %v5906 = vadd.f32 0.0, %v5905
          %v5907 = vpop.f32.mrf.mxu0
          %5908 = vmatprep.mubr.f32.mxu0 0.0
          %5909 = vmatmul.mubr.f32.gmra.mxu0 %v5784
          %v5910 = vpop.f32.mrf.mxu0
          %v5911 = vadd.f32 0.0, %v5910
          %v5912 = vpop.f32.mrf.mxu0
          %5913 = vmatprep.mubr.f32.mxu0 0.0
          %5914 = vmatmul.mubr.f32.gmra.mxu0 %v5787
          %v5915 = vpop.f32.mrf.mxu0
          %v5916 = vadd.f32 0.0, %v5915
          %v5917 = vpop.f32.mrf.mxu0
          %5918 = vmatprep.mubr.f32.mxu0 0.0
          %5919 = vmatmul.mubr.f32.gmra.mxu0 %v5790
          %v5920 = vpop.f32.mrf.mxu0
          %v5921 = vadd.f32 0.0, %v5920
          %v5922 = vpop.f32.mrf.mxu0
          %5923 = vmatprep.mubr.f32.mxu0 0.0
          %5924 = vmatmul.mubr.f32.gmra.mxu0 %v5793
          %v5925 = vpop.f32.mrf.mxu0
          %v5926 = vadd.f32 0.0, %v5925
          %v5927 = vpop.f32.mrf.mxu0
          %5928 = vmatprep.mubr.f32.mxu0 0.0
          %5929 = vmatmul.mubr.f32.gmra.mxu0 %v5796
          %v5930 = vpop.f32.mrf.mxu0
          %v5931 = vadd.f32 0.0, %v5930
          %v5932 = vpop.f32.mrf.mxu0
          %5933 = vmatprep.mubr.f32.mxu0 0.0
          %5934 = vmatmul.mubr.f32.gmra.mxu0 %v5799
          %v5935 = vpop.f32.mrf.mxu0
          %v5936 = vadd.f32 0.0, %v5935
          %v5937 = vpop.f32.mrf.mxu0
          %5938 = vmatprep.mubr.f32.mxu0 0.0
          %5939 = vmatmul.mubr.f32.gmra.mxu0 %v5802
          %v5940 = vpop.f32.mrf.mxu0
          %v5941 = vadd.f32 0.0, %v5940
          %v5942 = vpop.f32.mrf.mxu0
          %5943 = vmatprep.mubr.f32.mxu0 0.0
          %5944 = vmatmul.mubr.f32.gmra.mxu0 %v5805
          %v5945 = vpop.f32.mrf.mxu0
          %v5946 = vadd.f32 0.0, %v5945
          %v5947 = vpop.f32.mrf.mxu0
          %5948 = vmatprep.mubr.f32.mxu0 0.0
          %5949 = vmatmul.mubr.f32.gmra.mxu0 %v5808
          %v5950 = vpop.f32.mrf.mxu0
          %v5951 = vadd.f32 0.0, %v5950
          %v5952 = vpop.f32.mrf.mxu0
          %5953 = vmatprep.mubr.f32.mxu0 0.0
          %5954 = vmatmul.mubr.f32.gmra.mxu0 %v5811
          %v5955 = vpop.f32.mrf.mxu0
          %v5956 = vadd.f32 0.0, %v5955
          %v5957 = vpop.f32.mrf.mxu0
          %5958 = vmatprep.mubr.f32.mxu0 0.0
          %5959 = vmatmul.mubr.f32.gmra.mxu0 %v5814
          %v5960 = vpop.f32.mrf.mxu0
          %v5961 = vadd.f32 0.0, %v5960
          %v5962 = vpop.f32.mrf.mxu0
          %5963 = vdwg.mxu0
          %v5964 = vsel %vm5480, %v5886, -inf
          %v5965 = vrot.slane %v5964, 4
          %v5966 = vmax.f32 %v5964, %v5965
          %v5967 = vrot.slane %v5966, 2
          %v5968 = vmax.f32 %v5966, %v5967
          %v5969 = vrot.slane %v5968, 1
          %v5970 = vmax.f32 %v5968, %v5969
          %v5971 = vsel %vm5480, %v5891, -inf
          %v5972 = vrot.slane %v5971, 4
          %v5973 = vmax.f32 %v5971, %v5972
          %v5974 = vrot.slane %v5973, 2
          %v5975 = vmax.f32 %v5973, %v5974
          %v5976 = vrot.slane %v5975, 1
          %v5977 = vmax.f32 %v5975, %v5976
          %v5978 = vsel %vm5480, %v5896, -inf
          %v5979 = vrot.slane %v5978, 4
          %v5980 = vmax.f32 %v5978, %v5979
          %v5981 = vrot.slane %v5980, 2
          %v5982 = vmax.f32 %v5980, %v5981
          %v5983 = vrot.slane %v5982, 1
          %v5984 = vmax.f32 %v5982, %v5983
          %v5985 = vsel %vm5480, %v5901, -inf
          %v5986 = vrot.slane %v5985, 4
          %v5987 = vmax.f32 %v5985, %v5986
          %v5988 = vrot.slane %v5987, 2
          %v5989 = vmax.f32 %v5987, %v5988
          %v5990 = vrot.slane %v5989, 1
          %v5991 = vmax.f32 %v5989, %v5990
          %v5992 = vsel %vm5480, %v5906, -inf
          %v5993 = vrot.slane %v5992, 4
          %v5994 = vmax.f32 %v5992, %v5993
          %v5995 = vrot.slane %v5994, 2
          %v5996 = vmax.f32 %v5994, %v5995
          %v5997 = vrot.slane %v5996, 1
          %v5998 = vmax.f32 %v5996, %v5997
          %v5999 = vsel %vm5480, %v5911, -inf
          %v6000 = vrot.slane %v5999, 4
          %v6001 = vmax.f32 %v5999, %v6000
          %v6002 = vrot.slane %v6001, 2
          %v6003 = vmax.f32 %v6001, %v6002
          %v6004 = vrot.slane %v6003, 1
          %v6005 = vmax.f32 %v6003, %v6004
          %v6006 = vsel %vm5480, %v5916, -inf
          %v6007 = vrot.slane %v6006, 4
          %v6008 = vmax.f32 %v6006, %v6007
          %v6009 = vrot.slane %v6008, 2
          %v6010 = vmax.f32 %v6008, %v6009
          %v6011 = vrot.slane %v6010, 1
          %v6012 = vmax.f32 %v6010, %v6011
          %v6013 = vsel %vm5480, %v5921, -inf
          %v6014 = vrot.slane %v6013, 4
          %v6015 = vmax.f32 %v6013, %v6014
          %v6016 = vrot.slane %v6015, 2
          %v6017 = vmax.f32 %v6015, %v6016
          %v6018 = vrot.slane %v6017, 1
          %v6019 = vmax.f32 %v6017, %v6018
          %v6020 = vsel %vm5480, %v5926, -inf
          %v6021 = vrot.slane %v6020, 4
          %v6022 = vmax.f32 %v6020, %v6021
          %v6023 = vrot.slane %v6022, 2
          %v6024 = vmax.f32 %v6022, %v6023
          %v6025 = vrot.slane %v6024, 1
          %v6026 = vmax.f32 %v6024, %v6025
          %v6027 = vsel %vm5480, %v5931, -inf
          %v6028 = vrot.slane %v6027, 4
          %v6029 = vmax.f32 %v6027, %v6028
          %v6030 = vrot.slane %v6029, 2
          %v6031 = vmax.f32 %v6029, %v6030
          %v6032 = vrot.slane %v6031, 1
          %v6033 = vmax.f32 %v6031, %v6032
          %v6034 = vsel %vm5480, %v5936, -inf
          %v6035 = vrot.slane %v6034, 4
          %v6036 = vmax.f32 %v6034, %v6035
          %v6037 = vrot.slane %v6036, 2
          %v6038 = vmax.f32 %v6036, %v6037
          %v6039 = vrot.slane %v6038, 1
          %v6040 = vmax.f32 %v6038, %v6039
          %v6041 = vsel %vm5480, %v5941, -inf
          %v6042 = vrot.slane %v6041, 4
          %v6043 = vmax.f32 %v6041, %v6042
          %v6044 = vrot.slane %v6043, 2
          %v6045 = vmax.f32 %v6043, %v6044
          %v6046 = vrot.slane %v6045, 1
          %v6047 = vmax.f32 %v6045, %v6046
          %v6048 = vsel %vm5480, %v5946, -inf
          %v6049 = vrot.slane %v6048, 4
          %v6050 = vmax.f32 %v6048, %v6049
          %v6051 = vrot.slane %v6050, 2
          %v6052 = vmax.f32 %v6050, %v6051
          %v6053 = vrot.slane %v6052, 1
          %v6054 = vmax.f32 %v6052, %v6053
          %v6055 = vsel %vm5480, %v5951, -inf
          %v6056 = vrot.slane %v6055, 4
          %v6057 = vmax.f32 %v6055, %v6056
          %v6058 = vrot.slane %v6057, 2
          %v6059 = vmax.f32 %v6057, %v6058
          %v6060 = vrot.slane %v6059, 1
          %v6061 = vmax.f32 %v6059, %v6060
          %v6062 = vsel %vm5480, %v5956, -inf
          %v6063 = vrot.slane %v6062, 4
          %v6064 = vmax.f32 %v6062, %v6063
          %v6065 = vrot.slane %v6064, 2
          %v6066 = vmax.f32 %v6064, %v6065
          %v6067 = vrot.slane %v6066, 1
          %v6068 = vmax.f32 %v6066, %v6067
          %v6069 = vsel %vm5480, %v5961, -inf
          %v6070 = vrot.slane %v6069, 4
          %v6071 = vmax.f32 %v6069, %v6070
          %v6072 = vrot.slane %v6071, 2
          %v6073 = vmax.f32 %v6071, %v6072
          %v6074 = vrot.slane %v6073, 1
          %v6075 = vmax.f32 %v6073, %v6074
          %v6076 = vsub.f32 %v5886, %v5970
          %v6077 = vsub.f32 %v5891, %v5977
          %v6078 = vsub.f32 %v5896, %v5984
          %v6079 = vsub.f32 %v5901, %v5991
          %v6080 = vsub.f32 %v5906, %v5998
          %v6081 = vsub.f32 %v5911, %v6005
          %v6082 = vsub.f32 %v5916, %v6012
          %v6083 = vsub.f32 %v5921, %v6019
          %v6084 = vsub.f32 %v5926, %v6026
          %v6085 = vsub.f32 %v5931, %v6033
          %v6086 = vsub.f32 %v5936, %v6040
          %v6087 = vsub.f32 %v5941, %v6047
          %v6088 = vsub.f32 %v5946, %v6054
          %v6089 = vsub.f32 %v5951, %v6061
          %v6090 = vsub.f32 %v5956, %v6068
          %v6091 = vsub.f32 %v5961, %v6075
          %v6092 = vmul.f32 %v6076, 1.442695
          %v6093 = vpow.pop %v6092
          %v6094 = vmul.f32 %v6077, 1.442695
          %v6095 = vpow.pop %v6094
          %v6096 = vmul.f32 %v6078, 1.442695
          %v6097 = vpow.pop %v6096
          %v6098 = vmul.f32 %v6079, 1.442695
          %v6099 = vpow.pop %v6098
          %v6100 = vmul.f32 %v6080, 1.442695
          %v6101 = vpow.pop %v6100
          %v6102 = vmul.f32 %v6081, 1.442695
          %v6103 = vpow.pop %v6102
          %v6104 = vmul.f32 %v6082, 1.442695
          %v6105 = vpow.pop %v6104
          %v6106 = vmul.f32 %v6083, 1.442695
          %v6107 = vpow.pop %v6106
          %v6108 = vmul.f32 %v6084, 1.442695
          %v6109 = vpow.pop %v6108
          %v6110 = vmul.f32 %v6085, 1.442695
          %v6111 = vpow.pop %v6110
          %v6112 = vmul.f32 %v6086, 1.442695
          %v6113 = vpow.pop %v6112
          %v6114 = vmul.f32 %v6087, 1.442695
          %v6115 = vpow.pop %v6114
          %v6116 = vmul.f32 %v6088, 1.442695
          %v6117 = vpow.pop %v6116
          %v6118 = vmul.f32 %v6089, 1.442695
          %v6119 = vpow.pop %v6118
          %v6120 = vmul.f32 %v6090, 1.442695
          %v6121 = vpow.pop %v6120
          %v6122 = vmul.f32 %v6091, 1.442695
          %v6123 = vpow.pop %v6122
          %v6124 = vsel %vm5480, %v6093, 0.0
          %v6125 = vrot.slane %v6124, 4
          %v6126 = vadd.f32 %v6124, %v6125
          %v6127 = vrot.slane %v6126, 2
          %v6128 = vadd.f32 %v6126, %v6127
          %v6129 = vrot.slane %v6128, 1
          %v6130 = vadd.f32 %v6128, %v6129
          %v6131 = vsel %vm5480, %v6095, 0.0
          %v6132 = vrot.slane %v6131, 4
          %v6133 = vadd.f32 %v6131, %v6132
          %v6134 = vrot.slane %v6133, 2
          %v6135 = vadd.f32 %v6133, %v6134
          %v6136 = vrot.slane %v6135, 1
          %v6137 = vadd.f32 %v6135, %v6136
          %v6138 = vsel %vm5480, %v6097, 0.0
          %v6139 = vrot.slane %v6138, 4
          %v6140 = vadd.f32 %v6138, %v6139
          %v6141 = vrot.slane %v6140, 2
          %v6142 = vadd.f32 %v6140, %v6141
          %v6143 = vrot.slane %v6142, 1
          %v6144 = vadd.f32 %v6142, %v6143
          %v6145 = vsel %vm5480, %v6099, 0.0
          %v6146 = vrot.slane %v6145, 4
          %v6147 = vadd.f32 %v6145, %v6146
          %v6148 = vrot.slane %v6147, 2
          %v6149 = vadd.f32 %v6147, %v6148
          %v6150 = vrot.slane %v6149, 1
          %v6151 = vadd.f32 %v6149, %v6150
          %v6152 = vsel %vm5480, %v6101, 0.0
          %v6153 = vrot.slane %v6152, 4
          %v6154 = vadd.f32 %v6152, %v6153
          %v6155 = vrot.slane %v6154, 2
          %v6156 = vadd.f32 %v6154, %v6155
          %v6157 = vrot.slane %v6156, 1
          %v6158 = vadd.f32 %v6156, %v6157
          %v6159 = vsel %vm5480, %v6103, 0.0
          %v6160 = vrot.slane %v6159, 4
          %v6161 = vadd.f32 %v6159, %v6160
          %v6162 = vrot.slane %v6161, 2
          %v6163 = vadd.f32 %v6161, %v6162
          %v6164 = vrot.slane %v6163, 1
          %v6165 = vadd.f32 %v6163, %v6164
          %v6166 = vsel %vm5480, %v6105, 0.0
          %v6167 = vrot.slane %v6166, 4
          %v6168 = vadd.f32 %v6166, %v6167
          %v6169 = vrot.slane %v6168, 2
          %v6170 = vadd.f32 %v6168, %v6169
          %v6171 = vrot.slane %v6170, 1
          %v6172 = vadd.f32 %v6170, %v6171
          %v6173 = vsel %vm5480, %v6107, 0.0
          %v6174 = vrot.slane %v6173, 4
          %v6175 = vadd.f32 %v6173, %v6174
          %v6176 = vrot.slane %v6175, 2
          %v6177 = vadd.f32 %v6175, %v6176
          %v6178 = vrot.slane %v6177, 1
          %v6179 = vadd.f32 %v6177, %v6178
          %v6180 = vsel %vm5480, %v6109, 0.0
          %v6181 = vrot.slane %v6180, 4
          %v6182 = vadd.f32 %v6180, %v6181
          %v6183 = vrot.slane %v6182, 2
          %v6184 = vadd.f32 %v6182, %v6183
          %v6185 = vrot.slane %v6184, 1
          %v6186 = vadd.f32 %v6184, %v6185
          %v6187 = vsel %vm5480, %v6111, 0.0
          %v6188 = vrot.slane %v6187, 4
          %v6189 = vadd.f32 %v6187, %v6188
          %v6190 = vrot.slane %v6189, 2
          %v6191 = vadd.f32 %v6189, %v6190
          %v6192 = vrot.slane %v6191, 1
          %v6193 = vadd.f32 %v6191, %v6192
          %v6194 = vsel %vm5480, %v6113, 0.0
          %v6195 = vrot.slane %v6194, 4
          %v6196 = vadd.f32 %v6194, %v6195
          %v6197 = vrot.slane %v6196, 2
          %v6198 = vadd.f32 %v6196, %v6197
          %v6199 = vrot.slane %v6198, 1
          %v6200 = vadd.f32 %v6198, %v6199
          %v6201 = vsel %vm5480, %v6115, 0.0
          %v6202 = vrot.slane %v6201, 4
          %v6203 = vadd.f32 %v6201, %v6202
          %v6204 = vrot.slane %v6203, 2
          %v6205 = vadd.f32 %v6203, %v6204
          %v6206 = vrot.slane %v6205, 1
          %v6207 = vadd.f32 %v6205, %v6206
          %v6208 = vsel %vm5480, %v6117, 0.0
          %v6209 = vrot.slane %v6208, 4
          %v6210 = vadd.f32 %v6208, %v6209
          %v6211 = vrot.slane %v6210, 2
          %v6212 = vadd.f32 %v6210, %v6211
          %v6213 = vrot.slane %v6212, 1
          %v6214 = vadd.f32 %v6212, %v6213
          %v6215 = vsel %vm5480, %v6119, 0.0
          %v6216 = vrot.slane %v6215, 4
          %v6217 = vadd.f32 %v6215, %v6216
          %v6218 = vrot.slane %v6217, 2
          %v6219 = vadd.f32 %v6217, %v6218
          %v6220 = vrot.slane %v6219, 1
          %v6221 = vadd.f32 %v6219, %v6220
          %v6222 = vsel %vm5480, %v6121, 0.0
          %v6223 = vrot.slane %v6222, 4
          %v6224 = vadd.f32 %v6222, %v6223
          %v6225 = vrot.slane %v6224, 2
          %v6226 = vadd.f32 %v6224, %v6225
          %v6227 = vrot.slane %v6226, 1
          %v6228 = vadd.f32 %v6226, %v6227
          %v6229 = vsel %vm5480, %v6123, 0.0
          %v6230 = vrot.slane %v6229, 4
          %v6231 = vadd.f32 %v6229, %v6230
          %v6232 = vrot.slane %v6231, 2
          %v6233 = vadd.f32 %v6231, %v6232
          %v6234 = vrot.slane %v6233, 1
          %v6235 = vadd.f32 %v6233, %v6234
          %v6236 = vrcp.pop %v6130
          %v6237 = vrcp.pop %v6137
          %v6238 = vrcp.pop %v6144
          %v6239 = vrcp.pop %v6151
          %v6240 = vrcp.pop %v6158
          %v6241 = vrcp.pop %v6165
          %v6242 = vrcp.pop %v6172
          %v6243 = vrcp.pop %v6179
          %v6244 = vrcp.pop %v6186
          %v6245 = vrcp.pop %v6193
          %v6246 = vrcp.pop %v6200
          %v6247 = vrcp.pop %v6207
          %v6248 = vrcp.pop %v6214
          %v6249 = vrcp.pop %v6221
          %v6250 = vrcp.pop %v6228
          %v6251 = vrcp.pop %v6235
          %v6252 = vmul.f32 %v6093, %v6236
          %v6253 = vmul.f32 %v6095, %v6237
          %v6254 = vmul.f32 %v6097, %v6238
          %v6255 = vmul.f32 %v6099, %v6239
          %v6256 = vmul.f32 %v6101, %v6240
          %v6257 = vmul.f32 %v6103, %v6241
          %v6258 = vmul.f32 %v6105, %v6242
          %v6259 = vmul.f32 %v6107, %v6243
          %v6260 = vmul.f32 %v6109, %v6244
          %v6261 = vmul.f32 %v6111, %v6245
          %v6262 = vmul.f32 %v6113, %v6246
          %v6263 = vmul.f32 %v6115, %v6247
          %v6264 = vmul.f32 %v6117, %v6248
          %v6265 = vmul.f32 %v6119, %v6249
          %v6266 = vmul.f32 %v6121, %v6250
          %v6267 = vmul.f32 %v6123, %v6251
          %v6269 = vsel %vm5480, %v6252, 0
          %v6272 = vsel %vm5480, %v6253, 0
          %v6275 = vsel %vm5480, %v6254, 0
          %v6278 = vsel %vm5480, %v6255, 0
          %v6281 = vsel %vm5480, %v6256, 0
          %v6284 = vsel %vm5480, %v6257, 0
          %v6287 = vsel %vm5480, %v6258, 0
          %v6290 = vsel %vm5480, %v6259, 0
          %v6293 = vsel %vm5480, %v6260, 0
          %v6296 = vsel %vm5480, %v6261, 0
          %v6299 = vsel %vm5480, %v6262, 0
          %v6302 = vsel %vm5480, %v6263, 0
          %v6305 = vsel %vm5480, %v6264, 0
          %v6308 = vsel %vm5480, %v6265, 0
          %v6311 = vsel %vm5480, %v6266, 0
          %v6314 = vsel %vm5480, %v6267, 0
          %v6317 = vsel %vm5487, %v5439, 0
          %6319 = vmatprep.subr.mxu0 0.0
          %6320 = vmatpush1.msra.mxu0 0.0
          %6321 = vmatprep.subr.mxu0 0.0
          %6322 = vmatpush1.msra.mxu0 0.0
          %6323 = vmatprep.subr.mxu0 0.0
          %6324 = vmatpush1.msra.mxu0 0.0
          %6325 = vmatprep.subr.mxu0 0.0
          %6326 = vmatpush1.msra.mxu0 0.0
          %6327 = vmatprep.subr.mxu0 0.0
          %6328 = vmatpush1.msra.mxu0 0.0
          %6329 = vmatprep.subr.mxu0 0.0
          %6330 = vmatpush1.msra.mxu0 0.0
          %6331 = vmatprep.subr.mxu0 0.0
          %6332 = vmatpush1.msra.mxu0 0.0
          %6333 = vmatprep.subr.mxu0 0.0
          %6334 = vmatpush1.msra.mxu0 0.0
          %6335 = vmatprep.subr.mxu0 0.0
          %6336 = vmatpush1.msra.mxu0 0.0
          %6337 = vmatprep.subr.mxu0 0.0
          %6338 = vmatpush1.msra.mxu0 0.0
          %6339 = vmatprep.subr.mxu0 0.0
          %6340 = vmatpush1.msra.mxu0 0.0
          %6341 = vmatprep.subr.mxu0 0.0
          %6342 = vmatpush1.msra.mxu0 0.0
          %6343 = vmatprep.subr.mxu0 0.0
          %6344 = vmatpush1.msra.mxu0 0.0
          %6345 = vmatprep.subr.mxu0 0.0
          %6346 = vmatpush1.msra.mxu0 0.0
          %6347 = vmatprep.subr.mxu0 0.0
          %6348 = vmatpush1.msra.mxu0 0.0
          %6349 = vmatprep.subr.mxu0 0.0
          %6350 = vmatpush1.msra.mxu0 %v6317
          %6351 = vmatprep.subr.mxu0 0.0
          %6352 = vmatpush2.msra.mxu0 0.0
          %6353 = vmatprep.subr.mxu0 0.0
          %6354 = vmatpush2.msra.mxu0 0.0
          %6355 = vmatprep.subr.mxu0 0.0
          %6356 = vmatpush2.msra.mxu0 0.0
          %6357 = vmatprep.subr.mxu0 0.0
          %6358 = vmatpush2.msra.mxu0 0.0
          %6359 = vmatprep.subr.mxu0 0.0
          %6360 = vmatpush2.msra.mxu0 0.0
          %6361 = vmatprep.subr.mxu0 0.0
          %6362 = vmatpush2.msra.mxu0 0.0
          %6363 = vmatprep.subr.mxu0 0.0
          %6364 = vmatpush2.msra.mxu0 0.0
          %6365 = vmatprep.subr.mxu0 0.0
          %6366 = vmatpush2.msra.mxu0 0.0
          %6367 = vmatprep.subr.mxu0 0.0
          %6368 = vmatpush2.msra.mxu0 0.0
          %6369 = vmatprep.subr.mxu0 0.0
          %6370 = vmatpush2.msra.mxu0 0.0
          %6371 = vmatprep.subr.mxu0 0.0
          %6372 = vmatpush2.msra.mxu0 0.0
          %6373 = vmatprep.subr.mxu0 0.0
          %6374 = vmatpush2.msra.mxu0 0.0
          %6375 = vmatprep.subr.mxu0 0.0
          %6376 = vmatpush2.msra.mxu0 0.0
          %6377 = vmatprep.subr.mxu0 0.0
          %6378 = vmatpush2.msra.mxu0 0.0
          %6379 = vmatprep.subr.mxu0 0.0
          %6380 = vmatpush2.msra.mxu0 0.0
          %6381 = vmatprep.subr.mxu0 0.0
          %6382 = vmatpush2.msra.mxu0 0.0
          %6383 = vmatprep.mubr.f32.mxu0 0.0
          %6384 = vmatmul.mubr.f32.gmra.mxu0 %v6269
          %v6385 = vpop.f32.mrf.mxu0
          %v6386 = vadd.f32 0.0, %v6385
          %v6387 = vpop.f32.mrf.mxu0
          %6388 = vmatprep.mubr.f32.mxu0 0.0
          %6389 = vmatmul.mubr.f32.gmra.mxu0 %v6272
          %v6390 = vpop.f32.mrf.mxu0
          %v6391 = vadd.f32 0.0, %v6390
          %v6392 = vpop.f32.mrf.mxu0
          %6393 = vmatprep.mubr.f32.mxu0 0.0
          %6394 = vmatmul.mubr.f32.gmra.mxu0 %v6275
          %v6395 = vpop.f32.mrf.mxu0
          %v6396 = vadd.f32 0.0, %v6395
          %v6397 = vpop.f32.mrf.mxu0
          %6398 = vmatprep.mubr.f32.mxu0 0.0
          %6399 = vmatmul.mubr.f32.gmra.mxu0 %v6278
          %v6400 = vpop.f32.mrf.mxu0
          %v6401 = vadd.f32 0.0, %v6400
          %v6402 = vpop.f32.mrf.mxu0
          %6403 = vmatprep.mubr.f32.mxu0 0.0
          %6404 = vmatmul.mubr.f32.gmra.mxu0 %v6281
          %v6405 = vpop.f32.mrf.mxu0
          %v6406 = vadd.f32 0.0, %v6405
          %v6407 = vpop.f32.mrf.mxu0
          %6408 = vmatprep.mubr.f32.mxu0 0.0
          %6409 = vmatmul.mubr.f32.gmra.mxu0 %v6284
          %v6410 = vpop.f32.mrf.mxu0
          %v6411 = vadd.f32 0.0, %v6410
          %v6412 = vpop.f32.mrf.mxu0
          %6413 = vmatprep.mubr.f32.mxu0 0.0
          %6414 = vmatmul.mubr.f32.gmra.mxu0 %v6287
          %v6415 = vpop.f32.mrf.mxu0
          %v6416 = vadd.f32 0.0, %v6415
          %v6417 = vpop.f32.mrf.mxu0
          %6418 = vmatprep.mubr.f32.mxu0 0.0
          %6419 = vmatmul.mubr.f32.gmra.mxu0 %v6290
          %v6420 = vpop.f32.mrf.mxu0
          %v6421 = vadd.f32 0.0, %v6420
          %v6422 = vpop.f32.mrf.mxu0
          %6423 = vmatprep.mubr.f32.mxu0 0.0
          %6424 = vmatmul.mubr.f32.gmra.mxu0 %v6293
          %v6425 = vpop.f32.mrf.mxu0
          %v6426 = vadd.f32 0.0, %v6425
          %v6427 = vpop.f32.mrf.mxu0
          %6428 = vmatprep.mubr.f32.mxu0 0.0
          %6429 = vmatmul.mubr.f32.gmra.mxu0 %v6296
          %v6430 = vpop.f32.mrf.mxu0
          %v6431 = vadd.f32 0.0, %v6430
          %v6432 = vpop.f32.mrf.mxu0
          %6433 = vmatprep.mubr.f32.mxu0 0.0
          %6434 = vmatmul.mubr.f32.gmra.mxu0 %v6299
          %v6435 = vpop.f32.mrf.mxu0
          %v6436 = vadd.f32 0.0, %v6435
          %v6437 = vpop.f32.mrf.mxu0
          %6438 = vmatprep.mubr.f32.mxu0 0.0
          %6439 = vmatmul.mubr.f32.gmra.mxu0 %v6302
          %v6440 = vpop.f32.mrf.mxu0
          %v6441 = vadd.f32 0.0, %v6440
          %v6442 = vpop.f32.mrf.mxu0
          %6443 = vmatprep.mubr.f32.mxu0 0.0
          %6444 = vmatmul.mubr.f32.gmra.mxu0 %v6305
          %v6445 = vpop.f32.mrf.mxu0
          %v6446 = vadd.f32 0.0, %v6445
          %v6447 = vpop.f32.mrf.mxu0
          %6448 = vmatprep.mubr.f32.mxu0 0.0
          %6449 = vmatmul.mubr.f32.gmra.mxu0 %v6308
          %v6450 = vpop.f32.mrf.mxu0
          %v6451 = vadd.f32 0.0, %v6450
          %v6452 = vpop.f32.mrf.mxu0
          %6453 = vmatprep.mubr.f32.mxu0 0.0
          %6454 = vmatmul.mubr.f32.gmra.mxu0 %v6311
          %v6455 = vpop.f32.mrf.mxu0
          %v6456 = vadd.f32 0.0, %v6455
          %v6457 = vpop.f32.mrf.mxu0
          %6458 = vmatprep.mubr.f32.mxu0 0.0
          %6459 = vmatmul.mubr.f32.gmra.mxu0 %v6314
          %v6460 = vpop.f32.mrf.mxu0
          %v6461 = vadd.f32 0.0, %v6460
          %v6462 = vpop.f32.mrf.mxu0
          %6463 = vdwg.mxu0
          %6464 = vrot.lane.b32.xlu0 %v5558, 120
          %v6465 = vpop.permute.xlu0 %6464
          %6466 = vrot.lane.b32.xlu0 %v5563, 120
          %v6467 = vpop.permute.xlu0 %6466
          %v6470 = vmul.f32 %v6386, %v6465
          %v6471 = vmul.f32 %v6391, %v6465
          %v6472 = vmul.f32 %v6396, %v6465
          %v6473 = vmul.f32 %v6401, %v6465
          %v6474 = vmul.f32 %v6406, %v6465
          %v6475 = vmul.f32 %v6411, %v6465
          %v6476 = vmul.f32 %v6416, %v6465
          %v6477 = vmul.f32 %v6421, %v6465
          %v6478 = vmul.f32 %v6426, %v6467
          %v6479 = vmul.f32 %v6431, %v6467
          %v6480 = vmul.f32 %v6436, %v6467
          %v6481 = vmul.f32 %v6441, %v6467
          %v6482 = vmul.f32 %v6446, %v6467
          %v6483 = vmul.f32 %v6451, %v6467
          %v6484 = vmul.f32 %v6456, %v6467
          %v6485 = vmul.f32 %v6461, %v6467
          %v6486 = vsel %vm5480, %v6470, 0.0
          %v6487 = vrot.slane %v6486, 4
          %v6488 = vadd.f32 %v6486, %v6487
          %v6489 = vrot.slane %v6488, 2
          %v6490 = vadd.f32 %v6488, %v6489
          %v6491 = vrot.slane %v6490, 1
          %v6492 = vadd.f32 %v6490, %v6491
          %v6493 = vsel %vm5480, %v6471, 0.0
          %v6494 = vrot.slane %v6493, 4
          %v6495 = vadd.f32 %v6493, %v6494
          %v6496 = vrot.slane %v6495, 2
          %v6497 = vadd.f32 %v6495, %v6496
          %v6498 = vrot.slane %v6497, 1
          %v6499 = vadd.f32 %v6497, %v6498
          %v6500 = vsel %vm5480, %v6472, 0.0
          %v6501 = vrot.slane %v6500, 4
          %v6502 = vadd.f32 %v6500, %v6501
          %v6503 = vrot.slane %v6502, 2
          %v6504 = vadd.f32 %v6502, %v6503
          %v6505 = vrot.slane %v6504, 1
          %v6506 = vadd.f32 %v6504, %v6505
          %v6507 = vsel %vm5480, %v6473, 0.0
          %v6508 = vrot.slane %v6507, 4
          %v6509 = vadd.f32 %v6507, %v6508
          %v6510 = vrot.slane %v6509, 2
          %v6511 = vadd.f32 %v6509, %v6510
          %v6512 = vrot.slane %v6511, 1
          %v6513 = vadd.f32 %v6511, %v6512
          %v6514 = vsel %vm5480, %v6474, 0.0
          %v6515 = vrot.slane %v6514, 4
          %v6516 = vadd.f32 %v6514, %v6515
          %v6517 = vrot.slane %v6516, 2
          %v6518 = vadd.f32 %v6516, %v6517
          %v6519 = vrot.slane %v6518, 1
          %v6520 = vadd.f32 %v6518, %v6519
          %v6521 = vsel %vm5480, %v6475, 0.0
          %v6522 = vrot.slane %v6521, 4
          %v6523 = vadd.f32 %v6521, %v6522
          %v6524 = vrot.slane %v6523, 2
          %v6525 = vadd.f32 %v6523, %v6524
          %v6526 = vrot.slane %v6525, 1
          %v6527 = vadd.f32 %v6525, %v6526
          %v6528 = vsel %vm5480, %v6476, 0.0
          %v6529 = vrot.slane %v6528, 4
          %v6530 = vadd.f32 %v6528, %v6529
          %v6531 = vrot.slane %v6530, 2
          %v6532 = vadd.f32 %v6530, %v6531
          %v6533 = vrot.slane %v6532, 1
          %v6534 = vadd.f32 %v6532, %v6533
          %v6535 = vsel %vm5480, %v6477, 0.0
          %v6536 = vrot.slane %v6535, 4
          %v6537 = vadd.f32 %v6535, %v6536
          %v6538 = vrot.slane %v6537, 2
          %v6539 = vadd.f32 %v6537, %v6538
          %v6540 = vrot.slane %v6539, 1
          %v6541 = vadd.f32 %v6539, %v6540
          %v6542 = vsel %vm5480, %v6478, 0.0
          %v6543 = vrot.slane %v6542, 4
          %v6544 = vadd.f32 %v6542, %v6543
          %v6545 = vrot.slane %v6544, 2
          %v6546 = vadd.f32 %v6544, %v6545
          %v6547 = vrot.slane %v6546, 1
          %v6548 = vadd.f32 %v6546, %v6547
          %v6549 = vsel %vm5480, %v6479, 0.0
          %v6550 = vrot.slane %v6549, 4
          %v6551 = vadd.f32 %v6549, %v6550
          %v6552 = vrot.slane %v6551, 2
          %v6553 = vadd.f32 %v6551, %v6552
          %v6554 = vrot.slane %v6553, 1
          %v6555 = vadd.f32 %v6553, %v6554
          %v6556 = vsel %vm5480, %v6480, 0.0
          %v6557 = vrot.slane %v6556, 4
          %v6558 = vadd.f32 %v6556, %v6557
          %v6559 = vrot.slane %v6558, 2
          %v6560 = vadd.f32 %v6558, %v6559
          %v6561 = vrot.slane %v6560, 1
          %v6562 = vadd.f32 %v6560, %v6561
          %v6563 = vsel %vm5480, %v6481, 0.0
          %v6564 = vrot.slane %v6563, 4
          %v6565 = vadd.f32 %v6563, %v6564
          %v6566 = vrot.slane %v6565, 2
          %v6567 = vadd.f32 %v6565, %v6566
          %v6568 = vrot.slane %v6567, 1
          %v6569 = vadd.f32 %v6567, %v6568
          %v6570 = vsel %vm5480, %v6482, 0.0
          %v6571 = vrot.slane %v6570, 4
          %v6572 = vadd.f32 %v6570, %v6571
          %v6573 = vrot.slane %v6572, 2
          %v6574 = vadd.f32 %v6572, %v6573
          %v6575 = vrot.slane %v6574, 1
          %v6576 = vadd.f32 %v6574, %v6575
          %v6577 = vsel %vm5480, %v6483, 0.0
          %v6578 = vrot.slane %v6577, 4
          %v6579 = vadd.f32 %v6577, %v6578
          %v6580 = vrot.slane %v6579, 2
          %v6581 = vadd.f32 %v6579, %v6580
          %v6582 = vrot.slane %v6581, 1
          %v6583 = vadd.f32 %v6581, %v6582
          %v6584 = vsel %vm5480, %v6484, 0.0
          %v6585 = vrot.slane %v6584, 4
          %v6586 = vadd.f32 %v6584, %v6585
          %v6587 = vrot.slane %v6586, 2
          %v6588 = vadd.f32 %v6586, %v6587
          %v6589 = vrot.slane %v6588, 1
          %v6590 = vadd.f32 %v6588, %v6589
          %v6591 = vsel %vm5480, %v6485, 0.0
          %v6592 = vrot.slane %v6591, 4
          %v6593 = vadd.f32 %v6591, %v6592
          %v6594 = vrot.slane %v6593, 2
          %v6595 = vadd.f32 %v6593, %v6594
          %v6596 = vrot.slane %v6595, 1
          %v6597 = vadd.f32 %v6595, %v6596
          %v6599 = vlaneseq
          %v6600 = vshrl.u32 %v6599, 7
          %v6601 = vsub.s32 0, %v6600
          %v6602 = vrot.slane %v5456, %v6601
          %vm6620 = vcmask 1041409
          %v6621 = vsel %vm6620, %v6499, %v6492
          %vm6622 = vcmask 1042434
          %v6623 = vsel %vm6622, %v6506, %v6621
          %vm6624 = vcmask 1043459
          %v6625 = vsel %vm6624, %v6513, %v6623
          %vm6626 = vcmask 1044484
          %v6627 = vsel %vm6626, %v6520, %v6625
          %vm6628 = vcmask 1045509
          %v6629 = vsel %vm6628, %v6527, %v6627
          %vm6630 = vcmask 1046534
          %v6631 = vsel %vm6630, %v6534, %v6629
          %vm6632 = vcmask 1047559
          %v6633 = vsel %vm6632, %v6541, %v6631
          %v6634 = vsel %vm6620, %v6555, %v6548
          %v6635 = vsel %vm6622, %v6562, %v6634
          %v6636 = vsel %vm6624, %v6569, %v6635
          %v6637 = vsel %vm6626, %v6576, %v6636
          %v6638 = vsel %vm6628, %v6583, %v6637
          %v6639 = vsel %vm6630, %v6590, %v6638
          %v6640 = vsel %vm6632, %v6597, %v6639
          %v6641 = vsel %vm5480, %v6633, 0
          %v6643 = vsel %vm5480, %v6640, 0
          %v6646 = vsel %vm5487, %v5454, 0
          %6648 = vmatprep.subr.mxu0 0.0
          %6649 = vmatpush1.msra.mxu0 0.0
          %6650 = vmatprep.subr.mxu0 0.0
          %6651 = vmatpush1.msra.mxu0 0.0
          %6652 = vmatprep.subr.mxu0 0.0
          %6653 = vmatpush1.msra.mxu0 0.0
          %6654 = vmatprep.subr.mxu0 0.0
          %6655 = vmatpush1.msra.mxu0 0.0
          %6656 = vmatprep.subr.mxu0 0.0
          %6657 = vmatpush1.msra.mxu0 0.0
          %6658 = vmatprep.subr.mxu0 0.0
          %6659 = vmatpush1.msra.mxu0 0.0
          %6660 = vmatprep.subr.mxu0 0.0
          %6661 = vmatpush1.msra.mxu0 0.0
          %6662 = vmatprep.subr.mxu0 0.0
          %6663 = vmatpush1.msra.mxu0 0.0
          %6664 = vmatprep.subr.mxu0 0.0
          %6665 = vmatpush1.msra.mxu0 0.0
          %6666 = vmatprep.subr.mxu0 0.0
          %6667 = vmatpush1.msra.mxu0 0.0
          %6668 = vmatprep.subr.mxu0 0.0
          %6669 = vmatpush1.msra.mxu0 0.0
          %6670 = vmatprep.subr.mxu0 0.0
          %6671 = vmatpush1.msra.mxu0 0.0
          %6672 = vmatprep.subr.mxu0 0.0
          %6673 = vmatpush1.msra.mxu0 0.0
          %6674 = vmatprep.subr.mxu0 0.0
          %6675 = vmatpush1.msra.mxu0 0.0
          %6676 = vmatprep.subr.mxu0 0.0
          %6677 = vmatpush1.msra.mxu0 0.0
          %6678 = vmatprep.subr.mxu0 0.0
          %6679 = vmatpush1.msra.mxu0 %v6646
          %6680 = vmatprep.subr.mxu0 0.0
          %6681 = vmatpush2.msra.mxu0 0.0
          %6682 = vmatprep.subr.mxu0 0.0
          %6683 = vmatpush2.msra.mxu0 0.0
          %6684 = vmatprep.subr.mxu0 0.0
          %6685 = vmatpush2.msra.mxu0 0.0
          %6686 = vmatprep.subr.mxu0 0.0
          %6687 = vmatpush2.msra.mxu0 0.0
          %6688 = vmatprep.subr.mxu0 0.0
          %6689 = vmatpush2.msra.mxu0 0.0
          %6690 = vmatprep.subr.mxu0 0.0
          %6691 = vmatpush2.msra.mxu0 0.0
          %6692 = vmatprep.subr.mxu0 0.0
          %6693 = vmatpush2.msra.mxu0 0.0
          %6694 = vmatprep.subr.mxu0 0.0
          %6695 = vmatpush2.msra.mxu0 0.0
          %6696 = vmatprep.subr.mxu0 0.0
          %6697 = vmatpush2.msra.mxu0 0.0
          %6698 = vmatprep.subr.mxu0 0.0
          %6699 = vmatpush2.msra.mxu0 0.0
          %6700 = vmatprep.subr.mxu0 0.0
          %6701 = vmatpush2.msra.mxu0 0.0
          %6702 = vmatprep.subr.mxu0 0.0
          %6703 = vmatpush2.msra.mxu0 0.0
          %6704 = vmatprep.subr.mxu0 0.0
          %6705 = vmatpush2.msra.mxu0 0.0
          %6706 = vmatprep.subr.mxu0 0.0
          %6707 = vmatpush2.msra.mxu0 0.0
          %6708 = vmatprep.subr.mxu0 0.0
          %6709 = vmatpush2.msra.mxu0 0.0
          %6710 = vmatprep.subr.mxu0 0.0
          %6711 = vmatpush2.msra.mxu0 0.0
          %6712 = vmatprep.mubr.f32.mxu0 0.0
          %6713 = vmatmul.mubr.f32.gmra.mxu0 %v6641
          %v6714 = vpop.f32.mrf.mxu0
          %v6715 = vadd.f32 %v6602, %v6714
          %v6716 = vpop.f32.mrf.mxu0
          %6717 = vmatprep.mubr.f32.mxu0 0.0
          %6718 = vmatmul.mubr.f32.gmra.mxu0 %v6643
          %v6719 = vpop.f32.mrf.mxu0
          %v6720 = vadd.f32 %v6602, %v6719
          %v6721 = vpop.f32.mrf.mxu0
          %6722 = vdwg.mxu0
          %v6723 = vadd.f32 %v5446, %v6715
          %v6724 = vadd.f32 %v5447, %v6720
          %v6725 = vsel %vm5480, %v6723, 0.0
          %6726 = vadd.xlane.f32.xlu0 %v6725
          %v6727 = vpop.xlane.xlu0 %6726
          %v6728 = vsel %vm5480, %v6724, 0.0
          %6729 = vadd.xlane.f32.xlu0 %v6728
          %v6730 = vpop.xlane.xlu0 %6729
          %v6731 = vrcp.pop 4.0
          %v6732 = vmul.f32 %v6727, %v6731
          %v6733 = vmul.f32 %v6730, %v6731
          %v6734 = vsub.f32 %v6723, %v6732
          %v6735 = vsub.f32 %v6724, %v6733
          %v6736 = vmul.f32 %v6734, %v6734
          %v6737 = vmul.f32 %v6735, %v6735
          %v6738 = vsel %vm5480, %v6736, 0.0
          %6739 = vadd.xlane.f32.xlu0 %v6738
          %v6740 = vpop.xlane.xlu0 %6739
          %v6741 = vsel %vm5480, %v6737, 0.0
          %6742 = vadd.xlane.f32.xlu0 %v6741
          %v6743 = vpop.xlane.xlu0 %6742
          %v6744 = vmul.f32 %v6740, %v6731
          %v6745 = vmul.f32 %v6743, %v6731
          %v6746 = vadd.f32 %v6744, 1e-05
          %v6747 = vadd.f32 %v6745, 1e-05
          %v6748 = vrsqrt.pop %v6746
          %v6749 = vrsqrt.pop %v6747
          %v6750 = vmul.f32 %v6734, %v6748
          %v6751 = vmul.f32 %v6735, %v6749
          %v6753 = vlaneseq
          %v6754 = vshrl.u32 %v6753, 7
          %v6755 = vsub.s32 0, %v6754
          %v6756 = vrot.slane %v5458, %v6755
          %v6758 = vmul.f32 %v6750, %v6756
          %v6759 = vmul.f32 %v6751, %v6756
          %v6761 = vlaneseq
          %v6762 = vshrl.u32 %v6761, 7
          %v6763 = vsub.s32 0, %v6762
          %v6764 = vrot.slane %v5460, %v6763
          %v6766 = vadd.f32 %v6758, %v6764
          %v6767 = vadd.f32 %v6759, %v6764
          %v6769 = vlaneseq
          %v6770 = vshrl.u32 %v6769, 7
          %v6771 = vsub.s32 0, %v6770
          %v6772 = vrot.slane %v5464, %v6771
          %v6775 = vsel %vm5480, %v6766, 0
          %v6778 = vsel %vm5480, %v6767, 0
          %v6781 = vsel %vm5487, %v5462, 0
          %6783 = vmatprep.subr.mxu0 0.0
          %6784 = vmatpush1.msra.mxu0 0.0
          %6785 = vmatprep.subr.mxu0 0.0
          %6786 = vmatpush1.msra.mxu0 0.0
          %6787 = vmatprep.subr.mxu0 0.0
          %6788 = vmatpush1.msra.mxu0 0.0
          %6789 = vmatprep.subr.mxu0 0.0
          %6790 = vmatpush1.msra.mxu0 0.0
          %6791 = vmatprep.subr.mxu0 0.0
          %6792 = vmatpush1.msra.mxu0 0.0
          %6793 = vmatprep.subr.mxu0 0.0
          %6794 = vmatpush1.msra.mxu0 0.0
          %6795 = vmatprep.subr.mxu0 0.0
          %6796 = vmatpush1.msra.mxu0 0.0
          %6797 = vmatprep.subr.mxu0 0.0
          %6798 = vmatpush1.msra.mxu0 0.0
          %6799 = vmatprep.subr.mxu0 0.0
          %6800 = vmatpush1.msra.mxu0 0.0
          %6801 = vmatprep.subr.mxu0 0.0
          %6802 = vmatpush1.msra.mxu0 0.0
          %6803 = vmatprep.subr.mxu0 0.0
          %6804 = vmatpush1.msra.mxu0 0.0
          %6805 = vmatprep.subr.mxu0 0.0
          %6806 = vmatpush1.msra.mxu0 0.0
          %6807 = vmatprep.subr.mxu0 0.0
          %6808 = vmatpush1.msra.mxu0 0.0
          %6809 = vmatprep.subr.mxu0 0.0
          %6810 = vmatpush1.msra.mxu0 0.0
          %6811 = vmatprep.subr.mxu0 0.0
          %6812 = vmatpush1.msra.mxu0 0.0
          %6813 = vmatprep.subr.mxu0 0.0
          %6814 = vmatpush1.msra.mxu0 %v6781
          %6815 = vmatprep.subr.mxu0 0.0
          %6816 = vmatpush2.msra.mxu0 0.0
          %6817 = vmatprep.subr.mxu0 0.0
          %6818 = vmatpush2.msra.mxu0 0.0
          %6819 = vmatprep.subr.mxu0 0.0
          %6820 = vmatpush2.msra.mxu0 0.0
          %6821 = vmatprep.subr.mxu0 0.0
          %6822 = vmatpush2.msra.mxu0 0.0
          %6823 = vmatprep.subr.mxu0 0.0
          %6824 = vmatpush2.msra.mxu0 0.0
          %6825 = vmatprep.subr.mxu0 0.0
          %6826 = vmatpush2.msra.mxu0 0.0
          %6827 = vmatprep.subr.mxu0 0.0
          %6828 = vmatpush2.msra.mxu0 0.0
          %6829 = vmatprep.subr.mxu0 0.0
          %6830 = vmatpush2.msra.mxu0 0.0
          %6831 = vmatprep.subr.mxu0 0.0
          %6832 = vmatpush2.msra.mxu0 0.0
          %6833 = vmatprep.subr.mxu0 0.0
          %6834 = vmatpush2.msra.mxu0 0.0
          %6835 = vmatprep.subr.mxu0 0.0
          %6836 = vmatpush2.msra.mxu0 0.0
          %6837 = vmatprep.subr.mxu0 0.0
          %6838 = vmatpush2.msra.mxu0 0.0
          %6839 = vmatprep.subr.mxu0 0.0
          %6840 = vmatpush2.msra.mxu0 0.0
          %6841 = vmatprep.subr.mxu0 0.0
          %6842 = vmatpush2.msra.mxu0 0.0
          %6843 = vmatprep.subr.mxu0 0.0
          %6844 = vmatpush2.msra.mxu0 0.0
          %6845 = vmatprep.subr.mxu0 0.0
          %6846 = vmatpush2.msra.mxu0 0.0
          %6847 = vmatprep.mubr.f32.mxu0 0.0
          %6848 = vmatmul.mubr.f32.gmra.mxu0 %v6775
          %v6849 = vpop.f32.mrf.mxu0
          %v6850 = vadd.f32 %v6772, %v6849
          %v6851 = vpop.f32.mrf.mxu0
          %6852 = vmatprep.mubr.f32.mxu0 0.0
          %6853 = vmatmul.mubr.f32.gmra.mxu0 %v6778
          %v6854 = vpop.f32.mrf.mxu0
          %v6855 = vadd.f32 %v6772, %v6854
          %v6856 = vpop.f32.mrf.mxu0
          %6857 = vdwg.mxu0
          %v6858 = vmax.f32 %v6850, 0.0
          %v6859 = vmax.f32 %v6855, 0.0
          %v6861 = vlaneseq
          %v6862 = vshrl.u32 %v6861, 7
          %v6863 = vsub.s32 0, %v6862
          %v6864 = vrot.slane %v5469, %v6863
          %v6867 = vsel %vm1893, %v6858, 0
          %v6870 = vsel %vm1893, %v6859, 0
          %6872 = vmatprep.subr.mxu0 0.0
          %6873 = vmatpush1.msra.mxu0 0.0
          %6874 = vmatprep.subr.mxu0 0.0
          %6875 = vmatpush1.msra.mxu0 0.0
          %6876 = vmatprep.subr.mxu0 0.0
          %6877 = vmatpush1.msra.mxu0 0.0
          %6878 = vmatprep.subr.mxu0 0.0
          %6879 = vmatpush1.msra.mxu0 0.0
          %6880 = vmatprep.subr.mxu0 0.0
          %6881 = vmatpush1.msra.mxu0 0.0
          %6882 = vmatprep.subr.mxu0 0.0
          %6883 = vmatpush1.msra.mxu0 0.0
          %6884 = vmatprep.subr.mxu0 0.0
          %6885 = vmatpush1.msra.mxu0 0.0
          %6886 = vmatprep.subr.mxu0 0.0
          %6887 = vmatpush1.msra.mxu0 0.0
          %6888 = vmatprep.subr.mxu0 0.0
          %6889 = vmatpush1.msra.mxu0 0.0
          %6890 = vmatprep.subr.mxu0 0.0
          %6891 = vmatpush1.msra.mxu0 0.0
          %6892 = vmatprep.subr.mxu0 0.0
          %6893 = vmatpush1.msra.mxu0 0.0
          %6894 = vmatprep.subr.mxu0 0.0
          %6895 = vmatpush1.msra.mxu0 0.0
          %6896 = vmatprep.subr.mxu0 0.0
          %6897 = vmatpush1.msra.mxu0 0.0
          %6898 = vmatprep.subr.mxu0 0.0
          %6899 = vmatpush1.msra.mxu0 0.0
          %6900 = vmatprep.subr.mxu0 0.0
          %6901 = vmatpush1.msra.mxu0 0.0
          %6902 = vmatprep.subr.mxu0 0.0
          %6903 = vmatpush1.msra.mxu0 %v5467
          %6904 = vmatprep.subr.mxu0 0.0
          %6905 = vmatpush2.msra.mxu0 0.0
          %6906 = vmatprep.subr.mxu0 0.0
          %6907 = vmatpush2.msra.mxu0 0.0
          %6908 = vmatprep.subr.mxu0 0.0
          %6909 = vmatpush2.msra.mxu0 0.0
          %6910 = vmatprep.subr.mxu0 0.0
          %6911 = vmatpush2.msra.mxu0 0.0
          %6912 = vmatprep.subr.mxu0 0.0
          %6913 = vmatpush2.msra.mxu0 0.0
          %6914 = vmatprep.subr.mxu0 0.0
          %6915 = vmatpush2.msra.mxu0 0.0
          %6916 = vmatprep.subr.mxu0 0.0
          %6917 = vmatpush2.msra.mxu0 0.0
          %6918 = vmatprep.subr.mxu0 0.0
          %6919 = vmatpush2.msra.mxu0 0.0
          %6920 = vmatprep.subr.mxu0 0.0
          %6921 = vmatpush2.msra.mxu0 0.0
          %6922 = vmatprep.subr.mxu0 0.0
          %6923 = vmatpush2.msra.mxu0 0.0
          %6924 = vmatprep.subr.mxu0 0.0
          %6925 = vmatpush2.msra.mxu0 0.0
          %6926 = vmatprep.subr.mxu0 0.0
          %6927 = vmatpush2.msra.mxu0 0.0
          %6928 = vmatprep.subr.mxu0 0.0
          %6929 = vmatpush2.msra.mxu0 0.0
          %6930 = vmatprep.subr.mxu0 0.0
          %6931 = vmatpush2.msra.mxu0 0.0
          %6932 = vmatprep.subr.mxu0 0.0
          %6933 = vmatpush2.msra.mxu0 0.0
          %6934 = vmatprep.subr.mxu0 0.0
          %6935 = vmatpush2.msra.mxu0 0.0
          %6936 = vmatprep.mubr.f32.mxu0 0.0
          %6937 = vmatmul.mubr.f32.gmra.mxu0 %v6867
          %v6938 = vpop.f32.mrf.mxu0
          %v6939 = vadd.f32 %v6864, %v6938
          %v6940 = vpop.f32.mrf.mxu0
          %6941 = vmatprep.mubr.f32.mxu0 0.0
          %6942 = vmatmul.mubr.f32.gmra.mxu0 %v6870
          %v6943 = vpop.f32.mrf.mxu0
          %v6944 = vadd.f32 %v6864, %v6943
          %v6945 = vpop.f32.mrf.mxu0
          %6946 = vdwg.mxu0
          %v6947 = vadd.f32 %v6766, %v6939
          %v6948 = vadd.f32 %v6767, %v6944
          %v6949 = vsel %vm5480, %v6947, 0.0
          %6950 = vadd.xlane.f32.xlu0 %v6949
          %v6951 = vpop.xlane.xlu0 %6950
          %v6952 = vsel %vm5480, %v6948, 0.0
          %6953 = vadd.xlane.f32.xlu0 %v6952
          %v6954 = vpop.xlane.xlu0 %6953
          %v6955 = vmul.f32 %v6951, %v6731
          %v6956 = vmul.f32 %v6954, %v6731
          %v6957 = vsub.f32 %v6947, %v6955
          %v6958 = vsub.f32 %v6948, %v6956
          %v6959 = vmul.f32 %v6957, %v6957
          %v6960 = vmul.f32 %v6958, %v6958
          %v6961 = vsel %vm5480, %v6959, 0.0
          %6962 = vadd.xlane.f32.xlu0 %v6961
          %v6963 = vpop.xlane.xlu0 %6962
          %v6964 = vsel %vm5480, %v6960, 0.0
          %6965 = vadd.xlane.f32.xlu0 %v6964
          %v6966 = vpop.xlane.xlu0 %6965
          %v6967 = vmul.f32 %v6963, %v6731
          %v6968 = vmul.f32 %v6966, %v6731
          %v6969 = vadd.f32 %v6967, 1e-05
          %v6970 = vadd.f32 %v6968, 1e-05
          %v6971 = vrsqrt.pop %v6969
          %v6972 = vrsqrt.pop %v6970
          %v6973 = vmul.f32 %v6957, %v6971
          %v6974 = vmul.f32 %v6958, %v6972
          %v6976 = vlaneseq
          %v6977 = vshrl.u32 %v6976, 7
          %v6978 = vsub.s32 0, %v6977
          %v6979 = vrot.slane %v5471, %v6978
          %v6981 = vmul.f32 %v6973, %v6979
          %v6982 = vmul.f32 %v6974, %v6979
          %v6984 = vlaneseq
          %v6985 = vshrl.u32 %v6984, 7
          %v6986 = vsub.s32 0, %v6985
          %v6987 = vrot.slane %v5473, %v6986
          %v6989 = vadd.f32 %v6981, %v6987
          %v6990 = vadd.f32 %v6982, %v6987
        $region359: #{encoder_forward.1} parent=207 // loop_footer
          %s5445 = sadd.s32 1, %s5441
        $region360: #{encoder_forward.1} parent=207 // loop_footer_branch
          %5440 = sbr.rel target = $region356
        $region361: #{encoder_forward.1} parent=207 // loop_exit
          _
        %v6991 = vld [vmem:[#allocation50] sm:$0xf]
        %v6992 = vld [vmem:[#allocation52] sm:$0x1]
        %v6994 = vlaneseq
        %v6995 = vshrl.u32 %v6994, 7
        %v6996 = vsub.s32 0, %v6995
        %v6997 = vrot.slane %v6992, %v6996
        %vm6999 = vcmask 31744
        %v7001 = vsel %vm6999, %v5446, 0
        %v7004 = vsel %vm6999, %v5447, 0
        %vm7006 = vcmask 1043456
        %v7008 = vsel %vm7006, %v6991, 0
        %7010 = vmatprep.subr.mxu0 0.0
        %7011 = vmatpush1.msra.mxu0 0.0
        %7012 = vmatprep.subr.mxu0 0.0
        %7013 = vmatpush1.msra.mxu0 0.0
        %7014 = vmatprep.subr.mxu0 0.0
        %7015 = vmatpush1.msra.mxu0 0.0
        %7016 = vmatprep.subr.mxu0 0.0
        %7017 = vmatpush1.msra.mxu0 0.0
        %7018 = vmatprep.subr.mxu0 0.0
        %7019 = vmatpush1.msra.mxu0 0.0
        %7020 = vmatprep.subr.mxu0 0.0
        %7021 = vmatpush1.msra.mxu0 0.0
        %7022 = vmatprep.subr.mxu0 0.0
        %7023 = vmatpush1.msra.mxu0 0.0
        %7024 = vmatprep.subr.mxu0 0.0
        %7025 = vmatpush1.msra.mxu0 0.0
        %7026 = vmatprep.subr.mxu0 0.0
        %7027 = vmatpush1.msra.mxu0 0.0
        %7028 = vmatprep.subr.mxu0 0.0
        %7029 = vmatpush1.msra.mxu0 0.0
        %7030 = vmatprep.subr.mxu0 0.0
        %7031 = vmatpush1.msra.mxu0 0.0
        %7032 = vmatprep.subr.mxu0 0.0
        %7033 = vmatpush1.msra.mxu0 0.0
        %7034 = vmatprep.subr.mxu0 0.0
        %7035 = vmatpush1.msra.mxu0 0.0
        %7036 = vmatprep.subr.mxu0 0.0
        %7037 = vmatpush1.msra.mxu0 0.0
        %7038 = vmatprep.subr.mxu0 0.0
        %7039 = vmatpush1.msra.mxu0 0.0
        %7040 = vmatprep.subr.mxu0 0.0
        %7041 = vmatpush1.msra.mxu0 %v7008
        %7042 = vmatprep.subr.mxu0 0.0
        %7043 = vmatpush2.msra.mxu0 0.0
        %7044 = vmatprep.subr.mxu0 0.0
        %7045 = vmatpush2.msra.mxu0 0.0
        %7046 = vmatprep.subr.mxu0 0.0
        %7047 = vmatpush2.msra.mxu0 0.0
        %7048 = vmatprep.subr.mxu0 0.0
        %7049 = vmatpush2.msra.mxu0 0.0
        %7050 = vmatprep.subr.mxu0 0.0
        %7051 = vmatpush2.msra.mxu0 0.0
        %7052 = vmatprep.subr.mxu0 0.0
        %7053 = vmatpush2.msra.mxu0 0.0
        %7054 = vmatprep.subr.mxu0 0.0
        %7055 = vmatpush2.msra.mxu0 0.0
        %7056 = vmatprep.subr.mxu0 0.0
        %7057 = vmatpush2.msra.mxu0 0.0
        %7058 = vmatprep.subr.mxu0 0.0
        %7059 = vmatpush2.msra.mxu0 0.0
        %7060 = vmatprep.subr.mxu0 0.0
        %7061 = vmatpush2.msra.mxu0 0.0
        %7062 = vmatprep.subr.mxu0 0.0
        %7063 = vmatpush2.msra.mxu0 0.0
        %7064 = vmatprep.subr.mxu0 0.0
        %7065 = vmatpush2.msra.mxu0 0.0
        %7066 = vmatprep.subr.mxu0 0.0
        %7067 = vmatpush2.msra.mxu0 0.0
        %7068 = vmatprep.subr.mxu0 0.0
        %7069 = vmatpush2.msra.mxu0 0.0
        %7070 = vmatprep.subr.mxu0 0.0
        %7071 = vmatpush2.msra.mxu0 0.0
        %7072 = vmatprep.subr.mxu0 0.0
        %7073 = vmatpush2.msra.mxu0 0.0
        %7074 = vmatprep.mubr.f32.mxu0 0.0
        %7075 = vmatmul.mubr.f32.gmra.mxu0 %v7001
        %v7076 = vpop.f32.mrf.mxu0
        %v7077 = vadd.f32 %v6997, %v7076
        %v7078 = vpop.f32.mrf.mxu0
        %7079 = vmatprep.mubr.f32.mxu0 0.0
        %7080 = vmatmul.mubr.f32.gmra.mxu0 %v7004
        %v7081 = vpop.f32.mrf.mxu0
        %v7082 = vadd.f32 %v6997, %v7081
        %v7083 = vpop.f32.mrf.mxu0
        %7084 = vdwg.mxu0
        %v7085 = vsel %vm1893, %v7077, 0.0
        %v7086 = vrot.slane %v7085, 4
        %v7087 = vadd.f32 %v7085, %v7086
        %v7088 = vrot.slane %v7087, 2
        %v7089 = vadd.f32 %v7087, %v7088
        %v7090 = vrot.slane %v7089, 1
        %v7091 = vadd.f32 %v7089, %v7090
        %v7092 = vsel %vm1893, %v7082, 0.0
        %v7093 = vrot.slane %v7092, 4
        %v7094 = vadd.f32 %v7092, %v7093
        %v7095 = vrot.slane %v7094, 2
        %v7096 = vadd.f32 %v7094, %v7095
        %v7097 = vrot.slane %v7096, 1
        %v7098 = vadd.f32 %v7096, %v7097
        %vm7101 = vcmask 1041409
        %v7102 = vsel %vm7101, %v7098, %v7091
        %vm7104 = vcmask 58368
        %7105 = vst.msk [vmem:[%s1880] sm:$0x3] %vm7104, %v7102
        %s7106 = sand.u32 %s1128, 1
        %s7107 = scalar_lea.sflag [#allocation4], %s7106
        %s7108 = sand.u32 %s1128, 1
        %s7109 = smul.addr %s7108, 2
        %s7110 = scalar_lea.vmem [#allocation53], %s7109
        // Predicated region
        $region362: #{encoder_forward.1} parent=207 // pred_check
          %p7111 = pneg %p1138
        $region363: #{encoder_forward.1} parent=207 // pred_check_branch
          %7113 = sbr.rel (%p7111) target = $region365
        $region364: #{encoder_forward.1} parent=207 // pred_region
          %s7115 = ssub.s32 32, 32
          %7116 = vsyncadd %s7107, %s7115
          %s7117 = smul.addr %s128, 32
          %s7118 = scalar_lea.hbm %s95, %s7117
          %s7120 = sshll.u32 %s7110, 4
          %s7121 = int_to_ptr.vmem [resolvable:$true] %s7120
          %7123 = dma.vmem_to_hbm [thread:$0]  %s7121, 32, %s7118, %s7107
        $region365: #{encoder_forward.1} parent=207 // pred_fallthru
          _
      $region208: #{encoder_forward.1} parent=5 // pred_fallthru
        _
      %p7124 = scmp.le.s32.totalorder 2, %s123
      // Predicated region
      $region366: #{encoder_forward.1} parent=5 // pred_check
        %p7125 = pneg %p7124
      $region367: #{encoder_forward.1} parent=5 // pred_check_branch
        %7127 = sbr.rel (%p7125) target = $region369
      $region368: #{encoder_forward.1} parent=5 // pred_region
        %s7128 = ssub.s32 %s123, 2
        // Predicated region
        $region370: #{encoder_forward.1} parent=368 // pred_check
          %p7129 = pneg %p1144
        $region371: #{encoder_forward.1} parent=368 // pred_check_branch
          %7131 = sbr.rel (%p7129) target = $region373
        $region372: #{encoder_forward.1} parent=368 // pred_region
          %s7132 = sand.u32 %s1129, 1
          %s7133 = scalar_lea.sflag [#allocation4], %s7132
          %s7134 = sand.u32 %s1129, 1
          %s7135 = smul.addr %s7134, 2
          %s7136 = scalar_lea.vmem [#allocation53], %s7135
          %7137 = dma.done %s7133, 32
        $region373: #{encoder_forward.1} parent=368 // pred_fallthru
          _
      $region369: #{encoder_forward.1} parent=5 // pred_fallthru
        _
    $region6: #{encoder_forward.1} parent=1 // loop_footer
      %s127 = sadd.s32 1, %s123
    $region7: #{encoder_forward.1} parent=1 // loop_footer_branch
      %122 = sbr.rel target = $region3
    $region8: #{encoder_forward.1} parent=1 // loop_exit
      _
    %7138 = vsyncpa [#allocation3], 1
    %s7139 = scalar_lea.sflag [#allocation3], 1
    %7140 = vsyncpa %s7139, 1
    %7141 = vsyncpa [#allocation6], 1
    %7142 = vsyncpa [#allocation9], 1
    %7143 = vsyncpa [#allocation12], 1
    %7144 = vsyncpa [#allocation15], 1
    %7145 = vsyncpa [#allocation18], 1
    %7146 = vsyncpa [#allocation21], 1
    %7147 = vsyncpa [#allocation24], 1
    %7148 = vsyncpa [#allocation27], 1
    %7149 = vsyncpa [#allocation30], 1
    %7150 = vsyncpa [#allocation33], 1
    %7151 = vsyncpa [#allocation36], 1
    %7152 = vsyncpa [#allocation39], 1
    %7153 = vsyncpa [#allocation42], 1
    %7154 = vsyncpa [#allocation45], 1
    %7155 = vsyncpa [#allocation48], 1
    %7156 = vsyncpa [#allocation51], 1
    %7157 = vsyncpa [#allocation4], 1
    %s7158 = scalar_lea.sflag [#allocation4], 1
    %7159 = vsyncpa %s7158, 1

</llo_original>
